<compile_context>
chip_gen: v5e
topology: v5e:2x2
jax: 0.10.0
libtpu: 0.0.40
codegen_flags: <defaults>
</compile_context>

<pallas_src>
import numpy as np
import jax
import jax.numpy as jnp
from jax.experimental import pallas as pl
from jax.experimental.pallas import tpu as pltpu

# (in_features, out_features) for each nn.Linear, in forward order.
LAYER_DIMS = ((2, 9), (9, 18), (18, 9), (9, 18), (18, 9), (9, 2))
RELU_FLAGS = (True, True, False, True, True, False)
N_LAYERS = len(LAYER_DIMS)

SUB = 8
LANE = 128
UNIT = SUB * LANE  # 1024 samples == one (8,128) vreg slab per feature


def _layer_offsets():
    offs, off = [], 0
    for din, dout in LAYER_DIMS:
        offs.append(off)
        off += dout * din + dout          # row-major W, then bias
    return tuple(offs), off


LAYER_OFFS, TOTAL_PARAMS = _layer_offsets()   # 749 scalars total


def _ae_kernel(w_ref, x_ref, o_ref):
    """Fused 6-layer MLP forward for one batch tile.

    w_ref: (TOTAL_PARAMS,) f32 in SMEM.  For layer l: W[l] row-major at
           LAYER_OFFS[l], bias[l] right after it.
    x_ref: (FIN,  n_ch, 8, 128) f32 in VMEM -- batch on full (8,128) vregs.
    o_ref: (FOUT, n_ch, 8, 128) f32 in VMEM.
    """
    fin = x_ref.shape[0]
    fout = o_ref.shape[0]
    n_ch = x_ref.shape[1]

    def chunk(c):
        # One 1024-sample chunk: each feature is exactly one (8,128) vreg.
        h = [x_ref[f, c] for f in range(fin)]
        for l, ((din, dout), relu) in enumerate(zip(LAYER_DIMS, RELU_FLAGS)):
            w_off = LAYER_OFFS[l]
            b_off = w_off + dout * din
            nh = []
            for o in range(dout):
                row = w_off + o * din
                # Full-vreg MAC chain with scalar-splat weight/bias operands.
                acc = h[0] * w_ref[row] + w_ref[b_off + o]
                for k in range(1, din):
                    acc = acc + h[k] * w_ref[row + k]
                nh.append(jnp.maximum(acc, 0.0) if relu else acc)
            h = nh
        for f in range(fout):
            o_ref[f, c] = h[f]

    # scf.for over chunks keeps vreg live ranges bounded regardless of tile_b.
    pl.loop(0, n_ch)(chunk)


def pack_params(params):
    """params: list of 6 (W, b) pairs, W shaped (out, in), b shaped (out,).
    Host-side (numpy) packing into one flat f32 table -- call once at init."""
    parts = []
    for (din, dout), (w, b) in zip(LAYER_DIMS, params):
        w = np.asarray(w, np.float32)
        b = np.asarray(b, np.float32)
        assert w.shape == (dout, din) and b.shape == (dout,)
        parts.append(w.reshape(-1))
        parts.append(b.reshape(-1))
    flat = np.concatenate(parts)
    assert flat.shape == (TOTAL_PARAMS,)
    return jnp.asarray(flat)


def _pick_tile(batch, max_tile=8192):
    """Multiple of 1024 samples, capped, aiming for >=2 grid steps (v7x)."""
    half = (batch + 1) // 2
    tile = ((half + UNIT - 1) // UNIT) * UNIT
    return int(min(max_tile, max(UNIT, tile)))


def autoencoder_forward(x, flat_params, *, tile_b=None):
    """x: (B, 2) float.  flat_params: output of pack_params()."""
    B, fin = x.shape
    assert fin == LAYER_DIMS[0][0]
    fout = LAYER_DIMS[-1][1]

    if tile_b is None:
        tile_b = _pick_tile(B)
    assert tile_b % UNIT == 0
    n_ch = tile_b // UNIT
    n_tiles = (B + tile_b - 1) // tile_b
    bp = n_tiles * tile_b

    # Batch onto the (sublane, lane) axes; zero-pad the ragged tail.
    xt = x.T.astype(jnp.float32)                       # (fin, B)
    if bp != B:
        xt = jnp.pad(xt, ((0, 0), (0, bp - B)))
    xt = xt.reshape(fin, n_tiles, n_ch, SUB, LANE)

    out = pl.pallas_call(
        _ae_kernel,
        out_shape=jax.ShapeDtypeStruct((fout, n_tiles, n_ch, SUB, LANE),
                                       jnp.float32),
        grid_spec=pltpu.PrefetchScalarGridSpec(
            num_scalar_prefetch=0,
            grid=(n_tiles,),
            in_specs=[
                # Flat weight/bias table -> SMEM (scalar-splat operands).
                pl.BlockSpec(memory_space=pltpu.MemorySpace.SMEM),
                # Lane- and sublane-dense activation tile.
                pl.BlockSpec((fin, None, n_ch, SUB, LANE),
                             lambda i: (0, i, 0, 0, 0)),
            ],
            out_specs=pl.BlockSpec((fout, None, n_ch, SUB, LANE),
                                   lambda i: (0, i, 0, 0, 0)),
        ),
        compiler_params=pltpu.CompilerParams(
            dimension_semantics=("parallel",)),   # shards tiles across v7x TCs
    )(flat_params, xt)

    out = out.reshape(fout, bp)[:, :B]
    return out.T.astype(x.dtype)


def _init_linear(key, fan_in, fan_out):
    """Mimics torch.nn.Linear default init.  W: (out, in), b: (out,)."""
    kw, kb = jax.random.split(key)
    bound = 1.0 / np.sqrt(float(fan_in))
    w = jax.random.uniform(kw, (fan_out, fan_in), jnp.float32, -bound, bound)
    b = jax.random.uniform(kb, (fan_out,), jnp.float32, -bound, bound)
    return w, b


def _reference_forward(x, params):
    h = x.astype(jnp.float32)
    for (w, b), relu in zip(params, RELU_FLAGS):
        h = jnp.dot(h, w.T, precision=jax.lax.Precision.HIGHEST) + b
        if relu:
            h = jnp.maximum(h, 0.0)
    return h


if __name__ == "__main__":
    key = jax.random.PRNGKey(0)
    keys = jax.random.split(key, N_LAYERS + 1)
    params = [_init_linear(k, fi, fo)
              for k, (fi, fo) in zip(keys[:N_LAYERS], LAYER_DIMS)]
    flat_params = pack_params(params)   # packed once at init (host-side)

    # Ragged batch spanning 2 grid steps at the auto-picked 1024-sample tile.
    B = 1300
    x = jax.random.normal(keys[N_LAYERS], (B, 2), dtype=jnp.float32)

    out = jax.block_until_ready(autoencoder_forward(x, flat_params))
    ref = _reference_forward(x, params)

    assert out.shape == (B, 2)
    assert jnp.allclose(out, ref, atol=1e-4, rtol=1e-4), "mismatch vs reference"
    print("KERNEL_OK")
</pallas_src>

<mosaic_0001>
module attributes {stable_mosaic.version = 11 : i64} {
  func.func @_ae_kernel(%arg0: i32, %arg1: memref<749xf32, #tpu.memory_space<smem>>, %arg2: memref<2x1x1x8x128xf32, #tpu.memory_space<vmem>>, %arg3: memref<2x1x1x8x128xf32, #tpu.memory_space<vmem>>) attributes {dimension_semantics = [#tpu.dimension_semantics<parallel>], iteration_bounds = array<i64: 2>, scalar_prefetch = 0 : i64, scratch_operands = 0 : i64, tpu.core_type = #tpu.core_type<tc>, window_params = [{transform_indices = @transform_0, window_bounds = array<i64: 749>}, {transform_indices = @transform_1, window_bounds = array<i64: 2, 1, 1, 8, 128>}, {transform_indices = @transform_2, window_bounds = array<i64: 2, 1, 1, 8, 128>}]} {
    %c0_i32 = arith.constant 0 : i32
    %c1_i32 = arith.constant 1 : i32
    %0 = arith.muli %c0_i32, %c1_i32 : i32
    %c0_i32_0 = arith.constant 0 : i32
    %1 = arith.addi %c0_i32_0, %0 : i32
    %c0 = arith.constant 0 : index
    %c0_1 = arith.constant 0 : index
    %2 = arith.index_cast %1 : i32 to index
    %c0_2 = arith.constant 0 : index
    %c0_3 = arith.constant 0 : index
    %3 = vector.load %arg2[%c0, %c0_1, %2, %c0_2, %c0_3] : memref<2x1x1x8x128xf32, #tpu.memory_space<vmem>>, vector<1x1x1x8x128xf32>
    %4 = vector.shape_cast %3 : vector<1x1x1x8x128xf32> to vector<8x128xf32>
    %c1 = arith.constant 1 : index
    %c0_4 = arith.constant 0 : index
    %5 = arith.index_cast %1 : i32 to index
    %c0_5 = arith.constant 0 : index
    %c0_6 = arith.constant 0 : index
    %6 = vector.load %arg2[%c1, %c0_4, %5, %c0_5, %c0_6] : memref<2x1x1x8x128xf32, #tpu.memory_space<vmem>>, vector<1x1x1x8x128xf32>
    %7 = vector.shape_cast %6 : vector<1x1x1x8x128xf32> to vector<8x128xf32>
    %c0_7 = arith.constant 0 : index
    %8 = memref.load %arg1[%c0_7] : memref<749xf32, #tpu.memory_space<smem>>
    %9 = vector.broadcast %8 : f32 to vector<8x128xf32>
    %10 = arith.mulf %4, %9 : vector<8x128xf32>
    %c18 = arith.constant 18 : index
    %11 = memref.load %arg1[%c18] : memref<749xf32, #tpu.memory_space<smem>>
    %12 = vector.broadcast %11 : f32 to vector<8x128xf32>
    %13 = arith.addf %10, %12 : vector<8x128xf32>
    %c1_8 = arith.constant 1 : index
    %14 = memref.load %arg1[%c1_8] : memref<749xf32, #tpu.memory_space<smem>>
    %15 = vector.broadcast %14 : f32 to vector<8x128xf32>
    %16 = arith.mulf %7, %15 : vector<8x128xf32>
    %17 = arith.addf %13, %16 : vector<8x128xf32>
    %cst = arith.constant 0.000000e+00 : f32
    %18 = vector.broadcast %cst : f32 to vector<8x128xf32>
    %19 = arith.maximumf %17, %18 : vector<8x128xf32>
    %c2 = arith.constant 2 : index
    %20 = memref.load %arg1[%c2] : memref<749xf32, #tpu.memory_space<smem>>
    %21 = vector.broadcast %20 : f32 to vector<8x128xf32>
    %22 = arith.mulf %4, %21 : vector<8x128xf32>
    %c19 = arith.constant 19 : index
    %23 = memref.load %arg1[%c19] : memref<749xf32, #tpu.memory_space<smem>>
    %24 = vector.broadcast %23 : f32 to vector<8x128xf32>
    %25 = arith.addf %22, %24 : vector<8x128xf32>
    %c3 = arith.constant 3 : index
    %26 = memref.load %arg1[%c3] : memref<749xf32, #tpu.memory_space<smem>>
    %27 = vector.broadcast %26 : f32 to vector<8x128xf32>
    %28 = arith.mulf %7, %27 : vector<8x128xf32>
    %29 = arith.addf %25, %28 : vector<8x128xf32>
    %cst_9 = arith.constant 0.000000e+00 : f32
    %30 = vector.broadcast %cst_9 : f32 to vector<8x128xf32>
    %31 = arith.maximumf %29, %30 : vector<8x128xf32>
    %c4 = arith.constant 4 : index
    %32 = memref.load %arg1[%c4] : memref<749xf32, #tpu.memory_space<smem>>
    %33 = vector.broadcast %32 : f32 to vector<8x128xf32>
    %34 = arith.mulf %4, %33 : vector<8x128xf32>
    %c20 = arith.constant 20 : index
    %35 = memref.load %arg1[%c20] : memref<749xf32, #tpu.memory_space<smem>>
    %36 = vector.broadcast %35 : f32 to vector<8x128xf32>
    %37 = arith.addf %34, %36 : vector<8x128xf32>
    %c5 = arith.constant 5 : index
    %38 = memref.load %arg1[%c5] : memref<749xf32, #tpu.memory_space<smem>>
    %39 = vector.broadcast %38 : f32 to vector<8x128xf32>
    %40 = arith.mulf %7, %39 : vector<8x128xf32>
    %41 = arith.addf %37, %40 : vector<8x128xf32>
    %cst_10 = arith.constant 0.000000e+00 : f32
    %42 = vector.broadcast %cst_10 : f32 to vector<8x128xf32>
    %43 = arith.maximumf %41, %42 : vector<8x128xf32>
    %c6 = arith.constant 6 : index
    %44 = memref.load %arg1[%c6] : memref<749xf32, #tpu.memory_space<smem>>
    %45 = vector.broadcast %44 : f32 to vector<8x128xf32>
    %46 = arith.mulf %4, %45 : vector<8x128xf32>
    %c21 = arith.constant 21 : index
    %47 = memref.load %arg1[%c21] : memref<749xf32, #tpu.memory_space<smem>>
    %48 = vector.broadcast %47 : f32 to vector<8x128xf32>
    %49 = arith.addf %46, %48 : vector<8x128xf32>
    %c7 = arith.constant 7 : index
    %50 = memref.load %arg1[%c7] : memref<749xf32, #tpu.memory_space<smem>>
    %51 = vector.broadcast %50 : f32 to vector<8x128xf32>
    %52 = arith.mulf %7, %51 : vector<8x128xf32>
    %53 = arith.addf %49, %52 : vector<8x128xf32>
    %cst_11 = arith.constant 0.000000e+00 : f32
    %54 = vector.broadcast %cst_11 : f32 to vector<8x128xf32>
    %55 = arith.maximumf %53, %54 : vector<8x128xf32>
    %c8 = arith.constant 8 : index
    %56 = memref.load %arg1[%c8] : memref<749xf32, #tpu.memory_space<smem>>
    %57 = vector.broadcast %56 : f32 to vector<8x128xf32>
    %58 = arith.mulf %4, %57 : vector<8x128xf32>
    %c22 = arith.constant 22 : index
    %59 = memref.load %arg1[%c22] : memref<749xf32, #tpu.memory_space<smem>>
    %60 = vector.broadcast %59 : f32 to vector<8x128xf32>
    %61 = arith.addf %58, %60 : vector<8x128xf32>
    %c9 = arith.constant 9 : index
    %62 = memref.load %arg1[%c9] : memref<749xf32, #tpu.memory_space<smem>>
    %63 = vector.broadcast %62 : f32 to vector<8x128xf32>
    %64 = arith.mulf %7, %63 : vector<8x128xf32>
    %65 = arith.addf %61, %64 : vector<8x128xf32>
    %cst_12 = arith.constant 0.000000e+00 : f32
    %66 = vector.broadcast %cst_12 : f32 to vector<8x128xf32>
    %67 = arith.maximumf %65, %66 : vector<8x128xf32>
    %c10 = arith.constant 10 : index
    %68 = memref.load %arg1[%c10] : memref<749xf32, #tpu.memory_space<smem>>
    %69 = vector.broadcast %68 : f32 to vector<8x128xf32>
    %70 = arith.mulf %4, %69 : vector<8x128xf32>
    %c23 = arith.constant 23 : index
    %71 = memref.load %arg1[%c23] : memref<749xf32, #tpu.memory_space<smem>>
    %72 = vector.broadcast %71 : f32 to vector<8x128xf32>
    %73 = arith.addf %70, %72 : vector<8x128xf32>
    %c11 = arith.constant 11 : index
    %74 = memref.load %arg1[%c11] : memref<749xf32, #tpu.memory_space<smem>>
    %75 = vector.broadcast %74 : f32 to vector<8x128xf32>
    %76 = arith.mulf %7, %75 : vector<8x128xf32>
    %77 = arith.addf %73, %76 : vector<8x128xf32>
    %cst_13 = arith.constant 0.000000e+00 : f32
    %78 = vector.broadcast %cst_13 : f32 to vector<8x128xf32>
    %79 = arith.maximumf %77, %78 : vector<8x128xf32>
    %c12 = arith.constant 12 : index
    %80 = memref.load %arg1[%c12] : memref<749xf32, #tpu.memory_space<smem>>
    %81 = vector.broadcast %80 : f32 to vector<8x128xf32>
    %82 = arith.mulf %4, %81 : vector<8x128xf32>
    %c24 = arith.constant 24 : index
    %83 = memref.load %arg1[%c24] : memref<749xf32, #tpu.memory_space<smem>>
    %84 = vector.broadcast %83 : f32 to vector<8x128xf32>
    %85 = arith.addf %82, %84 : vector<8x128xf32>
    %c13 = arith.constant 13 : index
    %86 = memref.load %arg1[%c13] : memref<749xf32, #tpu.memory_space<smem>>
    %87 = vector.broadcast %86 : f32 to vector<8x128xf32>
    %88 = arith.mulf %7, %87 : vector<8x128xf32>
    %89 = arith.addf %85, %88 : vector<8x128xf32>
    %cst_14 = arith.constant 0.000000e+00 : f32
    %90 = vector.broadcast %cst_14 : f32 to vector<8x128xf32>
    %91 = arith.maximumf %89, %90 : vector<8x128xf32>
    %c14 = arith.constant 14 : index
    %92 = memref.load %arg1[%c14] : memref<749xf32, #tpu.memory_space<smem>>
    %93 = vector.broadcast %92 : f32 to vector<8x128xf32>
    %94 = arith.mulf %4, %93 : vector<8x128xf32>
    %c25 = arith.constant 25 : index
    %95 = memref.load %arg1[%c25] : memref<749xf32, #tpu.memory_space<smem>>
    %96 = vector.broadcast %95 : f32 to vector<8x128xf32>
    %97 = arith.addf %94, %96 : vector<8x128xf32>
    %c15 = arith.constant 15 : index
    %98 = memref.load %arg1[%c15] : memref<749xf32, #tpu.memory_space<smem>>
    %99 = vector.broadcast %98 : f32 to vector<8x128xf32>
    %100 = arith.mulf %7, %99 : vector<8x128xf32>
    %101 = arith.addf %97, %100 : vector<8x128xf32>
    %cst_15 = arith.constant 0.000000e+00 : f32
    %102 = vector.broadcast %cst_15 : f32 to vector<8x128xf32>
    %103 = arith.maximumf %101, %102 : vector<8x128xf32>
    %c16 = arith.constant 16 : index
    %104 = memref.load %arg1[%c16] : memref<749xf32, #tpu.memory_space<smem>>
    %105 = vector.broadcast %104 : f32 to vector<8x128xf32>
    %106 = arith.mulf %4, %105 : vector<8x128xf32>
    %c26 = arith.constant 26 : index
    %107 = memref.load %arg1[%c26] : memref<749xf32, #tpu.memory_space<smem>>
    %108 = vector.broadcast %107 : f32 to vector<8x128xf32>
    %109 = arith.addf %106, %108 : vector<8x128xf32>
    %c17 = arith.constant 17 : index
    %110 = memref.load %arg1[%c17] : memref<749xf32, #tpu.memory_space<smem>>
    %111 = vector.broadcast %110 : f32 to vector<8x128xf32>
    %112 = arith.mulf %7, %111 : vector<8x128xf32>
    %113 = arith.addf %109, %112 : vector<8x128xf32>
    %cst_16 = arith.constant 0.000000e+00 : f32
    %114 = vector.broadcast %cst_16 : f32 to vector<8x128xf32>
    %115 = arith.maximumf %113, %114 : vector<8x128xf32>
    %c27 = arith.constant 27 : index
    %116 = memref.load %arg1[%c27] : memref<749xf32, #tpu.memory_space<smem>>
    %117 = vector.broadcast %116 : f32 to vector<8x128xf32>
    %118 = arith.mulf %19, %117 : vector<8x128xf32>
    %c189 = arith.constant 189 : index
    %119 = memref.load %arg1[%c189] : memref<749xf32, #tpu.memory_space<smem>>
    %120 = vector.broadcast %119 : f32 to vector<8x128xf32>
    %121 = arith.addf %118, %120 : vector<8x128xf32>
    %c28 = arith.constant 28 : index
    %122 = memref.load %arg1[%c28] : memref<749xf32, #tpu.memory_space<smem>>
    %123 = vector.broadcast %122 : f32 to vector<8x128xf32>
    %124 = arith.mulf %31, %123 : vector<8x128xf32>
    %125 = arith.addf %121, %124 : vector<8x128xf32>
    %c29 = arith.constant 29 : index
    %126 = memref.load %arg1[%c29] : memref<749xf32, #tpu.memory_space<smem>>
    %127 = vector.broadcast %126 : f32 to vector<8x128xf32>
    %128 = arith.mulf %43, %127 : vector<8x128xf32>
    %129 = arith.addf %125, %128 : vector<8x128xf32>
    %c30 = arith.constant 30 : index
    %130 = memref.load %arg1[%c30] : memref<749xf32, #tpu.memory_space<smem>>
    %131 = vector.broadcast %130 : f32 to vector<8x128xf32>
    %132 = arith.mulf %55, %131 : vector<8x128xf32>
    %133 = arith.addf %129, %132 : vector<8x128xf32>
    %c31 = arith.constant 31 : index
    %134 = memref.load %arg1[%c31] : memref<749xf32, #tpu.memory_space<smem>>
    %135 = vector.broadcast %134 : f32 to vector<8x128xf32>
    %136 = arith.mulf %67, %135 : vector<8x128xf32>
    %137 = arith.addf %133, %136 : vector<8x128xf32>
    %c32 = arith.constant 32 : index
    %138 = memref.load %arg1[%c32] : memref<749xf32, #tpu.memory_space<smem>>
    %139 = vector.broadcast %138 : f32 to vector<8x128xf32>
    %140 = arith.mulf %79, %139 : vector<8x128xf32>
    %141 = arith.addf %137, %140 : vector<8x128xf32>
    %c33 = arith.constant 33 : index
    %142 = memref.load %arg1[%c33] : memref<749xf32, #tpu.memory_space<smem>>
    %143 = vector.broadcast %142 : f32 to vector<8x128xf32>
    %144 = arith.mulf %91, %143 : vector<8x128xf32>
    %145 = arith.addf %141, %144 : vector<8x128xf32>
    %c34 = arith.constant 34 : index
    %146 = memref.load %arg1[%c34] : memref<749xf32, #tpu.memory_space<smem>>
    %147 = vector.broadcast %146 : f32 to vector<8x128xf32>
    %148 = arith.mulf %103, %147 : vector<8x128xf32>
    %149 = arith.addf %145, %148 : vector<8x128xf32>
    %c35 = arith.constant 35 : index
    %150 = memref.load %arg1[%c35] : memref<749xf32, #tpu.memory_space<smem>>
    %151 = vector.broadcast %150 : f32 to vector<8x128xf32>
    %152 = arith.mulf %115, %151 : vector<8x128xf32>
    %153 = arith.addf %149, %152 : vector<8x128xf32>
    %cst_17 = arith.constant 0.000000e+00 : f32
    %154 = vector.broadcast %cst_17 : f32 to vector<8x128xf32>
    %155 = arith.maximumf %153, %154 : vector<8x128xf32>
    %c36 = arith.constant 36 : index
    %156 = memref.load %arg1[%c36] : memref<749xf32, #tpu.memory_space<smem>>
    %157 = vector.broadcast %156 : f32 to vector<8x128xf32>
    %158 = arith.mulf %19, %157 : vector<8x128xf32>
    %c190 = arith.constant 190 : index
    %159 = memref.load %arg1[%c190] : memref<749xf32, #tpu.memory_space<smem>>
    %160 = vector.broadcast %159 : f32 to vector<8x128xf32>
    %161 = arith.addf %158, %160 : vector<8x128xf32>
    %c37 = arith.constant 37 : index
    %162 = memref.load %arg1[%c37] : memref<749xf32, #tpu.memory_space<smem>>
    %163 = vector.broadcast %162 : f32 to vector<8x128xf32>
    %164 = arith.mulf %31, %163 : vector<8x128xf32>
    %165 = arith.addf %161, %164 : vector<8x128xf32>
    %c38 = arith.constant 38 : index
    %166 = memref.load %arg1[%c38] : memref<749xf32, #tpu.memory_space<smem>>
    %167 = vector.broadcast %166 : f32 to vector<8x128xf32>
    %168 = arith.mulf %43, %167 : vector<8x128xf32>
    %169 = arith.addf %165, %168 : vector<8x128xf32>
    %c39 = arith.constant 39 : index
    %170 = memref.load %arg1[%c39] : memref<749xf32, #tpu.memory_space<smem>>
    %171 = vector.broadcast %170 : f32 to vector<8x128xf32>
    %172 = arith.mulf %55, %171 : vector<8x128xf32>
    %173 = arith.addf %169, %172 : vector<8x128xf32>
    %c40 = arith.constant 40 : index
    %174 = memref.load %arg1[%c40] : memref<749xf32, #tpu.memory_space<smem>>
    %175 = vector.broadcast %174 : f32 to vector<8x128xf32>
    %176 = arith.mulf %67, %175 : vector<8x128xf32>
    %177 = arith.addf %173, %176 : vector<8x128xf32>
    %c41 = arith.constant 41 : index
    %178 = memref.load %arg1[%c41] : memref<749xf32, #tpu.memory_space<smem>>
    %179 = vector.broadcast %178 : f32 to vector<8x128xf32>
    %180 = arith.mulf %79, %179 : vector<8x128xf32>
    %181 = arith.addf %177, %180 : vector<8x128xf32>
    %c42 = arith.constant 42 : index
    %182 = memref.load %arg1[%c42] : memref<749xf32, #tpu.memory_space<smem>>
    %183 = vector.broadcast %182 : f32 to vector<8x128xf32>
    %184 = arith.mulf %91, %183 : vector<8x128xf32>
    %185 = arith.addf %181, %184 : vector<8x128xf32>
    %c43 = arith.constant 43 : index
    %186 = memref.load %arg1[%c43] : memref<749xf32, #tpu.memory_space<smem>>
    %187 = vector.broadcast %186 : f32 to vector<8x128xf32>
    %188 = arith.mulf %103, %187 : vector<8x128xf32>
    %189 = arith.addf %185, %188 : vector<8x128xf32>
    %c44 = arith.constant 44 : index
    %190 = memref.load %arg1[%c44] : memref<749xf32, #tpu.memory_space<smem>>
    %191 = vector.broadcast %190 : f32 to vector<8x128xf32>
    %192 = arith.mulf %115, %191 : vector<8x128xf32>
    %193 = arith.addf %189, %192 : vector<8x128xf32>
    %cst_18 = arith.constant 0.000000e+00 : f32
    %194 = vector.broadcast %cst_18 : f32 to vector<8x128xf32>
    %195 = arith.maximumf %193, %194 : vector<8x128xf32>
    %c45 = arith.constant 45 : index
    %196 = memref.load %arg1[%c45] : memref<749xf32, #tpu.memory_space<smem>>
    %197 = vector.broadcast %196 : f32 to vector<8x128xf32>
    %198 = arith.mulf %19, %197 : vector<8x128xf32>
    %c191 = arith.constant 191 : index
    %199 = memref.load %arg1[%c191] : memref<749xf32, #tpu.memory_space<smem>>
    %200 = vector.broadcast %199 : f32 to vector<8x128xf32>
    %201 = arith.addf %198, %200 : vector<8x128xf32>
    %c46 = arith.constant 46 : index
    %202 = memref.load %arg1[%c46] : memref<749xf32, #tpu.memory_space<smem>>
    %203 = vector.broadcast %202 : f32 to vector<8x128xf32>
    %204 = arith.mulf %31, %203 : vector<8x128xf32>
    %205 = arith.addf %201, %204 : vector<8x128xf32>
    %c47 = arith.constant 47 : index
    %206 = memref.load %arg1[%c47] : memref<749xf32, #tpu.memory_space<smem>>
    %207 = vector.broadcast %206 : f32 to vector<8x128xf32>
    %208 = arith.mulf %43, %207 : vector<8x128xf32>
    %209 = arith.addf %205, %208 : vector<8x128xf32>
    %c48 = arith.constant 48 : index
    %210 = memref.load %arg1[%c48] : memref<749xf32, #tpu.memory_space<smem>>
    %211 = vector.broadcast %210 : f32 to vector<8x128xf32>
    %212 = arith.mulf %55, %211 : vector<8x128xf32>
    %213 = arith.addf %209, %212 : vector<8x128xf32>
    %c49 = arith.constant 49 : index
    %214 = memref.load %arg1[%c49] : memref<749xf32, #tpu.memory_space<smem>>
    %215 = vector.broadcast %214 : f32 to vector<8x128xf32>
    %216 = arith.mulf %67, %215 : vector<8x128xf32>
    %217 = arith.addf %213, %216 : vector<8x128xf32>
    %c50 = arith.constant 50 : index
    %218 = memref.load %arg1[%c50] : memref<749xf32, #tpu.memory_space<smem>>
    %219 = vector.broadcast %218 : f32 to vector<8x128xf32>
    %220 = arith.mulf %79, %219 : vector<8x128xf32>
    %221 = arith.addf %217, %220 : vector<8x128xf32>
    %c51 = arith.constant 51 : index
    %222 = memref.load %arg1[%c51] : memref<749xf32, #tpu.memory_space<smem>>
    %223 = vector.broadcast %222 : f32 to vector<8x128xf32>
    %224 = arith.mulf %91, %223 : vector<8x128xf32>
    %225 = arith.addf %221, %224 : vector<8x128xf32>
    %c52 = arith.constant 52 : index
    %226 = memref.load %arg1[%c52] : memref<749xf32, #tpu.memory_space<smem>>
    %227 = vector.broadcast %226 : f32 to vector<8x128xf32>
    %228 = arith.mulf %103, %227 : vector<8x128xf32>
    %229 = arith.addf %225, %228 : vector<8x128xf32>
    %c53 = arith.constant 53 : index
    %230 = memref.load %arg1[%c53] : memref<749xf32, #tpu.memory_space<smem>>
    %231 = vector.broadcast %230 : f32 to vector<8x128xf32>
    %232 = arith.mulf %115, %231 : vector<8x128xf32>
    %233 = arith.addf %229, %232 : vector<8x128xf32>
    %cst_19 = arith.constant 0.000000e+00 : f32
    %234 = vector.broadcast %cst_19 : f32 to vector<8x128xf32>
    %235 = arith.maximumf %233, %234 : vector<8x128xf32>
    %c54 = arith.constant 54 : index
    %236 = memref.load %arg1[%c54] : memref<749xf32, #tpu.memory_space<smem>>
    %237 = vector.broadcast %236 : f32 to vector<8x128xf32>
    %238 = arith.mulf %19, %237 : vector<8x128xf32>
    %c192 = arith.constant 192 : index
    %239 = memref.load %arg1[%c192] : memref<749xf32, #tpu.memory_space<smem>>
    %240 = vector.broadcast %239 : f32 to vector<8x128xf32>
    %241 = arith.addf %238, %240 : vector<8x128xf32>
    %c55 = arith.constant 55 : index
    %242 = memref.load %arg1[%c55] : memref<749xf32, #tpu.memory_space<smem>>
    %243 = vector.broadcast %242 : f32 to vector<8x128xf32>
    %244 = arith.mulf %31, %243 : vector<8x128xf32>
    %245 = arith.addf %241, %244 : vector<8x128xf32>
    %c56 = arith.constant 56 : index
    %246 = memref.load %arg1[%c56] : memref<749xf32, #tpu.memory_space<smem>>
    %247 = vector.broadcast %246 : f32 to vector<8x128xf32>
    %248 = arith.mulf %43, %247 : vector<8x128xf32>
    %249 = arith.addf %245, %248 : vector<8x128xf32>
    %c57 = arith.constant 57 : index
    %250 = memref.load %arg1[%c57] : memref<749xf32, #tpu.memory_space<smem>>
    %251 = vector.broadcast %250 : f32 to vector<8x128xf32>
    %252 = arith.mulf %55, %251 : vector<8x128xf32>
    %253 = arith.addf %249, %252 : vector<8x128xf32>
    %c58 = arith.constant 58 : index
    %254 = memref.load %arg1[%c58] : memref<749xf32, #tpu.memory_space<smem>>
    %255 = vector.broadcast %254 : f32 to vector<8x128xf32>
    %256 = arith.mulf %67, %255 : vector<8x128xf32>
    %257 = arith.addf %253, %256 : vector<8x128xf32>
    %c59 = arith.constant 59 : index
    %258 = memref.load %arg1[%c59] : memref<749xf32, #tpu.memory_space<smem>>
    %259 = vector.broadcast %258 : f32 to vector<8x128xf32>
    %260 = arith.mulf %79, %259 : vector<8x128xf32>
    %261 = arith.addf %257, %260 : vector<8x128xf32>
    %c60 = arith.constant 60 : index
    %262 = memref.load %arg1[%c60] : memref<749xf32, #tpu.memory_space<smem>>
    %263 = vector.broadcast %262 : f32 to vector<8x128xf32>
    %264 = arith.mulf %91, %263 : vector<8x128xf32>
    %265 = arith.addf %261, %264 : vector<8x128xf32>
    %c61 = arith.constant 61 : index
    %266 = memref.load %arg1[%c61] : memref<749xf32, #tpu.memory_space<smem>>
    %267 = vector.broadcast %266 : f32 to vector<8x128xf32>
    %268 = arith.mulf %103, %267 : vector<8x128xf32>
    %269 = arith.addf %265, %268 : vector<8x128xf32>
    %c62 = arith.constant 62 : index
    %270 = memref.load %arg1[%c62] : memref<749xf32, #tpu.memory_space<smem>>
    %271 = vector.broadcast %270 : f32 to vector<8x128xf32>
    %272 = arith.mulf %115, %271 : vector<8x128xf32>
    %273 = arith.addf %269, %272 : vector<8x128xf32>
    %cst_20 = arith.constant 0.000000e+00 : f32
    %274 = vector.broadcast %cst_20 : f32 to vector<8x128xf32>
    %275 = arith.maximumf %273, %274 : vector<8x128xf32>
    %c63 = arith.constant 63 : index
    %276 = memref.load %arg1[%c63] : memref<749xf32, #tpu.memory_space<smem>>
    %277 = vector.broadcast %276 : f32 to vector<8x128xf32>
    %278 = arith.mulf %19, %277 : vector<8x128xf32>
    %c193 = arith.constant 193 : index
    %279 = memref.load %arg1[%c193] : memref<749xf32, #tpu.memory_space<smem>>
    %280 = vector.broadcast %279 : f32 to vector<8x128xf32>
    %281 = arith.addf %278, %280 : vector<8x128xf32>
    %c64 = arith.constant 64 : index
    %282 = memref.load %arg1[%c64] : memref<749xf32, #tpu.memory_space<smem>>
    %283 = vector.broadcast %282 : f32 to vector<8x128xf32>
    %284 = arith.mulf %31, %283 : vector<8x128xf32>
    %285 = arith.addf %281, %284 : vector<8x128xf32>
    %c65 = arith.constant 65 : index
    %286 = memref.load %arg1[%c65] : memref<749xf32, #tpu.memory_space<smem>>
    %287 = vector.broadcast %286 : f32 to vector<8x128xf32>
    %288 = arith.mulf %43, %287 : vector<8x128xf32>
    %289 = arith.addf %285, %288 : vector<8x128xf32>
    %c66 = arith.constant 66 : index
    %290 = memref.load %arg1[%c66] : memref<749xf32, #tpu.memory_space<smem>>
    %291 = vector.broadcast %290 : f32 to vector<8x128xf32>
    %292 = arith.mulf %55, %291 : vector<8x128xf32>
    %293 = arith.addf %289, %292 : vector<8x128xf32>
    %c67 = arith.constant 67 : index
    %294 = memref.load %arg1[%c67] : memref<749xf32, #tpu.memory_space<smem>>
    %295 = vector.broadcast %294 : f32 to vector<8x128xf32>
    %296 = arith.mulf %67, %295 : vector<8x128xf32>
    %297 = arith.addf %293, %296 : vector<8x128xf32>
    %c68 = arith.constant 68 : index
    %298 = memref.load %arg1[%c68] : memref<749xf32, #tpu.memory_space<smem>>
    %299 = vector.broadcast %298 : f32 to vector<8x128xf32>
    %300 = arith.mulf %79, %299 : vector<8x128xf32>
    %301 = arith.addf %297, %300 : vector<8x128xf32>
    %c69 = arith.constant 69 : index
    %302 = memref.load %arg1[%c69] : memref<749xf32, #tpu.memory_space<smem>>
    %303 = vector.broadcast %302 : f32 to vector<8x128xf32>
    %304 = arith.mulf %91, %303 : vector<8x128xf32>
    %305 = arith.addf %301, %304 : vector<8x128xf32>
    %c70 = arith.constant 70 : index
    %306 = memref.load %arg1[%c70] : memref<749xf32, #tpu.memory_space<smem>>
    %307 = vector.broadcast %306 : f32 to vector<8x128xf32>
    %308 = arith.mulf %103, %307 : vector<8x128xf32>
    %309 = arith.addf %305, %308 : vector<8x128xf32>
    %c71 = arith.constant 71 : index
    %310 = memref.load %arg1[%c71] : memref<749xf32, #tpu.memory_space<smem>>
    %311 = vector.broadcast %310 : f32 to vector<8x128xf32>
    %312 = arith.mulf %115, %311 : vector<8x128xf32>
    %313 = arith.addf %309, %312 : vector<8x128xf32>
    %cst_21 = arith.constant 0.000000e+00 : f32
    %314 = vector.broadcast %cst_21 : f32 to vector<8x128xf32>
    %315 = arith.maximumf %313, %314 : vector<8x128xf32>
    %c72 = arith.constant 72 : index
    %316 = memref.load %arg1[%c72] : memref<749xf32, #tpu.memory_space<smem>>
    %317 = vector.broadcast %316 : f32 to vector<8x128xf32>
    %318 = arith.mulf %19, %317 : vector<8x128xf32>
    %c194 = arith.constant 194 : index
    %319 = memref.load %arg1[%c194] : memref<749xf32, #tpu.memory_space<smem>>
    %320 = vector.broadcast %319 : f32 to vector<8x128xf32>
    %321 = arith.addf %318, %320 : vector<8x128xf32>
    %c73 = arith.constant 73 : index
    %322 = memref.load %arg1[%c73] : memref<749xf32, #tpu.memory_space<smem>>
    %323 = vector.broadcast %322 : f32 to vector<8x128xf32>
    %324 = arith.mulf %31, %323 : vector<8x128xf32>
    %325 = arith.addf %321, %324 : vector<8x128xf32>
    %c74 = arith.constant 74 : index
    %326 = memref.load %arg1[%c74] : memref<749xf32, #tpu.memory_space<smem>>
    %327 = vector.broadcast %326 : f32 to vector<8x128xf32>
    %328 = arith.mulf %43, %327 : vector<8x128xf32>
    %329 = arith.addf %325, %328 : vector<8x128xf32>
    %c75 = arith.constant 75 : index
    %330 = memref.load %arg1[%c75] : memref<749xf32, #tpu.memory_space<smem>>
    %331 = vector.broadcast %330 : f32 to vector<8x128xf32>
    %332 = arith.mulf %55, %331 : vector<8x128xf32>
    %333 = arith.addf %329, %332 : vector<8x128xf32>
    %c76 = arith.constant 76 : index
    %334 = memref.load %arg1[%c76] : memref<749xf32, #tpu.memory_space<smem>>
    %335 = vector.broadcast %334 : f32 to vector<8x128xf32>
    %336 = arith.mulf %67, %335 : vector<8x128xf32>
    %337 = arith.addf %333, %336 : vector<8x128xf32>
    %c77 = arith.constant 77 : index
    %338 = memref.load %arg1[%c77] : memref<749xf32, #tpu.memory_space<smem>>
    %339 = vector.broadcast %338 : f32 to vector<8x128xf32>
    %340 = arith.mulf %79, %339 : vector<8x128xf32>
    %341 = arith.addf %337, %340 : vector<8x128xf32>
    %c78 = arith.constant 78 : index
    %342 = memref.load %arg1[%c78] : memref<749xf32, #tpu.memory_space<smem>>
    %343 = vector.broadcast %342 : f32 to vector<8x128xf32>
    %344 = arith.mulf %91, %343 : vector<8x128xf32>
    %345 = arith.addf %341, %344 : vector<8x128xf32>
    %c79 = arith.constant 79 : index
    %346 = memref.load %arg1[%c79] : memref<749xf32, #tpu.memory_space<smem>>
    %347 = vector.broadcast %346 : f32 to vector<8x128xf32>
    %348 = arith.mulf %103, %347 : vector<8x128xf32>
    %349 = arith.addf %345, %348 : vector<8x128xf32>
    %c80 = arith.constant 80 : index
    %350 = memref.load %arg1[%c80] : memref<749xf32, #tpu.memory_space<smem>>
    %351 = vector.broadcast %350 : f32 to vector<8x128xf32>
    %352 = arith.mulf %115, %351 : vector<8x128xf32>
    %353 = arith.addf %349, %352 : vector<8x128xf32>
    %cst_22 = arith.constant 0.000000e+00 : f32
    %354 = vector.broadcast %cst_22 : f32 to vector<8x128xf32>
    %355 = arith.maximumf %353, %354 : vector<8x128xf32>
    %c81 = arith.constant 81 : index
    %356 = memref.load %arg1[%c81] : memref<749xf32, #tpu.memory_space<smem>>
    %357 = vector.broadcast %356 : f32 to vector<8x128xf32>
    %358 = arith.mulf %19, %357 : vector<8x128xf32>
    %c195 = arith.constant 195 : index
    %359 = memref.load %arg1[%c195] : memref<749xf32, #tpu.memory_space<smem>>
    %360 = vector.broadcast %359 : f32 to vector<8x128xf32>
    %361 = arith.addf %358, %360 : vector<8x128xf32>
    %c82 = arith.constant 82 : index
    %362 = memref.load %arg1[%c82] : memref<749xf32, #tpu.memory_space<smem>>
    %363 = vector.broadcast %362 : f32 to vector<8x128xf32>
    %364 = arith.mulf %31, %363 : vector<8x128xf32>
    %365 = arith.addf %361, %364 : vector<8x128xf32>
    %c83 = arith.constant 83 : index
    %366 = memref.load %arg1[%c83] : memref<749xf32, #tpu.memory_space<smem>>
    %367 = vector.broadcast %366 : f32 to vector<8x128xf32>
    %368 = arith.mulf %43, %367 : vector<8x128xf32>
    %369 = arith.addf %365, %368 : vector<8x128xf32>
    %c84 = arith.constant 84 : index
    %370 = memref.load %arg1[%c84] : memref<749xf32, #tpu.memory_space<smem>>
    %371 = vector.broadcast %370 : f32 to vector<8x128xf32>
    %372 = arith.mulf %55, %371 : vector<8x128xf32>
    %373 = arith.addf %369, %372 : vector<8x128xf32>
    %c85 = arith.constant 85 : index
    %374 = memref.load %arg1[%c85] : memref<749xf32, #tpu.memory_space<smem>>
    %375 = vector.broadcast %374 : f32 to vector<8x128xf32>
    %376 = arith.mulf %67, %375 : vector<8x128xf32>
    %377 = arith.addf %373, %376 : vector<8x128xf32>
    %c86 = arith.constant 86 : index
    %378 = memref.load %arg1[%c86] : memref<749xf32, #tpu.memory_space<smem>>
    %379 = vector.broadcast %378 : f32 to vector<8x128xf32>
    %380 = arith.mulf %79, %379 : vector<8x128xf32>
    %381 = arith.addf %377, %380 : vector<8x128xf32>
    %c87 = arith.constant 87 : index
    %382 = memref.load %arg1[%c87] : memref<749xf32, #tpu.memory_space<smem>>
    %383 = vector.broadcast %382 : f32 to vector<8x128xf32>
    %384 = arith.mulf %91, %383 : vector<8x128xf32>
    %385 = arith.addf %381, %384 : vector<8x128xf32>
    %c88 = arith.constant 88 : index
    %386 = memref.load %arg1[%c88] : memref<749xf32, #tpu.memory_space<smem>>
    %387 = vector.broadcast %386 : f32 to vector<8x128xf32>
    %388 = arith.mulf %103, %387 : vector<8x128xf32>
    %389 = arith.addf %385, %388 : vector<8x128xf32>
    %c89 = arith.constant 89 : index
    %390 = memref.load %arg1[%c89] : memref<749xf32, #tpu.memory_space<smem>>
    %391 = vector.broadcast %390 : f32 to vector<8x128xf32>
    %392 = arith.mulf %115, %391 : vector<8x128xf32>
    %393 = arith.addf %389, %392 : vector<8x128xf32>
    %cst_23 = arith.constant 0.000000e+00 : f32
    %394 = vector.broadcast %cst_23 : f32 to vector<8x128xf32>
    %395 = arith.maximumf %393, %394 : vector<8x128xf32>
    %c90 = arith.constant 90 : index
    %396 = memref.load %arg1[%c90] : memref<749xf32, #tpu.memory_space<smem>>
    %397 = vector.broadcast %396 : f32 to vector<8x128xf32>
    %398 = arith.mulf %19, %397 : vector<8x128xf32>
    %c196 = arith.constant 196 : index
    %399 = memref.load %arg1[%c196] : memref<749xf32, #tpu.memory_space<smem>>
    %400 = vector.broadcast %399 : f32 to vector<8x128xf32>
    %401 = arith.addf %398, %400 : vector<8x128xf32>
    %c91 = arith.constant 91 : index
    %402 = memref.load %arg1[%c91] : memref<749xf32, #tpu.memory_space<smem>>
    %403 = vector.broadcast %402 : f32 to vector<8x128xf32>
    %404 = arith.mulf %31, %403 : vector<8x128xf32>
    %405 = arith.addf %401, %404 : vector<8x128xf32>
    %c92 = arith.constant 92 : index
    %406 = memref.load %arg1[%c92] : memref<749xf32, #tpu.memory_space<smem>>
    %407 = vector.broadcast %406 : f32 to vector<8x128xf32>
    %408 = arith.mulf %43, %407 : vector<8x128xf32>
    %409 = arith.addf %405, %408 : vector<8x128xf32>
    %c93 = arith.constant 93 : index
    %410 = memref.load %arg1[%c93] : memref<749xf32, #tpu.memory_space<smem>>
    %411 = vector.broadcast %410 : f32 to vector<8x128xf32>
    %412 = arith.mulf %55, %411 : vector<8x128xf32>
    %413 = arith.addf %409, %412 : vector<8x128xf32>
    %c94 = arith.constant 94 : index
    %414 = memref.load %arg1[%c94] : memref<749xf32, #tpu.memory_space<smem>>
    %415 = vector.broadcast %414 : f32 to vector<8x128xf32>
    %416 = arith.mulf %67, %415 : vector<8x128xf32>
    %417 = arith.addf %413, %416 : vector<8x128xf32>
    %c95 = arith.constant 95 : index
    %418 = memref.load %arg1[%c95] : memref<749xf32, #tpu.memory_space<smem>>
    %419 = vector.broadcast %418 : f32 to vector<8x128xf32>
    %420 = arith.mulf %79, %419 : vector<8x128xf32>
    %421 = arith.addf %417, %420 : vector<8x128xf32>
    %c96 = arith.constant 96 : index
    %422 = memref.load %arg1[%c96] : memref<749xf32, #tpu.memory_space<smem>>
    %423 = vector.broadcast %422 : f32 to vector<8x128xf32>
    %424 = arith.mulf %91, %423 : vector<8x128xf32>
    %425 = arith.addf %421, %424 : vector<8x128xf32>
    %c97 = arith.constant 97 : index
    %426 = memref.load %arg1[%c97] : memref<749xf32, #tpu.memory_space<smem>>
    %427 = vector.broadcast %426 : f32 to vector<8x128xf32>
    %428 = arith.mulf %103, %427 : vector<8x128xf32>
    %429 = arith.addf %425, %428 : vector<8x128xf32>
    %c98 = arith.constant 98 : index
    %430 = memref.load %arg1[%c98] : memref<749xf32, #tpu.memory_space<smem>>
    %431 = vector.broadcast %430 : f32 to vector<8x128xf32>
    %432 = arith.mulf %115, %431 : vector<8x128xf32>
    %433 = arith.addf %429, %432 : vector<8x128xf32>
    %cst_24 = arith.constant 0.000000e+00 : f32
    %434 = vector.broadcast %cst_24 : f32 to vector<8x128xf32>
    %435 = arith.maximumf %433, %434 : vector<8x128xf32>
    %c99 = arith.constant 99 : index
    %436 = memref.load %arg1[%c99] : memref<749xf32, #tpu.memory_space<smem>>
    %437 = vector.broadcast %436 : f32 to vector<8x128xf32>
    %438 = arith.mulf %19, %437 : vector<8x128xf32>
    %c197 = arith.constant 197 : index
    %439 = memref.load %arg1[%c197] : memref<749xf32, #tpu.memory_space<smem>>
    %440 = vector.broadcast %439 : f32 to vector<8x128xf32>
    %441 = arith.addf %438, %440 : vector<8x128xf32>
    %c100 = arith.constant 100 : index
    %442 = memref.load %arg1[%c100] : memref<749xf32, #tpu.memory_space<smem>>
    %443 = vector.broadcast %442 : f32 to vector<8x128xf32>
    %444 = arith.mulf %31, %443 : vector<8x128xf32>
    %445 = arith.addf %441, %444 : vector<8x128xf32>
    %c101 = arith.constant 101 : index
    %446 = memref.load %arg1[%c101] : memref<749xf32, #tpu.memory_space<smem>>
    %447 = vector.broadcast %446 : f32 to vector<8x128xf32>
    %448 = arith.mulf %43, %447 : vector<8x128xf32>
    %449 = arith.addf %445, %448 : vector<8x128xf32>
    %c102 = arith.constant 102 : index
    %450 = memref.load %arg1[%c102] : memref<749xf32, #tpu.memory_space<smem>>
    %451 = vector.broadcast %450 : f32 to vector<8x128xf32>
    %452 = arith.mulf %55, %451 : vector<8x128xf32>
    %453 = arith.addf %449, %452 : vector<8x128xf32>
    %c103 = arith.constant 103 : index
    %454 = memref.load %arg1[%c103] : memref<749xf32, #tpu.memory_space<smem>>
    %455 = vector.broadcast %454 : f32 to vector<8x128xf32>
    %456 = arith.mulf %67, %455 : vector<8x128xf32>
    %457 = arith.addf %453, %456 : vector<8x128xf32>
    %c104 = arith.constant 104 : index
    %458 = memref.load %arg1[%c104] : memref<749xf32, #tpu.memory_space<smem>>
    %459 = vector.broadcast %458 : f32 to vector<8x128xf32>
    %460 = arith.mulf %79, %459 : vector<8x128xf32>
    %461 = arith.addf %457, %460 : vector<8x128xf32>
    %c105 = arith.constant 105 : index
    %462 = memref.load %arg1[%c105] : memref<749xf32, #tpu.memory_space<smem>>
    %463 = vector.broadcast %462 : f32 to vector<8x128xf32>
    %464 = arith.mulf %91, %463 : vector<8x128xf32>
    %465 = arith.addf %461, %464 : vector<8x128xf32>
    %c106 = arith.constant 106 : index
    %466 = memref.load %arg1[%c106] : memref<749xf32, #tpu.memory_space<smem>>
    %467 = vector.broadcast %466 : f32 to vector<8x128xf32>
    %468 = arith.mulf %103, %467 : vector<8x128xf32>
    %469 = arith.addf %465, %468 : vector<8x128xf32>
    %c107 = arith.constant 107 : index
    %470 = memref.load %arg1[%c107] : memref<749xf32, #tpu.memory_space<smem>>
    %471 = vector.broadcast %470 : f32 to vector<8x128xf32>
    %472 = arith.mulf %115, %471 : vector<8x128xf32>
    %473 = arith.addf %469, %472 : vector<8x128xf32>
    %cst_25 = arith.constant 0.000000e+00 : f32
    %474 = vector.broadcast %cst_25 : f32 to vector<8x128xf32>
    %475 = arith.maximumf %473, %474 : vector<8x128xf32>
    %c108 = arith.constant 108 : index
    %476 = memref.load %arg1[%c108] : memref<749xf32, #tpu.memory_space<smem>>
    %477 = vector.broadcast %476 : f32 to vector<8x128xf32>
    %478 = arith.mulf %19, %477 : vector<8x128xf32>
    %c198 = arith.constant 198 : index
    %479 = memref.load %arg1[%c198] : memref<749xf32, #tpu.memory_space<smem>>
    %480 = vector.broadcast %479 : f32 to vector<8x128xf32>
    %481 = arith.addf %478, %480 : vector<8x128xf32>
    %c109 = arith.constant 109 : index
    %482 = memref.load %arg1[%c109] : memref<749xf32, #tpu.memory_space<smem>>
    %483 = vector.broadcast %482 : f32 to vector<8x128xf32>
    %484 = arith.mulf %31, %483 : vector<8x128xf32>
    %485 = arith.addf %481, %484 : vector<8x128xf32>
    %c110 = arith.constant 110 : index
    %486 = memref.load %arg1[%c110] : memref<749xf32, #tpu.memory_space<smem>>
    %487 = vector.broadcast %486 : f32 to vector<8x128xf32>
    %488 = arith.mulf %43, %487 : vector<8x128xf32>
    %489 = arith.addf %485, %488 : vector<8x128xf32>
    %c111 = arith.constant 111 : index
    %490 = memref.load %arg1[%c111] : memref<749xf32, #tpu.memory_space<smem>>
    %491 = vector.broadcast %490 : f32 to vector<8x128xf32>
    %492 = arith.mulf %55, %491 : vector<8x128xf32>
    %493 = arith.addf %489, %492 : vector<8x128xf32>
    %c112 = arith.constant 112 : index
    %494 = memref.load %arg1[%c112] : memref<749xf32, #tpu.memory_space<smem>>
    %495 = vector.broadcast %494 : f32 to vector<8x128xf32>
    %496 = arith.mulf %67, %495 : vector<8x128xf32>
    %497 = arith.addf %493, %496 : vector<8x128xf32>
    %c113 = arith.constant 113 : index
    %498 = memref.load %arg1[%c113] : memref<749xf32, #tpu.memory_space<smem>>
    %499 = vector.broadcast %498 : f32 to vector<8x128xf32>
    %500 = arith.mulf %79, %499 : vector<8x128xf32>
    %501 = arith.addf %497, %500 : vector<8x128xf32>
    %c114 = arith.constant 114 : index
    %502 = memref.load %arg1[%c114] : memref<749xf32, #tpu.memory_space<smem>>
    %503 = vector.broadcast %502 : f32 to vector<8x128xf32>
    %504 = arith.mulf %91, %503 : vector<8x128xf32>
    %505 = arith.addf %501, %504 : vector<8x128xf32>
    %c115 = arith.constant 115 : index
    %506 = memref.load %arg1[%c115] : memref<749xf32, #tpu.memory_space<smem>>
    %507 = vector.broadcast %506 : f32 to vector<8x128xf32>
    %508 = arith.mulf %103, %507 : vector<8x128xf32>
    %509 = arith.addf %505, %508 : vector<8x128xf32>
    %c116 = arith.constant 116 : index
    %510 = memref.load %arg1[%c116] : memref<749xf32, #tpu.memory_space<smem>>
    %511 = vector.broadcast %510 : f32 to vector<8x128xf32>
    %512 = arith.mulf %115, %511 : vector<8x128xf32>
    %513 = arith.addf %509, %512 : vector<8x128xf32>
    %cst_26 = arith.constant 0.000000e+00 : f32
    %514 = vector.broadcast %cst_26 : f32 to vector<8x128xf32>
    %515 = arith.maximumf %513, %514 : vector<8x128xf32>
    %c117 = arith.constant 117 : index
    %516 = memref.load %arg1[%c117] : memref<749xf32, #tpu.memory_space<smem>>
    %517 = vector.broadcast %516 : f32 to vector<8x128xf32>
    %518 = arith.mulf %19, %517 : vector<8x128xf32>
    %c199 = arith.constant 199 : index
    %519 = memref.load %arg1[%c199] : memref<749xf32, #tpu.memory_space<smem>>
    %520 = vector.broadcast %519 : f32 to vector<8x128xf32>
    %521 = arith.addf %518, %520 : vector<8x128xf32>
    %c118 = arith.constant 118 : index
    %522 = memref.load %arg1[%c118] : memref<749xf32, #tpu.memory_space<smem>>
    %523 = vector.broadcast %522 : f32 to vector<8x128xf32>
    %524 = arith.mulf %31, %523 : vector<8x128xf32>
    %525 = arith.addf %521, %524 : vector<8x128xf32>
    %c119 = arith.constant 119 : index
    %526 = memref.load %arg1[%c119] : memref<749xf32, #tpu.memory_space<smem>>
    %527 = vector.broadcast %526 : f32 to vector<8x128xf32>
    %528 = arith.mulf %43, %527 : vector<8x128xf32>
    %529 = arith.addf %525, %528 : vector<8x128xf32>
    %c120 = arith.constant 120 : index
    %530 = memref.load %arg1[%c120] : memref<749xf32, #tpu.memory_space<smem>>
    %531 = vector.broadcast %530 : f32 to vector<8x128xf32>
    %532 = arith.mulf %55, %531 : vector<8x128xf32>
    %533 = arith.addf %529, %532 : vector<8x128xf32>
    %c121 = arith.constant 121 : index
    %534 = memref.load %arg1[%c121] : memref<749xf32, #tpu.memory_space<smem>>
    %535 = vector.broadcast %534 : f32 to vector<8x128xf32>
    %536 = arith.mulf %67, %535 : vector<8x128xf32>
    %537 = arith.addf %533, %536 : vector<8x128xf32>
    %c122 = arith.constant 122 : index
    %538 = memref.load %arg1[%c122] : memref<749xf32, #tpu.memory_space<smem>>
    %539 = vector.broadcast %538 : f32 to vector<8x128xf32>
    %540 = arith.mulf %79, %539 : vector<8x128xf32>
    %541 = arith.addf %537, %540 : vector<8x128xf32>
    %c123 = arith.constant 123 : index
    %542 = memref.load %arg1[%c123] : memref<749xf32, #tpu.memory_space<smem>>
    %543 = vector.broadcast %542 : f32 to vector<8x128xf32>
    %544 = arith.mulf %91, %543 : vector<8x128xf32>
    %545 = arith.addf %541, %544 : vector<8x128xf32>
    %c124 = arith.constant 124 : index
    %546 = memref.load %arg1[%c124] : memref<749xf32, #tpu.memory_space<smem>>
    %547 = vector.broadcast %546 : f32 to vector<8x128xf32>
    %548 = arith.mulf %103, %547 : vector<8x128xf32>
    %549 = arith.addf %545, %548 : vector<8x128xf32>
    %c125 = arith.constant 125 : index
    %550 = memref.load %arg1[%c125] : memref<749xf32, #tpu.memory_space<smem>>
    %551 = vector.broadcast %550 : f32 to vector<8x128xf32>
    %552 = arith.mulf %115, %551 : vector<8x128xf32>
    %553 = arith.addf %549, %552 : vector<8x128xf32>
    %cst_27 = arith.constant 0.000000e+00 : f32
    %554 = vector.broadcast %cst_27 : f32 to vector<8x128xf32>
    %555 = arith.maximumf %553, %554 : vector<8x128xf32>
    %c126 = arith.constant 126 : index
    %556 = memref.load %arg1[%c126] : memref<749xf32, #tpu.memory_space<smem>>
    %557 = vector.broadcast %556 : f32 to vector<8x128xf32>
    %558 = arith.mulf %19, %557 : vector<8x128xf32>
    %c200 = arith.constant 200 : index
    %559 = memref.load %arg1[%c200] : memref<749xf32, #tpu.memory_space<smem>>
    %560 = vector.broadcast %559 : f32 to vector<8x128xf32>
    %561 = arith.addf %558, %560 : vector<8x128xf32>
    %c127 = arith.constant 127 : index
    %562 = memref.load %arg1[%c127] : memref<749xf32, #tpu.memory_space<smem>>
    %563 = vector.broadcast %562 : f32 to vector<8x128xf32>
    %564 = arith.mulf %31, %563 : vector<8x128xf32>
    %565 = arith.addf %561, %564 : vector<8x128xf32>
    %c128 = arith.constant 128 : index
    %566 = memref.load %arg1[%c128] : memref<749xf32, #tpu.memory_space<smem>>
    %567 = vector.broadcast %566 : f32 to vector<8x128xf32>
    %568 = arith.mulf %43, %567 : vector<8x128xf32>
    %569 = arith.addf %565, %568 : vector<8x128xf32>
    %c129 = arith.constant 129 : index
    %570 = memref.load %arg1[%c129] : memref<749xf32, #tpu.memory_space<smem>>
    %571 = vector.broadcast %570 : f32 to vector<8x128xf32>
    %572 = arith.mulf %55, %571 : vector<8x128xf32>
    %573 = arith.addf %569, %572 : vector<8x128xf32>
    %c130 = arith.constant 130 : index
    %574 = memref.load %arg1[%c130] : memref<749xf32, #tpu.memory_space<smem>>
    %575 = vector.broadcast %574 : f32 to vector<8x128xf32>
    %576 = arith.mulf %67, %575 : vector<8x128xf32>
    %577 = arith.addf %573, %576 : vector<8x128xf32>
    %c131 = arith.constant 131 : index
    %578 = memref.load %arg1[%c131] : memref<749xf32, #tpu.memory_space<smem>>
    %579 = vector.broadcast %578 : f32 to vector<8x128xf32>
    %580 = arith.mulf %79, %579 : vector<8x128xf32>
    %581 = arith.addf %577, %580 : vector<8x128xf32>
    %c132 = arith.constant 132 : index
    %582 = memref.load %arg1[%c132] : memref<749xf32, #tpu.memory_space<smem>>
    %583 = vector.broadcast %582 : f32 to vector<8x128xf32>
    %584 = arith.mulf %91, %583 : vector<8x128xf32>
    %585 = arith.addf %581, %584 : vector<8x128xf32>
    %c133 = arith.constant 133 : index
    %586 = memref.load %arg1[%c133] : memref<749xf32, #tpu.memory_space<smem>>
    %587 = vector.broadcast %586 : f32 to vector<8x128xf32>
    %588 = arith.mulf %103, %587 : vector<8x128xf32>
    %589 = arith.addf %585, %588 : vector<8x128xf32>
    %c134 = arith.constant 134 : index
    %590 = memref.load %arg1[%c134] : memref<749xf32, #tpu.memory_space<smem>>
    %591 = vector.broadcast %590 : f32 to vector<8x128xf32>
    %592 = arith.mulf %115, %591 : vector<8x128xf32>
    %593 = arith.addf %589, %592 : vector<8x128xf32>
    %cst_28 = arith.constant 0.000000e+00 : f32
    %594 = vector.broadcast %cst_28 : f32 to vector<8x128xf32>
    %595 = arith.maximumf %593, %594 : vector<8x128xf32>
    %c135 = arith.constant 135 : index
    %596 = memref.load %arg1[%c135] : memref<749xf32, #tpu.memory_space<smem>>
    %597 = vector.broadcast %596 : f32 to vector<8x128xf32>
    %598 = arith.mulf %19, %597 : vector<8x128xf32>
    %c201 = arith.constant 201 : index
    %599 = memref.load %arg1[%c201] : memref<749xf32, #tpu.memory_space<smem>>
    %600 = vector.broadcast %599 : f32 to vector<8x128xf32>
    %601 = arith.addf %598, %600 : vector<8x128xf32>
    %c136 = arith.constant 136 : index
    %602 = memref.load %arg1[%c136] : memref<749xf32, #tpu.memory_space<smem>>
    %603 = vector.broadcast %602 : f32 to vector<8x128xf32>
    %604 = arith.mulf %31, %603 : vector<8x128xf32>
    %605 = arith.addf %601, %604 : vector<8x128xf32>
    %c137 = arith.constant 137 : index
    %606 = memref.load %arg1[%c137] : memref<749xf32, #tpu.memory_space<smem>>
    %607 = vector.broadcast %606 : f32 to vector<8x128xf32>
    %608 = arith.mulf %43, %607 : vector<8x128xf32>
    %609 = arith.addf %605, %608 : vector<8x128xf32>
    %c138 = arith.constant 138 : index
    %610 = memref.load %arg1[%c138] : memref<749xf32, #tpu.memory_space<smem>>
    %611 = vector.broadcast %610 : f32 to vector<8x128xf32>
    %612 = arith.mulf %55, %611 : vector<8x128xf32>
    %613 = arith.addf %609, %612 : vector<8x128xf32>
    %c139 = arith.constant 139 : index
    %614 = memref.load %arg1[%c139] : memref<749xf32, #tpu.memory_space<smem>>
    %615 = vector.broadcast %614 : f32 to vector<8x128xf32>
    %616 = arith.mulf %67, %615 : vector<8x128xf32>
    %617 = arith.addf %613, %616 : vector<8x128xf32>
    %c140 = arith.constant 140 : index
    %618 = memref.load %arg1[%c140] : memref<749xf32, #tpu.memory_space<smem>>
    %619 = vector.broadcast %618 : f32 to vector<8x128xf32>
    %620 = arith.mulf %79, %619 : vector<8x128xf32>
    %621 = arith.addf %617, %620 : vector<8x128xf32>
    %c141 = arith.constant 141 : index
    %622 = memref.load %arg1[%c141] : memref<749xf32, #tpu.memory_space<smem>>
    %623 = vector.broadcast %622 : f32 to vector<8x128xf32>
    %624 = arith.mulf %91, %623 : vector<8x128xf32>
    %625 = arith.addf %621, %624 : vector<8x128xf32>
    %c142 = arith.constant 142 : index
    %626 = memref.load %arg1[%c142] : memref<749xf32, #tpu.memory_space<smem>>
    %627 = vector.broadcast %626 : f32 to vector<8x128xf32>
    %628 = arith.mulf %103, %627 : vector<8x128xf32>
    %629 = arith.addf %625, %628 : vector<8x128xf32>
    %c143 = arith.constant 143 : index
    %630 = memref.load %arg1[%c143] : memref<749xf32, #tpu.memory_space<smem>>
    %631 = vector.broadcast %630 : f32 to vector<8x128xf32>
    %632 = arith.mulf %115, %631 : vector<8x128xf32>
    %633 = arith.addf %629, %632 : vector<8x128xf32>
    %cst_29 = arith.constant 0.000000e+00 : f32
    %634 = vector.broadcast %cst_29 : f32 to vector<8x128xf32>
    %635 = arith.maximumf %633, %634 : vector<8x128xf32>
    %c144 = arith.constant 144 : index
    %636 = memref.load %arg1[%c144] : memref<749xf32, #tpu.memory_space<smem>>
    %637 = vector.broadcast %636 : f32 to vector<8x128xf32>
    %638 = arith.mulf %19, %637 : vector<8x128xf32>
    %c202 = arith.constant 202 : index
    %639 = memref.load %arg1[%c202] : memref<749xf32, #tpu.memory_space<smem>>
    %640 = vector.broadcast %639 : f32 to vector<8x128xf32>
    %641 = arith.addf %638, %640 : vector<8x128xf32>
    %c145 = arith.constant 145 : index
    %642 = memref.load %arg1[%c145] : memref<749xf32, #tpu.memory_space<smem>>
    %643 = vector.broadcast %642 : f32 to vector<8x128xf32>
    %644 = arith.mulf %31, %643 : vector<8x128xf32>
    %645 = arith.addf %641, %644 : vector<8x128xf32>
    %c146 = arith.constant 146 : index
    %646 = memref.load %arg1[%c146] : memref<749xf32, #tpu.memory_space<smem>>
    %647 = vector.broadcast %646 : f32 to vector<8x128xf32>
    %648 = arith.mulf %43, %647 : vector<8x128xf32>
    %649 = arith.addf %645, %648 : vector<8x128xf32>
    %c147 = arith.constant 147 : index
    %650 = memref.load %arg1[%c147] : memref<749xf32, #tpu.memory_space<smem>>
    %651 = vector.broadcast %650 : f32 to vector<8x128xf32>
    %652 = arith.mulf %55, %651 : vector<8x128xf32>
    %653 = arith.addf %649, %652 : vector<8x128xf32>
    %c148 = arith.constant 148 : index
    %654 = memref.load %arg1[%c148] : memref<749xf32, #tpu.memory_space<smem>>
    %655 = vector.broadcast %654 : f32 to vector<8x128xf32>
    %656 = arith.mulf %67, %655 : vector<8x128xf32>
    %657 = arith.addf %653, %656 : vector<8x128xf32>
    %c149 = arith.constant 149 : index
    %658 = memref.load %arg1[%c149] : memref<749xf32, #tpu.memory_space<smem>>
    %659 = vector.broadcast %658 : f32 to vector<8x128xf32>
    %660 = arith.mulf %79, %659 : vector<8x128xf32>
    %661 = arith.addf %657, %660 : vector<8x128xf32>
    %c150 = arith.constant 150 : index
    %662 = memref.load %arg1[%c150] : memref<749xf32, #tpu.memory_space<smem>>
    %663 = vector.broadcast %662 : f32 to vector<8x128xf32>
    %664 = arith.mulf %91, %663 : vector<8x128xf32>
    %665 = arith.addf %661, %664 : vector<8x128xf32>
    %c151 = arith.constant 151 : index
    %666 = memref.load %arg1[%c151] : memref<749xf32, #tpu.memory_space<smem>>
    %667 = vector.broadcast %666 : f32 to vector<8x128xf32>
    %668 = arith.mulf %103, %667 : vector<8x128xf32>
    %669 = arith.addf %665, %668 : vector<8x128xf32>
    %c152 = arith.constant 152 : index
    %670 = memref.load %arg1[%c152] : memref<749xf32, #tpu.memory_space<smem>>
    %671 = vector.broadcast %670 : f32 to vector<8x128xf32>
    %672 = arith.mulf %115, %671 : vector<8x128xf32>
    %673 = arith.addf %669, %672 : vector<8x128xf32>
    %cst_30 = arith.constant 0.000000e+00 : f32
    %674 = vector.broadcast %cst_30 : f32 to vector<8x128xf32>
    %675 = arith.maximumf %673, %674 : vector<8x128xf32>
    %c153 = arith.constant 153 : index
    %676 = memref.load %arg1[%c153] : memref<749xf32, #tpu.memory_space<smem>>
    %677 = vector.broadcast %676 : f32 to vector<8x128xf32>
    %678 = arith.mulf %19, %677 : vector<8x128xf32>
    %c203 = arith.constant 203 : index
    %679 = memref.load %arg1[%c203] : memref<749xf32, #tpu.memory_space<smem>>
    %680 = vector.broadcast %679 : f32 to vector<8x128xf32>
    %681 = arith.addf %678, %680 : vector<8x128xf32>
    %c154 = arith.constant 154 : index
    %682 = memref.load %arg1[%c154] : memref<749xf32, #tpu.memory_space<smem>>
    %683 = vector.broadcast %682 : f32 to vector<8x128xf32>
    %684 = arith.mulf %31, %683 : vector<8x128xf32>
    %685 = arith.addf %681, %684 : vector<8x128xf32>
    %c155 = arith.constant 155 : index
    %686 = memref.load %arg1[%c155] : memref<749xf32, #tpu.memory_space<smem>>
    %687 = vector.broadcast %686 : f32 to vector<8x128xf32>
    %688 = arith.mulf %43, %687 : vector<8x128xf32>
    %689 = arith.addf %685, %688 : vector<8x128xf32>
    %c156 = arith.constant 156 : index
    %690 = memref.load %arg1[%c156] : memref<749xf32, #tpu.memory_space<smem>>
    %691 = vector.broadcast %690 : f32 to vector<8x128xf32>
    %692 = arith.mulf %55, %691 : vector<8x128xf32>
    %693 = arith.addf %689, %692 : vector<8x128xf32>
    %c157 = arith.constant 157 : index
    %694 = memref.load %arg1[%c157] : memref<749xf32, #tpu.memory_space<smem>>
    %695 = vector.broadcast %694 : f32 to vector<8x128xf32>
    %696 = arith.mulf %67, %695 : vector<8x128xf32>
    %697 = arith.addf %693, %696 : vector<8x128xf32>
    %c158 = arith.constant 158 : index
    %698 = memref.load %arg1[%c158] : memref<749xf32, #tpu.memory_space<smem>>
    %699 = vector.broadcast %698 : f32 to vector<8x128xf32>
    %700 = arith.mulf %79, %699 : vector<8x128xf32>
    %701 = arith.addf %697, %700 : vector<8x128xf32>
    %c159 = arith.constant 159 : index
    %702 = memref.load %arg1[%c159] : memref<749xf32, #tpu.memory_space<smem>>
    %703 = vector.broadcast %702 : f32 to vector<8x128xf32>
    %704 = arith.mulf %91, %703 : vector<8x128xf32>
    %705 = arith.addf %701, %704 : vector<8x128xf32>
    %c160 = arith.constant 160 : index
    %706 = memref.load %arg1[%c160] : memref<749xf32, #tpu.memory_space<smem>>
    %707 = vector.broadcast %706 : f32 to vector<8x128xf32>
    %708 = arith.mulf %103, %707 : vector<8x128xf32>
    %709 = arith.addf %705, %708 : vector<8x128xf32>
    %c161 = arith.constant 161 : index
    %710 = memref.load %arg1[%c161] : memref<749xf32, #tpu.memory_space<smem>>
    %711 = vector.broadcast %710 : f32 to vector<8x128xf32>
    %712 = arith.mulf %115, %711 : vector<8x128xf32>
    %713 = arith.addf %709, %712 : vector<8x128xf32>
    %cst_31 = arith.constant 0.000000e+00 : f32
    %714 = vector.broadcast %cst_31 : f32 to vector<8x128xf32>
    %715 = arith.maximumf %713, %714 : vector<8x128xf32>
    %c162 = arith.constant 162 : index
    %716 = memref.load %arg1[%c162] : memref<749xf32, #tpu.memory_space<smem>>
    %717 = vector.broadcast %716 : f32 to vector<8x128xf32>
    %718 = arith.mulf %19, %717 : vector<8x128xf32>
    %c204 = arith.constant 204 : index
    %719 = memref.load %arg1[%c204] : memref<749xf32, #tpu.memory_space<smem>>
    %720 = vector.broadcast %719 : f32 to vector<8x128xf32>
    %721 = arith.addf %718, %720 : vector<8x128xf32>
    %c163 = arith.constant 163 : index
    %722 = memref.load %arg1[%c163] : memref<749xf32, #tpu.memory_space<smem>>
    %723 = vector.broadcast %722 : f32 to vector<8x128xf32>
    %724 = arith.mulf %31, %723 : vector<8x128xf32>
    %725 = arith.addf %721, %724 : vector<8x128xf32>
    %c164 = arith.constant 164 : index
    %726 = memref.load %arg1[%c164] : memref<749xf32, #tpu.memory_space<smem>>
    %727 = vector.broadcast %726 : f32 to vector<8x128xf32>
    %728 = arith.mulf %43, %727 : vector<8x128xf32>
    %729 = arith.addf %725, %728 : vector<8x128xf32>
    %c165 = arith.constant 165 : index
    %730 = memref.load %arg1[%c165] : memref<749xf32, #tpu.memory_space<smem>>
    %731 = vector.broadcast %730 : f32 to vector<8x128xf32>
    %732 = arith.mulf %55, %731 : vector<8x128xf32>
    %733 = arith.addf %729, %732 : vector<8x128xf32>
    %c166 = arith.constant 166 : index
    %734 = memref.load %arg1[%c166] : memref<749xf32, #tpu.memory_space<smem>>
    %735 = vector.broadcast %734 : f32 to vector<8x128xf32>
    %736 = arith.mulf %67, %735 : vector<8x128xf32>
    %737 = arith.addf %733, %736 : vector<8x128xf32>
    %c167 = arith.constant 167 : index
    %738 = memref.load %arg1[%c167] : memref<749xf32, #tpu.memory_space<smem>>
    %739 = vector.broadcast %738 : f32 to vector<8x128xf32>
    %740 = arith.mulf %79, %739 : vector<8x128xf32>
    %741 = arith.addf %737, %740 : vector<8x128xf32>
    %c168 = arith.constant 168 : index
    %742 = memref.load %arg1[%c168] : memref<749xf32, #tpu.memory_space<smem>>
    %743 = vector.broadcast %742 : f32 to vector<8x128xf32>
    %744 = arith.mulf %91, %743 : vector<8x128xf32>
    %745 = arith.addf %741, %744 : vector<8x128xf32>
    %c169 = arith.constant 169 : index
    %746 = memref.load %arg1[%c169] : memref<749xf32, #tpu.memory_space<smem>>
    %747 = vector.broadcast %746 : f32 to vector<8x128xf32>
    %748 = arith.mulf %103, %747 : vector<8x128xf32>
    %749 = arith.addf %745, %748 : vector<8x128xf32>
    %c170 = arith.constant 170 : index
    %750 = memref.load %arg1[%c170] : memref<749xf32, #tpu.memory_space<smem>>
    %751 = vector.broadcast %750 : f32 to vector<8x128xf32>
    %752 = arith.mulf %115, %751 : vector<8x128xf32>
    %753 = arith.addf %749, %752 : vector<8x128xf32>
    %cst_32 = arith.constant 0.000000e+00 : f32
    %754 = vector.broadcast %cst_32 : f32 to vector<8x128xf32>
    %755 = arith.maximumf %753, %754 : vector<8x128xf32>
    %c171 = arith.constant 171 : index
    %756 = memref.load %arg1[%c171] : memref<749xf32, #tpu.memory_space<smem>>
    %757 = vector.broadcast %756 : f32 to vector<8x128xf32>
    %758 = arith.mulf %19, %757 : vector<8x128xf32>
    %c205 = arith.constant 205 : index
    %759 = memref.load %arg1[%c205] : memref<749xf32, #tpu.memory_space<smem>>
    %760 = vector.broadcast %759 : f32 to vector<8x128xf32>
    %761 = arith.addf %758, %760 : vector<8x128xf32>
    %c172 = arith.constant 172 : index
    %762 = memref.load %arg1[%c172] : memref<749xf32, #tpu.memory_space<smem>>
    %763 = vector.broadcast %762 : f32 to vector<8x128xf32>
    %764 = arith.mulf %31, %763 : vector<8x128xf32>
    %765 = arith.addf %761, %764 : vector<8x128xf32>
    %c173 = arith.constant 173 : index
    %766 = memref.load %arg1[%c173] : memref<749xf32, #tpu.memory_space<smem>>
    %767 = vector.broadcast %766 : f32 to vector<8x128xf32>
    %768 = arith.mulf %43, %767 : vector<8x128xf32>
    %769 = arith.addf %765, %768 : vector<8x128xf32>
    %c174 = arith.constant 174 : index
    %770 = memref.load %arg1[%c174] : memref<749xf32, #tpu.memory_space<smem>>
    %771 = vector.broadcast %770 : f32 to vector<8x128xf32>
    %772 = arith.mulf %55, %771 : vector<8x128xf32>
    %773 = arith.addf %769, %772 : vector<8x128xf32>
    %c175 = arith.constant 175 : index
    %774 = memref.load %arg1[%c175] : memref<749xf32, #tpu.memory_space<smem>>
    %775 = vector.broadcast %774 : f32 to vector<8x128xf32>
    %776 = arith.mulf %67, %775 : vector<8x128xf32>
    %777 = arith.addf %773, %776 : vector<8x128xf32>
    %c176 = arith.constant 176 : index
    %778 = memref.load %arg1[%c176] : memref<749xf32, #tpu.memory_space<smem>>
    %779 = vector.broadcast %778 : f32 to vector<8x128xf32>
    %780 = arith.mulf %79, %779 : vector<8x128xf32>
    %781 = arith.addf %777, %780 : vector<8x128xf32>
    %c177 = arith.constant 177 : index
    %782 = memref.load %arg1[%c177] : memref<749xf32, #tpu.memory_space<smem>>
    %783 = vector.broadcast %782 : f32 to vector<8x128xf32>
    %784 = arith.mulf %91, %783 : vector<8x128xf32>
    %785 = arith.addf %781, %784 : vector<8x128xf32>
    %c178 = arith.constant 178 : index
    %786 = memref.load %arg1[%c178] : memref<749xf32, #tpu.memory_space<smem>>
    %787 = vector.broadcast %786 : f32 to vector<8x128xf32>
    %788 = arith.mulf %103, %787 : vector<8x128xf32>
    %789 = arith.addf %785, %788 : vector<8x128xf32>
    %c179 = arith.constant 179 : index
    %790 = memref.load %arg1[%c179] : memref<749xf32, #tpu.memory_space<smem>>
    %791 = vector.broadcast %790 : f32 to vector<8x128xf32>
    %792 = arith.mulf %115, %791 : vector<8x128xf32>
    %793 = arith.addf %789, %792 : vector<8x128xf32>
    %cst_33 = arith.constant 0.000000e+00 : f32
    %794 = vector.broadcast %cst_33 : f32 to vector<8x128xf32>
    %795 = arith.maximumf %793, %794 : vector<8x128xf32>
    %c180 = arith.constant 180 : index
    %796 = memref.load %arg1[%c180] : memref<749xf32, #tpu.memory_space<smem>>
    %797 = vector.broadcast %796 : f32 to vector<8x128xf32>
    %798 = arith.mulf %19, %797 : vector<8x128xf32>
    %c206 = arith.constant 206 : index
    %799 = memref.load %arg1[%c206] : memref<749xf32, #tpu.memory_space<smem>>
    %800 = vector.broadcast %799 : f32 to vector<8x128xf32>
    %801 = arith.addf %798, %800 : vector<8x128xf32>
    %c181 = arith.constant 181 : index
    %802 = memref.load %arg1[%c181] : memref<749xf32, #tpu.memory_space<smem>>
    %803 = vector.broadcast %802 : f32 to vector<8x128xf32>
    %804 = arith.mulf %31, %803 : vector<8x128xf32>
    %805 = arith.addf %801, %804 : vector<8x128xf32>
    %c182 = arith.constant 182 : index
    %806 = memref.load %arg1[%c182] : memref<749xf32, #tpu.memory_space<smem>>
    %807 = vector.broadcast %806 : f32 to vector<8x128xf32>
    %808 = arith.mulf %43, %807 : vector<8x128xf32>
    %809 = arith.addf %805, %808 : vector<8x128xf32>
    %c183 = arith.constant 183 : index
    %810 = memref.load %arg1[%c183] : memref<749xf32, #tpu.memory_space<smem>>
    %811 = vector.broadcast %810 : f32 to vector<8x128xf32>
    %812 = arith.mulf %55, %811 : vector<8x128xf32>
    %813 = arith.addf %809, %812 : vector<8x128xf32>
    %c184 = arith.constant 184 : index
    %814 = memref.load %arg1[%c184] : memref<749xf32, #tpu.memory_space<smem>>
    %815 = vector.broadcast %814 : f32 to vector<8x128xf32>
    %816 = arith.mulf %67, %815 : vector<8x128xf32>
    %817 = arith.addf %813, %816 : vector<8x128xf32>
    %c185 = arith.constant 185 : index
    %818 = memref.load %arg1[%c185] : memref<749xf32, #tpu.memory_space<smem>>
    %819 = vector.broadcast %818 : f32 to vector<8x128xf32>
    %820 = arith.mulf %79, %819 : vector<8x128xf32>
    %821 = arith.addf %817, %820 : vector<8x128xf32>
    %c186 = arith.constant 186 : index
    %822 = memref.load %arg1[%c186] : memref<749xf32, #tpu.memory_space<smem>>
    %823 = vector.broadcast %822 : f32 to vector<8x128xf32>
    %824 = arith.mulf %91, %823 : vector<8x128xf32>
    %825 = arith.addf %821, %824 : vector<8x128xf32>
    %c187 = arith.constant 187 : index
    %826 = memref.load %arg1[%c187] : memref<749xf32, #tpu.memory_space<smem>>
    %827 = vector.broadcast %826 : f32 to vector<8x128xf32>
    %828 = arith.mulf %103, %827 : vector<8x128xf32>
    %829 = arith.addf %825, %828 : vector<8x128xf32>
    %c188 = arith.constant 188 : index
    %830 = memref.load %arg1[%c188] : memref<749xf32, #tpu.memory_space<smem>>
    %831 = vector.broadcast %830 : f32 to vector<8x128xf32>
    %832 = arith.mulf %115, %831 : vector<8x128xf32>
    %833 = arith.addf %829, %832 : vector<8x128xf32>
    %cst_34 = arith.constant 0.000000e+00 : f32
    %834 = vector.broadcast %cst_34 : f32 to vector<8x128xf32>
    %835 = arith.maximumf %833, %834 : vector<8x128xf32>
    %c207 = arith.constant 207 : index
    %836 = memref.load %arg1[%c207] : memref<749xf32, #tpu.memory_space<smem>>
    %837 = vector.broadcast %836 : f32 to vector<8x128xf32>
    %838 = arith.mulf %155, %837 : vector<8x128xf32>
    %c369 = arith.constant 369 : index
    %839 = memref.load %arg1[%c369] : memref<749xf32, #tpu.memory_space<smem>>
    %840 = vector.broadcast %839 : f32 to vector<8x128xf32>
    %841 = arith.addf %838, %840 : vector<8x128xf32>
    %c208 = arith.constant 208 : index
    %842 = memref.load %arg1[%c208] : memref<749xf32, #tpu.memory_space<smem>>
    %843 = vector.broadcast %842 : f32 to vector<8x128xf32>
    %844 = arith.mulf %195, %843 : vector<8x128xf32>
    %845 = arith.addf %841, %844 : vector<8x128xf32>
    %c209 = arith.constant 209 : index
    %846 = memref.load %arg1[%c209] : memref<749xf32, #tpu.memory_space<smem>>
    %847 = vector.broadcast %846 : f32 to vector<8x128xf32>
    %848 = arith.mulf %235, %847 : vector<8x128xf32>
    %849 = arith.addf %845, %848 : vector<8x128xf32>
    %c210 = arith.constant 210 : index
    %850 = memref.load %arg1[%c210] : memref<749xf32, #tpu.memory_space<smem>>
    %851 = vector.broadcast %850 : f32 to vector<8x128xf32>
    %852 = arith.mulf %275, %851 : vector<8x128xf32>
    %853 = arith.addf %849, %852 : vector<8x128xf32>
    %c211 = arith.constant 211 : index
    %854 = memref.load %arg1[%c211] : memref<749xf32, #tpu.memory_space<smem>>
    %855 = vector.broadcast %854 : f32 to vector<8x128xf32>
    %856 = arith.mulf %315, %855 : vector<8x128xf32>
    %857 = arith.addf %853, %856 : vector<8x128xf32>
    %c212 = arith.constant 212 : index
    %858 = memref.load %arg1[%c212] : memref<749xf32, #tpu.memory_space<smem>>
    %859 = vector.broadcast %858 : f32 to vector<8x128xf32>
    %860 = arith.mulf %355, %859 : vector<8x128xf32>
    %861 = arith.addf %857, %860 : vector<8x128xf32>
    %c213 = arith.constant 213 : index
    %862 = memref.load %arg1[%c213] : memref<749xf32, #tpu.memory_space<smem>>
    %863 = vector.broadcast %862 : f32 to vector<8x128xf32>
    %864 = arith.mulf %395, %863 : vector<8x128xf32>
    %865 = arith.addf %861, %864 : vector<8x128xf32>
    %c214 = arith.constant 214 : index
    %866 = memref.load %arg1[%c214] : memref<749xf32, #tpu.memory_space<smem>>
    %867 = vector.broadcast %866 : f32 to vector<8x128xf32>
    %868 = arith.mulf %435, %867 : vector<8x128xf32>
    %869 = arith.addf %865, %868 : vector<8x128xf32>
    %c215 = arith.constant 215 : index
    %870 = memref.load %arg1[%c215] : memref<749xf32, #tpu.memory_space<smem>>
    %871 = vector.broadcast %870 : f32 to vector<8x128xf32>
    %872 = arith.mulf %475, %871 : vector<8x128xf32>
    %873 = arith.addf %869, %872 : vector<8x128xf32>
    %c216 = arith.constant 216 : index
    %874 = memref.load %arg1[%c216] : memref<749xf32, #tpu.memory_space<smem>>
    %875 = vector.broadcast %874 : f32 to vector<8x128xf32>
    %876 = arith.mulf %515, %875 : vector<8x128xf32>
    %877 = arith.addf %873, %876 : vector<8x128xf32>
    %c217 = arith.constant 217 : index
    %878 = memref.load %arg1[%c217] : memref<749xf32, #tpu.memory_space<smem>>
    %879 = vector.broadcast %878 : f32 to vector<8x128xf32>
    %880 = arith.mulf %555, %879 : vector<8x128xf32>
    %881 = arith.addf %877, %880 : vector<8x128xf32>
    %c218 = arith.constant 218 : index
    %882 = memref.load %arg1[%c218] : memref<749xf32, #tpu.memory_space<smem>>
    %883 = vector.broadcast %882 : f32 to vector<8x128xf32>
    %884 = arith.mulf %595, %883 : vector<8x128xf32>
    %885 = arith.addf %881, %884 : vector<8x128xf32>
    %c219 = arith.constant 219 : index
    %886 = memref.load %arg1[%c219] : memref<749xf32, #tpu.memory_space<smem>>
    %887 = vector.broadcast %886 : f32 to vector<8x128xf32>
    %888 = arith.mulf %635, %887 : vector<8x128xf32>
    %889 = arith.addf %885, %888 : vector<8x128xf32>
    %c220 = arith.constant 220 : index
    %890 = memref.load %arg1[%c220] : memref<749xf32, #tpu.memory_space<smem>>
    %891 = vector.broadcast %890 : f32 to vector<8x128xf32>
    %892 = arith.mulf %675, %891 : vector<8x128xf32>
    %893 = arith.addf %889, %892 : vector<8x128xf32>
    %c221 = arith.constant 221 : index
    %894 = memref.load %arg1[%c221] : memref<749xf32, #tpu.memory_space<smem>>
    %895 = vector.broadcast %894 : f32 to vector<8x128xf32>
    %896 = arith.mulf %715, %895 : vector<8x128xf32>
    %897 = arith.addf %893, %896 : vector<8x128xf32>
    %c222 = arith.constant 222 : index
    %898 = memref.load %arg1[%c222] : memref<749xf32, #tpu.memory_space<smem>>
    %899 = vector.broadcast %898 : f32 to vector<8x128xf32>
    %900 = arith.mulf %755, %899 : vector<8x128xf32>
    %901 = arith.addf %897, %900 : vector<8x128xf32>
    %c223 = arith.constant 223 : index
    %902 = memref.load %arg1[%c223] : memref<749xf32, #tpu.memory_space<smem>>
    %903 = vector.broadcast %902 : f32 to vector<8x128xf32>
    %904 = arith.mulf %795, %903 : vector<8x128xf32>
    %905 = arith.addf %901, %904 : vector<8x128xf32>
    %c224 = arith.constant 224 : index
    %906 = memref.load %arg1[%c224] : memref<749xf32, #tpu.memory_space<smem>>
    %907 = vector.broadcast %906 : f32 to vector<8x128xf32>
    %908 = arith.mulf %835, %907 : vector<8x128xf32>
    %909 = arith.addf %905, %908 : vector<8x128xf32>
    %c225 = arith.constant 225 : index
    %910 = memref.load %arg1[%c225] : memref<749xf32, #tpu.memory_space<smem>>
    %911 = vector.broadcast %910 : f32 to vector<8x128xf32>
    %912 = arith.mulf %155, %911 : vector<8x128xf32>
    %c370 = arith.constant 370 : index
    %913 = memref.load %arg1[%c370] : memref<749xf32, #tpu.memory_space<smem>>
    %914 = vector.broadcast %913 : f32 to vector<8x128xf32>
    %915 = arith.addf %912, %914 : vector<8x128xf32>
    %c226 = arith.constant 226 : index
    %916 = memref.load %arg1[%c226] : memref<749xf32, #tpu.memory_space<smem>>
    %917 = vector.broadcast %916 : f32 to vector<8x128xf32>
    %918 = arith.mulf %195, %917 : vector<8x128xf32>
    %919 = arith.addf %915, %918 : vector<8x128xf32>
    %c227 = arith.constant 227 : index
    %920 = memref.load %arg1[%c227] : memref<749xf32, #tpu.memory_space<smem>>
    %921 = vector.broadcast %920 : f32 to vector<8x128xf32>
    %922 = arith.mulf %235, %921 : vector<8x128xf32>
    %923 = arith.addf %919, %922 : vector<8x128xf32>
    %c228 = arith.constant 228 : index
    %924 = memref.load %arg1[%c228] : memref<749xf32, #tpu.memory_space<smem>>
    %925 = vector.broadcast %924 : f32 to vector<8x128xf32>
    %926 = arith.mulf %275, %925 : vector<8x128xf32>
    %927 = arith.addf %923, %926 : vector<8x128xf32>
    %c229 = arith.constant 229 : index
    %928 = memref.load %arg1[%c229] : memref<749xf32, #tpu.memory_space<smem>>
    %929 = vector.broadcast %928 : f32 to vector<8x128xf32>
    %930 = arith.mulf %315, %929 : vector<8x128xf32>
    %931 = arith.addf %927, %930 : vector<8x128xf32>
    %c230 = arith.constant 230 : index
    %932 = memref.load %arg1[%c230] : memref<749xf32, #tpu.memory_space<smem>>
    %933 = vector.broadcast %932 : f32 to vector<8x128xf32>
    %934 = arith.mulf %355, %933 : vector<8x128xf32>
    %935 = arith.addf %931, %934 : vector<8x128xf32>
    %c231 = arith.constant 231 : index
    %936 = memref.load %arg1[%c231] : memref<749xf32, #tpu.memory_space<smem>>
    %937 = vector.broadcast %936 : f32 to vector<8x128xf32>
    %938 = arith.mulf %395, %937 : vector<8x128xf32>
    %939 = arith.addf %935, %938 : vector<8x128xf32>
    %c232 = arith.constant 232 : index
    %940 = memref.load %arg1[%c232] : memref<749xf32, #tpu.memory_space<smem>>
    %941 = vector.broadcast %940 : f32 to vector<8x128xf32>
    %942 = arith.mulf %435, %941 : vector<8x128xf32>
    %943 = arith.addf %939, %942 : vector<8x128xf32>
    %c233 = arith.constant 233 : index
    %944 = memref.load %arg1[%c233] : memref<749xf32, #tpu.memory_space<smem>>
    %945 = vector.broadcast %944 : f32 to vector<8x128xf32>
    %946 = arith.mulf %475, %945 : vector<8x128xf32>
    %947 = arith.addf %943, %946 : vector<8x128xf32>
    %c234 = arith.constant 234 : index
    %948 = memref.load %arg1[%c234] : memref<749xf32, #tpu.memory_space<smem>>
    %949 = vector.broadcast %948 : f32 to vector<8x128xf32>
    %950 = arith.mulf %515, %949 : vector<8x128xf32>
    %951 = arith.addf %947, %950 : vector<8x128xf32>
    %c235 = arith.constant 235 : index
    %952 = memref.load %arg1[%c235] : memref<749xf32, #tpu.memory_space<smem>>
    %953 = vector.broadcast %952 : f32 to vector<8x128xf32>
    %954 = arith.mulf %555, %953 : vector<8x128xf32>
    %955 = arith.addf %951, %954 : vector<8x128xf32>
    %c236 = arith.constant 236 : index
    %956 = memref.load %arg1[%c236] : memref<749xf32, #tpu.memory_space<smem>>
    %957 = vector.broadcast %956 : f32 to vector<8x128xf32>
    %958 = arith.mulf %595, %957 : vector<8x128xf32>
    %959 = arith.addf %955, %958 : vector<8x128xf32>
    %c237 = arith.constant 237 : index
    %960 = memref.load %arg1[%c237] : memref<749xf32, #tpu.memory_space<smem>>
    %961 = vector.broadcast %960 : f32 to vector<8x128xf32>
    %962 = arith.mulf %635, %961 : vector<8x128xf32>
    %963 = arith.addf %959, %962 : vector<8x128xf32>
    %c238 = arith.constant 238 : index
    %964 = memref.load %arg1[%c238] : memref<749xf32, #tpu.memory_space<smem>>
    %965 = vector.broadcast %964 : f32 to vector<8x128xf32>
    %966 = arith.mulf %675, %965 : vector<8x128xf32>
    %967 = arith.addf %963, %966 : vector<8x128xf32>
    %c239 = arith.constant 239 : index
    %968 = memref.load %arg1[%c239] : memref<749xf32, #tpu.memory_space<smem>>
    %969 = vector.broadcast %968 : f32 to vector<8x128xf32>
    %970 = arith.mulf %715, %969 : vector<8x128xf32>
    %971 = arith.addf %967, %970 : vector<8x128xf32>
    %c240 = arith.constant 240 : index
    %972 = memref.load %arg1[%c240] : memref<749xf32, #tpu.memory_space<smem>>
    %973 = vector.broadcast %972 : f32 to vector<8x128xf32>
    %974 = arith.mulf %755, %973 : vector<8x128xf32>
    %975 = arith.addf %971, %974 : vector<8x128xf32>
    %c241 = arith.constant 241 : index
    %976 = memref.load %arg1[%c241] : memref<749xf32, #tpu.memory_space<smem>>
    %977 = vector.broadcast %976 : f32 to vector<8x128xf32>
    %978 = arith.mulf %795, %977 : vector<8x128xf32>
    %979 = arith.addf %975, %978 : vector<8x128xf32>
    %c242 = arith.constant 242 : index
    %980 = memref.load %arg1[%c242] : memref<749xf32, #tpu.memory_space<smem>>
    %981 = vector.broadcast %980 : f32 to vector<8x128xf32>
    %982 = arith.mulf %835, %981 : vector<8x128xf32>
    %983 = arith.addf %979, %982 : vector<8x128xf32>
    %c243 = arith.constant 243 : index
    %984 = memref.load %arg1[%c243] : memref<749xf32, #tpu.memory_space<smem>>
    %985 = vector.broadcast %984 : f32 to vector<8x128xf32>
    %986 = arith.mulf %155, %985 : vector<8x128xf32>
    %c371 = arith.constant 371 : index
    %987 = memref.load %arg1[%c371] : memref<749xf32, #tpu.memory_space<smem>>
    %988 = vector.broadcast %987 : f32 to vector<8x128xf32>
    %989 = arith.addf %986, %988 : vector<8x128xf32>
    %c244 = arith.constant 244 : index
    %990 = memref.load %arg1[%c244] : memref<749xf32, #tpu.memory_space<smem>>
    %991 = vector.broadcast %990 : f32 to vector<8x128xf32>
    %992 = arith.mulf %195, %991 : vector<8x128xf32>
    %993 = arith.addf %989, %992 : vector<8x128xf32>
    %c245 = arith.constant 245 : index
    %994 = memref.load %arg1[%c245] : memref<749xf32, #tpu.memory_space<smem>>
    %995 = vector.broadcast %994 : f32 to vector<8x128xf32>
    %996 = arith.mulf %235, %995 : vector<8x128xf32>
    %997 = arith.addf %993, %996 : vector<8x128xf32>
    %c246 = arith.constant 246 : index
    %998 = memref.load %arg1[%c246] : memref<749xf32, #tpu.memory_space<smem>>
    %999 = vector.broadcast %998 : f32 to vector<8x128xf32>
    %1000 = arith.mulf %275, %999 : vector<8x128xf32>
    %1001 = arith.addf %997, %1000 : vector<8x128xf32>
    %c247 = arith.constant 247 : index
    %1002 = memref.load %arg1[%c247] : memref<749xf32, #tpu.memory_space<smem>>
    %1003 = vector.broadcast %1002 : f32 to vector<8x128xf32>
    %1004 = arith.mulf %315, %1003 : vector<8x128xf32>
    %1005 = arith.addf %1001, %1004 : vector<8x128xf32>
    %c248 = arith.constant 248 : index
    %1006 = memref.load %arg1[%c248] : memref<749xf32, #tpu.memory_space<smem>>
    %1007 = vector.broadcast %1006 : f32 to vector<8x128xf32>
    %1008 = arith.mulf %355, %1007 : vector<8x128xf32>
    %1009 = arith.addf %1005, %1008 : vector<8x128xf32>
    %c249 = arith.constant 249 : index
    %1010 = memref.load %arg1[%c249] : memref<749xf32, #tpu.memory_space<smem>>
    %1011 = vector.broadcast %1010 : f32 to vector<8x128xf32>
    %1012 = arith.mulf %395, %1011 : vector<8x128xf32>
    %1013 = arith.addf %1009, %1012 : vector<8x128xf32>
    %c250 = arith.constant 250 : index
    %1014 = memref.load %arg1[%c250] : memref<749xf32, #tpu.memory_space<smem>>
    %1015 = vector.broadcast %1014 : f32 to vector<8x128xf32>
    %1016 = arith.mulf %435, %1015 : vector<8x128xf32>
    %1017 = arith.addf %1013, %1016 : vector<8x128xf32>
    %c251 = arith.constant 251 : index
    %1018 = memref.load %arg1[%c251] : memref<749xf32, #tpu.memory_space<smem>>
    %1019 = vector.broadcast %1018 : f32 to vector<8x128xf32>
    %1020 = arith.mulf %475, %1019 : vector<8x128xf32>
    %1021 = arith.addf %1017, %1020 : vector<8x128xf32>
    %c252 = arith.constant 252 : index
    %1022 = memref.load %arg1[%c252] : memref<749xf32, #tpu.memory_space<smem>>
    %1023 = vector.broadcast %1022 : f32 to vector<8x128xf32>
    %1024 = arith.mulf %515, %1023 : vector<8x128xf32>
    %1025 = arith.addf %1021, %1024 : vector<8x128xf32>
    %c253 = arith.constant 253 : index
    %1026 = memref.load %arg1[%c253] : memref<749xf32, #tpu.memory_space<smem>>
    %1027 = vector.broadcast %1026 : f32 to vector<8x128xf32>
    %1028 = arith.mulf %555, %1027 : vector<8x128xf32>
    %1029 = arith.addf %1025, %1028 : vector<8x128xf32>
    %c254 = arith.constant 254 : index
    %1030 = memref.load %arg1[%c254] : memref<749xf32, #tpu.memory_space<smem>>
    %1031 = vector.broadcast %1030 : f32 to vector<8x128xf32>
    %1032 = arith.mulf %595, %1031 : vector<8x128xf32>
    %1033 = arith.addf %1029, %1032 : vector<8x128xf32>
    %c255 = arith.constant 255 : index
    %1034 = memref.load %arg1[%c255] : memref<749xf32, #tpu.memory_space<smem>>
    %1035 = vector.broadcast %1034 : f32 to vector<8x128xf32>
    %1036 = arith.mulf %635, %1035 : vector<8x128xf32>
    %1037 = arith.addf %1033, %1036 : vector<8x128xf32>
    %c256 = arith.constant 256 : index
    %1038 = memref.load %arg1[%c256] : memref<749xf32, #tpu.memory_space<smem>>
    %1039 = vector.broadcast %1038 : f32 to vector<8x128xf32>
    %1040 = arith.mulf %675, %1039 : vector<8x128xf32>
    %1041 = arith.addf %1037, %1040 : vector<8x128xf32>
    %c257 = arith.constant 257 : index
    %1042 = memref.load %arg1[%c257] : memref<749xf32, #tpu.memory_space<smem>>
    %1043 = vector.broadcast %1042 : f32 to vector<8x128xf32>
    %1044 = arith.mulf %715, %1043 : vector<8x128xf32>
    %1045 = arith.addf %1041, %1044 : vector<8x128xf32>
    %c258 = arith.constant 258 : index
    %1046 = memref.load %arg1[%c258] : memref<749xf32, #tpu.memory_space<smem>>
    %1047 = vector.broadcast %1046 : f32 to vector<8x128xf32>
    %1048 = arith.mulf %755, %1047 : vector<8x128xf32>
    %1049 = arith.addf %1045, %1048 : vector<8x128xf32>
    %c259 = arith.constant 259 : index
    %1050 = memref.load %arg1[%c259] : memref<749xf32, #tpu.memory_space<smem>>
    %1051 = vector.broadcast %1050 : f32 to vector<8x128xf32>
    %1052 = arith.mulf %795, %1051 : vector<8x128xf32>
    %1053 = arith.addf %1049, %1052 : vector<8x128xf32>
    %c260 = arith.constant 260 : index
    %1054 = memref.load %arg1[%c260] : memref<749xf32, #tpu.memory_space<smem>>
    %1055 = vector.broadcast %1054 : f32 to vector<8x128xf32>
    %1056 = arith.mulf %835, %1055 : vector<8x128xf32>
    %1057 = arith.addf %1053, %1056 : vector<8x128xf32>
    %c261 = arith.constant 261 : index
    %1058 = memref.load %arg1[%c261] : memref<749xf32, #tpu.memory_space<smem>>
    %1059 = vector.broadcast %1058 : f32 to vector<8x128xf32>
    %1060 = arith.mulf %155, %1059 : vector<8x128xf32>
    %c372 = arith.constant 372 : index
    %1061 = memref.load %arg1[%c372] : memref<749xf32, #tpu.memory_space<smem>>
    %1062 = vector.broadcast %1061 : f32 to vector<8x128xf32>
    %1063 = arith.addf %1060, %1062 : vector<8x128xf32>
    %c262 = arith.constant 262 : index
    %1064 = memref.load %arg1[%c262] : memref<749xf32, #tpu.memory_space<smem>>
    %1065 = vector.broadcast %1064 : f32 to vector<8x128xf32>
    %1066 = arith.mulf %195, %1065 : vector<8x128xf32>
    %1067 = arith.addf %1063, %1066 : vector<8x128xf32>
    %c263 = arith.constant 263 : index
    %1068 = memref.load %arg1[%c263] : memref<749xf32, #tpu.memory_space<smem>>
    %1069 = vector.broadcast %1068 : f32 to vector<8x128xf32>
    %1070 = arith.mulf %235, %1069 : vector<8x128xf32>
    %1071 = arith.addf %1067, %1070 : vector<8x128xf32>
    %c264 = arith.constant 264 : index
    %1072 = memref.load %arg1[%c264] : memref<749xf32, #tpu.memory_space<smem>>
    %1073 = vector.broadcast %1072 : f32 to vector<8x128xf32>
    %1074 = arith.mulf %275, %1073 : vector<8x128xf32>
    %1075 = arith.addf %1071, %1074 : vector<8x128xf32>
    %c265 = arith.constant 265 : index
    %1076 = memref.load %arg1[%c265] : memref<749xf32, #tpu.memory_space<smem>>
    %1077 = vector.broadcast %1076 : f32 to vector<8x128xf32>
    %1078 = arith.mulf %315, %1077 : vector<8x128xf32>
    %1079 = arith.addf %1075, %1078 : vector<8x128xf32>
    %c266 = arith.constant 266 : index
    %1080 = memref.load %arg1[%c266] : memref<749xf32, #tpu.memory_space<smem>>
    %1081 = vector.broadcast %1080 : f32 to vector<8x128xf32>
    %1082 = arith.mulf %355, %1081 : vector<8x128xf32>
    %1083 = arith.addf %1079, %1082 : vector<8x128xf32>
    %c267 = arith.constant 267 : index
    %1084 = memref.load %arg1[%c267] : memref<749xf32, #tpu.memory_space<smem>>
    %1085 = vector.broadcast %1084 : f32 to vector<8x128xf32>
    %1086 = arith.mulf %395, %1085 : vector<8x128xf32>
    %1087 = arith.addf %1083, %1086 : vector<8x128xf32>
    %c268 = arith.constant 268 : index
    %1088 = memref.load %arg1[%c268] : memref<749xf32, #tpu.memory_space<smem>>
    %1089 = vector.broadcast %1088 : f32 to vector<8x128xf32>
    %1090 = arith.mulf %435, %1089 : vector<8x128xf32>
    %1091 = arith.addf %1087, %1090 : vector<8x128xf32>
    %c269 = arith.constant 269 : index
    %1092 = memref.load %arg1[%c269] : memref<749xf32, #tpu.memory_space<smem>>
    %1093 = vector.broadcast %1092 : f32 to vector<8x128xf32>
    %1094 = arith.mulf %475, %1093 : vector<8x128xf32>
    %1095 = arith.addf %1091, %1094 : vector<8x128xf32>
    %c270 = arith.constant 270 : index
    %1096 = memref.load %arg1[%c270] : memref<749xf32, #tpu.memory_space<smem>>
    %1097 = vector.broadcast %1096 : f32 to vector<8x128xf32>
    %1098 = arith.mulf %515, %1097 : vector<8x128xf32>
    %1099 = arith.addf %1095, %1098 : vector<8x128xf32>
    %c271 = arith.constant 271 : index
    %1100 = memref.load %arg1[%c271] : memref<749xf32, #tpu.memory_space<smem>>
    %1101 = vector.broadcast %1100 : f32 to vector<8x128xf32>
    %1102 = arith.mulf %555, %1101 : vector<8x128xf32>
    %1103 = arith.addf %1099, %1102 : vector<8x128xf32>
    %c272 = arith.constant 272 : index
    %1104 = memref.load %arg1[%c272] : memref<749xf32, #tpu.memory_space<smem>>
    %1105 = vector.broadcast %1104 : f32 to vector<8x128xf32>
    %1106 = arith.mulf %595, %1105 : vector<8x128xf32>
    %1107 = arith.addf %1103, %1106 : vector<8x128xf32>
    %c273 = arith.constant 273 : index
    %1108 = memref.load %arg1[%c273] : memref<749xf32, #tpu.memory_space<smem>>
    %1109 = vector.broadcast %1108 : f32 to vector<8x128xf32>
    %1110 = arith.mulf %635, %1109 : vector<8x128xf32>
    %1111 = arith.addf %1107, %1110 : vector<8x128xf32>
    %c274 = arith.constant 274 : index
    %1112 = memref.load %arg1[%c274] : memref<749xf32, #tpu.memory_space<smem>>
    %1113 = vector.broadcast %1112 : f32 to vector<8x128xf32>
    %1114 = arith.mulf %675, %1113 : vector<8x128xf32>
    %1115 = arith.addf %1111, %1114 : vector<8x128xf32>
    %c275 = arith.constant 275 : index
    %1116 = memref.load %arg1[%c275] : memref<749xf32, #tpu.memory_space<smem>>
    %1117 = vector.broadcast %1116 : f32 to vector<8x128xf32>
    %1118 = arith.mulf %715, %1117 : vector<8x128xf32>
    %1119 = arith.addf %1115, %1118 : vector<8x128xf32>
    %c276 = arith.constant 276 : index
    %1120 = memref.load %arg1[%c276] : memref<749xf32, #tpu.memory_space<smem>>
    %1121 = vector.broadcast %1120 : f32 to vector<8x128xf32>
    %1122 = arith.mulf %755, %1121 : vector<8x128xf32>
    %1123 = arith.addf %1119, %1122 : vector<8x128xf32>
    %c277 = arith.constant 277 : index
    %1124 = memref.load %arg1[%c277] : memref<749xf32, #tpu.memory_space<smem>>
    %1125 = vector.broadcast %1124 : f32 to vector<8x128xf32>
    %1126 = arith.mulf %795, %1125 : vector<8x128xf32>
    %1127 = arith.addf %1123, %1126 : vector<8x128xf32>
    %c278 = arith.constant 278 : index
    %1128 = memref.load %arg1[%c278] : memref<749xf32, #tpu.memory_space<smem>>
    %1129 = vector.broadcast %1128 : f32 to vector<8x128xf32>
    %1130 = arith.mulf %835, %1129 : vector<8x128xf32>
    %1131 = arith.addf %1127, %1130 : vector<8x128xf32>
    %c279 = arith.constant 279 : index
    %1132 = memref.load %arg1[%c279] : memref<749xf32, #tpu.memory_space<smem>>
    %1133 = vector.broadcast %1132 : f32 to vector<8x128xf32>
    %1134 = arith.mulf %155, %1133 : vector<8x128xf32>
    %c373 = arith.constant 373 : index
    %1135 = memref.load %arg1[%c373] : memref<749xf32, #tpu.memory_space<smem>>
    %1136 = vector.broadcast %1135 : f32 to vector<8x128xf32>
    %1137 = arith.addf %1134, %1136 : vector<8x128xf32>
    %c280 = arith.constant 280 : index
    %1138 = memref.load %arg1[%c280] : memref<749xf32, #tpu.memory_space<smem>>
    %1139 = vector.broadcast %1138 : f32 to vector<8x128xf32>
    %1140 = arith.mulf %195, %1139 : vector<8x128xf32>
    %1141 = arith.addf %1137, %1140 : vector<8x128xf32>
    %c281 = arith.constant 281 : index
    %1142 = memref.load %arg1[%c281] : memref<749xf32, #tpu.memory_space<smem>>
    %1143 = vector.broadcast %1142 : f32 to vector<8x128xf32>
    %1144 = arith.mulf %235, %1143 : vector<8x128xf32>
    %1145 = arith.addf %1141, %1144 : vector<8x128xf32>
    %c282 = arith.constant 282 : index
    %1146 = memref.load %arg1[%c282] : memref<749xf32, #tpu.memory_space<smem>>
    %1147 = vector.broadcast %1146 : f32 to vector<8x128xf32>
    %1148 = arith.mulf %275, %1147 : vector<8x128xf32>
    %1149 = arith.addf %1145, %1148 : vector<8x128xf32>
    %c283 = arith.constant 283 : index
    %1150 = memref.load %arg1[%c283] : memref<749xf32, #tpu.memory_space<smem>>
    %1151 = vector.broadcast %1150 : f32 to vector<8x128xf32>
    %1152 = arith.mulf %315, %1151 : vector<8x128xf32>
    %1153 = arith.addf %1149, %1152 : vector<8x128xf32>
    %c284 = arith.constant 284 : index
    %1154 = memref.load %arg1[%c284] : memref<749xf32, #tpu.memory_space<smem>>
    %1155 = vector.broadcast %1154 : f32 to vector<8x128xf32>
    %1156 = arith.mulf %355, %1155 : vector<8x128xf32>
    %1157 = arith.addf %1153, %1156 : vector<8x128xf32>
    %c285 = arith.constant 285 : index
    %1158 = memref.load %arg1[%c285] : memref<749xf32, #tpu.memory_space<smem>>
    %1159 = vector.broadcast %1158 : f32 to vector<8x128xf32>
    %1160 = arith.mulf %395, %1159 : vector<8x128xf32>
    %1161 = arith.addf %1157, %1160 : vector<8x128xf32>
    %c286 = arith.constant 286 : index
    %1162 = memref.load %arg1[%c286] : memref<749xf32, #tpu.memory_space<smem>>
    %1163 = vector.broadcast %1162 : f32 to vector<8x128xf32>
    %1164 = arith.mulf %435, %1163 : vector<8x128xf32>
    %1165 = arith.addf %1161, %1164 : vector<8x128xf32>
    %c287 = arith.constant 287 : index
    %1166 = memref.load %arg1[%c287] : memref<749xf32, #tpu.memory_space<smem>>
    %1167 = vector.broadcast %1166 : f32 to vector<8x128xf32>
    %1168 = arith.mulf %475, %1167 : vector<8x128xf32>
    %1169 = arith.addf %1165, %1168 : vector<8x128xf32>
    %c288 = arith.constant 288 : index
    %1170 = memref.load %arg1[%c288] : memref<749xf32, #tpu.memory_space<smem>>
    %1171 = vector.broadcast %1170 : f32 to vector<8x128xf32>
    %1172 = arith.mulf %515, %1171 : vector<8x128xf32>
    %1173 = arith.addf %1169, %1172 : vector<8x128xf32>
    %c289 = arith.constant 289 : index
    %1174 = memref.load %arg1[%c289] : memref<749xf32, #tpu.memory_space<smem>>
    %1175 = vector.broadcast %1174 : f32 to vector<8x128xf32>
    %1176 = arith.mulf %555, %1175 : vector<8x128xf32>
    %1177 = arith.addf %1173, %1176 : vector<8x128xf32>
    %c290 = arith.constant 290 : index
    %1178 = memref.load %arg1[%c290] : memref<749xf32, #tpu.memory_space<smem>>
    %1179 = vector.broadcast %1178 : f32 to vector<8x128xf32>
    %1180 = arith.mulf %595, %1179 : vector<8x128xf32>
    %1181 = arith.addf %1177, %1180 : vector<8x128xf32>
    %c291 = arith.constant 291 : index
    %1182 = memref.load %arg1[%c291] : memref<749xf32, #tpu.memory_space<smem>>
    %1183 = vector.broadcast %1182 : f32 to vector<8x128xf32>
    %1184 = arith.mulf %635, %1183 : vector<8x128xf32>
    %1185 = arith.addf %1181, %1184 : vector<8x128xf32>
    %c292 = arith.constant 292 : index
    %1186 = memref.load %arg1[%c292] : memref<749xf32, #tpu.memory_space<smem>>
    %1187 = vector.broadcast %1186 : f32 to vector<8x128xf32>
    %1188 = arith.mulf %675, %1187 : vector<8x128xf32>
    %1189 = arith.addf %1185, %1188 : vector<8x128xf32>
    %c293 = arith.constant 293 : index
    %1190 = memref.load %arg1[%c293] : memref<749xf32, #tpu.memory_space<smem>>
    %1191 = vector.broadcast %1190 : f32 to vector<8x128xf32>
    %1192 = arith.mulf %715, %1191 : vector<8x128xf32>
    %1193 = arith.addf %1189, %1192 : vector<8x128xf32>
    %c294 = arith.constant 294 : index
    %1194 = memref.load %arg1[%c294] : memref<749xf32, #tpu.memory_space<smem>>
    %1195 = vector.broadcast %1194 : f32 to vector<8x128xf32>
    %1196 = arith.mulf %755, %1195 : vector<8x128xf32>
    %1197 = arith.addf %1193, %1196 : vector<8x128xf32>
    %c295 = arith.constant 295 : index
    %1198 = memref.load %arg1[%c295] : memref<749xf32, #tpu.memory_space<smem>>
    %1199 = vector.broadcast %1198 : f32 to vector<8x128xf32>
    %1200 = arith.mulf %795, %1199 : vector<8x128xf32>
    %1201 = arith.addf %1197, %1200 : vector<8x128xf32>
    %c296 = arith.constant 296 : index
    %1202 = memref.load %arg1[%c296] : memref<749xf32, #tpu.memory_space<smem>>
    %1203 = vector.broadcast %1202 : f32 to vector<8x128xf32>
    %1204 = arith.mulf %835, %1203 : vector<8x128xf32>
    %1205 = arith.addf %1201, %1204 : vector<8x128xf32>
    %c297 = arith.constant 297 : index
    %1206 = memref.load %arg1[%c297] : memref<749xf32, #tpu.memory_space<smem>>
    %1207 = vector.broadcast %1206 : f32 to vector<8x128xf32>
    %1208 = arith.mulf %155, %1207 : vector<8x128xf32>
    %c374 = arith.constant 374 : index
    %1209 = memref.load %arg1[%c374] : memref<749xf32, #tpu.memory_space<smem>>
    %1210 = vector.broadcast %1209 : f32 to vector<8x128xf32>
    %1211 = arith.addf %1208, %1210 : vector<8x128xf32>
    %c298 = arith.constant 298 : index
    %1212 = memref.load %arg1[%c298] : memref<749xf32, #tpu.memory_space<smem>>
    %1213 = vector.broadcast %1212 : f32 to vector<8x128xf32>
    %1214 = arith.mulf %195, %1213 : vector<8x128xf32>
    %1215 = arith.addf %1211, %1214 : vector<8x128xf32>
    %c299 = arith.constant 299 : index
    %1216 = memref.load %arg1[%c299] : memref<749xf32, #tpu.memory_space<smem>>
    %1217 = vector.broadcast %1216 : f32 to vector<8x128xf32>
    %1218 = arith.mulf %235, %1217 : vector<8x128xf32>
    %1219 = arith.addf %1215, %1218 : vector<8x128xf32>
    %c300 = arith.constant 300 : index
    %1220 = memref.load %arg1[%c300] : memref<749xf32, #tpu.memory_space<smem>>
    %1221 = vector.broadcast %1220 : f32 to vector<8x128xf32>
    %1222 = arith.mulf %275, %1221 : vector<8x128xf32>
    %1223 = arith.addf %1219, %1222 : vector<8x128xf32>
    %c301 = arith.constant 301 : index
    %1224 = memref.load %arg1[%c301] : memref<749xf32, #tpu.memory_space<smem>>
    %1225 = vector.broadcast %1224 : f32 to vector<8x128xf32>
    %1226 = arith.mulf %315, %1225 : vector<8x128xf32>
    %1227 = arith.addf %1223, %1226 : vector<8x128xf32>
    %c302 = arith.constant 302 : index
    %1228 = memref.load %arg1[%c302] : memref<749xf32, #tpu.memory_space<smem>>
    %1229 = vector.broadcast %1228 : f32 to vector<8x128xf32>
    %1230 = arith.mulf %355, %1229 : vector<8x128xf32>
    %1231 = arith.addf %1227, %1230 : vector<8x128xf32>
    %c303 = arith.constant 303 : index
    %1232 = memref.load %arg1[%c303] : memref<749xf32, #tpu.memory_space<smem>>
    %1233 = vector.broadcast %1232 : f32 to vector<8x128xf32>
    %1234 = arith.mulf %395, %1233 : vector<8x128xf32>
    %1235 = arith.addf %1231, %1234 : vector<8x128xf32>
    %c304 = arith.constant 304 : index
    %1236 = memref.load %arg1[%c304] : memref<749xf32, #tpu.memory_space<smem>>
    %1237 = vector.broadcast %1236 : f32 to vector<8x128xf32>
    %1238 = arith.mulf %435, %1237 : vector<8x128xf32>
    %1239 = arith.addf %1235, %1238 : vector<8x128xf32>
    %c305 = arith.constant 305 : index
    %1240 = memref.load %arg1[%c305] : memref<749xf32, #tpu.memory_space<smem>>
    %1241 = vector.broadcast %1240 : f32 to vector<8x128xf32>
    %1242 = arith.mulf %475, %1241 : vector<8x128xf32>
    %1243 = arith.addf %1239, %1242 : vector<8x128xf32>
    %c306 = arith.constant 306 : index
    %1244 = memref.load %arg1[%c306] : memref<749xf32, #tpu.memory_space<smem>>
    %1245 = vector.broadcast %1244 : f32 to vector<8x128xf32>
    %1246 = arith.mulf %515, %1245 : vector<8x128xf32>
    %1247 = arith.addf %1243, %1246 : vector<8x128xf32>
    %c307 = arith.constant 307 : index
    %1248 = memref.load %arg1[%c307] : memref<749xf32, #tpu.memory_space<smem>>
    %1249 = vector.broadcast %1248 : f32 to vector<8x128xf32>
    %1250 = arith.mulf %555, %1249 : vector<8x128xf32>
    %1251 = arith.addf %1247, %1250 : vector<8x128xf32>
    %c308 = arith.constant 308 : index
    %1252 = memref.load %arg1[%c308] : memref<749xf32, #tpu.memory_space<smem>>
    %1253 = vector.broadcast %1252 : f32 to vector<8x128xf32>
    %1254 = arith.mulf %595, %1253 : vector<8x128xf32>
    %1255 = arith.addf %1251, %1254 : vector<8x128xf32>
    %c309 = arith.constant 309 : index
    %1256 = memref.load %arg1[%c309] : memref<749xf32, #tpu.memory_space<smem>>
    %1257 = vector.broadcast %1256 : f32 to vector<8x128xf32>
    %1258 = arith.mulf %635, %1257 : vector<8x128xf32>
    %1259 = arith.addf %1255, %1258 : vector<8x128xf32>
    %c310 = arith.constant 310 : index
    %1260 = memref.load %arg1[%c310] : memref<749xf32, #tpu.memory_space<smem>>
    %1261 = vector.broadcast %1260 : f32 to vector<8x128xf32>
    %1262 = arith.mulf %675, %1261 : vector<8x128xf32>
    %1263 = arith.addf %1259, %1262 : vector<8x128xf32>
    %c311 = arith.constant 311 : index
    %1264 = memref.load %arg1[%c311] : memref<749xf32, #tpu.memory_space<smem>>
    %1265 = vector.broadcast %1264 : f32 to vector<8x128xf32>
    %1266 = arith.mulf %715, %1265 : vector<8x128xf32>
    %1267 = arith.addf %1263, %1266 : vector<8x128xf32>
    %c312 = arith.constant 312 : index
    %1268 = memref.load %arg1[%c312] : memref<749xf32, #tpu.memory_space<smem>>
    %1269 = vector.broadcast %1268 : f32 to vector<8x128xf32>
    %1270 = arith.mulf %755, %1269 : vector<8x128xf32>
    %1271 = arith.addf %1267, %1270 : vector<8x128xf32>
    %c313 = arith.constant 313 : index
    %1272 = memref.load %arg1[%c313] : memref<749xf32, #tpu.memory_space<smem>>
    %1273 = vector.broadcast %1272 : f32 to vector<8x128xf32>
    %1274 = arith.mulf %795, %1273 : vector<8x128xf32>
    %1275 = arith.addf %1271, %1274 : vector<8x128xf32>
    %c314 = arith.constant 314 : index
    %1276 = memref.load %arg1[%c314] : memref<749xf32, #tpu.memory_space<smem>>
    %1277 = vector.broadcast %1276 : f32 to vector<8x128xf32>
    %1278 = arith.mulf %835, %1277 : vector<8x128xf32>
    %1279 = arith.addf %1275, %1278 : vector<8x128xf32>
    %c315 = arith.constant 315 : index
    %1280 = memref.load %arg1[%c315] : memref<749xf32, #tpu.memory_space<smem>>
    %1281 = vector.broadcast %1280 : f32 to vector<8x128xf32>
    %1282 = arith.mulf %155, %1281 : vector<8x128xf32>
    %c375 = arith.constant 375 : index
    %1283 = memref.load %arg1[%c375] : memref<749xf32, #tpu.memory_space<smem>>
    %1284 = vector.broadcast %1283 : f32 to vector<8x128xf32>
    %1285 = arith.addf %1282, %1284 : vector<8x128xf32>
    %c316 = arith.constant 316 : index
    %1286 = memref.load %arg1[%c316] : memref<749xf32, #tpu.memory_space<smem>>
    %1287 = vector.broadcast %1286 : f32 to vector<8x128xf32>
    %1288 = arith.mulf %195, %1287 : vector<8x128xf32>
    %1289 = arith.addf %1285, %1288 : vector<8x128xf32>
    %c317 = arith.constant 317 : index
    %1290 = memref.load %arg1[%c317] : memref<749xf32, #tpu.memory_space<smem>>
    %1291 = vector.broadcast %1290 : f32 to vector<8x128xf32>
    %1292 = arith.mulf %235, %1291 : vector<8x128xf32>
    %1293 = arith.addf %1289, %1292 : vector<8x128xf32>
    %c318 = arith.constant 318 : index
    %1294 = memref.load %arg1[%c318] : memref<749xf32, #tpu.memory_space<smem>>
    %1295 = vector.broadcast %1294 : f32 to vector<8x128xf32>
    %1296 = arith.mulf %275, %1295 : vector<8x128xf32>
    %1297 = arith.addf %1293, %1296 : vector<8x128xf32>
    %c319 = arith.constant 319 : index
    %1298 = memref.load %arg1[%c319] : memref<749xf32, #tpu.memory_space<smem>>
    %1299 = vector.broadcast %1298 : f32 to vector<8x128xf32>
    %1300 = arith.mulf %315, %1299 : vector<8x128xf32>
    %1301 = arith.addf %1297, %1300 : vector<8x128xf32>
    %c320 = arith.constant 320 : index
    %1302 = memref.load %arg1[%c320] : memref<749xf32, #tpu.memory_space<smem>>
    %1303 = vector.broadcast %1302 : f32 to vector<8x128xf32>
    %1304 = arith.mulf %355, %1303 : vector<8x128xf32>
    %1305 = arith.addf %1301, %1304 : vector<8x128xf32>
    %c321 = arith.constant 321 : index
    %1306 = memref.load %arg1[%c321] : memref<749xf32, #tpu.memory_space<smem>>
    %1307 = vector.broadcast %1306 : f32 to vector<8x128xf32>
    %1308 = arith.mulf %395, %1307 : vector<8x128xf32>
    %1309 = arith.addf %1305, %1308 : vector<8x128xf32>
    %c322 = arith.constant 322 : index
    %1310 = memref.load %arg1[%c322] : memref<749xf32, #tpu.memory_space<smem>>
    %1311 = vector.broadcast %1310 : f32 to vector<8x128xf32>
    %1312 = arith.mulf %435, %1311 : vector<8x128xf32>
    %1313 = arith.addf %1309, %1312 : vector<8x128xf32>
    %c323 = arith.constant 323 : index
    %1314 = memref.load %arg1[%c323] : memref<749xf32, #tpu.memory_space<smem>>
    %1315 = vector.broadcast %1314 : f32 to vector<8x128xf32>
    %1316 = arith.mulf %475, %1315 : vector<8x128xf32>
    %1317 = arith.addf %1313, %1316 : vector<8x128xf32>
    %c324 = arith.constant 324 : index
    %1318 = memref.load %arg1[%c324] : memref<749xf32, #tpu.memory_space<smem>>
    %1319 = vector.broadcast %1318 : f32 to vector<8x128xf32>
    %1320 = arith.mulf %515, %1319 : vector<8x128xf32>
    %1321 = arith.addf %1317, %1320 : vector<8x128xf32>
    %c325 = arith.constant 325 : index
    %1322 = memref.load %arg1[%c325] : memref<749xf32, #tpu.memory_space<smem>>
    %1323 = vector.broadcast %1322 : f32 to vector<8x128xf32>
    %1324 = arith.mulf %555, %1323 : vector<8x128xf32>
    %1325 = arith.addf %1321, %1324 : vector<8x128xf32>
    %c326 = arith.constant 326 : index
    %1326 = memref.load %arg1[%c326] : memref<749xf32, #tpu.memory_space<smem>>
    %1327 = vector.broadcast %1326 : f32 to vector<8x128xf32>
    %1328 = arith.mulf %595, %1327 : vector<8x128xf32>
    %1329 = arith.addf %1325, %1328 : vector<8x128xf32>
    %c327 = arith.constant 327 : index
    %1330 = memref.load %arg1[%c327] : memref<749xf32, #tpu.memory_space<smem>>
    %1331 = vector.broadcast %1330 : f32 to vector<8x128xf32>
    %1332 = arith.mulf %635, %1331 : vector<8x128xf32>
    %1333 = arith.addf %1329, %1332 : vector<8x128xf32>
    %c328 = arith.constant 328 : index
    %1334 = memref.load %arg1[%c328] : memref<749xf32, #tpu.memory_space<smem>>
    %1335 = vector.broadcast %1334 : f32 to vector<8x128xf32>
    %1336 = arith.mulf %675, %1335 : vector<8x128xf32>
    %1337 = arith.addf %1333, %1336 : vector<8x128xf32>
    %c329 = arith.constant 329 : index
    %1338 = memref.load %arg1[%c329] : memref<749xf32, #tpu.memory_space<smem>>
    %1339 = vector.broadcast %1338 : f32 to vector<8x128xf32>
    %1340 = arith.mulf %715, %1339 : vector<8x128xf32>
    %1341 = arith.addf %1337, %1340 : vector<8x128xf32>
    %c330 = arith.constant 330 : index
    %1342 = memref.load %arg1[%c330] : memref<749xf32, #tpu.memory_space<smem>>
    %1343 = vector.broadcast %1342 : f32 to vector<8x128xf32>
    %1344 = arith.mulf %755, %1343 : vector<8x128xf32>
    %1345 = arith.addf %1341, %1344 : vector<8x128xf32>
    %c331 = arith.constant 331 : index
    %1346 = memref.load %arg1[%c331] : memref<749xf32, #tpu.memory_space<smem>>
    %1347 = vector.broadcast %1346 : f32 to vector<8x128xf32>
    %1348 = arith.mulf %795, %1347 : vector<8x128xf32>
    %1349 = arith.addf %1345, %1348 : vector<8x128xf32>
    %c332 = arith.constant 332 : index
    %1350 = memref.load %arg1[%c332] : memref<749xf32, #tpu.memory_space<smem>>
    %1351 = vector.broadcast %1350 : f32 to vector<8x128xf32>
    %1352 = arith.mulf %835, %1351 : vector<8x128xf32>
    %1353 = arith.addf %1349, %1352 : vector<8x128xf32>
    %c333 = arith.constant 333 : index
    %1354 = memref.load %arg1[%c333] : memref<749xf32, #tpu.memory_space<smem>>
    %1355 = vector.broadcast %1354 : f32 to vector<8x128xf32>
    %1356 = arith.mulf %155, %1355 : vector<8x128xf32>
    %c376 = arith.constant 376 : index
    %1357 = memref.load %arg1[%c376] : memref<749xf32, #tpu.memory_space<smem>>
    %1358 = vector.broadcast %1357 : f32 to vector<8x128xf32>
    %1359 = arith.addf %1356, %1358 : vector<8x128xf32>
    %c334 = arith.constant 334 : index
    %1360 = memref.load %arg1[%c334] : memref<749xf32, #tpu.memory_space<smem>>
    %1361 = vector.broadcast %1360 : f32 to vector<8x128xf32>
    %1362 = arith.mulf %195, %1361 : vector<8x128xf32>
    %1363 = arith.addf %1359, %1362 : vector<8x128xf32>
    %c335 = arith.constant 335 : index
    %1364 = memref.load %arg1[%c335] : memref<749xf32, #tpu.memory_space<smem>>
    %1365 = vector.broadcast %1364 : f32 to vector<8x128xf32>
    %1366 = arith.mulf %235, %1365 : vector<8x128xf32>
    %1367 = arith.addf %1363, %1366 : vector<8x128xf32>
    %c336 = arith.constant 336 : index
    %1368 = memref.load %arg1[%c336] : memref<749xf32, #tpu.memory_space<smem>>
    %1369 = vector.broadcast %1368 : f32 to vector<8x128xf32>
    %1370 = arith.mulf %275, %1369 : vector<8x128xf32>
    %1371 = arith.addf %1367, %1370 : vector<8x128xf32>
    %c337 = arith.constant 337 : index
    %1372 = memref.load %arg1[%c337] : memref<749xf32, #tpu.memory_space<smem>>
    %1373 = vector.broadcast %1372 : f32 to vector<8x128xf32>
    %1374 = arith.mulf %315, %1373 : vector<8x128xf32>
    %1375 = arith.addf %1371, %1374 : vector<8x128xf32>
    %c338 = arith.constant 338 : index
    %1376 = memref.load %arg1[%c338] : memref<749xf32, #tpu.memory_space<smem>>
    %1377 = vector.broadcast %1376 : f32 to vector<8x128xf32>
    %1378 = arith.mulf %355, %1377 : vector<8x128xf32>
    %1379 = arith.addf %1375, %1378 : vector<8x128xf32>
    %c339 = arith.constant 339 : index
    %1380 = memref.load %arg1[%c339] : memref<749xf32, #tpu.memory_space<smem>>
    %1381 = vector.broadcast %1380 : f32 to vector<8x128xf32>
    %1382 = arith.mulf %395, %1381 : vector<8x128xf32>
    %1383 = arith.addf %1379, %1382 : vector<8x128xf32>
    %c340 = arith.constant 340 : index
    %1384 = memref.load %arg1[%c340] : memref<749xf32, #tpu.memory_space<smem>>
    %1385 = vector.broadcast %1384 : f32 to vector<8x128xf32>
    %1386 = arith.mulf %435, %1385 : vector<8x128xf32>
    %1387 = arith.addf %1383, %1386 : vector<8x128xf32>
    %c341 = arith.constant 341 : index
    %1388 = memref.load %arg1[%c341] : memref<749xf32, #tpu.memory_space<smem>>
    %1389 = vector.broadcast %1388 : f32 to vector<8x128xf32>
    %1390 = arith.mulf %475, %1389 : vector<8x128xf32>
    %1391 = arith.addf %1387, %1390 : vector<8x128xf32>
    %c342 = arith.constant 342 : index
    %1392 = memref.load %arg1[%c342] : memref<749xf32, #tpu.memory_space<smem>>
    %1393 = vector.broadcast %1392 : f32 to vector<8x128xf32>
    %1394 = arith.mulf %515, %1393 : vector<8x128xf32>
    %1395 = arith.addf %1391, %1394 : vector<8x128xf32>
    %c343 = arith.constant 343 : index
    %1396 = memref.load %arg1[%c343] : memref<749xf32, #tpu.memory_space<smem>>
    %1397 = vector.broadcast %1396 : f32 to vector<8x128xf32>
    %1398 = arith.mulf %555, %1397 : vector<8x128xf32>
    %1399 = arith.addf %1395, %1398 : vector<8x128xf32>
    %c344 = arith.constant 344 : index
    %1400 = memref.load %arg1[%c344] : memref<749xf32, #tpu.memory_space<smem>>
    %1401 = vector.broadcast %1400 : f32 to vector<8x128xf32>
    %1402 = arith.mulf %595, %1401 : vector<8x128xf32>
    %1403 = arith.addf %1399, %1402 : vector<8x128xf32>
    %c345 = arith.constant 345 : index
    %1404 = memref.load %arg1[%c345] : memref<749xf32, #tpu.memory_space<smem>>
    %1405 = vector.broadcast %1404 : f32 to vector<8x128xf32>
    %1406 = arith.mulf %635, %1405 : vector<8x128xf32>
    %1407 = arith.addf %1403, %1406 : vector<8x128xf32>
    %c346 = arith.constant 346 : index
    %1408 = memref.load %arg1[%c346] : memref<749xf32, #tpu.memory_space<smem>>
    %1409 = vector.broadcast %1408 : f32 to vector<8x128xf32>
    %1410 = arith.mulf %675, %1409 : vector<8x128xf32>
    %1411 = arith.addf %1407, %1410 : vector<8x128xf32>
    %c347 = arith.constant 347 : index
    %1412 = memref.load %arg1[%c347] : memref<749xf32, #tpu.memory_space<smem>>
    %1413 = vector.broadcast %1412 : f32 to vector<8x128xf32>
    %1414 = arith.mulf %715, %1413 : vector<8x128xf32>
    %1415 = arith.addf %1411, %1414 : vector<8x128xf32>
    %c348 = arith.constant 348 : index
    %1416 = memref.load %arg1[%c348] : memref<749xf32, #tpu.memory_space<smem>>
    %1417 = vector.broadcast %1416 : f32 to vector<8x128xf32>
    %1418 = arith.mulf %755, %1417 : vector<8x128xf32>
    %1419 = arith.addf %1415, %1418 : vector<8x128xf32>
    %c349 = arith.constant 349 : index
    %1420 = memref.load %arg1[%c349] : memref<749xf32, #tpu.memory_space<smem>>
    %1421 = vector.broadcast %1420 : f32 to vector<8x128xf32>
    %1422 = arith.mulf %795, %1421 : vector<8x128xf32>
    %1423 = arith.addf %1419, %1422 : vector<8x128xf32>
    %c350 = arith.constant 350 : index
    %1424 = memref.load %arg1[%c350] : memref<749xf32, #tpu.memory_space<smem>>
    %1425 = vector.broadcast %1424 : f32 to vector<8x128xf32>
    %1426 = arith.mulf %835, %1425 : vector<8x128xf32>
    %1427 = arith.addf %1423, %1426 : vector<8x128xf32>
    %c351 = arith.constant 351 : index
    %1428 = memref.load %arg1[%c351] : memref<749xf32, #tpu.memory_space<smem>>
    %1429 = vector.broadcast %1428 : f32 to vector<8x128xf32>
    %1430 = arith.mulf %155, %1429 : vector<8x128xf32>
    %c377 = arith.constant 377 : index
    %1431 = memref.load %arg1[%c377] : memref<749xf32, #tpu.memory_space<smem>>
    %1432 = vector.broadcast %1431 : f32 to vector<8x128xf32>
    %1433 = arith.addf %1430, %1432 : vector<8x128xf32>
    %c352 = arith.constant 352 : index
    %1434 = memref.load %arg1[%c352] : memref<749xf32, #tpu.memory_space<smem>>
    %1435 = vector.broadcast %1434 : f32 to vector<8x128xf32>
    %1436 = arith.mulf %195, %1435 : vector<8x128xf32>
    %1437 = arith.addf %1433, %1436 : vector<8x128xf32>
    %c353 = arith.constant 353 : index
    %1438 = memref.load %arg1[%c353] : memref<749xf32, #tpu.memory_space<smem>>
    %1439 = vector.broadcast %1438 : f32 to vector<8x128xf32>
    %1440 = arith.mulf %235, %1439 : vector<8x128xf32>
    %1441 = arith.addf %1437, %1440 : vector<8x128xf32>
    %c354 = arith.constant 354 : index
    %1442 = memref.load %arg1[%c354] : memref<749xf32, #tpu.memory_space<smem>>
    %1443 = vector.broadcast %1442 : f32 to vector<8x128xf32>
    %1444 = arith.mulf %275, %1443 : vector<8x128xf32>
    %1445 = arith.addf %1441, %1444 : vector<8x128xf32>
    %c355 = arith.constant 355 : index
    %1446 = memref.load %arg1[%c355] : memref<749xf32, #tpu.memory_space<smem>>
    %1447 = vector.broadcast %1446 : f32 to vector<8x128xf32>
    %1448 = arith.mulf %315, %1447 : vector<8x128xf32>
    %1449 = arith.addf %1445, %1448 : vector<8x128xf32>
    %c356 = arith.constant 356 : index
    %1450 = memref.load %arg1[%c356] : memref<749xf32, #tpu.memory_space<smem>>
    %1451 = vector.broadcast %1450 : f32 to vector<8x128xf32>
    %1452 = arith.mulf %355, %1451 : vector<8x128xf32>
    %1453 = arith.addf %1449, %1452 : vector<8x128xf32>
    %c357 = arith.constant 357 : index
    %1454 = memref.load %arg1[%c357] : memref<749xf32, #tpu.memory_space<smem>>
    %1455 = vector.broadcast %1454 : f32 to vector<8x128xf32>
    %1456 = arith.mulf %395, %1455 : vector<8x128xf32>
    %1457 = arith.addf %1453, %1456 : vector<8x128xf32>
    %c358 = arith.constant 358 : index
    %1458 = memref.load %arg1[%c358] : memref<749xf32, #tpu.memory_space<smem>>
    %1459 = vector.broadcast %1458 : f32 to vector<8x128xf32>
    %1460 = arith.mulf %435, %1459 : vector<8x128xf32>
    %1461 = arith.addf %1457, %1460 : vector<8x128xf32>
    %c359 = arith.constant 359 : index
    %1462 = memref.load %arg1[%c359] : memref<749xf32, #tpu.memory_space<smem>>
    %1463 = vector.broadcast %1462 : f32 to vector<8x128xf32>
    %1464 = arith.mulf %475, %1463 : vector<8x128xf32>
    %1465 = arith.addf %1461, %1464 : vector<8x128xf32>
    %c360 = arith.constant 360 : index
    %1466 = memref.load %arg1[%c360] : memref<749xf32, #tpu.memory_space<smem>>
    %1467 = vector.broadcast %1466 : f32 to vector<8x128xf32>
    %1468 = arith.mulf %515, %1467 : vector<8x128xf32>
    %1469 = arith.addf %1465, %1468 : vector<8x128xf32>
    %c361 = arith.constant 361 : index
    %1470 = memref.load %arg1[%c361] : memref<749xf32, #tpu.memory_space<smem>>
    %1471 = vector.broadcast %1470 : f32 to vector<8x128xf32>
    %1472 = arith.mulf %555, %1471 : vector<8x128xf32>
    %1473 = arith.addf %1469, %1472 : vector<8x128xf32>
    %c362 = arith.constant 362 : index
    %1474 = memref.load %arg1[%c362] : memref<749xf32, #tpu.memory_space<smem>>
    %1475 = vector.broadcast %1474 : f32 to vector<8x128xf32>
    %1476 = arith.mulf %595, %1475 : vector<8x128xf32>
    %1477 = arith.addf %1473, %1476 : vector<8x128xf32>
    %c363 = arith.constant 363 : index
    %1478 = memref.load %arg1[%c363] : memref<749xf32, #tpu.memory_space<smem>>
    %1479 = vector.broadcast %1478 : f32 to vector<8x128xf32>
    %1480 = arith.mulf %635, %1479 : vector<8x128xf32>
    %1481 = arith.addf %1477, %1480 : vector<8x128xf32>
    %c364 = arith.constant 364 : index
    %1482 = memref.load %arg1[%c364] : memref<749xf32, #tpu.memory_space<smem>>
    %1483 = vector.broadcast %1482 : f32 to vector<8x128xf32>
    %1484 = arith.mulf %675, %1483 : vector<8x128xf32>
    %1485 = arith.addf %1481, %1484 : vector<8x128xf32>
    %c365 = arith.constant 365 : index
    %1486 = memref.load %arg1[%c365] : memref<749xf32, #tpu.memory_space<smem>>
    %1487 = vector.broadcast %1486 : f32 to vector<8x128xf32>
    %1488 = arith.mulf %715, %1487 : vector<8x128xf32>
    %1489 = arith.addf %1485, %1488 : vector<8x128xf32>
    %c366 = arith.constant 366 : index
    %1490 = memref.load %arg1[%c366] : memref<749xf32, #tpu.memory_space<smem>>
    %1491 = vector.broadcast %1490 : f32 to vector<8x128xf32>
    %1492 = arith.mulf %755, %1491 : vector<8x128xf32>
    %1493 = arith.addf %1489, %1492 : vector<8x128xf32>
    %c367 = arith.constant 367 : index
    %1494 = memref.load %arg1[%c367] : memref<749xf32, #tpu.memory_space<smem>>
    %1495 = vector.broadcast %1494 : f32 to vector<8x128xf32>
    %1496 = arith.mulf %795, %1495 : vector<8x128xf32>
    %1497 = arith.addf %1493, %1496 : vector<8x128xf32>
    %c368 = arith.constant 368 : index
    %1498 = memref.load %arg1[%c368] : memref<749xf32, #tpu.memory_space<smem>>
    %1499 = vector.broadcast %1498 : f32 to vector<8x128xf32>
    %1500 = arith.mulf %835, %1499 : vector<8x128xf32>
    %1501 = arith.addf %1497, %1500 : vector<8x128xf32>
    %c378 = arith.constant 378 : index
    %1502 = memref.load %arg1[%c378] : memref<749xf32, #tpu.memory_space<smem>>
    %1503 = vector.broadcast %1502 : f32 to vector<8x128xf32>
    %1504 = arith.mulf %909, %1503 : vector<8x128xf32>
    %c540 = arith.constant 540 : index
    %1505 = memref.load %arg1[%c540] : memref<749xf32, #tpu.memory_space<smem>>
    %1506 = vector.broadcast %1505 : f32 to vector<8x128xf32>
    %1507 = arith.addf %1504, %1506 : vector<8x128xf32>
    %c379 = arith.constant 379 : index
    %1508 = memref.load %arg1[%c379] : memref<749xf32, #tpu.memory_space<smem>>
    %1509 = vector.broadcast %1508 : f32 to vector<8x128xf32>
    %1510 = arith.mulf %983, %1509 : vector<8x128xf32>
    %1511 = arith.addf %1507, %1510 : vector<8x128xf32>
    %c380 = arith.constant 380 : index
    %1512 = memref.load %arg1[%c380] : memref<749xf32, #tpu.memory_space<smem>>
    %1513 = vector.broadcast %1512 : f32 to vector<8x128xf32>
    %1514 = arith.mulf %1057, %1513 : vector<8x128xf32>
    %1515 = arith.addf %1511, %1514 : vector<8x128xf32>
    %c381 = arith.constant 381 : index
    %1516 = memref.load %arg1[%c381] : memref<749xf32, #tpu.memory_space<smem>>
    %1517 = vector.broadcast %1516 : f32 to vector<8x128xf32>
    %1518 = arith.mulf %1131, %1517 : vector<8x128xf32>
    %1519 = arith.addf %1515, %1518 : vector<8x128xf32>
    %c382 = arith.constant 382 : index
    %1520 = memref.load %arg1[%c382] : memref<749xf32, #tpu.memory_space<smem>>
    %1521 = vector.broadcast %1520 : f32 to vector<8x128xf32>
    %1522 = arith.mulf %1205, %1521 : vector<8x128xf32>
    %1523 = arith.addf %1519, %1522 : vector<8x128xf32>
    %c383 = arith.constant 383 : index
    %1524 = memref.load %arg1[%c383] : memref<749xf32, #tpu.memory_space<smem>>
    %1525 = vector.broadcast %1524 : f32 to vector<8x128xf32>
    %1526 = arith.mulf %1279, %1525 : vector<8x128xf32>
    %1527 = arith.addf %1523, %1526 : vector<8x128xf32>
    %c384 = arith.constant 384 : index
    %1528 = memref.load %arg1[%c384] : memref<749xf32, #tpu.memory_space<smem>>
    %1529 = vector.broadcast %1528 : f32 to vector<8x128xf32>
    %1530 = arith.mulf %1353, %1529 : vector<8x128xf32>
    %1531 = arith.addf %1527, %1530 : vector<8x128xf32>
    %c385 = arith.constant 385 : index
    %1532 = memref.load %arg1[%c385] : memref<749xf32, #tpu.memory_space<smem>>
    %1533 = vector.broadcast %1532 : f32 to vector<8x128xf32>
    %1534 = arith.mulf %1427, %1533 : vector<8x128xf32>
    %1535 = arith.addf %1531, %1534 : vector<8x128xf32>
    %c386 = arith.constant 386 : index
    %1536 = memref.load %arg1[%c386] : memref<749xf32, #tpu.memory_space<smem>>
    %1537 = vector.broadcast %1536 : f32 to vector<8x128xf32>
    %1538 = arith.mulf %1501, %1537 : vector<8x128xf32>
    %1539 = arith.addf %1535, %1538 : vector<8x128xf32>
    %cst_35 = arith.constant 0.000000e+00 : f32
    %1540 = vector.broadcast %cst_35 : f32 to vector<8x128xf32>
    %1541 = arith.maximumf %1539, %1540 : vector<8x128xf32>
    %c387 = arith.constant 387 : index
    %1542 = memref.load %arg1[%c387] : memref<749xf32, #tpu.memory_space<smem>>
    %1543 = vector.broadcast %1542 : f32 to vector<8x128xf32>
    %1544 = arith.mulf %909, %1543 : vector<8x128xf32>
    %c541 = arith.constant 541 : index
    %1545 = memref.load %arg1[%c541] : memref<749xf32, #tpu.memory_space<smem>>
    %1546 = vector.broadcast %1545 : f32 to vector<8x128xf32>
    %1547 = arith.addf %1544, %1546 : vector<8x128xf32>
    %c388 = arith.constant 388 : index
    %1548 = memref.load %arg1[%c388] : memref<749xf32, #tpu.memory_space<smem>>
    %1549 = vector.broadcast %1548 : f32 to vector<8x128xf32>
    %1550 = arith.mulf %983, %1549 : vector<8x128xf32>
    %1551 = arith.addf %1547, %1550 : vector<8x128xf32>
    %c389 = arith.constant 389 : index
    %1552 = memref.load %arg1[%c389] : memref<749xf32, #tpu.memory_space<smem>>
    %1553 = vector.broadcast %1552 : f32 to vector<8x128xf32>
    %1554 = arith.mulf %1057, %1553 : vector<8x128xf32>
    %1555 = arith.addf %1551, %1554 : vector<8x128xf32>
    %c390 = arith.constant 390 : index
    %1556 = memref.load %arg1[%c390] : memref<749xf32, #tpu.memory_space<smem>>
    %1557 = vector.broadcast %1556 : f32 to vector<8x128xf32>
    %1558 = arith.mulf %1131, %1557 : vector<8x128xf32>
    %1559 = arith.addf %1555, %1558 : vector<8x128xf32>
    %c391 = arith.constant 391 : index
    %1560 = memref.load %arg1[%c391] : memref<749xf32, #tpu.memory_space<smem>>
    %1561 = vector.broadcast %1560 : f32 to vector<8x128xf32>
    %1562 = arith.mulf %1205, %1561 : vector<8x128xf32>
    %1563 = arith.addf %1559, %1562 : vector<8x128xf32>
    %c392 = arith.constant 392 : index
    %1564 = memref.load %arg1[%c392] : memref<749xf32, #tpu.memory_space<smem>>
    %1565 = vector.broadcast %1564 : f32 to vector<8x128xf32>
    %1566 = arith.mulf %1279, %1565 : vector<8x128xf32>
    %1567 = arith.addf %1563, %1566 : vector<8x128xf32>
    %c393 = arith.constant 393 : index
    %1568 = memref.load %arg1[%c393] : memref<749xf32, #tpu.memory_space<smem>>
    %1569 = vector.broadcast %1568 : f32 to vector<8x128xf32>
    %1570 = arith.mulf %1353, %1569 : vector<8x128xf32>
    %1571 = arith.addf %1567, %1570 : vector<8x128xf32>
    %c394 = arith.constant 394 : index
    %1572 = memref.load %arg1[%c394] : memref<749xf32, #tpu.memory_space<smem>>
    %1573 = vector.broadcast %1572 : f32 to vector<8x128xf32>
    %1574 = arith.mulf %1427, %1573 : vector<8x128xf32>
    %1575 = arith.addf %1571, %1574 : vector<8x128xf32>
    %c395 = arith.constant 395 : index
    %1576 = memref.load %arg1[%c395] : memref<749xf32, #tpu.memory_space<smem>>
    %1577 = vector.broadcast %1576 : f32 to vector<8x128xf32>
    %1578 = arith.mulf %1501, %1577 : vector<8x128xf32>
    %1579 = arith.addf %1575, %1578 : vector<8x128xf32>
    %cst_36 = arith.constant 0.000000e+00 : f32
    %1580 = vector.broadcast %cst_36 : f32 to vector<8x128xf32>
    %1581 = arith.maximumf %1579, %1580 : vector<8x128xf32>
    %c396 = arith.constant 396 : index
    %1582 = memref.load %arg1[%c396] : memref<749xf32, #tpu.memory_space<smem>>
    %1583 = vector.broadcast %1582 : f32 to vector<8x128xf32>
    %1584 = arith.mulf %909, %1583 : vector<8x128xf32>
    %c542 = arith.constant 542 : index
    %1585 = memref.load %arg1[%c542] : memref<749xf32, #tpu.memory_space<smem>>
    %1586 = vector.broadcast %1585 : f32 to vector<8x128xf32>
    %1587 = arith.addf %1584, %1586 : vector<8x128xf32>
    %c397 = arith.constant 397 : index
    %1588 = memref.load %arg1[%c397] : memref<749xf32, #tpu.memory_space<smem>>
    %1589 = vector.broadcast %1588 : f32 to vector<8x128xf32>
    %1590 = arith.mulf %983, %1589 : vector<8x128xf32>
    %1591 = arith.addf %1587, %1590 : vector<8x128xf32>
    %c398 = arith.constant 398 : index
    %1592 = memref.load %arg1[%c398] : memref<749xf32, #tpu.memory_space<smem>>
    %1593 = vector.broadcast %1592 : f32 to vector<8x128xf32>
    %1594 = arith.mulf %1057, %1593 : vector<8x128xf32>
    %1595 = arith.addf %1591, %1594 : vector<8x128xf32>
    %c399 = arith.constant 399 : index
    %1596 = memref.load %arg1[%c399] : memref<749xf32, #tpu.memory_space<smem>>
    %1597 = vector.broadcast %1596 : f32 to vector<8x128xf32>
    %1598 = arith.mulf %1131, %1597 : vector<8x128xf32>
    %1599 = arith.addf %1595, %1598 : vector<8x128xf32>
    %c400 = arith.constant 400 : index
    %1600 = memref.load %arg1[%c400] : memref<749xf32, #tpu.memory_space<smem>>
    %1601 = vector.broadcast %1600 : f32 to vector<8x128xf32>
    %1602 = arith.mulf %1205, %1601 : vector<8x128xf32>
    %1603 = arith.addf %1599, %1602 : vector<8x128xf32>
    %c401 = arith.constant 401 : index
    %1604 = memref.load %arg1[%c401] : memref<749xf32, #tpu.memory_space<smem>>
    %1605 = vector.broadcast %1604 : f32 to vector<8x128xf32>
    %1606 = arith.mulf %1279, %1605 : vector<8x128xf32>
    %1607 = arith.addf %1603, %1606 : vector<8x128xf32>
    %c402 = arith.constant 402 : index
    %1608 = memref.load %arg1[%c402] : memref<749xf32, #tpu.memory_space<smem>>
    %1609 = vector.broadcast %1608 : f32 to vector<8x128xf32>
    %1610 = arith.mulf %1353, %1609 : vector<8x128xf32>
    %1611 = arith.addf %1607, %1610 : vector<8x128xf32>
    %c403 = arith.constant 403 : index
    %1612 = memref.load %arg1[%c403] : memref<749xf32, #tpu.memory_space<smem>>
    %1613 = vector.broadcast %1612 : f32 to vector<8x128xf32>
    %1614 = arith.mulf %1427, %1613 : vector<8x128xf32>
    %1615 = arith.addf %1611, %1614 : vector<8x128xf32>
    %c404 = arith.constant 404 : index
    %1616 = memref.load %arg1[%c404] : memref<749xf32, #tpu.memory_space<smem>>
    %1617 = vector.broadcast %1616 : f32 to vector<8x128xf32>
    %1618 = arith.mulf %1501, %1617 : vector<8x128xf32>
    %1619 = arith.addf %1615, %1618 : vector<8x128xf32>
    %cst_37 = arith.constant 0.000000e+00 : f32
    %1620 = vector.broadcast %cst_37 : f32 to vector<8x128xf32>
    %1621 = arith.maximumf %1619, %1620 : vector<8x128xf32>
    %c405 = arith.constant 405 : index
    %1622 = memref.load %arg1[%c405] : memref<749xf32, #tpu.memory_space<smem>>
    %1623 = vector.broadcast %1622 : f32 to vector<8x128xf32>
    %1624 = arith.mulf %909, %1623 : vector<8x128xf32>
    %c543 = arith.constant 543 : index
    %1625 = memref.load %arg1[%c543] : memref<749xf32, #tpu.memory_space<smem>>
    %1626 = vector.broadcast %1625 : f32 to vector<8x128xf32>
    %1627 = arith.addf %1624, %1626 : vector<8x128xf32>
    %c406 = arith.constant 406 : index
    %1628 = memref.load %arg1[%c406] : memref<749xf32, #tpu.memory_space<smem>>
    %1629 = vector.broadcast %1628 : f32 to vector<8x128xf32>
    %1630 = arith.mulf %983, %1629 : vector<8x128xf32>
    %1631 = arith.addf %1627, %1630 : vector<8x128xf32>
    %c407 = arith.constant 407 : index
    %1632 = memref.load %arg1[%c407] : memref<749xf32, #tpu.memory_space<smem>>
    %1633 = vector.broadcast %1632 : f32 to vector<8x128xf32>
    %1634 = arith.mulf %1057, %1633 : vector<8x128xf32>
    %1635 = arith.addf %1631, %1634 : vector<8x128xf32>
    %c408 = arith.constant 408 : index
    %1636 = memref.load %arg1[%c408] : memref<749xf32, #tpu.memory_space<smem>>
    %1637 = vector.broadcast %1636 : f32 to vector<8x128xf32>
    %1638 = arith.mulf %1131, %1637 : vector<8x128xf32>
    %1639 = arith.addf %1635, %1638 : vector<8x128xf32>
    %c409 = arith.constant 409 : index
    %1640 = memref.load %arg1[%c409] : memref<749xf32, #tpu.memory_space<smem>>
    %1641 = vector.broadcast %1640 : f32 to vector<8x128xf32>
    %1642 = arith.mulf %1205, %1641 : vector<8x128xf32>
    %1643 = arith.addf %1639, %1642 : vector<8x128xf32>
    %c410 = arith.constant 410 : index
    %1644 = memref.load %arg1[%c410] : memref<749xf32, #tpu.memory_space<smem>>
    %1645 = vector.broadcast %1644 : f32 to vector<8x128xf32>
    %1646 = arith.mulf %1279, %1645 : vector<8x128xf32>
    %1647 = arith.addf %1643, %1646 : vector<8x128xf32>
    %c411 = arith.constant 411 : index
    %1648 = memref.load %arg1[%c411] : memref<749xf32, #tpu.memory_space<smem>>
    %1649 = vector.broadcast %1648 : f32 to vector<8x128xf32>
    %1650 = arith.mulf %1353, %1649 : vector<8x128xf32>
    %1651 = arith.addf %1647, %1650 : vector<8x128xf32>
    %c412 = arith.constant 412 : index
    %1652 = memref.load %arg1[%c412] : memref<749xf32, #tpu.memory_space<smem>>
    %1653 = vector.broadcast %1652 : f32 to vector<8x128xf32>
    %1654 = arith.mulf %1427, %1653 : vector<8x128xf32>
    %1655 = arith.addf %1651, %1654 : vector<8x128xf32>
    %c413 = arith.constant 413 : index
    %1656 = memref.load %arg1[%c413] : memref<749xf32, #tpu.memory_space<smem>>
    %1657 = vector.broadcast %1656 : f32 to vector<8x128xf32>
    %1658 = arith.mulf %1501, %1657 : vector<8x128xf32>
    %1659 = arith.addf %1655, %1658 : vector<8x128xf32>
    %cst_38 = arith.constant 0.000000e+00 : f32
    %1660 = vector.broadcast %cst_38 : f32 to vector<8x128xf32>
    %1661 = arith.maximumf %1659, %1660 : vector<8x128xf32>
    %c414 = arith.constant 414 : index
    %1662 = memref.load %arg1[%c414] : memref<749xf32, #tpu.memory_space<smem>>
    %1663 = vector.broadcast %1662 : f32 to vector<8x128xf32>
    %1664 = arith.mulf %909, %1663 : vector<8x128xf32>
    %c544 = arith.constant 544 : index
    %1665 = memref.load %arg1[%c544] : memref<749xf32, #tpu.memory_space<smem>>
    %1666 = vector.broadcast %1665 : f32 to vector<8x128xf32>
    %1667 = arith.addf %1664, %1666 : vector<8x128xf32>
    %c415 = arith.constant 415 : index
    %1668 = memref.load %arg1[%c415] : memref<749xf32, #tpu.memory_space<smem>>
    %1669 = vector.broadcast %1668 : f32 to vector<8x128xf32>
    %1670 = arith.mulf %983, %1669 : vector<8x128xf32>
    %1671 = arith.addf %1667, %1670 : vector<8x128xf32>
    %c416 = arith.constant 416 : index
    %1672 = memref.load %arg1[%c416] : memref<749xf32, #tpu.memory_space<smem>>
    %1673 = vector.broadcast %1672 : f32 to vector<8x128xf32>
    %1674 = arith.mulf %1057, %1673 : vector<8x128xf32>
    %1675 = arith.addf %1671, %1674 : vector<8x128xf32>
    %c417 = arith.constant 417 : index
    %1676 = memref.load %arg1[%c417] : memref<749xf32, #tpu.memory_space<smem>>
    %1677 = vector.broadcast %1676 : f32 to vector<8x128xf32>
    %1678 = arith.mulf %1131, %1677 : vector<8x128xf32>
    %1679 = arith.addf %1675, %1678 : vector<8x128xf32>
    %c418 = arith.constant 418 : index
    %1680 = memref.load %arg1[%c418] : memref<749xf32, #tpu.memory_space<smem>>
    %1681 = vector.broadcast %1680 : f32 to vector<8x128xf32>
    %1682 = arith.mulf %1205, %1681 : vector<8x128xf32>
    %1683 = arith.addf %1679, %1682 : vector<8x128xf32>
    %c419 = arith.constant 419 : index
    %1684 = memref.load %arg1[%c419] : memref<749xf32, #tpu.memory_space<smem>>
    %1685 = vector.broadcast %1684 : f32 to vector<8x128xf32>
    %1686 = arith.mulf %1279, %1685 : vector<8x128xf32>
    %1687 = arith.addf %1683, %1686 : vector<8x128xf32>
    %c420 = arith.constant 420 : index
    %1688 = memref.load %arg1[%c420] : memref<749xf32, #tpu.memory_space<smem>>
    %1689 = vector.broadcast %1688 : f32 to vector<8x128xf32>
    %1690 = arith.mulf %1353, %1689 : vector<8x128xf32>
    %1691 = arith.addf %1687, %1690 : vector<8x128xf32>
    %c421 = arith.constant 421 : index
    %1692 = memref.load %arg1[%c421] : memref<749xf32, #tpu.memory_space<smem>>
    %1693 = vector.broadcast %1692 : f32 to vector<8x128xf32>
    %1694 = arith.mulf %1427, %1693 : vector<8x128xf32>
    %1695 = arith.addf %1691, %1694 : vector<8x128xf32>
    %c422 = arith.constant 422 : index
    %1696 = memref.load %arg1[%c422] : memref<749xf32, #tpu.memory_space<smem>>
    %1697 = vector.broadcast %1696 : f32 to vector<8x128xf32>
    %1698 = arith.mulf %1501, %1697 : vector<8x128xf32>
    %1699 = arith.addf %1695, %1698 : vector<8x128xf32>
    %cst_39 = arith.constant 0.000000e+00 : f32
    %1700 = vector.broadcast %cst_39 : f32 to vector<8x128xf32>
    %1701 = arith.maximumf %1699, %1700 : vector<8x128xf32>
    %c423 = arith.constant 423 : index
    %1702 = memref.load %arg1[%c423] : memref<749xf32, #tpu.memory_space<smem>>
    %1703 = vector.broadcast %1702 : f32 to vector<8x128xf32>
    %1704 = arith.mulf %909, %1703 : vector<8x128xf32>
    %c545 = arith.constant 545 : index
    %1705 = memref.load %arg1[%c545] : memref<749xf32, #tpu.memory_space<smem>>
    %1706 = vector.broadcast %1705 : f32 to vector<8x128xf32>
    %1707 = arith.addf %1704, %1706 : vector<8x128xf32>
    %c424 = arith.constant 424 : index
    %1708 = memref.load %arg1[%c424] : memref<749xf32, #tpu.memory_space<smem>>
    %1709 = vector.broadcast %1708 : f32 to vector<8x128xf32>
    %1710 = arith.mulf %983, %1709 : vector<8x128xf32>
    %1711 = arith.addf %1707, %1710 : vector<8x128xf32>
    %c425 = arith.constant 425 : index
    %1712 = memref.load %arg1[%c425] : memref<749xf32, #tpu.memory_space<smem>>
    %1713 = vector.broadcast %1712 : f32 to vector<8x128xf32>
    %1714 = arith.mulf %1057, %1713 : vector<8x128xf32>
    %1715 = arith.addf %1711, %1714 : vector<8x128xf32>
    %c426 = arith.constant 426 : index
    %1716 = memref.load %arg1[%c426] : memref<749xf32, #tpu.memory_space<smem>>
    %1717 = vector.broadcast %1716 : f32 to vector<8x128xf32>
    %1718 = arith.mulf %1131, %1717 : vector<8x128xf32>
    %1719 = arith.addf %1715, %1718 : vector<8x128xf32>
    %c427 = arith.constant 427 : index
    %1720 = memref.load %arg1[%c427] : memref<749xf32, #tpu.memory_space<smem>>
    %1721 = vector.broadcast %1720 : f32 to vector<8x128xf32>
    %1722 = arith.mulf %1205, %1721 : vector<8x128xf32>
    %1723 = arith.addf %1719, %1722 : vector<8x128xf32>
    %c428 = arith.constant 428 : index
    %1724 = memref.load %arg1[%c428] : memref<749xf32, #tpu.memory_space<smem>>
    %1725 = vector.broadcast %1724 : f32 to vector<8x128xf32>
    %1726 = arith.mulf %1279, %1725 : vector<8x128xf32>
    %1727 = arith.addf %1723, %1726 : vector<8x128xf32>
    %c429 = arith.constant 429 : index
    %1728 = memref.load %arg1[%c429] : memref<749xf32, #tpu.memory_space<smem>>
    %1729 = vector.broadcast %1728 : f32 to vector<8x128xf32>
    %1730 = arith.mulf %1353, %1729 : vector<8x128xf32>
    %1731 = arith.addf %1727, %1730 : vector<8x128xf32>
    %c430 = arith.constant 430 : index
    %1732 = memref.load %arg1[%c430] : memref<749xf32, #tpu.memory_space<smem>>
    %1733 = vector.broadcast %1732 : f32 to vector<8x128xf32>
    %1734 = arith.mulf %1427, %1733 : vector<8x128xf32>
    %1735 = arith.addf %1731, %1734 : vector<8x128xf32>
    %c431 = arith.constant 431 : index
    %1736 = memref.load %arg1[%c431] : memref<749xf32, #tpu.memory_space<smem>>
    %1737 = vector.broadcast %1736 : f32 to vector<8x128xf32>
    %1738 = arith.mulf %1501, %1737 : vector<8x128xf32>
    %1739 = arith.addf %1735, %1738 : vector<8x128xf32>
    %cst_40 = arith.constant 0.000000e+00 : f32
    %1740 = vector.broadcast %cst_40 : f32 to vector<8x128xf32>
    %1741 = arith.maximumf %1739, %1740 : vector<8x128xf32>
    %c432 = arith.constant 432 : index
    %1742 = memref.load %arg1[%c432] : memref<749xf32, #tpu.memory_space<smem>>
    %1743 = vector.broadcast %1742 : f32 to vector<8x128xf32>
    %1744 = arith.mulf %909, %1743 : vector<8x128xf32>
    %c546 = arith.constant 546 : index
    %1745 = memref.load %arg1[%c546] : memref<749xf32, #tpu.memory_space<smem>>
    %1746 = vector.broadcast %1745 : f32 to vector<8x128xf32>
    %1747 = arith.addf %1744, %1746 : vector<8x128xf32>
    %c433 = arith.constant 433 : index
    %1748 = memref.load %arg1[%c433] : memref<749xf32, #tpu.memory_space<smem>>
    %1749 = vector.broadcast %1748 : f32 to vector<8x128xf32>
    %1750 = arith.mulf %983, %1749 : vector<8x128xf32>
    %1751 = arith.addf %1747, %1750 : vector<8x128xf32>
    %c434 = arith.constant 434 : index
    %1752 = memref.load %arg1[%c434] : memref<749xf32, #tpu.memory_space<smem>>
    %1753 = vector.broadcast %1752 : f32 to vector<8x128xf32>
    %1754 = arith.mulf %1057, %1753 : vector<8x128xf32>
    %1755 = arith.addf %1751, %1754 : vector<8x128xf32>
    %c435 = arith.constant 435 : index
    %1756 = memref.load %arg1[%c435] : memref<749xf32, #tpu.memory_space<smem>>
    %1757 = vector.broadcast %1756 : f32 to vector<8x128xf32>
    %1758 = arith.mulf %1131, %1757 : vector<8x128xf32>
    %1759 = arith.addf %1755, %1758 : vector<8x128xf32>
    %c436 = arith.constant 436 : index
    %1760 = memref.load %arg1[%c436] : memref<749xf32, #tpu.memory_space<smem>>
    %1761 = vector.broadcast %1760 : f32 to vector<8x128xf32>
    %1762 = arith.mulf %1205, %1761 : vector<8x128xf32>
    %1763 = arith.addf %1759, %1762 : vector<8x128xf32>
    %c437 = arith.constant 437 : index
    %1764 = memref.load %arg1[%c437] : memref<749xf32, #tpu.memory_space<smem>>
    %1765 = vector.broadcast %1764 : f32 to vector<8x128xf32>
    %1766 = arith.mulf %1279, %1765 : vector<8x128xf32>
    %1767 = arith.addf %1763, %1766 : vector<8x128xf32>
    %c438 = arith.constant 438 : index
    %1768 = memref.load %arg1[%c438] : memref<749xf32, #tpu.memory_space<smem>>
    %1769 = vector.broadcast %1768 : f32 to vector<8x128xf32>
    %1770 = arith.mulf %1353, %1769 : vector<8x128xf32>
    %1771 = arith.addf %1767, %1770 : vector<8x128xf32>
    %c439 = arith.constant 439 : index
    %1772 = memref.load %arg1[%c439] : memref<749xf32, #tpu.memory_space<smem>>
    %1773 = vector.broadcast %1772 : f32 to vector<8x128xf32>
    %1774 = arith.mulf %1427, %1773 : vector<8x128xf32>
    %1775 = arith.addf %1771, %1774 : vector<8x128xf32>
    %c440 = arith.constant 440 : index
    %1776 = memref.load %arg1[%c440] : memref<749xf32, #tpu.memory_space<smem>>
    %1777 = vector.broadcast %1776 : f32 to vector<8x128xf32>
    %1778 = arith.mulf %1501, %1777 : vector<8x128xf32>
    %1779 = arith.addf %1775, %1778 : vector<8x128xf32>
    %cst_41 = arith.constant 0.000000e+00 : f32
    %1780 = vector.broadcast %cst_41 : f32 to vector<8x128xf32>
    %1781 = arith.maximumf %1779, %1780 : vector<8x128xf32>
    %c441 = arith.constant 441 : index
    %1782 = memref.load %arg1[%c441] : memref<749xf32, #tpu.memory_space<smem>>
    %1783 = vector.broadcast %1782 : f32 to vector<8x128xf32>
    %1784 = arith.mulf %909, %1783 : vector<8x128xf32>
    %c547 = arith.constant 547 : index
    %1785 = memref.load %arg1[%c547] : memref<749xf32, #tpu.memory_space<smem>>
    %1786 = vector.broadcast %1785 : f32 to vector<8x128xf32>
    %1787 = arith.addf %1784, %1786 : vector<8x128xf32>
    %c442 = arith.constant 442 : index
    %1788 = memref.load %arg1[%c442] : memref<749xf32, #tpu.memory_space<smem>>
    %1789 = vector.broadcast %1788 : f32 to vector<8x128xf32>
    %1790 = arith.mulf %983, %1789 : vector<8x128xf32>
    %1791 = arith.addf %1787, %1790 : vector<8x128xf32>
    %c443 = arith.constant 443 : index
    %1792 = memref.load %arg1[%c443] : memref<749xf32, #tpu.memory_space<smem>>
    %1793 = vector.broadcast %1792 : f32 to vector<8x128xf32>
    %1794 = arith.mulf %1057, %1793 : vector<8x128xf32>
    %1795 = arith.addf %1791, %1794 : vector<8x128xf32>
    %c444 = arith.constant 444 : index
    %1796 = memref.load %arg1[%c444] : memref<749xf32, #tpu.memory_space<smem>>
    %1797 = vector.broadcast %1796 : f32 to vector<8x128xf32>
    %1798 = arith.mulf %1131, %1797 : vector<8x128xf32>
    %1799 = arith.addf %1795, %1798 : vector<8x128xf32>
    %c445 = arith.constant 445 : index
    %1800 = memref.load %arg1[%c445] : memref<749xf32, #tpu.memory_space<smem>>
    %1801 = vector.broadcast %1800 : f32 to vector<8x128xf32>
    %1802 = arith.mulf %1205, %1801 : vector<8x128xf32>
    %1803 = arith.addf %1799, %1802 : vector<8x128xf32>
    %c446 = arith.constant 446 : index
    %1804 = memref.load %arg1[%c446] : memref<749xf32, #tpu.memory_space<smem>>
    %1805 = vector.broadcast %1804 : f32 to vector<8x128xf32>
    %1806 = arith.mulf %1279, %1805 : vector<8x128xf32>
    %1807 = arith.addf %1803, %1806 : vector<8x128xf32>
    %c447 = arith.constant 447 : index
    %1808 = memref.load %arg1[%c447] : memref<749xf32, #tpu.memory_space<smem>>
    %1809 = vector.broadcast %1808 : f32 to vector<8x128xf32>
    %1810 = arith.mulf %1353, %1809 : vector<8x128xf32>
    %1811 = arith.addf %1807, %1810 : vector<8x128xf32>
    %c448 = arith.constant 448 : index
    %1812 = memref.load %arg1[%c448] : memref<749xf32, #tpu.memory_space<smem>>
    %1813 = vector.broadcast %1812 : f32 to vector<8x128xf32>
    %1814 = arith.mulf %1427, %1813 : vector<8x128xf32>
    %1815 = arith.addf %1811, %1814 : vector<8x128xf32>
    %c449 = arith.constant 449 : index
    %1816 = memref.load %arg1[%c449] : memref<749xf32, #tpu.memory_space<smem>>
    %1817 = vector.broadcast %1816 : f32 to vector<8x128xf32>
    %1818 = arith.mulf %1501, %1817 : vector<8x128xf32>
    %1819 = arith.addf %1815, %1818 : vector<8x128xf32>
    %cst_42 = arith.constant 0.000000e+00 : f32
    %1820 = vector.broadcast %cst_42 : f32 to vector<8x128xf32>
    %1821 = arith.maximumf %1819, %1820 : vector<8x128xf32>
    %c450 = arith.constant 450 : index
    %1822 = memref.load %arg1[%c450] : memref<749xf32, #tpu.memory_space<smem>>
    %1823 = vector.broadcast %1822 : f32 to vector<8x128xf32>
    %1824 = arith.mulf %909, %1823 : vector<8x128xf32>
    %c548 = arith.constant 548 : index
    %1825 = memref.load %arg1[%c548] : memref<749xf32, #tpu.memory_space<smem>>
    %1826 = vector.broadcast %1825 : f32 to vector<8x128xf32>
    %1827 = arith.addf %1824, %1826 : vector<8x128xf32>
    %c451 = arith.constant 451 : index
    %1828 = memref.load %arg1[%c451] : memref<749xf32, #tpu.memory_space<smem>>
    %1829 = vector.broadcast %1828 : f32 to vector<8x128xf32>
    %1830 = arith.mulf %983, %1829 : vector<8x128xf32>
    %1831 = arith.addf %1827, %1830 : vector<8x128xf32>
    %c452 = arith.constant 452 : index
    %1832 = memref.load %arg1[%c452] : memref<749xf32, #tpu.memory_space<smem>>
    %1833 = vector.broadcast %1832 : f32 to vector<8x128xf32>
    %1834 = arith.mulf %1057, %1833 : vector<8x128xf32>
    %1835 = arith.addf %1831, %1834 : vector<8x128xf32>
    %c453 = arith.constant 453 : index
    %1836 = memref.load %arg1[%c453] : memref<749xf32, #tpu.memory_space<smem>>
    %1837 = vector.broadcast %1836 : f32 to vector<8x128xf32>
    %1838 = arith.mulf %1131, %1837 : vector<8x128xf32>
    %1839 = arith.addf %1835, %1838 : vector<8x128xf32>
    %c454 = arith.constant 454 : index
    %1840 = memref.load %arg1[%c454] : memref<749xf32, #tpu.memory_space<smem>>
    %1841 = vector.broadcast %1840 : f32 to vector<8x128xf32>
    %1842 = arith.mulf %1205, %1841 : vector<8x128xf32>
    %1843 = arith.addf %1839, %1842 : vector<8x128xf32>
    %c455 = arith.constant 455 : index
    %1844 = memref.load %arg1[%c455] : memref<749xf32, #tpu.memory_space<smem>>
    %1845 = vector.broadcast %1844 : f32 to vector<8x128xf32>
    %1846 = arith.mulf %1279, %1845 : vector<8x128xf32>
    %1847 = arith.addf %1843, %1846 : vector<8x128xf32>
    %c456 = arith.constant 456 : index
    %1848 = memref.load %arg1[%c456] : memref<749xf32, #tpu.memory_space<smem>>
    %1849 = vector.broadcast %1848 : f32 to vector<8x128xf32>
    %1850 = arith.mulf %1353, %1849 : vector<8x128xf32>
    %1851 = arith.addf %1847, %1850 : vector<8x128xf32>
    %c457 = arith.constant 457 : index
    %1852 = memref.load %arg1[%c457] : memref<749xf32, #tpu.memory_space<smem>>
    %1853 = vector.broadcast %1852 : f32 to vector<8x128xf32>
    %1854 = arith.mulf %1427, %1853 : vector<8x128xf32>
    %1855 = arith.addf %1851, %1854 : vector<8x128xf32>
    %c458 = arith.constant 458 : index
    %1856 = memref.load %arg1[%c458] : memref<749xf32, #tpu.memory_space<smem>>
    %1857 = vector.broadcast %1856 : f32 to vector<8x128xf32>
    %1858 = arith.mulf %1501, %1857 : vector<8x128xf32>
    %1859 = arith.addf %1855, %1858 : vector<8x128xf32>
    %cst_43 = arith.constant 0.000000e+00 : f32
    %1860 = vector.broadcast %cst_43 : f32 to vector<8x128xf32>
    %1861 = arith.maximumf %1859, %1860 : vector<8x128xf32>
    %c459 = arith.constant 459 : index
    %1862 = memref.load %arg1[%c459] : memref<749xf32, #tpu.memory_space<smem>>
    %1863 = vector.broadcast %1862 : f32 to vector<8x128xf32>
    %1864 = arith.mulf %909, %1863 : vector<8x128xf32>
    %c549 = arith.constant 549 : index
    %1865 = memref.load %arg1[%c549] : memref<749xf32, #tpu.memory_space<smem>>
    %1866 = vector.broadcast %1865 : f32 to vector<8x128xf32>
    %1867 = arith.addf %1864, %1866 : vector<8x128xf32>
    %c460 = arith.constant 460 : index
    %1868 = memref.load %arg1[%c460] : memref<749xf32, #tpu.memory_space<smem>>
    %1869 = vector.broadcast %1868 : f32 to vector<8x128xf32>
    %1870 = arith.mulf %983, %1869 : vector<8x128xf32>
    %1871 = arith.addf %1867, %1870 : vector<8x128xf32>
    %c461 = arith.constant 461 : index
    %1872 = memref.load %arg1[%c461] : memref<749xf32, #tpu.memory_space<smem>>
    %1873 = vector.broadcast %1872 : f32 to vector<8x128xf32>
    %1874 = arith.mulf %1057, %1873 : vector<8x128xf32>
    %1875 = arith.addf %1871, %1874 : vector<8x128xf32>
    %c462 = arith.constant 462 : index
    %1876 = memref.load %arg1[%c462] : memref<749xf32, #tpu.memory_space<smem>>
    %1877 = vector.broadcast %1876 : f32 to vector<8x128xf32>
    %1878 = arith.mulf %1131, %1877 : vector<8x128xf32>
    %1879 = arith.addf %1875, %1878 : vector<8x128xf32>
    %c463 = arith.constant 463 : index
    %1880 = memref.load %arg1[%c463] : memref<749xf32, #tpu.memory_space<smem>>
    %1881 = vector.broadcast %1880 : f32 to vector<8x128xf32>
    %1882 = arith.mulf %1205, %1881 : vector<8x128xf32>
    %1883 = arith.addf %1879, %1882 : vector<8x128xf32>
    %c464 = arith.constant 464 : index
    %1884 = memref.load %arg1[%c464] : memref<749xf32, #tpu.memory_space<smem>>
    %1885 = vector.broadcast %1884 : f32 to vector<8x128xf32>
    %1886 = arith.mulf %1279, %1885 : vector<8x128xf32>
    %1887 = arith.addf %1883, %1886 : vector<8x128xf32>
    %c465 = arith.constant 465 : index
    %1888 = memref.load %arg1[%c465] : memref<749xf32, #tpu.memory_space<smem>>
    %1889 = vector.broadcast %1888 : f32 to vector<8x128xf32>
    %1890 = arith.mulf %1353, %1889 : vector<8x128xf32>
    %1891 = arith.addf %1887, %1890 : vector<8x128xf32>
    %c466 = arith.constant 466 : index
    %1892 = memref.load %arg1[%c466] : memref<749xf32, #tpu.memory_space<smem>>
    %1893 = vector.broadcast %1892 : f32 to vector<8x128xf32>
    %1894 = arith.mulf %1427, %1893 : vector<8x128xf32>
    %1895 = arith.addf %1891, %1894 : vector<8x128xf32>
    %c467 = arith.constant 467 : index
    %1896 = memref.load %arg1[%c467] : memref<749xf32, #tpu.memory_space<smem>>
    %1897 = vector.broadcast %1896 : f32 to vector<8x128xf32>
    %1898 = arith.mulf %1501, %1897 : vector<8x128xf32>
    %1899 = arith.addf %1895, %1898 : vector<8x128xf32>
    %cst_44 = arith.constant 0.000000e+00 : f32
    %1900 = vector.broadcast %cst_44 : f32 to vector<8x128xf32>
    %1901 = arith.maximumf %1899, %1900 : vector<8x128xf32>
    %c468 = arith.constant 468 : index
    %1902 = memref.load %arg1[%c468] : memref<749xf32, #tpu.memory_space<smem>>
    %1903 = vector.broadcast %1902 : f32 to vector<8x128xf32>
    %1904 = arith.mulf %909, %1903 : vector<8x128xf32>
    %c550 = arith.constant 550 : index
    %1905 = memref.load %arg1[%c550] : memref<749xf32, #tpu.memory_space<smem>>
    %1906 = vector.broadcast %1905 : f32 to vector<8x128xf32>
    %1907 = arith.addf %1904, %1906 : vector<8x128xf32>
    %c469 = arith.constant 469 : index
    %1908 = memref.load %arg1[%c469] : memref<749xf32, #tpu.memory_space<smem>>
    %1909 = vector.broadcast %1908 : f32 to vector<8x128xf32>
    %1910 = arith.mulf %983, %1909 : vector<8x128xf32>
    %1911 = arith.addf %1907, %1910 : vector<8x128xf32>
    %c470 = arith.constant 470 : index
    %1912 = memref.load %arg1[%c470] : memref<749xf32, #tpu.memory_space<smem>>
    %1913 = vector.broadcast %1912 : f32 to vector<8x128xf32>
    %1914 = arith.mulf %1057, %1913 : vector<8x128xf32>
    %1915 = arith.addf %1911, %1914 : vector<8x128xf32>
    %c471 = arith.constant 471 : index
    %1916 = memref.load %arg1[%c471] : memref<749xf32, #tpu.memory_space<smem>>
    %1917 = vector.broadcast %1916 : f32 to vector<8x128xf32>
    %1918 = arith.mulf %1131, %1917 : vector<8x128xf32>
    %1919 = arith.addf %1915, %1918 : vector<8x128xf32>
    %c472 = arith.constant 472 : index
    %1920 = memref.load %arg1[%c472] : memref<749xf32, #tpu.memory_space<smem>>
    %1921 = vector.broadcast %1920 : f32 to vector<8x128xf32>
    %1922 = arith.mulf %1205, %1921 : vector<8x128xf32>
    %1923 = arith.addf %1919, %1922 : vector<8x128xf32>
    %c473 = arith.constant 473 : index
    %1924 = memref.load %arg1[%c473] : memref<749xf32, #tpu.memory_space<smem>>
    %1925 = vector.broadcast %1924 : f32 to vector<8x128xf32>
    %1926 = arith.mulf %1279, %1925 : vector<8x128xf32>
    %1927 = arith.addf %1923, %1926 : vector<8x128xf32>
    %c474 = arith.constant 474 : index
    %1928 = memref.load %arg1[%c474] : memref<749xf32, #tpu.memory_space<smem>>
    %1929 = vector.broadcast %1928 : f32 to vector<8x128xf32>
    %1930 = arith.mulf %1353, %1929 : vector<8x128xf32>
    %1931 = arith.addf %1927, %1930 : vector<8x128xf32>
    %c475 = arith.constant 475 : index
    %1932 = memref.load %arg1[%c475] : memref<749xf32, #tpu.memory_space<smem>>
    %1933 = vector.broadcast %1932 : f32 to vector<8x128xf32>
    %1934 = arith.mulf %1427, %1933 : vector<8x128xf32>
    %1935 = arith.addf %1931, %1934 : vector<8x128xf32>
    %c476 = arith.constant 476 : index
    %1936 = memref.load %arg1[%c476] : memref<749xf32, #tpu.memory_space<smem>>
    %1937 = vector.broadcast %1936 : f32 to vector<8x128xf32>
    %1938 = arith.mulf %1501, %1937 : vector<8x128xf32>
    %1939 = arith.addf %1935, %1938 : vector<8x128xf32>
    %cst_45 = arith.constant 0.000000e+00 : f32
    %1940 = vector.broadcast %cst_45 : f32 to vector<8x128xf32>
    %1941 = arith.maximumf %1939, %1940 : vector<8x128xf32>
    %c477 = arith.constant 477 : index
    %1942 = memref.load %arg1[%c477] : memref<749xf32, #tpu.memory_space<smem>>
    %1943 = vector.broadcast %1942 : f32 to vector<8x128xf32>
    %1944 = arith.mulf %909, %1943 : vector<8x128xf32>
    %c551 = arith.constant 551 : index
    %1945 = memref.load %arg1[%c551] : memref<749xf32, #tpu.memory_space<smem>>
    %1946 = vector.broadcast %1945 : f32 to vector<8x128xf32>
    %1947 = arith.addf %1944, %1946 : vector<8x128xf32>
    %c478 = arith.constant 478 : index
    %1948 = memref.load %arg1[%c478] : memref<749xf32, #tpu.memory_space<smem>>
    %1949 = vector.broadcast %1948 : f32 to vector<8x128xf32>
    %1950 = arith.mulf %983, %1949 : vector<8x128xf32>
    %1951 = arith.addf %1947, %1950 : vector<8x128xf32>
    %c479 = arith.constant 479 : index
    %1952 = memref.load %arg1[%c479] : memref<749xf32, #tpu.memory_space<smem>>
    %1953 = vector.broadcast %1952 : f32 to vector<8x128xf32>
    %1954 = arith.mulf %1057, %1953 : vector<8x128xf32>
    %1955 = arith.addf %1951, %1954 : vector<8x128xf32>
    %c480 = arith.constant 480 : index
    %1956 = memref.load %arg1[%c480] : memref<749xf32, #tpu.memory_space<smem>>
    %1957 = vector.broadcast %1956 : f32 to vector<8x128xf32>
    %1958 = arith.mulf %1131, %1957 : vector<8x128xf32>
    %1959 = arith.addf %1955, %1958 : vector<8x128xf32>
    %c481 = arith.constant 481 : index
    %1960 = memref.load %arg1[%c481] : memref<749xf32, #tpu.memory_space<smem>>
    %1961 = vector.broadcast %1960 : f32 to vector<8x128xf32>
    %1962 = arith.mulf %1205, %1961 : vector<8x128xf32>
    %1963 = arith.addf %1959, %1962 : vector<8x128xf32>
    %c482 = arith.constant 482 : index
    %1964 = memref.load %arg1[%c482] : memref<749xf32, #tpu.memory_space<smem>>
    %1965 = vector.broadcast %1964 : f32 to vector<8x128xf32>
    %1966 = arith.mulf %1279, %1965 : vector<8x128xf32>
    %1967 = arith.addf %1963, %1966 : vector<8x128xf32>
    %c483 = arith.constant 483 : index
    %1968 = memref.load %arg1[%c483] : memref<749xf32, #tpu.memory_space<smem>>
    %1969 = vector.broadcast %1968 : f32 to vector<8x128xf32>
    %1970 = arith.mulf %1353, %1969 : vector<8x128xf32>
    %1971 = arith.addf %1967, %1970 : vector<8x128xf32>
    %c484 = arith.constant 484 : index
    %1972 = memref.load %arg1[%c484] : memref<749xf32, #tpu.memory_space<smem>>
    %1973 = vector.broadcast %1972 : f32 to vector<8x128xf32>
    %1974 = arith.mulf %1427, %1973 : vector<8x128xf32>
    %1975 = arith.addf %1971, %1974 : vector<8x128xf32>
    %c485 = arith.constant 485 : index
    %1976 = memref.load %arg1[%c485] : memref<749xf32, #tpu.memory_space<smem>>
    %1977 = vector.broadcast %1976 : f32 to vector<8x128xf32>
    %1978 = arith.mulf %1501, %1977 : vector<8x128xf32>
    %1979 = arith.addf %1975, %1978 : vector<8x128xf32>
    %cst_46 = arith.constant 0.000000e+00 : f32
    %1980 = vector.broadcast %cst_46 : f32 to vector<8x128xf32>
    %1981 = arith.maximumf %1979, %1980 : vector<8x128xf32>
    %c486 = arith.constant 486 : index
    %1982 = memref.load %arg1[%c486] : memref<749xf32, #tpu.memory_space<smem>>
    %1983 = vector.broadcast %1982 : f32 to vector<8x128xf32>
    %1984 = arith.mulf %909, %1983 : vector<8x128xf32>
    %c552 = arith.constant 552 : index
    %1985 = memref.load %arg1[%c552] : memref<749xf32, #tpu.memory_space<smem>>
    %1986 = vector.broadcast %1985 : f32 to vector<8x128xf32>
    %1987 = arith.addf %1984, %1986 : vector<8x128xf32>
    %c487 = arith.constant 487 : index
    %1988 = memref.load %arg1[%c487] : memref<749xf32, #tpu.memory_space<smem>>
    %1989 = vector.broadcast %1988 : f32 to vector<8x128xf32>
    %1990 = arith.mulf %983, %1989 : vector<8x128xf32>
    %1991 = arith.addf %1987, %1990 : vector<8x128xf32>
    %c488 = arith.constant 488 : index
    %1992 = memref.load %arg1[%c488] : memref<749xf32, #tpu.memory_space<smem>>
    %1993 = vector.broadcast %1992 : f32 to vector<8x128xf32>
    %1994 = arith.mulf %1057, %1993 : vector<8x128xf32>
    %1995 = arith.addf %1991, %1994 : vector<8x128xf32>
    %c489 = arith.constant 489 : index
    %1996 = memref.load %arg1[%c489] : memref<749xf32, #tpu.memory_space<smem>>
    %1997 = vector.broadcast %1996 : f32 to vector<8x128xf32>
    %1998 = arith.mulf %1131, %1997 : vector<8x128xf32>
    %1999 = arith.addf %1995, %1998 : vector<8x128xf32>
    %c490 = arith.constant 490 : index
    %2000 = memref.load %arg1[%c490] : memref<749xf32, #tpu.memory_space<smem>>
    %2001 = vector.broadcast %2000 : f32 to vector<8x128xf32>
    %2002 = arith.mulf %1205, %2001 : vector<8x128xf32>
    %2003 = arith.addf %1999, %2002 : vector<8x128xf32>
    %c491 = arith.constant 491 : index
    %2004 = memref.load %arg1[%c491] : memref<749xf32, #tpu.memory_space<smem>>
    %2005 = vector.broadcast %2004 : f32 to vector<8x128xf32>
    %2006 = arith.mulf %1279, %2005 : vector<8x128xf32>
    %2007 = arith.addf %2003, %2006 : vector<8x128xf32>
    %c492 = arith.constant 492 : index
    %2008 = memref.load %arg1[%c492] : memref<749xf32, #tpu.memory_space<smem>>
    %2009 = vector.broadcast %2008 : f32 to vector<8x128xf32>
    %2010 = arith.mulf %1353, %2009 : vector<8x128xf32>
    %2011 = arith.addf %2007, %2010 : vector<8x128xf32>
    %c493 = arith.constant 493 : index
    %2012 = memref.load %arg1[%c493] : memref<749xf32, #tpu.memory_space<smem>>
    %2013 = vector.broadcast %2012 : f32 to vector<8x128xf32>
    %2014 = arith.mulf %1427, %2013 : vector<8x128xf32>
    %2015 = arith.addf %2011, %2014 : vector<8x128xf32>
    %c494 = arith.constant 494 : index
    %2016 = memref.load %arg1[%c494] : memref<749xf32, #tpu.memory_space<smem>>
    %2017 = vector.broadcast %2016 : f32 to vector<8x128xf32>
    %2018 = arith.mulf %1501, %2017 : vector<8x128xf32>
    %2019 = arith.addf %2015, %2018 : vector<8x128xf32>
    %cst_47 = arith.constant 0.000000e+00 : f32
    %2020 = vector.broadcast %cst_47 : f32 to vector<8x128xf32>
    %2021 = arith.maximumf %2019, %2020 : vector<8x128xf32>
    %c495 = arith.constant 495 : index
    %2022 = memref.load %arg1[%c495] : memref<749xf32, #tpu.memory_space<smem>>
    %2023 = vector.broadcast %2022 : f32 to vector<8x128xf32>
    %2024 = arith.mulf %909, %2023 : vector<8x128xf32>
    %c553 = arith.constant 553 : index
    %2025 = memref.load %arg1[%c553] : memref<749xf32, #tpu.memory_space<smem>>
    %2026 = vector.broadcast %2025 : f32 to vector<8x128xf32>
    %2027 = arith.addf %2024, %2026 : vector<8x128xf32>
    %c496 = arith.constant 496 : index
    %2028 = memref.load %arg1[%c496] : memref<749xf32, #tpu.memory_space<smem>>
    %2029 = vector.broadcast %2028 : f32 to vector<8x128xf32>
    %2030 = arith.mulf %983, %2029 : vector<8x128xf32>
    %2031 = arith.addf %2027, %2030 : vector<8x128xf32>
    %c497 = arith.constant 497 : index
    %2032 = memref.load %arg1[%c497] : memref<749xf32, #tpu.memory_space<smem>>
    %2033 = vector.broadcast %2032 : f32 to vector<8x128xf32>
    %2034 = arith.mulf %1057, %2033 : vector<8x128xf32>
    %2035 = arith.addf %2031, %2034 : vector<8x128xf32>
    %c498 = arith.constant 498 : index
    %2036 = memref.load %arg1[%c498] : memref<749xf32, #tpu.memory_space<smem>>
    %2037 = vector.broadcast %2036 : f32 to vector<8x128xf32>
    %2038 = arith.mulf %1131, %2037 : vector<8x128xf32>
    %2039 = arith.addf %2035, %2038 : vector<8x128xf32>
    %c499 = arith.constant 499 : index
    %2040 = memref.load %arg1[%c499] : memref<749xf32, #tpu.memory_space<smem>>
    %2041 = vector.broadcast %2040 : f32 to vector<8x128xf32>
    %2042 = arith.mulf %1205, %2041 : vector<8x128xf32>
    %2043 = arith.addf %2039, %2042 : vector<8x128xf32>
    %c500 = arith.constant 500 : index
    %2044 = memref.load %arg1[%c500] : memref<749xf32, #tpu.memory_space<smem>>
    %2045 = vector.broadcast %2044 : f32 to vector<8x128xf32>
    %2046 = arith.mulf %1279, %2045 : vector<8x128xf32>
    %2047 = arith.addf %2043, %2046 : vector<8x128xf32>
    %c501 = arith.constant 501 : index
    %2048 = memref.load %arg1[%c501] : memref<749xf32, #tpu.memory_space<smem>>
    %2049 = vector.broadcast %2048 : f32 to vector<8x128xf32>
    %2050 = arith.mulf %1353, %2049 : vector<8x128xf32>
    %2051 = arith.addf %2047, %2050 : vector<8x128xf32>
    %c502 = arith.constant 502 : index
    %2052 = memref.load %arg1[%c502] : memref<749xf32, #tpu.memory_space<smem>>
    %2053 = vector.broadcast %2052 : f32 to vector<8x128xf32>
    %2054 = arith.mulf %1427, %2053 : vector<8x128xf32>
    %2055 = arith.addf %2051, %2054 : vector<8x128xf32>
    %c503 = arith.constant 503 : index
    %2056 = memref.load %arg1[%c503] : memref<749xf32, #tpu.memory_space<smem>>
    %2057 = vector.broadcast %2056 : f32 to vector<8x128xf32>
    %2058 = arith.mulf %1501, %2057 : vector<8x128xf32>
    %2059 = arith.addf %2055, %2058 : vector<8x128xf32>
    %cst_48 = arith.constant 0.000000e+00 : f32
    %2060 = vector.broadcast %cst_48 : f32 to vector<8x128xf32>
    %2061 = arith.maximumf %2059, %2060 : vector<8x128xf32>
    %c504 = arith.constant 504 : index
    %2062 = memref.load %arg1[%c504] : memref<749xf32, #tpu.memory_space<smem>>
    %2063 = vector.broadcast %2062 : f32 to vector<8x128xf32>
    %2064 = arith.mulf %909, %2063 : vector<8x128xf32>
    %c554 = arith.constant 554 : index
    %2065 = memref.load %arg1[%c554] : memref<749xf32, #tpu.memory_space<smem>>
    %2066 = vector.broadcast %2065 : f32 to vector<8x128xf32>
    %2067 = arith.addf %2064, %2066 : vector<8x128xf32>
    %c505 = arith.constant 505 : index
    %2068 = memref.load %arg1[%c505] : memref<749xf32, #tpu.memory_space<smem>>
    %2069 = vector.broadcast %2068 : f32 to vector<8x128xf32>
    %2070 = arith.mulf %983, %2069 : vector<8x128xf32>
    %2071 = arith.addf %2067, %2070 : vector<8x128xf32>
    %c506 = arith.constant 506 : index
    %2072 = memref.load %arg1[%c506] : memref<749xf32, #tpu.memory_space<smem>>
    %2073 = vector.broadcast %2072 : f32 to vector<8x128xf32>
    %2074 = arith.mulf %1057, %2073 : vector<8x128xf32>
    %2075 = arith.addf %2071, %2074 : vector<8x128xf32>
    %c507 = arith.constant 507 : index
    %2076 = memref.load %arg1[%c507] : memref<749xf32, #tpu.memory_space<smem>>
    %2077 = vector.broadcast %2076 : f32 to vector<8x128xf32>
    %2078 = arith.mulf %1131, %2077 : vector<8x128xf32>
    %2079 = arith.addf %2075, %2078 : vector<8x128xf32>
    %c508 = arith.constant 508 : index
    %2080 = memref.load %arg1[%c508] : memref<749xf32, #tpu.memory_space<smem>>
    %2081 = vector.broadcast %2080 : f32 to vector<8x128xf32>
    %2082 = arith.mulf %1205, %2081 : vector<8x128xf32>
    %2083 = arith.addf %2079, %2082 : vector<8x128xf32>
    %c509 = arith.constant 509 : index
    %2084 = memref.load %arg1[%c509] : memref<749xf32, #tpu.memory_space<smem>>
    %2085 = vector.broadcast %2084 : f32 to vector<8x128xf32>
    %2086 = arith.mulf %1279, %2085 : vector<8x128xf32>
    %2087 = arith.addf %2083, %2086 : vector<8x128xf32>
    %c510 = arith.constant 510 : index
    %2088 = memref.load %arg1[%c510] : memref<749xf32, #tpu.memory_space<smem>>
    %2089 = vector.broadcast %2088 : f32 to vector<8x128xf32>
    %2090 = arith.mulf %1353, %2089 : vector<8x128xf32>
    %2091 = arith.addf %2087, %2090 : vector<8x128xf32>
    %c511 = arith.constant 511 : index
    %2092 = memref.load %arg1[%c511] : memref<749xf32, #tpu.memory_space<smem>>
    %2093 = vector.broadcast %2092 : f32 to vector<8x128xf32>
    %2094 = arith.mulf %1427, %2093 : vector<8x128xf32>
    %2095 = arith.addf %2091, %2094 : vector<8x128xf32>
    %c512 = arith.constant 512 : index
    %2096 = memref.load %arg1[%c512] : memref<749xf32, #tpu.memory_space<smem>>
    %2097 = vector.broadcast %2096 : f32 to vector<8x128xf32>
    %2098 = arith.mulf %1501, %2097 : vector<8x128xf32>
    %2099 = arith.addf %2095, %2098 : vector<8x128xf32>
    %cst_49 = arith.constant 0.000000e+00 : f32
    %2100 = vector.broadcast %cst_49 : f32 to vector<8x128xf32>
    %2101 = arith.maximumf %2099, %2100 : vector<8x128xf32>
    %c513 = arith.constant 513 : index
    %2102 = memref.load %arg1[%c513] : memref<749xf32, #tpu.memory_space<smem>>
    %2103 = vector.broadcast %2102 : f32 to vector<8x128xf32>
    %2104 = arith.mulf %909, %2103 : vector<8x128xf32>
    %c555 = arith.constant 555 : index
    %2105 = memref.load %arg1[%c555] : memref<749xf32, #tpu.memory_space<smem>>
    %2106 = vector.broadcast %2105 : f32 to vector<8x128xf32>
    %2107 = arith.addf %2104, %2106 : vector<8x128xf32>
    %c514 = arith.constant 514 : index
    %2108 = memref.load %arg1[%c514] : memref<749xf32, #tpu.memory_space<smem>>
    %2109 = vector.broadcast %2108 : f32 to vector<8x128xf32>
    %2110 = arith.mulf %983, %2109 : vector<8x128xf32>
    %2111 = arith.addf %2107, %2110 : vector<8x128xf32>
    %c515 = arith.constant 515 : index
    %2112 = memref.load %arg1[%c515] : memref<749xf32, #tpu.memory_space<smem>>
    %2113 = vector.broadcast %2112 : f32 to vector<8x128xf32>
    %2114 = arith.mulf %1057, %2113 : vector<8x128xf32>
    %2115 = arith.addf %2111, %2114 : vector<8x128xf32>
    %c516 = arith.constant 516 : index
    %2116 = memref.load %arg1[%c516] : memref<749xf32, #tpu.memory_space<smem>>
    %2117 = vector.broadcast %2116 : f32 to vector<8x128xf32>
    %2118 = arith.mulf %1131, %2117 : vector<8x128xf32>
    %2119 = arith.addf %2115, %2118 : vector<8x128xf32>
    %c517 = arith.constant 517 : index
    %2120 = memref.load %arg1[%c517] : memref<749xf32, #tpu.memory_space<smem>>
    %2121 = vector.broadcast %2120 : f32 to vector<8x128xf32>
    %2122 = arith.mulf %1205, %2121 : vector<8x128xf32>
    %2123 = arith.addf %2119, %2122 : vector<8x128xf32>
    %c518 = arith.constant 518 : index
    %2124 = memref.load %arg1[%c518] : memref<749xf32, #tpu.memory_space<smem>>
    %2125 = vector.broadcast %2124 : f32 to vector<8x128xf32>
    %2126 = arith.mulf %1279, %2125 : vector<8x128xf32>
    %2127 = arith.addf %2123, %2126 : vector<8x128xf32>
    %c519 = arith.constant 519 : index
    %2128 = memref.load %arg1[%c519] : memref<749xf32, #tpu.memory_space<smem>>
    %2129 = vector.broadcast %2128 : f32 to vector<8x128xf32>
    %2130 = arith.mulf %1353, %2129 : vector<8x128xf32>
    %2131 = arith.addf %2127, %2130 : vector<8x128xf32>
    %c520 = arith.constant 520 : index
    %2132 = memref.load %arg1[%c520] : memref<749xf32, #tpu.memory_space<smem>>
    %2133 = vector.broadcast %2132 : f32 to vector<8x128xf32>
    %2134 = arith.mulf %1427, %2133 : vector<8x128xf32>
    %2135 = arith.addf %2131, %2134 : vector<8x128xf32>
    %c521 = arith.constant 521 : index
    %2136 = memref.load %arg1[%c521] : memref<749xf32, #tpu.memory_space<smem>>
    %2137 = vector.broadcast %2136 : f32 to vector<8x128xf32>
    %2138 = arith.mulf %1501, %2137 : vector<8x128xf32>
    %2139 = arith.addf %2135, %2138 : vector<8x128xf32>
    %cst_50 = arith.constant 0.000000e+00 : f32
    %2140 = vector.broadcast %cst_50 : f32 to vector<8x128xf32>
    %2141 = arith.maximumf %2139, %2140 : vector<8x128xf32>
    %c522 = arith.constant 522 : index
    %2142 = memref.load %arg1[%c522] : memref<749xf32, #tpu.memory_space<smem>>
    %2143 = vector.broadcast %2142 : f32 to vector<8x128xf32>
    %2144 = arith.mulf %909, %2143 : vector<8x128xf32>
    %c556 = arith.constant 556 : index
    %2145 = memref.load %arg1[%c556] : memref<749xf32, #tpu.memory_space<smem>>
    %2146 = vector.broadcast %2145 : f32 to vector<8x128xf32>
    %2147 = arith.addf %2144, %2146 : vector<8x128xf32>
    %c523 = arith.constant 523 : index
    %2148 = memref.load %arg1[%c523] : memref<749xf32, #tpu.memory_space<smem>>
    %2149 = vector.broadcast %2148 : f32 to vector<8x128xf32>
    %2150 = arith.mulf %983, %2149 : vector<8x128xf32>
    %2151 = arith.addf %2147, %2150 : vector<8x128xf32>
    %c524 = arith.constant 524 : index
    %2152 = memref.load %arg1[%c524] : memref<749xf32, #tpu.memory_space<smem>>
    %2153 = vector.broadcast %2152 : f32 to vector<8x128xf32>
    %2154 = arith.mulf %1057, %2153 : vector<8x128xf32>
    %2155 = arith.addf %2151, %2154 : vector<8x128xf32>
    %c525 = arith.constant 525 : index
    %2156 = memref.load %arg1[%c525] : memref<749xf32, #tpu.memory_space<smem>>
    %2157 = vector.broadcast %2156 : f32 to vector<8x128xf32>
    %2158 = arith.mulf %1131, %2157 : vector<8x128xf32>
    %2159 = arith.addf %2155, %2158 : vector<8x128xf32>
    %c526 = arith.constant 526 : index
    %2160 = memref.load %arg1[%c526] : memref<749xf32, #tpu.memory_space<smem>>
    %2161 = vector.broadcast %2160 : f32 to vector<8x128xf32>
    %2162 = arith.mulf %1205, %2161 : vector<8x128xf32>
    %2163 = arith.addf %2159, %2162 : vector<8x128xf32>
    %c527 = arith.constant 527 : index
    %2164 = memref.load %arg1[%c527] : memref<749xf32, #tpu.memory_space<smem>>
    %2165 = vector.broadcast %2164 : f32 to vector<8x128xf32>
    %2166 = arith.mulf %1279, %2165 : vector<8x128xf32>
    %2167 = arith.addf %2163, %2166 : vector<8x128xf32>
    %c528 = arith.constant 528 : index
    %2168 = memref.load %arg1[%c528] : memref<749xf32, #tpu.memory_space<smem>>
    %2169 = vector.broadcast %2168 : f32 to vector<8x128xf32>
    %2170 = arith.mulf %1353, %2169 : vector<8x128xf32>
    %2171 = arith.addf %2167, %2170 : vector<8x128xf32>
    %c529 = arith.constant 529 : index
    %2172 = memref.load %arg1[%c529] : memref<749xf32, #tpu.memory_space<smem>>
    %2173 = vector.broadcast %2172 : f32 to vector<8x128xf32>
    %2174 = arith.mulf %1427, %2173 : vector<8x128xf32>
    %2175 = arith.addf %2171, %2174 : vector<8x128xf32>
    %c530 = arith.constant 530 : index
    %2176 = memref.load %arg1[%c530] : memref<749xf32, #tpu.memory_space<smem>>
    %2177 = vector.broadcast %2176 : f32 to vector<8x128xf32>
    %2178 = arith.mulf %1501, %2177 : vector<8x128xf32>
    %2179 = arith.addf %2175, %2178 : vector<8x128xf32>
    %cst_51 = arith.constant 0.000000e+00 : f32
    %2180 = vector.broadcast %cst_51 : f32 to vector<8x128xf32>
    %2181 = arith.maximumf %2179, %2180 : vector<8x128xf32>
    %c531 = arith.constant 531 : index
    %2182 = memref.load %arg1[%c531] : memref<749xf32, #tpu.memory_space<smem>>
    %2183 = vector.broadcast %2182 : f32 to vector<8x128xf32>
    %2184 = arith.mulf %909, %2183 : vector<8x128xf32>
    %c557 = arith.constant 557 : index
    %2185 = memref.load %arg1[%c557] : memref<749xf32, #tpu.memory_space<smem>>
    %2186 = vector.broadcast %2185 : f32 to vector<8x128xf32>
    %2187 = arith.addf %2184, %2186 : vector<8x128xf32>
    %c532 = arith.constant 532 : index
    %2188 = memref.load %arg1[%c532] : memref<749xf32, #tpu.memory_space<smem>>
    %2189 = vector.broadcast %2188 : f32 to vector<8x128xf32>
    %2190 = arith.mulf %983, %2189 : vector<8x128xf32>
    %2191 = arith.addf %2187, %2190 : vector<8x128xf32>
    %c533 = arith.constant 533 : index
    %2192 = memref.load %arg1[%c533] : memref<749xf32, #tpu.memory_space<smem>>
    %2193 = vector.broadcast %2192 : f32 to vector<8x128xf32>
    %2194 = arith.mulf %1057, %2193 : vector<8x128xf32>
    %2195 = arith.addf %2191, %2194 : vector<8x128xf32>
    %c534 = arith.constant 534 : index
    %2196 = memref.load %arg1[%c534] : memref<749xf32, #tpu.memory_space<smem>>
    %2197 = vector.broadcast %2196 : f32 to vector<8x128xf32>
    %2198 = arith.mulf %1131, %2197 : vector<8x128xf32>
    %2199 = arith.addf %2195, %2198 : vector<8x128xf32>
    %c535 = arith.constant 535 : index
    %2200 = memref.load %arg1[%c535] : memref<749xf32, #tpu.memory_space<smem>>
    %2201 = vector.broadcast %2200 : f32 to vector<8x128xf32>
    %2202 = arith.mulf %1205, %2201 : vector<8x128xf32>
    %2203 = arith.addf %2199, %2202 : vector<8x128xf32>
    %c536 = arith.constant 536 : index
    %2204 = memref.load %arg1[%c536] : memref<749xf32, #tpu.memory_space<smem>>
    %2205 = vector.broadcast %2204 : f32 to vector<8x128xf32>
    %2206 = arith.mulf %1279, %2205 : vector<8x128xf32>
    %2207 = arith.addf %2203, %2206 : vector<8x128xf32>
    %c537 = arith.constant 537 : index
    %2208 = memref.load %arg1[%c537] : memref<749xf32, #tpu.memory_space<smem>>
    %2209 = vector.broadcast %2208 : f32 to vector<8x128xf32>
    %2210 = arith.mulf %1353, %2209 : vector<8x128xf32>
    %2211 = arith.addf %2207, %2210 : vector<8x128xf32>
    %c538 = arith.constant 538 : index
    %2212 = memref.load %arg1[%c538] : memref<749xf32, #tpu.memory_space<smem>>
    %2213 = vector.broadcast %2212 : f32 to vector<8x128xf32>
    %2214 = arith.mulf %1427, %2213 : vector<8x128xf32>
    %2215 = arith.addf %2211, %2214 : vector<8x128xf32>
    %c539 = arith.constant 539 : index
    %2216 = memref.load %arg1[%c539] : memref<749xf32, #tpu.memory_space<smem>>
    %2217 = vector.broadcast %2216 : f32 to vector<8x128xf32>
    %2218 = arith.mulf %1501, %2217 : vector<8x128xf32>
    %2219 = arith.addf %2215, %2218 : vector<8x128xf32>
    %cst_52 = arith.constant 0.000000e+00 : f32
    %2220 = vector.broadcast %cst_52 : f32 to vector<8x128xf32>
    %2221 = arith.maximumf %2219, %2220 : vector<8x128xf32>
    %c558 = arith.constant 558 : index
    %2222 = memref.load %arg1[%c558] : memref<749xf32, #tpu.memory_space<smem>>
    %2223 = vector.broadcast %2222 : f32 to vector<8x128xf32>
    %2224 = arith.mulf %1541, %2223 : vector<8x128xf32>
    %c720 = arith.constant 720 : index
    %2225 = memref.load %arg1[%c720] : memref<749xf32, #tpu.memory_space<smem>>
    %2226 = vector.broadcast %2225 : f32 to vector<8x128xf32>
    %2227 = arith.addf %2224, %2226 : vector<8x128xf32>
    %c559 = arith.constant 559 : index
    %2228 = memref.load %arg1[%c559] : memref<749xf32, #tpu.memory_space<smem>>
    %2229 = vector.broadcast %2228 : f32 to vector<8x128xf32>
    %2230 = arith.mulf %1581, %2229 : vector<8x128xf32>
    %2231 = arith.addf %2227, %2230 : vector<8x128xf32>
    %c560 = arith.constant 560 : index
    %2232 = memref.load %arg1[%c560] : memref<749xf32, #tpu.memory_space<smem>>
    %2233 = vector.broadcast %2232 : f32 to vector<8x128xf32>
    %2234 = arith.mulf %1621, %2233 : vector<8x128xf32>
    %2235 = arith.addf %2231, %2234 : vector<8x128xf32>
    %c561 = arith.constant 561 : index
    %2236 = memref.load %arg1[%c561] : memref<749xf32, #tpu.memory_space<smem>>
    %2237 = vector.broadcast %2236 : f32 to vector<8x128xf32>
    %2238 = arith.mulf %1661, %2237 : vector<8x128xf32>
    %2239 = arith.addf %2235, %2238 : vector<8x128xf32>
    %c562 = arith.constant 562 : index
    %2240 = memref.load %arg1[%c562] : memref<749xf32, #tpu.memory_space<smem>>
    %2241 = vector.broadcast %2240 : f32 to vector<8x128xf32>
    %2242 = arith.mulf %1701, %2241 : vector<8x128xf32>
    %2243 = arith.addf %2239, %2242 : vector<8x128xf32>
    %c563 = arith.constant 563 : index
    %2244 = memref.load %arg1[%c563] : memref<749xf32, #tpu.memory_space<smem>>
    %2245 = vector.broadcast %2244 : f32 to vector<8x128xf32>
    %2246 = arith.mulf %1741, %2245 : vector<8x128xf32>
    %2247 = arith.addf %2243, %2246 : vector<8x128xf32>
    %c564 = arith.constant 564 : index
    %2248 = memref.load %arg1[%c564] : memref<749xf32, #tpu.memory_space<smem>>
    %2249 = vector.broadcast %2248 : f32 to vector<8x128xf32>
    %2250 = arith.mulf %1781, %2249 : vector<8x128xf32>
    %2251 = arith.addf %2247, %2250 : vector<8x128xf32>
    %c565 = arith.constant 565 : index
    %2252 = memref.load %arg1[%c565] : memref<749xf32, #tpu.memory_space<smem>>
    %2253 = vector.broadcast %2252 : f32 to vector<8x128xf32>
    %2254 = arith.mulf %1821, %2253 : vector<8x128xf32>
    %2255 = arith.addf %2251, %2254 : vector<8x128xf32>
    %c566 = arith.constant 566 : index
    %2256 = memref.load %arg1[%c566] : memref<749xf32, #tpu.memory_space<smem>>
    %2257 = vector.broadcast %2256 : f32 to vector<8x128xf32>
    %2258 = arith.mulf %1861, %2257 : vector<8x128xf32>
    %2259 = arith.addf %2255, %2258 : vector<8x128xf32>
    %c567 = arith.constant 567 : index
    %2260 = memref.load %arg1[%c567] : memref<749xf32, #tpu.memory_space<smem>>
    %2261 = vector.broadcast %2260 : f32 to vector<8x128xf32>
    %2262 = arith.mulf %1901, %2261 : vector<8x128xf32>
    %2263 = arith.addf %2259, %2262 : vector<8x128xf32>
    %c568 = arith.constant 568 : index
    %2264 = memref.load %arg1[%c568] : memref<749xf32, #tpu.memory_space<smem>>
    %2265 = vector.broadcast %2264 : f32 to vector<8x128xf32>
    %2266 = arith.mulf %1941, %2265 : vector<8x128xf32>
    %2267 = arith.addf %2263, %2266 : vector<8x128xf32>
    %c569 = arith.constant 569 : index
    %2268 = memref.load %arg1[%c569] : memref<749xf32, #tpu.memory_space<smem>>
    %2269 = vector.broadcast %2268 : f32 to vector<8x128xf32>
    %2270 = arith.mulf %1981, %2269 : vector<8x128xf32>
    %2271 = arith.addf %2267, %2270 : vector<8x128xf32>
    %c570 = arith.constant 570 : index
    %2272 = memref.load %arg1[%c570] : memref<749xf32, #tpu.memory_space<smem>>
    %2273 = vector.broadcast %2272 : f32 to vector<8x128xf32>
    %2274 = arith.mulf %2021, %2273 : vector<8x128xf32>
    %2275 = arith.addf %2271, %2274 : vector<8x128xf32>
    %c571 = arith.constant 571 : index
    %2276 = memref.load %arg1[%c571] : memref<749xf32, #tpu.memory_space<smem>>
    %2277 = vector.broadcast %2276 : f32 to vector<8x128xf32>
    %2278 = arith.mulf %2061, %2277 : vector<8x128xf32>
    %2279 = arith.addf %2275, %2278 : vector<8x128xf32>
    %c572 = arith.constant 572 : index
    %2280 = memref.load %arg1[%c572] : memref<749xf32, #tpu.memory_space<smem>>
    %2281 = vector.broadcast %2280 : f32 to vector<8x128xf32>
    %2282 = arith.mulf %2101, %2281 : vector<8x128xf32>
    %2283 = arith.addf %2279, %2282 : vector<8x128xf32>
    %c573 = arith.constant 573 : index
    %2284 = memref.load %arg1[%c573] : memref<749xf32, #tpu.memory_space<smem>>
    %2285 = vector.broadcast %2284 : f32 to vector<8x128xf32>
    %2286 = arith.mulf %2141, %2285 : vector<8x128xf32>
    %2287 = arith.addf %2283, %2286 : vector<8x128xf32>
    %c574 = arith.constant 574 : index
    %2288 = memref.load %arg1[%c574] : memref<749xf32, #tpu.memory_space<smem>>
    %2289 = vector.broadcast %2288 : f32 to vector<8x128xf32>
    %2290 = arith.mulf %2181, %2289 : vector<8x128xf32>
    %2291 = arith.addf %2287, %2290 : vector<8x128xf32>
    %c575 = arith.constant 575 : index
    %2292 = memref.load %arg1[%c575] : memref<749xf32, #tpu.memory_space<smem>>
    %2293 = vector.broadcast %2292 : f32 to vector<8x128xf32>
    %2294 = arith.mulf %2221, %2293 : vector<8x128xf32>
    %2295 = arith.addf %2291, %2294 : vector<8x128xf32>
    %cst_53 = arith.constant 0.000000e+00 : f32
    %2296 = vector.broadcast %cst_53 : f32 to vector<8x128xf32>
    %2297 = arith.maximumf %2295, %2296 : vector<8x128xf32>
    %c576 = arith.constant 576 : index
    %2298 = memref.load %arg1[%c576] : memref<749xf32, #tpu.memory_space<smem>>
    %2299 = vector.broadcast %2298 : f32 to vector<8x128xf32>
    %2300 = arith.mulf %1541, %2299 : vector<8x128xf32>
    %c721 = arith.constant 721 : index
    %2301 = memref.load %arg1[%c721] : memref<749xf32, #tpu.memory_space<smem>>
    %2302 = vector.broadcast %2301 : f32 to vector<8x128xf32>
    %2303 = arith.addf %2300, %2302 : vector<8x128xf32>
    %c577 = arith.constant 577 : index
    %2304 = memref.load %arg1[%c577] : memref<749xf32, #tpu.memory_space<smem>>
    %2305 = vector.broadcast %2304 : f32 to vector<8x128xf32>
    %2306 = arith.mulf %1581, %2305 : vector<8x128xf32>
    %2307 = arith.addf %2303, %2306 : vector<8x128xf32>
    %c578 = arith.constant 578 : index
    %2308 = memref.load %arg1[%c578] : memref<749xf32, #tpu.memory_space<smem>>
    %2309 = vector.broadcast %2308 : f32 to vector<8x128xf32>
    %2310 = arith.mulf %1621, %2309 : vector<8x128xf32>
    %2311 = arith.addf %2307, %2310 : vector<8x128xf32>
    %c579 = arith.constant 579 : index
    %2312 = memref.load %arg1[%c579] : memref<749xf32, #tpu.memory_space<smem>>
    %2313 = vector.broadcast %2312 : f32 to vector<8x128xf32>
    %2314 = arith.mulf %1661, %2313 : vector<8x128xf32>
    %2315 = arith.addf %2311, %2314 : vector<8x128xf32>
    %c580 = arith.constant 580 : index
    %2316 = memref.load %arg1[%c580] : memref<749xf32, #tpu.memory_space<smem>>
    %2317 = vector.broadcast %2316 : f32 to vector<8x128xf32>
    %2318 = arith.mulf %1701, %2317 : vector<8x128xf32>
    %2319 = arith.addf %2315, %2318 : vector<8x128xf32>
    %c581 = arith.constant 581 : index
    %2320 = memref.load %arg1[%c581] : memref<749xf32, #tpu.memory_space<smem>>
    %2321 = vector.broadcast %2320 : f32 to vector<8x128xf32>
    %2322 = arith.mulf %1741, %2321 : vector<8x128xf32>
    %2323 = arith.addf %2319, %2322 : vector<8x128xf32>
    %c582 = arith.constant 582 : index
    %2324 = memref.load %arg1[%c582] : memref<749xf32, #tpu.memory_space<smem>>
    %2325 = vector.broadcast %2324 : f32 to vector<8x128xf32>
    %2326 = arith.mulf %1781, %2325 : vector<8x128xf32>
    %2327 = arith.addf %2323, %2326 : vector<8x128xf32>
    %c583 = arith.constant 583 : index
    %2328 = memref.load %arg1[%c583] : memref<749xf32, #tpu.memory_space<smem>>
    %2329 = vector.broadcast %2328 : f32 to vector<8x128xf32>
    %2330 = arith.mulf %1821, %2329 : vector<8x128xf32>
    %2331 = arith.addf %2327, %2330 : vector<8x128xf32>
    %c584 = arith.constant 584 : index
    %2332 = memref.load %arg1[%c584] : memref<749xf32, #tpu.memory_space<smem>>
    %2333 = vector.broadcast %2332 : f32 to vector<8x128xf32>
    %2334 = arith.mulf %1861, %2333 : vector<8x128xf32>
    %2335 = arith.addf %2331, %2334 : vector<8x128xf32>
    %c585 = arith.constant 585 : index
    %2336 = memref.load %arg1[%c585] : memref<749xf32, #tpu.memory_space<smem>>
    %2337 = vector.broadcast %2336 : f32 to vector<8x128xf32>
    %2338 = arith.mulf %1901, %2337 : vector<8x128xf32>
    %2339 = arith.addf %2335, %2338 : vector<8x128xf32>
    %c586 = arith.constant 586 : index
    %2340 = memref.load %arg1[%c586] : memref<749xf32, #tpu.memory_space<smem>>
    %2341 = vector.broadcast %2340 : f32 to vector<8x128xf32>
    %2342 = arith.mulf %1941, %2341 : vector<8x128xf32>
    %2343 = arith.addf %2339, %2342 : vector<8x128xf32>
    %c587 = arith.constant 587 : index
    %2344 = memref.load %arg1[%c587] : memref<749xf32, #tpu.memory_space<smem>>
    %2345 = vector.broadcast %2344 : f32 to vector<8x128xf32>
    %2346 = arith.mulf %1981, %2345 : vector<8x128xf32>
    %2347 = arith.addf %2343, %2346 : vector<8x128xf32>
    %c588 = arith.constant 588 : index
    %2348 = memref.load %arg1[%c588] : memref<749xf32, #tpu.memory_space<smem>>
    %2349 = vector.broadcast %2348 : f32 to vector<8x128xf32>
    %2350 = arith.mulf %2021, %2349 : vector<8x128xf32>
    %2351 = arith.addf %2347, %2350 : vector<8x128xf32>
    %c589 = arith.constant 589 : index
    %2352 = memref.load %arg1[%c589] : memref<749xf32, #tpu.memory_space<smem>>
    %2353 = vector.broadcast %2352 : f32 to vector<8x128xf32>
    %2354 = arith.mulf %2061, %2353 : vector<8x128xf32>
    %2355 = arith.addf %2351, %2354 : vector<8x128xf32>
    %c590 = arith.constant 590 : index
    %2356 = memref.load %arg1[%c590] : memref<749xf32, #tpu.memory_space<smem>>
    %2357 = vector.broadcast %2356 : f32 to vector<8x128xf32>
    %2358 = arith.mulf %2101, %2357 : vector<8x128xf32>
    %2359 = arith.addf %2355, %2358 : vector<8x128xf32>
    %c591 = arith.constant 591 : index
    %2360 = memref.load %arg1[%c591] : memref<749xf32, #tpu.memory_space<smem>>
    %2361 = vector.broadcast %2360 : f32 to vector<8x128xf32>
    %2362 = arith.mulf %2141, %2361 : vector<8x128xf32>
    %2363 = arith.addf %2359, %2362 : vector<8x128xf32>
    %c592 = arith.constant 592 : index
    %2364 = memref.load %arg1[%c592] : memref<749xf32, #tpu.memory_space<smem>>
    %2365 = vector.broadcast %2364 : f32 to vector<8x128xf32>
    %2366 = arith.mulf %2181, %2365 : vector<8x128xf32>
    %2367 = arith.addf %2363, %2366 : vector<8x128xf32>
    %c593 = arith.constant 593 : index
    %2368 = memref.load %arg1[%c593] : memref<749xf32, #tpu.memory_space<smem>>
    %2369 = vector.broadcast %2368 : f32 to vector<8x128xf32>
    %2370 = arith.mulf %2221, %2369 : vector<8x128xf32>
    %2371 = arith.addf %2367, %2370 : vector<8x128xf32>
    %cst_54 = arith.constant 0.000000e+00 : f32
    %2372 = vector.broadcast %cst_54 : f32 to vector<8x128xf32>
    %2373 = arith.maximumf %2371, %2372 : vector<8x128xf32>
    %c594 = arith.constant 594 : index
    %2374 = memref.load %arg1[%c594] : memref<749xf32, #tpu.memory_space<smem>>
    %2375 = vector.broadcast %2374 : f32 to vector<8x128xf32>
    %2376 = arith.mulf %1541, %2375 : vector<8x128xf32>
    %c722 = arith.constant 722 : index
    %2377 = memref.load %arg1[%c722] : memref<749xf32, #tpu.memory_space<smem>>
    %2378 = vector.broadcast %2377 : f32 to vector<8x128xf32>
    %2379 = arith.addf %2376, %2378 : vector<8x128xf32>
    %c595 = arith.constant 595 : index
    %2380 = memref.load %arg1[%c595] : memref<749xf32, #tpu.memory_space<smem>>
    %2381 = vector.broadcast %2380 : f32 to vector<8x128xf32>
    %2382 = arith.mulf %1581, %2381 : vector<8x128xf32>
    %2383 = arith.addf %2379, %2382 : vector<8x128xf32>
    %c596 = arith.constant 596 : index
    %2384 = memref.load %arg1[%c596] : memref<749xf32, #tpu.memory_space<smem>>
    %2385 = vector.broadcast %2384 : f32 to vector<8x128xf32>
    %2386 = arith.mulf %1621, %2385 : vector<8x128xf32>
    %2387 = arith.addf %2383, %2386 : vector<8x128xf32>
    %c597 = arith.constant 597 : index
    %2388 = memref.load %arg1[%c597] : memref<749xf32, #tpu.memory_space<smem>>
    %2389 = vector.broadcast %2388 : f32 to vector<8x128xf32>
    %2390 = arith.mulf %1661, %2389 : vector<8x128xf32>
    %2391 = arith.addf %2387, %2390 : vector<8x128xf32>
    %c598 = arith.constant 598 : index
    %2392 = memref.load %arg1[%c598] : memref<749xf32, #tpu.memory_space<smem>>
    %2393 = vector.broadcast %2392 : f32 to vector<8x128xf32>
    %2394 = arith.mulf %1701, %2393 : vector<8x128xf32>
    %2395 = arith.addf %2391, %2394 : vector<8x128xf32>
    %c599 = arith.constant 599 : index
    %2396 = memref.load %arg1[%c599] : memref<749xf32, #tpu.memory_space<smem>>
    %2397 = vector.broadcast %2396 : f32 to vector<8x128xf32>
    %2398 = arith.mulf %1741, %2397 : vector<8x128xf32>
    %2399 = arith.addf %2395, %2398 : vector<8x128xf32>
    %c600 = arith.constant 600 : index
    %2400 = memref.load %arg1[%c600] : memref<749xf32, #tpu.memory_space<smem>>
    %2401 = vector.broadcast %2400 : f32 to vector<8x128xf32>
    %2402 = arith.mulf %1781, %2401 : vector<8x128xf32>
    %2403 = arith.addf %2399, %2402 : vector<8x128xf32>
    %c601 = arith.constant 601 : index
    %2404 = memref.load %arg1[%c601] : memref<749xf32, #tpu.memory_space<smem>>
    %2405 = vector.broadcast %2404 : f32 to vector<8x128xf32>
    %2406 = arith.mulf %1821, %2405 : vector<8x128xf32>
    %2407 = arith.addf %2403, %2406 : vector<8x128xf32>
    %c602 = arith.constant 602 : index
    %2408 = memref.load %arg1[%c602] : memref<749xf32, #tpu.memory_space<smem>>
    %2409 = vector.broadcast %2408 : f32 to vector<8x128xf32>
    %2410 = arith.mulf %1861, %2409 : vector<8x128xf32>
    %2411 = arith.addf %2407, %2410 : vector<8x128xf32>
    %c603 = arith.constant 603 : index
    %2412 = memref.load %arg1[%c603] : memref<749xf32, #tpu.memory_space<smem>>
    %2413 = vector.broadcast %2412 : f32 to vector<8x128xf32>
    %2414 = arith.mulf %1901, %2413 : vector<8x128xf32>
    %2415 = arith.addf %2411, %2414 : vector<8x128xf32>
    %c604 = arith.constant 604 : index
    %2416 = memref.load %arg1[%c604] : memref<749xf32, #tpu.memory_space<smem>>
    %2417 = vector.broadcast %2416 : f32 to vector<8x128xf32>
    %2418 = arith.mulf %1941, %2417 : vector<8x128xf32>
    %2419 = arith.addf %2415, %2418 : vector<8x128xf32>
    %c605 = arith.constant 605 : index
    %2420 = memref.load %arg1[%c605] : memref<749xf32, #tpu.memory_space<smem>>
    %2421 = vector.broadcast %2420 : f32 to vector<8x128xf32>
    %2422 = arith.mulf %1981, %2421 : vector<8x128xf32>
    %2423 = arith.addf %2419, %2422 : vector<8x128xf32>
    %c606 = arith.constant 606 : index
    %2424 = memref.load %arg1[%c606] : memref<749xf32, #tpu.memory_space<smem>>
    %2425 = vector.broadcast %2424 : f32 to vector<8x128xf32>
    %2426 = arith.mulf %2021, %2425 : vector<8x128xf32>
    %2427 = arith.addf %2423, %2426 : vector<8x128xf32>
    %c607 = arith.constant 607 : index
    %2428 = memref.load %arg1[%c607] : memref<749xf32, #tpu.memory_space<smem>>
    %2429 = vector.broadcast %2428 : f32 to vector<8x128xf32>
    %2430 = arith.mulf %2061, %2429 : vector<8x128xf32>
    %2431 = arith.addf %2427, %2430 : vector<8x128xf32>
    %c608 = arith.constant 608 : index
    %2432 = memref.load %arg1[%c608] : memref<749xf32, #tpu.memory_space<smem>>
    %2433 = vector.broadcast %2432 : f32 to vector<8x128xf32>
    %2434 = arith.mulf %2101, %2433 : vector<8x128xf32>
    %2435 = arith.addf %2431, %2434 : vector<8x128xf32>
    %c609 = arith.constant 609 : index
    %2436 = memref.load %arg1[%c609] : memref<749xf32, #tpu.memory_space<smem>>
    %2437 = vector.broadcast %2436 : f32 to vector<8x128xf32>
    %2438 = arith.mulf %2141, %2437 : vector<8x128xf32>
    %2439 = arith.addf %2435, %2438 : vector<8x128xf32>
    %c610 = arith.constant 610 : index
    %2440 = memref.load %arg1[%c610] : memref<749xf32, #tpu.memory_space<smem>>
    %2441 = vector.broadcast %2440 : f32 to vector<8x128xf32>
    %2442 = arith.mulf %2181, %2441 : vector<8x128xf32>
    %2443 = arith.addf %2439, %2442 : vector<8x128xf32>
    %c611 = arith.constant 611 : index
    %2444 = memref.load %arg1[%c611] : memref<749xf32, #tpu.memory_space<smem>>
    %2445 = vector.broadcast %2444 : f32 to vector<8x128xf32>
    %2446 = arith.mulf %2221, %2445 : vector<8x128xf32>
    %2447 = arith.addf %2443, %2446 : vector<8x128xf32>
    %cst_55 = arith.constant 0.000000e+00 : f32
    %2448 = vector.broadcast %cst_55 : f32 to vector<8x128xf32>
    %2449 = arith.maximumf %2447, %2448 : vector<8x128xf32>
    %c612 = arith.constant 612 : index
    %2450 = memref.load %arg1[%c612] : memref<749xf32, #tpu.memory_space<smem>>
    %2451 = vector.broadcast %2450 : f32 to vector<8x128xf32>
    %2452 = arith.mulf %1541, %2451 : vector<8x128xf32>
    %c723 = arith.constant 723 : index
    %2453 = memref.load %arg1[%c723] : memref<749xf32, #tpu.memory_space<smem>>
    %2454 = vector.broadcast %2453 : f32 to vector<8x128xf32>
    %2455 = arith.addf %2452, %2454 : vector<8x128xf32>
    %c613 = arith.constant 613 : index
    %2456 = memref.load %arg1[%c613] : memref<749xf32, #tpu.memory_space<smem>>
    %2457 = vector.broadcast %2456 : f32 to vector<8x128xf32>
    %2458 = arith.mulf %1581, %2457 : vector<8x128xf32>
    %2459 = arith.addf %2455, %2458 : vector<8x128xf32>
    %c614 = arith.constant 614 : index
    %2460 = memref.load %arg1[%c614] : memref<749xf32, #tpu.memory_space<smem>>
    %2461 = vector.broadcast %2460 : f32 to vector<8x128xf32>
    %2462 = arith.mulf %1621, %2461 : vector<8x128xf32>
    %2463 = arith.addf %2459, %2462 : vector<8x128xf32>
    %c615 = arith.constant 615 : index
    %2464 = memref.load %arg1[%c615] : memref<749xf32, #tpu.memory_space<smem>>
    %2465 = vector.broadcast %2464 : f32 to vector<8x128xf32>
    %2466 = arith.mulf %1661, %2465 : vector<8x128xf32>
    %2467 = arith.addf %2463, %2466 : vector<8x128xf32>
    %c616 = arith.constant 616 : index
    %2468 = memref.load %arg1[%c616] : memref<749xf32, #tpu.memory_space<smem>>
    %2469 = vector.broadcast %2468 : f32 to vector<8x128xf32>
    %2470 = arith.mulf %1701, %2469 : vector<8x128xf32>
    %2471 = arith.addf %2467, %2470 : vector<8x128xf32>
    %c617 = arith.constant 617 : index
    %2472 = memref.load %arg1[%c617] : memref<749xf32, #tpu.memory_space<smem>>
    %2473 = vector.broadcast %2472 : f32 to vector<8x128xf32>
    %2474 = arith.mulf %1741, %2473 : vector<8x128xf32>
    %2475 = arith.addf %2471, %2474 : vector<8x128xf32>
    %c618 = arith.constant 618 : index
    %2476 = memref.load %arg1[%c618] : memref<749xf32, #tpu.memory_space<smem>>
    %2477 = vector.broadcast %2476 : f32 to vector<8x128xf32>
    %2478 = arith.mulf %1781, %2477 : vector<8x128xf32>
    %2479 = arith.addf %2475, %2478 : vector<8x128xf32>
    %c619 = arith.constant 619 : index
    %2480 = memref.load %arg1[%c619] : memref<749xf32, #tpu.memory_space<smem>>
    %2481 = vector.broadcast %2480 : f32 to vector<8x128xf32>
    %2482 = arith.mulf %1821, %2481 : vector<8x128xf32>
    %2483 = arith.addf %2479, %2482 : vector<8x128xf32>
    %c620 = arith.constant 620 : index
    %2484 = memref.load %arg1[%c620] : memref<749xf32, #tpu.memory_space<smem>>
    %2485 = vector.broadcast %2484 : f32 to vector<8x128xf32>
    %2486 = arith.mulf %1861, %2485 : vector<8x128xf32>
    %2487 = arith.addf %2483, %2486 : vector<8x128xf32>
    %c621 = arith.constant 621 : index
    %2488 = memref.load %arg1[%c621] : memref<749xf32, #tpu.memory_space<smem>>
    %2489 = vector.broadcast %2488 : f32 to vector<8x128xf32>
    %2490 = arith.mulf %1901, %2489 : vector<8x128xf32>
    %2491 = arith.addf %2487, %2490 : vector<8x128xf32>
    %c622 = arith.constant 622 : index
    %2492 = memref.load %arg1[%c622] : memref<749xf32, #tpu.memory_space<smem>>
    %2493 = vector.broadcast %2492 : f32 to vector<8x128xf32>
    %2494 = arith.mulf %1941, %2493 : vector<8x128xf32>
    %2495 = arith.addf %2491, %2494 : vector<8x128xf32>
    %c623 = arith.constant 623 : index
    %2496 = memref.load %arg1[%c623] : memref<749xf32, #tpu.memory_space<smem>>
    %2497 = vector.broadcast %2496 : f32 to vector<8x128xf32>
    %2498 = arith.mulf %1981, %2497 : vector<8x128xf32>
    %2499 = arith.addf %2495, %2498 : vector<8x128xf32>
    %c624 = arith.constant 624 : index
    %2500 = memref.load %arg1[%c624] : memref<749xf32, #tpu.memory_space<smem>>
    %2501 = vector.broadcast %2500 : f32 to vector<8x128xf32>
    %2502 = arith.mulf %2021, %2501 : vector<8x128xf32>
    %2503 = arith.addf %2499, %2502 : vector<8x128xf32>
    %c625 = arith.constant 625 : index
    %2504 = memref.load %arg1[%c625] : memref<749xf32, #tpu.memory_space<smem>>
    %2505 = vector.broadcast %2504 : f32 to vector<8x128xf32>
    %2506 = arith.mulf %2061, %2505 : vector<8x128xf32>
    %2507 = arith.addf %2503, %2506 : vector<8x128xf32>
    %c626 = arith.constant 626 : index
    %2508 = memref.load %arg1[%c626] : memref<749xf32, #tpu.memory_space<smem>>
    %2509 = vector.broadcast %2508 : f32 to vector<8x128xf32>
    %2510 = arith.mulf %2101, %2509 : vector<8x128xf32>
    %2511 = arith.addf %2507, %2510 : vector<8x128xf32>
    %c627 = arith.constant 627 : index
    %2512 = memref.load %arg1[%c627] : memref<749xf32, #tpu.memory_space<smem>>
    %2513 = vector.broadcast %2512 : f32 to vector<8x128xf32>
    %2514 = arith.mulf %2141, %2513 : vector<8x128xf32>
    %2515 = arith.addf %2511, %2514 : vector<8x128xf32>
    %c628 = arith.constant 628 : index
    %2516 = memref.load %arg1[%c628] : memref<749xf32, #tpu.memory_space<smem>>
    %2517 = vector.broadcast %2516 : f32 to vector<8x128xf32>
    %2518 = arith.mulf %2181, %2517 : vector<8x128xf32>
    %2519 = arith.addf %2515, %2518 : vector<8x128xf32>
    %c629 = arith.constant 629 : index
    %2520 = memref.load %arg1[%c629] : memref<749xf32, #tpu.memory_space<smem>>
    %2521 = vector.broadcast %2520 : f32 to vector<8x128xf32>
    %2522 = arith.mulf %2221, %2521 : vector<8x128xf32>
    %2523 = arith.addf %2519, %2522 : vector<8x128xf32>
    %cst_56 = arith.constant 0.000000e+00 : f32
    %2524 = vector.broadcast %cst_56 : f32 to vector<8x128xf32>
    %2525 = arith.maximumf %2523, %2524 : vector<8x128xf32>
    %c630 = arith.constant 630 : index
    %2526 = memref.load %arg1[%c630] : memref<749xf32, #tpu.memory_space<smem>>
    %2527 = vector.broadcast %2526 : f32 to vector<8x128xf32>
    %2528 = arith.mulf %1541, %2527 : vector<8x128xf32>
    %c724 = arith.constant 724 : index
    %2529 = memref.load %arg1[%c724] : memref<749xf32, #tpu.memory_space<smem>>
    %2530 = vector.broadcast %2529 : f32 to vector<8x128xf32>
    %2531 = arith.addf %2528, %2530 : vector<8x128xf32>
    %c631 = arith.constant 631 : index
    %2532 = memref.load %arg1[%c631] : memref<749xf32, #tpu.memory_space<smem>>
    %2533 = vector.broadcast %2532 : f32 to vector<8x128xf32>
    %2534 = arith.mulf %1581, %2533 : vector<8x128xf32>
    %2535 = arith.addf %2531, %2534 : vector<8x128xf32>
    %c632 = arith.constant 632 : index
    %2536 = memref.load %arg1[%c632] : memref<749xf32, #tpu.memory_space<smem>>
    %2537 = vector.broadcast %2536 : f32 to vector<8x128xf32>
    %2538 = arith.mulf %1621, %2537 : vector<8x128xf32>
    %2539 = arith.addf %2535, %2538 : vector<8x128xf32>
    %c633 = arith.constant 633 : index
    %2540 = memref.load %arg1[%c633] : memref<749xf32, #tpu.memory_space<smem>>
    %2541 = vector.broadcast %2540 : f32 to vector<8x128xf32>
    %2542 = arith.mulf %1661, %2541 : vector<8x128xf32>
    %2543 = arith.addf %2539, %2542 : vector<8x128xf32>
    %c634 = arith.constant 634 : index
    %2544 = memref.load %arg1[%c634] : memref<749xf32, #tpu.memory_space<smem>>
    %2545 = vector.broadcast %2544 : f32 to vector<8x128xf32>
    %2546 = arith.mulf %1701, %2545 : vector<8x128xf32>
    %2547 = arith.addf %2543, %2546 : vector<8x128xf32>
    %c635 = arith.constant 635 : index
    %2548 = memref.load %arg1[%c635] : memref<749xf32, #tpu.memory_space<smem>>
    %2549 = vector.broadcast %2548 : f32 to vector<8x128xf32>
    %2550 = arith.mulf %1741, %2549 : vector<8x128xf32>
    %2551 = arith.addf %2547, %2550 : vector<8x128xf32>
    %c636 = arith.constant 636 : index
    %2552 = memref.load %arg1[%c636] : memref<749xf32, #tpu.memory_space<smem>>
    %2553 = vector.broadcast %2552 : f32 to vector<8x128xf32>
    %2554 = arith.mulf %1781, %2553 : vector<8x128xf32>
    %2555 = arith.addf %2551, %2554 : vector<8x128xf32>
    %c637 = arith.constant 637 : index
    %2556 = memref.load %arg1[%c637] : memref<749xf32, #tpu.memory_space<smem>>
    %2557 = vector.broadcast %2556 : f32 to vector<8x128xf32>
    %2558 = arith.mulf %1821, %2557 : vector<8x128xf32>
    %2559 = arith.addf %2555, %2558 : vector<8x128xf32>
    %c638 = arith.constant 638 : index
    %2560 = memref.load %arg1[%c638] : memref<749xf32, #tpu.memory_space<smem>>
    %2561 = vector.broadcast %2560 : f32 to vector<8x128xf32>
    %2562 = arith.mulf %1861, %2561 : vector<8x128xf32>
    %2563 = arith.addf %2559, %2562 : vector<8x128xf32>
    %c639 = arith.constant 639 : index
    %2564 = memref.load %arg1[%c639] : memref<749xf32, #tpu.memory_space<smem>>
    %2565 = vector.broadcast %2564 : f32 to vector<8x128xf32>
    %2566 = arith.mulf %1901, %2565 : vector<8x128xf32>
    %2567 = arith.addf %2563, %2566 : vector<8x128xf32>
    %c640 = arith.constant 640 : index
    %2568 = memref.load %arg1[%c640] : memref<749xf32, #tpu.memory_space<smem>>
    %2569 = vector.broadcast %2568 : f32 to vector<8x128xf32>
    %2570 = arith.mulf %1941, %2569 : vector<8x128xf32>
    %2571 = arith.addf %2567, %2570 : vector<8x128xf32>
    %c641 = arith.constant 641 : index
    %2572 = memref.load %arg1[%c641] : memref<749xf32, #tpu.memory_space<smem>>
    %2573 = vector.broadcast %2572 : f32 to vector<8x128xf32>
    %2574 = arith.mulf %1981, %2573 : vector<8x128xf32>
    %2575 = arith.addf %2571, %2574 : vector<8x128xf32>
    %c642 = arith.constant 642 : index
    %2576 = memref.load %arg1[%c642] : memref<749xf32, #tpu.memory_space<smem>>
    %2577 = vector.broadcast %2576 : f32 to vector<8x128xf32>
    %2578 = arith.mulf %2021, %2577 : vector<8x128xf32>
    %2579 = arith.addf %2575, %2578 : vector<8x128xf32>
    %c643 = arith.constant 643 : index
    %2580 = memref.load %arg1[%c643] : memref<749xf32, #tpu.memory_space<smem>>
    %2581 = vector.broadcast %2580 : f32 to vector<8x128xf32>
    %2582 = arith.mulf %2061, %2581 : vector<8x128xf32>
    %2583 = arith.addf %2579, %2582 : vector<8x128xf32>
    %c644 = arith.constant 644 : index
    %2584 = memref.load %arg1[%c644] : memref<749xf32, #tpu.memory_space<smem>>
    %2585 = vector.broadcast %2584 : f32 to vector<8x128xf32>
    %2586 = arith.mulf %2101, %2585 : vector<8x128xf32>
    %2587 = arith.addf %2583, %2586 : vector<8x128xf32>
    %c645 = arith.constant 645 : index
    %2588 = memref.load %arg1[%c645] : memref<749xf32, #tpu.memory_space<smem>>
    %2589 = vector.broadcast %2588 : f32 to vector<8x128xf32>
    %2590 = arith.mulf %2141, %2589 : vector<8x128xf32>
    %2591 = arith.addf %2587, %2590 : vector<8x128xf32>
    %c646 = arith.constant 646 : index
    %2592 = memref.load %arg1[%c646] : memref<749xf32, #tpu.memory_space<smem>>
    %2593 = vector.broadcast %2592 : f32 to vector<8x128xf32>
    %2594 = arith.mulf %2181, %2593 : vector<8x128xf32>
    %2595 = arith.addf %2591, %2594 : vector<8x128xf32>
    %c647 = arith.constant 647 : index
    %2596 = memref.load %arg1[%c647] : memref<749xf32, #tpu.memory_space<smem>>
    %2597 = vector.broadcast %2596 : f32 to vector<8x128xf32>
    %2598 = arith.mulf %2221, %2597 : vector<8x128xf32>
    %2599 = arith.addf %2595, %2598 : vector<8x128xf32>
    %cst_57 = arith.constant 0.000000e+00 : f32
    %2600 = vector.broadcast %cst_57 : f32 to vector<8x128xf32>
    %2601 = arith.maximumf %2599, %2600 : vector<8x128xf32>
    %c648 = arith.constant 648 : index
    %2602 = memref.load %arg1[%c648] : memref<749xf32, #tpu.memory_space<smem>>
    %2603 = vector.broadcast %2602 : f32 to vector<8x128xf32>
    %2604 = arith.mulf %1541, %2603 : vector<8x128xf32>
    %c725 = arith.constant 725 : index
    %2605 = memref.load %arg1[%c725] : memref<749xf32, #tpu.memory_space<smem>>
    %2606 = vector.broadcast %2605 : f32 to vector<8x128xf32>
    %2607 = arith.addf %2604, %2606 : vector<8x128xf32>
    %c649 = arith.constant 649 : index
    %2608 = memref.load %arg1[%c649] : memref<749xf32, #tpu.memory_space<smem>>
    %2609 = vector.broadcast %2608 : f32 to vector<8x128xf32>
    %2610 = arith.mulf %1581, %2609 : vector<8x128xf32>
    %2611 = arith.addf %2607, %2610 : vector<8x128xf32>
    %c650 = arith.constant 650 : index
    %2612 = memref.load %arg1[%c650] : memref<749xf32, #tpu.memory_space<smem>>
    %2613 = vector.broadcast %2612 : f32 to vector<8x128xf32>
    %2614 = arith.mulf %1621, %2613 : vector<8x128xf32>
    %2615 = arith.addf %2611, %2614 : vector<8x128xf32>
    %c651 = arith.constant 651 : index
    %2616 = memref.load %arg1[%c651] : memref<749xf32, #tpu.memory_space<smem>>
    %2617 = vector.broadcast %2616 : f32 to vector<8x128xf32>
    %2618 = arith.mulf %1661, %2617 : vector<8x128xf32>
    %2619 = arith.addf %2615, %2618 : vector<8x128xf32>
    %c652 = arith.constant 652 : index
    %2620 = memref.load %arg1[%c652] : memref<749xf32, #tpu.memory_space<smem>>
    %2621 = vector.broadcast %2620 : f32 to vector<8x128xf32>
    %2622 = arith.mulf %1701, %2621 : vector<8x128xf32>
    %2623 = arith.addf %2619, %2622 : vector<8x128xf32>
    %c653 = arith.constant 653 : index
    %2624 = memref.load %arg1[%c653] : memref<749xf32, #tpu.memory_space<smem>>
    %2625 = vector.broadcast %2624 : f32 to vector<8x128xf32>
    %2626 = arith.mulf %1741, %2625 : vector<8x128xf32>
    %2627 = arith.addf %2623, %2626 : vector<8x128xf32>
    %c654 = arith.constant 654 : index
    %2628 = memref.load %arg1[%c654] : memref<749xf32, #tpu.memory_space<smem>>
    %2629 = vector.broadcast %2628 : f32 to vector<8x128xf32>
    %2630 = arith.mulf %1781, %2629 : vector<8x128xf32>
    %2631 = arith.addf %2627, %2630 : vector<8x128xf32>
    %c655 = arith.constant 655 : index
    %2632 = memref.load %arg1[%c655] : memref<749xf32, #tpu.memory_space<smem>>
    %2633 = vector.broadcast %2632 : f32 to vector<8x128xf32>
    %2634 = arith.mulf %1821, %2633 : vector<8x128xf32>
    %2635 = arith.addf %2631, %2634 : vector<8x128xf32>
    %c656 = arith.constant 656 : index
    %2636 = memref.load %arg1[%c656] : memref<749xf32, #tpu.memory_space<smem>>
    %2637 = vector.broadcast %2636 : f32 to vector<8x128xf32>
    %2638 = arith.mulf %1861, %2637 : vector<8x128xf32>
    %2639 = arith.addf %2635, %2638 : vector<8x128xf32>
    %c657 = arith.constant 657 : index
    %2640 = memref.load %arg1[%c657] : memref<749xf32, #tpu.memory_space<smem>>
    %2641 = vector.broadcast %2640 : f32 to vector<8x128xf32>
    %2642 = arith.mulf %1901, %2641 : vector<8x128xf32>
    %2643 = arith.addf %2639, %2642 : vector<8x128xf32>
    %c658 = arith.constant 658 : index
    %2644 = memref.load %arg1[%c658] : memref<749xf32, #tpu.memory_space<smem>>
    %2645 = vector.broadcast %2644 : f32 to vector<8x128xf32>
    %2646 = arith.mulf %1941, %2645 : vector<8x128xf32>
    %2647 = arith.addf %2643, %2646 : vector<8x128xf32>
    %c659 = arith.constant 659 : index
    %2648 = memref.load %arg1[%c659] : memref<749xf32, #tpu.memory_space<smem>>
    %2649 = vector.broadcast %2648 : f32 to vector<8x128xf32>
    %2650 = arith.mulf %1981, %2649 : vector<8x128xf32>
    %2651 = arith.addf %2647, %2650 : vector<8x128xf32>
    %c660 = arith.constant 660 : index
    %2652 = memref.load %arg1[%c660] : memref<749xf32, #tpu.memory_space<smem>>
    %2653 = vector.broadcast %2652 : f32 to vector<8x128xf32>
    %2654 = arith.mulf %2021, %2653 : vector<8x128xf32>
    %2655 = arith.addf %2651, %2654 : vector<8x128xf32>
    %c661 = arith.constant 661 : index
    %2656 = memref.load %arg1[%c661] : memref<749xf32, #tpu.memory_space<smem>>
    %2657 = vector.broadcast %2656 : f32 to vector<8x128xf32>
    %2658 = arith.mulf %2061, %2657 : vector<8x128xf32>
    %2659 = arith.addf %2655, %2658 : vector<8x128xf32>
    %c662 = arith.constant 662 : index
    %2660 = memref.load %arg1[%c662] : memref<749xf32, #tpu.memory_space<smem>>
    %2661 = vector.broadcast %2660 : f32 to vector<8x128xf32>
    %2662 = arith.mulf %2101, %2661 : vector<8x128xf32>
    %2663 = arith.addf %2659, %2662 : vector<8x128xf32>
    %c663 = arith.constant 663 : index
    %2664 = memref.load %arg1[%c663] : memref<749xf32, #tpu.memory_space<smem>>
    %2665 = vector.broadcast %2664 : f32 to vector<8x128xf32>
    %2666 = arith.mulf %2141, %2665 : vector<8x128xf32>
    %2667 = arith.addf %2663, %2666 : vector<8x128xf32>
    %c664 = arith.constant 664 : index
    %2668 = memref.load %arg1[%c664] : memref<749xf32, #tpu.memory_space<smem>>
    %2669 = vector.broadcast %2668 : f32 to vector<8x128xf32>
    %2670 = arith.mulf %2181, %2669 : vector<8x128xf32>
    %2671 = arith.addf %2667, %2670 : vector<8x128xf32>
    %c665 = arith.constant 665 : index
    %2672 = memref.load %arg1[%c665] : memref<749xf32, #tpu.memory_space<smem>>
    %2673 = vector.broadcast %2672 : f32 to vector<8x128xf32>
    %2674 = arith.mulf %2221, %2673 : vector<8x128xf32>
    %2675 = arith.addf %2671, %2674 : vector<8x128xf32>
    %cst_58 = arith.constant 0.000000e+00 : f32
    %2676 = vector.broadcast %cst_58 : f32 to vector<8x128xf32>
    %2677 = arith.maximumf %2675, %2676 : vector<8x128xf32>
    %c666 = arith.constant 666 : index
    %2678 = memref.load %arg1[%c666] : memref<749xf32, #tpu.memory_space<smem>>
    %2679 = vector.broadcast %2678 : f32 to vector<8x128xf32>
    %2680 = arith.mulf %1541, %2679 : vector<8x128xf32>
    %c726 = arith.constant 726 : index
    %2681 = memref.load %arg1[%c726] : memref<749xf32, #tpu.memory_space<smem>>
    %2682 = vector.broadcast %2681 : f32 to vector<8x128xf32>
    %2683 = arith.addf %2680, %2682 : vector<8x128xf32>
    %c667 = arith.constant 667 : index
    %2684 = memref.load %arg1[%c667] : memref<749xf32, #tpu.memory_space<smem>>
    %2685 = vector.broadcast %2684 : f32 to vector<8x128xf32>
    %2686 = arith.mulf %1581, %2685 : vector<8x128xf32>
    %2687 = arith.addf %2683, %2686 : vector<8x128xf32>
    %c668 = arith.constant 668 : index
    %2688 = memref.load %arg1[%c668] : memref<749xf32, #tpu.memory_space<smem>>
    %2689 = vector.broadcast %2688 : f32 to vector<8x128xf32>
    %2690 = arith.mulf %1621, %2689 : vector<8x128xf32>
    %2691 = arith.addf %2687, %2690 : vector<8x128xf32>
    %c669 = arith.constant 669 : index
    %2692 = memref.load %arg1[%c669] : memref<749xf32, #tpu.memory_space<smem>>
    %2693 = vector.broadcast %2692 : f32 to vector<8x128xf32>
    %2694 = arith.mulf %1661, %2693 : vector<8x128xf32>
    %2695 = arith.addf %2691, %2694 : vector<8x128xf32>
    %c670 = arith.constant 670 : index
    %2696 = memref.load %arg1[%c670] : memref<749xf32, #tpu.memory_space<smem>>
    %2697 = vector.broadcast %2696 : f32 to vector<8x128xf32>
    %2698 = arith.mulf %1701, %2697 : vector<8x128xf32>
    %2699 = arith.addf %2695, %2698 : vector<8x128xf32>
    %c671 = arith.constant 671 : index
    %2700 = memref.load %arg1[%c671] : memref<749xf32, #tpu.memory_space<smem>>
    %2701 = vector.broadcast %2700 : f32 to vector<8x128xf32>
    %2702 = arith.mulf %1741, %2701 : vector<8x128xf32>
    %2703 = arith.addf %2699, %2702 : vector<8x128xf32>
    %c672 = arith.constant 672 : index
    %2704 = memref.load %arg1[%c672] : memref<749xf32, #tpu.memory_space<smem>>
    %2705 = vector.broadcast %2704 : f32 to vector<8x128xf32>
    %2706 = arith.mulf %1781, %2705 : vector<8x128xf32>
    %2707 = arith.addf %2703, %2706 : vector<8x128xf32>
    %c673 = arith.constant 673 : index
    %2708 = memref.load %arg1[%c673] : memref<749xf32, #tpu.memory_space<smem>>
    %2709 = vector.broadcast %2708 : f32 to vector<8x128xf32>
    %2710 = arith.mulf %1821, %2709 : vector<8x128xf32>
    %2711 = arith.addf %2707, %2710 : vector<8x128xf32>
    %c674 = arith.constant 674 : index
    %2712 = memref.load %arg1[%c674] : memref<749xf32, #tpu.memory_space<smem>>
    %2713 = vector.broadcast %2712 : f32 to vector<8x128xf32>
    %2714 = arith.mulf %1861, %2713 : vector<8x128xf32>
    %2715 = arith.addf %2711, %2714 : vector<8x128xf32>
    %c675 = arith.constant 675 : index
    %2716 = memref.load %arg1[%c675] : memref<749xf32, #tpu.memory_space<smem>>
    %2717 = vector.broadcast %2716 : f32 to vector<8x128xf32>
    %2718 = arith.mulf %1901, %2717 : vector<8x128xf32>
    %2719 = arith.addf %2715, %2718 : vector<8x128xf32>
    %c676 = arith.constant 676 : index
    %2720 = memref.load %arg1[%c676] : memref<749xf32, #tpu.memory_space<smem>>
    %2721 = vector.broadcast %2720 : f32 to vector<8x128xf32>
    %2722 = arith.mulf %1941, %2721 : vector<8x128xf32>
    %2723 = arith.addf %2719, %2722 : vector<8x128xf32>
    %c677 = arith.constant 677 : index
    %2724 = memref.load %arg1[%c677] : memref<749xf32, #tpu.memory_space<smem>>
    %2725 = vector.broadcast %2724 : f32 to vector<8x128xf32>
    %2726 = arith.mulf %1981, %2725 : vector<8x128xf32>
    %2727 = arith.addf %2723, %2726 : vector<8x128xf32>
    %c678 = arith.constant 678 : index
    %2728 = memref.load %arg1[%c678] : memref<749xf32, #tpu.memory_space<smem>>
    %2729 = vector.broadcast %2728 : f32 to vector<8x128xf32>
    %2730 = arith.mulf %2021, %2729 : vector<8x128xf32>
    %2731 = arith.addf %2727, %2730 : vector<8x128xf32>
    %c679 = arith.constant 679 : index
    %2732 = memref.load %arg1[%c679] : memref<749xf32, #tpu.memory_space<smem>>
    %2733 = vector.broadcast %2732 : f32 to vector<8x128xf32>
    %2734 = arith.mulf %2061, %2733 : vector<8x128xf32>
    %2735 = arith.addf %2731, %2734 : vector<8x128xf32>
    %c680 = arith.constant 680 : index
    %2736 = memref.load %arg1[%c680] : memref<749xf32, #tpu.memory_space<smem>>
    %2737 = vector.broadcast %2736 : f32 to vector<8x128xf32>
    %2738 = arith.mulf %2101, %2737 : vector<8x128xf32>
    %2739 = arith.addf %2735, %2738 : vector<8x128xf32>
    %c681 = arith.constant 681 : index
    %2740 = memref.load %arg1[%c681] : memref<749xf32, #tpu.memory_space<smem>>
    %2741 = vector.broadcast %2740 : f32 to vector<8x128xf32>
    %2742 = arith.mulf %2141, %2741 : vector<8x128xf32>
    %2743 = arith.addf %2739, %2742 : vector<8x128xf32>
    %c682 = arith.constant 682 : index
    %2744 = memref.load %arg1[%c682] : memref<749xf32, #tpu.memory_space<smem>>
    %2745 = vector.broadcast %2744 : f32 to vector<8x128xf32>
    %2746 = arith.mulf %2181, %2745 : vector<8x128xf32>
    %2747 = arith.addf %2743, %2746 : vector<8x128xf32>
    %c683 = arith.constant 683 : index
    %2748 = memref.load %arg1[%c683] : memref<749xf32, #tpu.memory_space<smem>>
    %2749 = vector.broadcast %2748 : f32 to vector<8x128xf32>
    %2750 = arith.mulf %2221, %2749 : vector<8x128xf32>
    %2751 = arith.addf %2747, %2750 : vector<8x128xf32>
    %cst_59 = arith.constant 0.000000e+00 : f32
    %2752 = vector.broadcast %cst_59 : f32 to vector<8x128xf32>
    %2753 = arith.maximumf %2751, %2752 : vector<8x128xf32>
    %c684 = arith.constant 684 : index
    %2754 = memref.load %arg1[%c684] : memref<749xf32, #tpu.memory_space<smem>>
    %2755 = vector.broadcast %2754 : f32 to vector<8x128xf32>
    %2756 = arith.mulf %1541, %2755 : vector<8x128xf32>
    %c727 = arith.constant 727 : index
    %2757 = memref.load %arg1[%c727] : memref<749xf32, #tpu.memory_space<smem>>
    %2758 = vector.broadcast %2757 : f32 to vector<8x128xf32>
    %2759 = arith.addf %2756, %2758 : vector<8x128xf32>
    %c685 = arith.constant 685 : index
    %2760 = memref.load %arg1[%c685] : memref<749xf32, #tpu.memory_space<smem>>
    %2761 = vector.broadcast %2760 : f32 to vector<8x128xf32>
    %2762 = arith.mulf %1581, %2761 : vector<8x128xf32>
    %2763 = arith.addf %2759, %2762 : vector<8x128xf32>
    %c686 = arith.constant 686 : index
    %2764 = memref.load %arg1[%c686] : memref<749xf32, #tpu.memory_space<smem>>
    %2765 = vector.broadcast %2764 : f32 to vector<8x128xf32>
    %2766 = arith.mulf %1621, %2765 : vector<8x128xf32>
    %2767 = arith.addf %2763, %2766 : vector<8x128xf32>
    %c687 = arith.constant 687 : index
    %2768 = memref.load %arg1[%c687] : memref<749xf32, #tpu.memory_space<smem>>
    %2769 = vector.broadcast %2768 : f32 to vector<8x128xf32>
    %2770 = arith.mulf %1661, %2769 : vector<8x128xf32>
    %2771 = arith.addf %2767, %2770 : vector<8x128xf32>
    %c688 = arith.constant 688 : index
    %2772 = memref.load %arg1[%c688] : memref<749xf32, #tpu.memory_space<smem>>
    %2773 = vector.broadcast %2772 : f32 to vector<8x128xf32>
    %2774 = arith.mulf %1701, %2773 : vector<8x128xf32>
    %2775 = arith.addf %2771, %2774 : vector<8x128xf32>
    %c689 = arith.constant 689 : index
    %2776 = memref.load %arg1[%c689] : memref<749xf32, #tpu.memory_space<smem>>
    %2777 = vector.broadcast %2776 : f32 to vector<8x128xf32>
    %2778 = arith.mulf %1741, %2777 : vector<8x128xf32>
    %2779 = arith.addf %2775, %2778 : vector<8x128xf32>
    %c690 = arith.constant 690 : index
    %2780 = memref.load %arg1[%c690] : memref<749xf32, #tpu.memory_space<smem>>
    %2781 = vector.broadcast %2780 : f32 to vector<8x128xf32>
    %2782 = arith.mulf %1781, %2781 : vector<8x128xf32>
    %2783 = arith.addf %2779, %2782 : vector<8x128xf32>
    %c691 = arith.constant 691 : index
    %2784 = memref.load %arg1[%c691] : memref<749xf32, #tpu.memory_space<smem>>
    %2785 = vector.broadcast %2784 : f32 to vector<8x128xf32>
    %2786 = arith.mulf %1821, %2785 : vector<8x128xf32>
    %2787 = arith.addf %2783, %2786 : vector<8x128xf32>
    %c692 = arith.constant 692 : index
    %2788 = memref.load %arg1[%c692] : memref<749xf32, #tpu.memory_space<smem>>
    %2789 = vector.broadcast %2788 : f32 to vector<8x128xf32>
    %2790 = arith.mulf %1861, %2789 : vector<8x128xf32>
    %2791 = arith.addf %2787, %2790 : vector<8x128xf32>
    %c693 = arith.constant 693 : index
    %2792 = memref.load %arg1[%c693] : memref<749xf32, #tpu.memory_space<smem>>
    %2793 = vector.broadcast %2792 : f32 to vector<8x128xf32>
    %2794 = arith.mulf %1901, %2793 : vector<8x128xf32>
    %2795 = arith.addf %2791, %2794 : vector<8x128xf32>
    %c694 = arith.constant 694 : index
    %2796 = memref.load %arg1[%c694] : memref<749xf32, #tpu.memory_space<smem>>
    %2797 = vector.broadcast %2796 : f32 to vector<8x128xf32>
    %2798 = arith.mulf %1941, %2797 : vector<8x128xf32>
    %2799 = arith.addf %2795, %2798 : vector<8x128xf32>
    %c695 = arith.constant 695 : index
    %2800 = memref.load %arg1[%c695] : memref<749xf32, #tpu.memory_space<smem>>
    %2801 = vector.broadcast %2800 : f32 to vector<8x128xf32>
    %2802 = arith.mulf %1981, %2801 : vector<8x128xf32>
    %2803 = arith.addf %2799, %2802 : vector<8x128xf32>
    %c696 = arith.constant 696 : index
    %2804 = memref.load %arg1[%c696] : memref<749xf32, #tpu.memory_space<smem>>
    %2805 = vector.broadcast %2804 : f32 to vector<8x128xf32>
    %2806 = arith.mulf %2021, %2805 : vector<8x128xf32>
    %2807 = arith.addf %2803, %2806 : vector<8x128xf32>
    %c697 = arith.constant 697 : index
    %2808 = memref.load %arg1[%c697] : memref<749xf32, #tpu.memory_space<smem>>
    %2809 = vector.broadcast %2808 : f32 to vector<8x128xf32>
    %2810 = arith.mulf %2061, %2809 : vector<8x128xf32>
    %2811 = arith.addf %2807, %2810 : vector<8x128xf32>
    %c698 = arith.constant 698 : index
    %2812 = memref.load %arg1[%c698] : memref<749xf32, #tpu.memory_space<smem>>
    %2813 = vector.broadcast %2812 : f32 to vector<8x128xf32>
    %2814 = arith.mulf %2101, %2813 : vector<8x128xf32>
    %2815 = arith.addf %2811, %2814 : vector<8x128xf32>
    %c699 = arith.constant 699 : index
    %2816 = memref.load %arg1[%c699] : memref<749xf32, #tpu.memory_space<smem>>
    %2817 = vector.broadcast %2816 : f32 to vector<8x128xf32>
    %2818 = arith.mulf %2141, %2817 : vector<8x128xf32>
    %2819 = arith.addf %2815, %2818 : vector<8x128xf32>
    %c700 = arith.constant 700 : index
    %2820 = memref.load %arg1[%c700] : memref<749xf32, #tpu.memory_space<smem>>
    %2821 = vector.broadcast %2820 : f32 to vector<8x128xf32>
    %2822 = arith.mulf %2181, %2821 : vector<8x128xf32>
    %2823 = arith.addf %2819, %2822 : vector<8x128xf32>
    %c701 = arith.constant 701 : index
    %2824 = memref.load %arg1[%c701] : memref<749xf32, #tpu.memory_space<smem>>
    %2825 = vector.broadcast %2824 : f32 to vector<8x128xf32>
    %2826 = arith.mulf %2221, %2825 : vector<8x128xf32>
    %2827 = arith.addf %2823, %2826 : vector<8x128xf32>
    %cst_60 = arith.constant 0.000000e+00 : f32
    %2828 = vector.broadcast %cst_60 : f32 to vector<8x128xf32>
    %2829 = arith.maximumf %2827, %2828 : vector<8x128xf32>
    %c702 = arith.constant 702 : index
    %2830 = memref.load %arg1[%c702] : memref<749xf32, #tpu.memory_space<smem>>
    %2831 = vector.broadcast %2830 : f32 to vector<8x128xf32>
    %2832 = arith.mulf %1541, %2831 : vector<8x128xf32>
    %c728 = arith.constant 728 : index
    %2833 = memref.load %arg1[%c728] : memref<749xf32, #tpu.memory_space<smem>>
    %2834 = vector.broadcast %2833 : f32 to vector<8x128xf32>
    %2835 = arith.addf %2832, %2834 : vector<8x128xf32>
    %c703 = arith.constant 703 : index
    %2836 = memref.load %arg1[%c703] : memref<749xf32, #tpu.memory_space<smem>>
    %2837 = vector.broadcast %2836 : f32 to vector<8x128xf32>
    %2838 = arith.mulf %1581, %2837 : vector<8x128xf32>
    %2839 = arith.addf %2835, %2838 : vector<8x128xf32>
    %c704 = arith.constant 704 : index
    %2840 = memref.load %arg1[%c704] : memref<749xf32, #tpu.memory_space<smem>>
    %2841 = vector.broadcast %2840 : f32 to vector<8x128xf32>
    %2842 = arith.mulf %1621, %2841 : vector<8x128xf32>
    %2843 = arith.addf %2839, %2842 : vector<8x128xf32>
    %c705 = arith.constant 705 : index
    %2844 = memref.load %arg1[%c705] : memref<749xf32, #tpu.memory_space<smem>>
    %2845 = vector.broadcast %2844 : f32 to vector<8x128xf32>
    %2846 = arith.mulf %1661, %2845 : vector<8x128xf32>
    %2847 = arith.addf %2843, %2846 : vector<8x128xf32>
    %c706 = arith.constant 706 : index
    %2848 = memref.load %arg1[%c706] : memref<749xf32, #tpu.memory_space<smem>>
    %2849 = vector.broadcast %2848 : f32 to vector<8x128xf32>
    %2850 = arith.mulf %1701, %2849 : vector<8x128xf32>
    %2851 = arith.addf %2847, %2850 : vector<8x128xf32>
    %c707 = arith.constant 707 : index
    %2852 = memref.load %arg1[%c707] : memref<749xf32, #tpu.memory_space<smem>>
    %2853 = vector.broadcast %2852 : f32 to vector<8x128xf32>
    %2854 = arith.mulf %1741, %2853 : vector<8x128xf32>
    %2855 = arith.addf %2851, %2854 : vector<8x128xf32>
    %c708 = arith.constant 708 : index
    %2856 = memref.load %arg1[%c708] : memref<749xf32, #tpu.memory_space<smem>>
    %2857 = vector.broadcast %2856 : f32 to vector<8x128xf32>
    %2858 = arith.mulf %1781, %2857 : vector<8x128xf32>
    %2859 = arith.addf %2855, %2858 : vector<8x128xf32>
    %c709 = arith.constant 709 : index
    %2860 = memref.load %arg1[%c709] : memref<749xf32, #tpu.memory_space<smem>>
    %2861 = vector.broadcast %2860 : f32 to vector<8x128xf32>
    %2862 = arith.mulf %1821, %2861 : vector<8x128xf32>
    %2863 = arith.addf %2859, %2862 : vector<8x128xf32>
    %c710 = arith.constant 710 : index
    %2864 = memref.load %arg1[%c710] : memref<749xf32, #tpu.memory_space<smem>>
    %2865 = vector.broadcast %2864 : f32 to vector<8x128xf32>
    %2866 = arith.mulf %1861, %2865 : vector<8x128xf32>
    %2867 = arith.addf %2863, %2866 : vector<8x128xf32>
    %c711 = arith.constant 711 : index
    %2868 = memref.load %arg1[%c711] : memref<749xf32, #tpu.memory_space<smem>>
    %2869 = vector.broadcast %2868 : f32 to vector<8x128xf32>
    %2870 = arith.mulf %1901, %2869 : vector<8x128xf32>
    %2871 = arith.addf %2867, %2870 : vector<8x128xf32>
    %c712 = arith.constant 712 : index
    %2872 = memref.load %arg1[%c712] : memref<749xf32, #tpu.memory_space<smem>>
    %2873 = vector.broadcast %2872 : f32 to vector<8x128xf32>
    %2874 = arith.mulf %1941, %2873 : vector<8x128xf32>
    %2875 = arith.addf %2871, %2874 : vector<8x128xf32>
    %c713 = arith.constant 713 : index
    %2876 = memref.load %arg1[%c713] : memref<749xf32, #tpu.memory_space<smem>>
    %2877 = vector.broadcast %2876 : f32 to vector<8x128xf32>
    %2878 = arith.mulf %1981, %2877 : vector<8x128xf32>
    %2879 = arith.addf %2875, %2878 : vector<8x128xf32>
    %c714 = arith.constant 714 : index
    %2880 = memref.load %arg1[%c714] : memref<749xf32, #tpu.memory_space<smem>>
    %2881 = vector.broadcast %2880 : f32 to vector<8x128xf32>
    %2882 = arith.mulf %2021, %2881 : vector<8x128xf32>
    %2883 = arith.addf %2879, %2882 : vector<8x128xf32>
    %c715 = arith.constant 715 : index
    %2884 = memref.load %arg1[%c715] : memref<749xf32, #tpu.memory_space<smem>>
    %2885 = vector.broadcast %2884 : f32 to vector<8x128xf32>
    %2886 = arith.mulf %2061, %2885 : vector<8x128xf32>
    %2887 = arith.addf %2883, %2886 : vector<8x128xf32>
    %c716 = arith.constant 716 : index
    %2888 = memref.load %arg1[%c716] : memref<749xf32, #tpu.memory_space<smem>>
    %2889 = vector.broadcast %2888 : f32 to vector<8x128xf32>
    %2890 = arith.mulf %2101, %2889 : vector<8x128xf32>
    %2891 = arith.addf %2887, %2890 : vector<8x128xf32>
    %c717 = arith.constant 717 : index
    %2892 = memref.load %arg1[%c717] : memref<749xf32, #tpu.memory_space<smem>>
    %2893 = vector.broadcast %2892 : f32 to vector<8x128xf32>
    %2894 = arith.mulf %2141, %2893 : vector<8x128xf32>
    %2895 = arith.addf %2891, %2894 : vector<8x128xf32>
    %c718 = arith.constant 718 : index
    %2896 = memref.load %arg1[%c718] : memref<749xf32, #tpu.memory_space<smem>>
    %2897 = vector.broadcast %2896 : f32 to vector<8x128xf32>
    %2898 = arith.mulf %2181, %2897 : vector<8x128xf32>
    %2899 = arith.addf %2895, %2898 : vector<8x128xf32>
    %c719 = arith.constant 719 : index
    %2900 = memref.load %arg1[%c719] : memref<749xf32, #tpu.memory_space<smem>>
    %2901 = vector.broadcast %2900 : f32 to vector<8x128xf32>
    %2902 = arith.mulf %2221, %2901 : vector<8x128xf32>
    %2903 = arith.addf %2899, %2902 : vector<8x128xf32>
    %cst_61 = arith.constant 0.000000e+00 : f32
    %2904 = vector.broadcast %cst_61 : f32 to vector<8x128xf32>
    %2905 = arith.maximumf %2903, %2904 : vector<8x128xf32>
    %c729 = arith.constant 729 : index
    %2906 = memref.load %arg1[%c729] : memref<749xf32, #tpu.memory_space<smem>>
    %2907 = vector.broadcast %2906 : f32 to vector<8x128xf32>
    %2908 = arith.mulf %2297, %2907 : vector<8x128xf32>
    %c747 = arith.constant 747 : index
    %2909 = memref.load %arg1[%c747] : memref<749xf32, #tpu.memory_space<smem>>
    %2910 = vector.broadcast %2909 : f32 to vector<8x128xf32>
    %2911 = arith.addf %2908, %2910 : vector<8x128xf32>
    %c730 = arith.constant 730 : index
    %2912 = memref.load %arg1[%c730] : memref<749xf32, #tpu.memory_space<smem>>
    %2913 = vector.broadcast %2912 : f32 to vector<8x128xf32>
    %2914 = arith.mulf %2373, %2913 : vector<8x128xf32>
    %2915 = arith.addf %2911, %2914 : vector<8x128xf32>
    %c731 = arith.constant 731 : index
    %2916 = memref.load %arg1[%c731] : memref<749xf32, #tpu.memory_space<smem>>
    %2917 = vector.broadcast %2916 : f32 to vector<8x128xf32>
    %2918 = arith.mulf %2449, %2917 : vector<8x128xf32>
    %2919 = arith.addf %2915, %2918 : vector<8x128xf32>
    %c732 = arith.constant 732 : index
    %2920 = memref.load %arg1[%c732] : memref<749xf32, #tpu.memory_space<smem>>
    %2921 = vector.broadcast %2920 : f32 to vector<8x128xf32>
    %2922 = arith.mulf %2525, %2921 : vector<8x128xf32>
    %2923 = arith.addf %2919, %2922 : vector<8x128xf32>
    %c733 = arith.constant 733 : index
    %2924 = memref.load %arg1[%c733] : memref<749xf32, #tpu.memory_space<smem>>
    %2925 = vector.broadcast %2924 : f32 to vector<8x128xf32>
    %2926 = arith.mulf %2601, %2925 : vector<8x128xf32>
    %2927 = arith.addf %2923, %2926 : vector<8x128xf32>
    %c734 = arith.constant 734 : index
    %2928 = memref.load %arg1[%c734] : memref<749xf32, #tpu.memory_space<smem>>
    %2929 = vector.broadcast %2928 : f32 to vector<8x128xf32>
    %2930 = arith.mulf %2677, %2929 : vector<8x128xf32>
    %2931 = arith.addf %2927, %2930 : vector<8x128xf32>
    %c735 = arith.constant 735 : index
    %2932 = memref.load %arg1[%c735] : memref<749xf32, #tpu.memory_space<smem>>
    %2933 = vector.broadcast %2932 : f32 to vector<8x128xf32>
    %2934 = arith.mulf %2753, %2933 : vector<8x128xf32>
    %2935 = arith.addf %2931, %2934 : vector<8x128xf32>
    %c736 = arith.constant 736 : index
    %2936 = memref.load %arg1[%c736] : memref<749xf32, #tpu.memory_space<smem>>
    %2937 = vector.broadcast %2936 : f32 to vector<8x128xf32>
    %2938 = arith.mulf %2829, %2937 : vector<8x128xf32>
    %2939 = arith.addf %2935, %2938 : vector<8x128xf32>
    %c737 = arith.constant 737 : index
    %2940 = memref.load %arg1[%c737] : memref<749xf32, #tpu.memory_space<smem>>
    %2941 = vector.broadcast %2940 : f32 to vector<8x128xf32>
    %2942 = arith.mulf %2905, %2941 : vector<8x128xf32>
    %2943 = arith.addf %2939, %2942 : vector<8x128xf32>
    %c738 = arith.constant 738 : index
    %2944 = memref.load %arg1[%c738] : memref<749xf32, #tpu.memory_space<smem>>
    %2945 = vector.broadcast %2944 : f32 to vector<8x128xf32>
    %2946 = arith.mulf %2297, %2945 : vector<8x128xf32>
    %c748 = arith.constant 748 : index
    %2947 = memref.load %arg1[%c748] : memref<749xf32, #tpu.memory_space<smem>>
    %2948 = vector.broadcast %2947 : f32 to vector<8x128xf32>
    %2949 = arith.addf %2946, %2948 : vector<8x128xf32>
    %c739 = arith.constant 739 : index
    %2950 = memref.load %arg1[%c739] : memref<749xf32, #tpu.memory_space<smem>>
    %2951 = vector.broadcast %2950 : f32 to vector<8x128xf32>
    %2952 = arith.mulf %2373, %2951 : vector<8x128xf32>
    %2953 = arith.addf %2949, %2952 : vector<8x128xf32>
    %c740 = arith.constant 740 : index
    %2954 = memref.load %arg1[%c740] : memref<749xf32, #tpu.memory_space<smem>>
    %2955 = vector.broadcast %2954 : f32 to vector<8x128xf32>
    %2956 = arith.mulf %2449, %2955 : vector<8x128xf32>
    %2957 = arith.addf %2953, %2956 : vector<8x128xf32>
    %c741 = arith.constant 741 : index
    %2958 = memref.load %arg1[%c741] : memref<749xf32, #tpu.memory_space<smem>>
    %2959 = vector.broadcast %2958 : f32 to vector<8x128xf32>
    %2960 = arith.mulf %2525, %2959 : vector<8x128xf32>
    %2961 = arith.addf %2957, %2960 : vector<8x128xf32>
    %c742 = arith.constant 742 : index
    %2962 = memref.load %arg1[%c742] : memref<749xf32, #tpu.memory_space<smem>>
    %2963 = vector.broadcast %2962 : f32 to vector<8x128xf32>
    %2964 = arith.mulf %2601, %2963 : vector<8x128xf32>
    %2965 = arith.addf %2961, %2964 : vector<8x128xf32>
    %c743 = arith.constant 743 : index
    %2966 = memref.load %arg1[%c743] : memref<749xf32, #tpu.memory_space<smem>>
    %2967 = vector.broadcast %2966 : f32 to vector<8x128xf32>
    %2968 = arith.mulf %2677, %2967 : vector<8x128xf32>
    %2969 = arith.addf %2965, %2968 : vector<8x128xf32>
    %c744 = arith.constant 744 : index
    %2970 = memref.load %arg1[%c744] : memref<749xf32, #tpu.memory_space<smem>>
    %2971 = vector.broadcast %2970 : f32 to vector<8x128xf32>
    %2972 = arith.mulf %2753, %2971 : vector<8x128xf32>
    %2973 = arith.addf %2969, %2972 : vector<8x128xf32>
    %c745 = arith.constant 745 : index
    %2974 = memref.load %arg1[%c745] : memref<749xf32, #tpu.memory_space<smem>>
    %2975 = vector.broadcast %2974 : f32 to vector<8x128xf32>
    %2976 = arith.mulf %2829, %2975 : vector<8x128xf32>
    %2977 = arith.addf %2973, %2976 : vector<8x128xf32>
    %c746 = arith.constant 746 : index
    %2978 = memref.load %arg1[%c746] : memref<749xf32, #tpu.memory_space<smem>>
    %2979 = vector.broadcast %2978 : f32 to vector<8x128xf32>
    %2980 = arith.mulf %2905, %2979 : vector<8x128xf32>
    %2981 = arith.addf %2977, %2980 : vector<8x128xf32>
    %c0_62 = arith.constant 0 : index
    %c0_63 = arith.constant 0 : index
    %2982 = arith.index_cast %1 : i32 to index
    %c0_64 = arith.constant 0 : index
    %c0_65 = arith.constant 0 : index
    %2983 = vector.load %arg3[%c0_62, %c0_63, %2982, %c0_64, %c0_65] : memref<2x1x1x8x128xf32, #tpu.memory_space<vmem>>, vector<1x1x1x8x128xf32>
    %2984 = vector.shape_cast %2983 : vector<1x1x1x8x128xf32> to vector<8x128xf32>
    %2985 = vector.shape_cast %2943 : vector<8x128xf32> to vector<1x1x1x8x128xf32>
    tpu.vector_store %arg3[%c0_62, %c0_63, %2982, %c0_64, %c0_65], %2985 {strides = array<i32>} : memref<2x1x1x8x128xf32, #tpu.memory_space<vmem>>, vector<1x1x1x8x128xf32>,
    %c1_66 = arith.constant 1 : index
    %c0_67 = arith.constant 0 : index
    %2986 = arith.index_cast %1 : i32 to index
    %c0_68 = arith.constant 0 : index
    %c0_69 = arith.constant 0 : index
    %2987 = vector.load %arg3[%c1_66, %c0_67, %2986, %c0_68, %c0_69] : memref<2x1x1x8x128xf32, #tpu.memory_space<vmem>>, vector<1x1x1x8x128xf32>
    %2988 = vector.shape_cast %2987 : vector<1x1x1x8x128xf32> to vector<8x128xf32>
    %2989 = vector.shape_cast %2981 : vector<8x128xf32> to vector<1x1x1x8x128xf32>
    tpu.vector_store %arg3[%c1_66, %c0_67, %2986, %c0_68, %c0_69], %2989 {strides = array<i32>} : memref<2x1x1x8x128xf32, #tpu.memory_space<vmem>>, vector<1x1x1x8x128xf32>,
    %c1_i32_70 = arith.constant 1 : i32
    return
  }
  func.func @transform_0(%arg0: i32) -> i32 {
    %c0_i32 = arith.constant 0 : i32
    %c0_i32_0 = arith.constant 0 : i32
    return %c0_i32 : i32
  }
  func.func @transform_1(%arg0: i32) -> (i32, i32, i32, i32, i32) {
    %c0_i32 = arith.constant 0 : i32
    %c0_i32_0 = arith.constant 0 : i32
    %c0_i32_1 = arith.constant 0 : i32
    %c0_i32_2 = arith.constant 0 : i32
    %c0_i32_3 = arith.constant 0 : i32
    return %c0_i32, %arg0, %c0_i32_0, %c0_i32_1, %c0_i32_2 : i32, i32, i32, i32, i32
  }
  func.func @transform_2(%arg0: i32) -> (i32, i32, i32, i32, i32) {
    %c0_i32 = arith.constant 0 : i32
    %c0_i32_0 = arith.constant 0 : i32
    %c0_i32_1 = arith.constant 0 : i32
    %c0_i32_2 = arith.constant 0 : i32
    %c0_i32_3 = arith.constant 0 : i32
    return %c0_i32, %arg0, %c0_i32_0, %c0_i32_1, %c0_i32_2 : i32, i32, i32, i32, i32
  }
}

</mosaic_0001>

<llo_original>
// kernel: tpu_custom_call.1
$region0: #{tpu_custom_call.1}
  #allocation0 [shape = 'u32[]', space=smem, size = 0x4, offset = 0x4, fixed_abs, tag = 'smem constant byte address 0x4 - core index']
  #allocation1 [shape = 'u32[72,128]{1,0:T(1,128)}', space=vmem, size = 0x9000, scoped, tag = 'internal scratch']
  %s0 = inlined_call_operand.hbm [shape: f32[749], index: 0, kind: input, shape index: {}]
  %s1 = inlined_call_operand.hbm [shape: f32[2,2,1,8,128], index: 1, kind: input, shape index: {}]
  %s2 = inlined_call_operand.hbm [shape: f32[2,2,1,8,128], index: 2, kind: output, shape index: {}]
  %s3 = sld [smem:[#allocation0]]
  $region49: #{tpu_custom_call.1} parent=0
    _
  %s5 = ssub.s32 1, %s3
  %s6 = scalar_select 0, %s5, %s3
  $region1: #{tpu_custom_call.1} parent=0
    #allocation2 [shape = 'u8[3072]{0}', space=smem, size = 0xc00, scoped, tag = 'input window, operand 0, single buffered']
    #allocation3 [shape = 's32[2]{0}', space=sflag, size = 0x8, scoped, tag = 'scoped memory for tpu_custom_call.1']
    #allocation4 [shape = 's32[2]{0}', space=sflag, size = 0x8, scoped, tag = 'scoped memory for tpu_custom_call.1']
    #allocation5 [shape = 's32[2]{0}', space=sflag, size = 0x8, scoped, tag = 'scoped memory for tpu_custom_call.1']
    #allocation6 [shape = 'u8[16384]{0}', space=vmem, size = 0x4000, scoped, tag = 'input window, operand 1']
    #allocation7 [shape = 'u8[16384]{0}', space=vmem, size = 0x4000, scoped, tag = 'output window, operand 0']
    %7 = vsyncpa [#allocation5], 0
    %8 = vsyncpa [#allocation3], 0
    %s9 = scalar_lea.sflag [#allocation3], 1
    %10 = vsyncpa %s9, 0
    %11 = vsyncpa [#allocation4], 0
    %s12 = scalar_lea.sflag [#allocation4], 1
    %13 = vsyncpa %s12, 0
    loop: start=0, step=1, limit=4
    $region2: #{tpu_custom_call.1} parent=1 // loop_pre_header
      _
    $region3: #{tpu_custom_call.1} parent=1 // loop_header
      %s15 = sphi 0, %s19
      %p16 = scmp.ge.s32.totalorder %s15, 4
      %s23 = sphi 0, %s23
      %s25 = sphi 0, %s23
      %s26 = sphi 0, %s25
      %s40 = sphi 0, %s26
      %s46 = sphi 0, %s48
      %s49 = sphi 0, %s46
      %s50 = sphi 0, %s49
      %s66 = sphi 0, %s50
      %s72 = sphi 0, %s74
      %s75 = sphi 0, %s72
      %s76 = sphi 0, %s75
      %s92 = sphi 0, %s76
    $region4: #{tpu_custom_call.1} parent=1 // loop_header_branch
      %18 = sbr.rel (%p16) target = $region8
    $region5: #{tpu_custom_call.1} parent=1 // loop_body
      %s20 = ssub.s32 %s15, 1
      %s21 = ssub.s32 %s15, 2
      %s22 = sadd.s32 %s15, 1
      %s24 = sadd.s32 %s23, 1
      %p27 = scmp.eq.s32.totalorder %s15, 1
      %p28 = scmp.ne.s32.totalorder %s23, %s25
      %p29 = scmp.eq.s32.totalorder %s15, 0
      %p30 = por %p28, %p29
      %p31 = scmp.ne.s32.totalorder %s23, %s25
      %p32 = scmp.eq.s32.totalorder %s20, 1
      %p33 = por %p31, %p32
      %p34 = scmp.ne.s32.totalorder %s25, %s26
      %p35 = scmp.eq.s32.totalorder %s20, 0
      %p36 = por %p34, %p35
      %p37 = scmp.ne.s32.totalorder %s25, %s26
      %p38 = scmp.eq.s32.totalorder %s21, 1
      %p39 = por %p37, %p38
      %p41 = scmp.ne.s32.totalorder %s26, %s40
      %p42 = scmp.eq.s32.totalorder %s21, 0
      %p43 = por %p41, %p42
      %s44 = ssub.s32 %s15, %s22
      %p45 = scmp.eq.s32.totalorder %s44, 0
      %s47 = sadd.s32 %s46, 1
      %s48 = scalar_select %p45, %s46, %s47
      %p51 = pneg %p45
      %p52 = scmp.eq.s32.totalorder %s15, 1
      %p53 = por %p51, %p52
      %p54 = scmp.ne.s32.totalorder %s46, %s49
      %p55 = scmp.eq.s32.totalorder %s15, 0
      %p56 = por %p54, %p55
      %p57 = scmp.ne.s32.totalorder %s46, %s49
      %p58 = scmp.eq.s32.totalorder %s20, 1
      %p59 = por %p57, %p58
      %p60 = scmp.ne.s32.totalorder %s49, %s50
      %p61 = scmp.eq.s32.totalorder %s20, 0
      %p62 = por %p60, %p61
      %p63 = scmp.ne.s32.totalorder %s49, %s50
      %p64 = scmp.eq.s32.totalorder %s21, 1
      %p65 = por %p63, %p64
      %p67 = scmp.ne.s32.totalorder %s50, %s66
      %p68 = scmp.eq.s32.totalorder %s21, 0
      %p69 = por %p67, %p68
      %s70 = ssub.s32 %s15, %s22
      %p71 = scmp.eq.s32.totalorder %s70, 0
      %s73 = sadd.s32 %s72, 1
      %s74 = scalar_select %p71, %s72, %s73
      %p77 = pneg %p71
      %p78 = scmp.eq.s32.totalorder %s15, 1
      %p79 = por %p77, %p78
      %p80 = scmp.ne.s32.totalorder %s72, %s75
      %p81 = scmp.eq.s32.totalorder %s15, 0
      %p82 = por %p80, %p81
      %p83 = scmp.ne.s32.totalorder %s72, %s75
      %p84 = scmp.eq.s32.totalorder %s20, 1
      %p85 = por %p83, %p84
      %p86 = scmp.ne.s32.totalorder %s75, %s76
      %p87 = scmp.eq.s32.totalorder %s20, 0
      %p88 = por %p86, %p87
      %p89 = scmp.ne.s32.totalorder %s75, %s76
      %p90 = scmp.eq.s32.totalorder %s21, 1
      %p91 = por %p89, %p90
      %p93 = scmp.ne.s32.totalorder %s76, %s92
      %p94 = scmp.eq.s32.totalorder %s21, 0
      %p95 = por %p93, %p94
      %p96 = scmp.le.s32.totalorder 1, %s15
      %p97 = scmp.lt.s32.totalorder %s15, 3
      %p98 = pnand %p96, %p97
      %p99 = pneg %p98
      // Predicated region
      $region9: #{tpu_custom_call.1} parent=5 // pred_check
        _
      $region10: #{tpu_custom_call.1} parent=5 // pred_check_branch
        %101 = sbr.rel (%p98) target = $region12
      $region11: #{tpu_custom_call.1} parent=5 // pred_region
        %s102 = ssub.s32 %s15, 1
        // Predicated region
        $region13: #{tpu_custom_call.1} parent=11 // pred_check
          %p103 = pneg %p36
        $region14: #{tpu_custom_call.1} parent=11 // pred_check_branch
          %105 = sbr.rel (%p103) target = $region16
        $region15: #{tpu_custom_call.1} parent=11 // pred_region
          %107 = vsyncadd [#allocation5], 0
          %s109 = sshll.u32 %s0, 4
          %s110 = int_to_ptr.hbm [resolvable:$true] %s109
          %112 = dma.hbm_to_smem %s110, 96, [#allocation2], [#allocation5]
        $region16: #{tpu_custom_call.1} parent=11 // pred_fallthru
          _
      $region12: #{tpu_custom_call.1} parent=5 // pred_fallthru
        _
      %p113 = scmp.lt.s32.totalorder %s15, 2
      // Predicated region
      $region17: #{tpu_custom_call.1} parent=5 // pred_check
        %p114 = pneg %p113
      $region18: #{tpu_custom_call.1} parent=5 // pred_check_branch
        %116 = sbr.rel (%p114) target = $region20
      $region19: #{tpu_custom_call.1} parent=5 // pred_region
        // Predicated region
        $region21: #{tpu_custom_call.1} parent=19 // pred_check
          %p117 = pneg %p56
        $region22: #{tpu_custom_call.1} parent=19 // pred_check_branch
          %119 = sbr.rel (%p117) target = $region24
        $region23: #{tpu_custom_call.1} parent=19 // pred_region
          %s120 = sand.u32 %s46, 1
          %s121 = scalar_lea.sflag [#allocation3], %s120
          %s122 = sand.u32 %s46, 1
          %s123 = smul.addr %s122, 16
          %s124 = scalar_lea.vmem [#allocation6], %s123
          %126 = vsyncadd %s121, 0
          %s127 = smul.addr %s15, 8
          %s128 = scalar_lea.hbm %s1, %s127
          %s129 = sshll.u32 %s128, 4
          %s130 = int_to_ptr.hbm [resolvable:$true] %s129
          %s131 = sshll.u32 %s124, 4
          %s132 = int_to_ptr.vmem [resolvable:$true] %s131
          %137 = dma.hbm_to_vmem [thread:$0]  %s130, 256, %s132, %s121, 256, 128, 8
        $region24: #{tpu_custom_call.1} parent=19 // pred_fallthru
          _
      $region20: #{tpu_custom_call.1} parent=5 // pred_fallthru
        _
      %p138 = scmp.le.s32.totalorder 1, %s15
      %p139 = scmp.lt.s32.totalorder %s15, 3
      %p140 = pnand %p138, %p139
      %p141 = pneg %p140
      // Predicated region
      $region25: #{tpu_custom_call.1} parent=5 // pred_check
        _
      $region26: #{tpu_custom_call.1} parent=5 // pred_check_branch
        %143 = sbr.rel (%p140) target = $region28
      $region27: #{tpu_custom_call.1} parent=5 // pred_region
        %s144 = ssub.s32 %s15, 1
        // Predicated region
        $region29: #{tpu_custom_call.1} parent=27 // pred_check
          %p145 = pneg %p36
        $region30: #{tpu_custom_call.1} parent=27 // pred_check_branch
          %147 = sbr.rel (%p145) target = $region32
        $region31: #{tpu_custom_call.1} parent=27 // pred_region
          %149 = dma.done [#allocation5], 96
        $region32: #{tpu_custom_call.1} parent=27 // pred_fallthru
          _
        %s150 = sand.u32 %s49, 1
        %s151 = scalar_lea.sflag [#allocation3], %s150
        %s152 = sand.u32 %s49, 1
        %s153 = smul.addr %s152, 16
        %s154 = scalar_lea.vmem [#allocation6], %s153
        // Predicated region
        $region33: #{tpu_custom_call.1} parent=27 // pred_check
          %p155 = pneg %p62
        $region34: #{tpu_custom_call.1} parent=27 // pred_check_branch
          %157 = sbr.rel (%p155) target = $region36
        $region35: #{tpu_custom_call.1} parent=27 // pred_region
          %159 = dma.done %s151, 256
        $region36: #{tpu_custom_call.1} parent=27 // pred_fallthru
          _
        %160 = sfence
        %p161 = pneg %p36
        %p162 = pneg %p33
        %s163 = sand.u32 %s49, 1
        %s164 = scalar_lea.sflag [#allocation3], %s163
        %s165 = sand.u32 %s49, 1
        %s166 = smul.addr %s165, 16
        %s167 = scalar_lea.vmem [#allocation6], %s166
        %p168 = pneg %p62
        %p169 = pneg %p59
        %p170 = pneg %p88
        %p171 = pneg %p85
        %s172 = sand.u32 %s75, 1
        %s173 = scalar_lea.sflag [#allocation4], %s172
        %s174 = sand.u32 %s75, 1
        %s175 = smul.addr %s174, 16
        %s176 = scalar_lea.vmem [#allocation7], %s175
        %v177 = vld [vmem:[%s154] sm:$0xff]
        %s178 = scalar_lea.vmem %s154, 8 [#allocation6]
        %v179 = vld [vmem:[%s178] sm:$0xff]
        %s180 = sld [smem:[#allocation2]]
        %v181 = vstv %s180
        %v182 = vmul.f32 %v177, %v181
        %s183 = sld [smem:[#allocation2 + $0x12]]
        %v184 = vstv %s183
        %v185 = vadd.f32 %v182, %v184
        %s186 = sld [smem:[#allocation2 + $0x1]]
        %v187 = vstv %s186
        %v188 = vmul.f32 %v179, %v187
        %v189 = vadd.f32 %v185, %v188
        %v190 = vmax.f32 %v189, 0.0
        %s191 = sld [smem:[#allocation2 + $0x2]]
        %v192 = vstv %s191
        %v193 = vmul.f32 %v177, %v192
        %s194 = sld [smem:[#allocation2 + $0x13]]
        %v195 = vstv %s194
        %v196 = vadd.f32 %v193, %v195
        %s197 = sld [smem:[#allocation2 + $0x3]]
        %v198 = vstv %s197
        %v199 = vmul.f32 %v179, %v198
        %v200 = vadd.f32 %v196, %v199
        %v201 = vmax.f32 %v200, 0.0
        %s202 = sld [smem:[#allocation2 + $0x4]]
        %v203 = vstv %s202
        %v204 = vmul.f32 %v177, %v203
        %s205 = sld [smem:[#allocation2 + $0x14]]
        %v206 = vstv %s205
        %v207 = vadd.f32 %v204, %v206
        %s208 = sld [smem:[#allocation2 + $0x5]]
        %v209 = vstv %s208
        %v210 = vmul.f32 %v179, %v209
        %v211 = vadd.f32 %v207, %v210
        %v212 = vmax.f32 %v211, 0.0
        %s213 = sld [smem:[#allocation2 + $0x6]]
        %v214 = vstv %s213
        %v215 = vmul.f32 %v177, %v214
        %s216 = sld [smem:[#allocation2 + $0x15]]
        %v217 = vstv %s216
        %v218 = vadd.f32 %v215, %v217
        %s219 = sld [smem:[#allocation2 + $0x7]]
        %v220 = vstv %s219
        %v221 = vmul.f32 %v179, %v220
        %v222 = vadd.f32 %v218, %v221
        %v223 = vmax.f32 %v222, 0.0
        %s224 = sld [smem:[#allocation2 + $0x8]]
        %v225 = vstv %s224
        %v226 = vmul.f32 %v177, %v225
        %s227 = sld [smem:[#allocation2 + $0x16]]
        %v228 = vstv %s227
        %v229 = vadd.f32 %v226, %v228
        %s230 = sld [smem:[#allocation2 + $0x9]]
        %v231 = vstv %s230
        %v232 = vmul.f32 %v179, %v231
        %v233 = vadd.f32 %v229, %v232
        %v234 = vmax.f32 %v233, 0.0
        %s235 = sld [smem:[#allocation2 + $0xa]]
        %v236 = vstv %s235
        %v237 = vmul.f32 %v177, %v236
        %s238 = sld [smem:[#allocation2 + $0x17]]
        %v239 = vstv %s238
        %v240 = vadd.f32 %v237, %v239
        %s241 = sld [smem:[#allocation2 + $0xb]]
        %v242 = vstv %s241
        %v243 = vmul.f32 %v179, %v242
        %v244 = vadd.f32 %v240, %v243
        %v245 = vmax.f32 %v244, 0.0
        %s246 = sld [smem:[#allocation2 + $0xc]]
        %v247 = vstv %s246
        %v248 = vmul.f32 %v177, %v247
        %s249 = sld [smem:[#allocation2 + $0x18]]
        %v250 = vstv %s249
        %v251 = vadd.f32 %v248, %v250
        %s252 = sld [smem:[#allocation2 + $0xd]]
        %v253 = vstv %s252
        %v254 = vmul.f32 %v179, %v253
        %v255 = vadd.f32 %v251, %v254
        %v256 = vmax.f32 %v255, 0.0
        %s257 = sld [smem:[#allocation2 + $0xe]]
        %v258 = vstv %s257
        %v259 = vmul.f32 %v177, %v258
        %s260 = sld [smem:[#allocation2 + $0x19]]
        %v261 = vstv %s260
        %v262 = vadd.f32 %v259, %v261
        %s263 = sld [smem:[#allocation2 + $0xf]]
        %v264 = vstv %s263
        %v265 = vmul.f32 %v179, %v264
        %v266 = vadd.f32 %v262, %v265
        %v267 = vmax.f32 %v266, 0.0
        %s268 = sld [smem:[#allocation2 + $0x10]]
        %v269 = vstv %s268
        %v270 = vmul.f32 %v177, %v269
        %s271 = sld [smem:[#allocation2 + $0x1a]]
        %v272 = vstv %s271
        %v273 = vadd.f32 %v270, %v272
        %s274 = sld [smem:[#allocation2 + $0x11]]
        %v275 = vstv %s274
        %v276 = vmul.f32 %v179, %v275
        %v277 = vadd.f32 %v273, %v276
        %v278 = vmax.f32 %v277, 0.0
        %s279 = sld [smem:[#allocation2 + $0x1b]]
        %v280 = vstv %s279
        %v281 = vmul.f32 %v190, %v280
        %s282 = sld [smem:[#allocation2 + $0xbd]]
        %v283 = vstv %s282
        %v284 = vadd.f32 %v281, %v283
        %s285 = sld [smem:[#allocation2 + $0x1c]]
        %v286 = vstv %s285
        %v287 = vmul.f32 %v201, %v286
        %v288 = vadd.f32 %v284, %v287
        %s289 = sld [smem:[#allocation2 + $0x1d]]
        %v290 = vstv %s289
        %v291 = vmul.f32 %v212, %v290
        %v292 = vadd.f32 %v288, %v291
        %s293 = sld [smem:[#allocation2 + $0x1e]]
        %v294 = vstv %s293
        %v295 = vmul.f32 %v223, %v294
        %v296 = vadd.f32 %v292, %v295
        %s297 = sld [smem:[#allocation2 + $0x1f]]
        %v298 = vstv %s297
        %v299 = vmul.f32 %v234, %v298
        %v300 = vadd.f32 %v296, %v299
        %s301 = sld [smem:[#allocation2 + $0x20]]
        %v302 = vstv %s301
        %v303 = vmul.f32 %v245, %v302
        %v304 = vadd.f32 %v300, %v303
        %s305 = sld [smem:[#allocation2 + $0x21]]
        %v306 = vstv %s305
        %v307 = vmul.f32 %v256, %v306
        %v308 = vadd.f32 %v304, %v307
        %s309 = sld [smem:[#allocation2 + $0x22]]
        %v310 = vstv %s309
        %v311 = vmul.f32 %v267, %v310
        %v312 = vadd.f32 %v308, %v311
        %s313 = sld [smem:[#allocation2 + $0x23]]
        %v314 = vstv %s313
        %v315 = vmul.f32 %v278, %v314
        %v316 = vadd.f32 %v312, %v315
        %v317 = vmax.f32 %v316, 0.0
        %s318 = sld [smem:[#allocation2 + $0x24]]
        %v319 = vstv %s318
        %v320 = vmul.f32 %v190, %v319
        %s321 = sld [smem:[#allocation2 + $0xbe]]
        %v322 = vstv %s321
        %v323 = vadd.f32 %v320, %v322
        %s324 = sld [smem:[#allocation2 + $0x25]]
        %v325 = vstv %s324
        %v326 = vmul.f32 %v201, %v325
        %v327 = vadd.f32 %v323, %v326
        %s328 = sld [smem:[#allocation2 + $0x26]]
        %v329 = vstv %s328
        %v330 = vmul.f32 %v212, %v329
        %v331 = vadd.f32 %v327, %v330
        %s332 = sld [smem:[#allocation2 + $0x27]]
        %v333 = vstv %s332
        %v334 = vmul.f32 %v223, %v333
        %v335 = vadd.f32 %v331, %v334
        %s336 = sld [smem:[#allocation2 + $0x28]]
        %v337 = vstv %s336
        %v338 = vmul.f32 %v234, %v337
        %v339 = vadd.f32 %v335, %v338
        %s340 = sld [smem:[#allocation2 + $0x29]]
        %v341 = vstv %s340
        %v342 = vmul.f32 %v245, %v341
        %v343 = vadd.f32 %v339, %v342
        %s344 = sld [smem:[#allocation2 + $0x2a]]
        %v345 = vstv %s344
        %v346 = vmul.f32 %v256, %v345
        %v347 = vadd.f32 %v343, %v346
        %s348 = sld [smem:[#allocation2 + $0x2b]]
        %v349 = vstv %s348
        %v350 = vmul.f32 %v267, %v349
        %v351 = vadd.f32 %v347, %v350
        %s352 = sld [smem:[#allocation2 + $0x2c]]
        %v353 = vstv %s352
        %v354 = vmul.f32 %v278, %v353
        %v355 = vadd.f32 %v351, %v354
        %v356 = vmax.f32 %v355, 0.0
        %s357 = sld [smem:[#allocation2 + $0x2d]]
        %v358 = vstv %s357
        %v359 = vmul.f32 %v190, %v358
        %s360 = sld [smem:[#allocation2 + $0xbf]]
        %v361 = vstv %s360
        %v362 = vadd.f32 %v359, %v361
        %s363 = sld [smem:[#allocation2 + $0x2e]]
        %v364 = vstv %s363
        %v365 = vmul.f32 %v201, %v364
        %v366 = vadd.f32 %v362, %v365
        %s367 = sld [smem:[#allocation2 + $0x2f]]
        %v368 = vstv %s367
        %v369 = vmul.f32 %v212, %v368
        %v370 = vadd.f32 %v366, %v369
        %s371 = sld [smem:[#allocation2 + $0x30]]
        %v372 = vstv %s371
        %v373 = vmul.f32 %v223, %v372
        %v374 = vadd.f32 %v370, %v373
        %s375 = sld [smem:[#allocation2 + $0x31]]
        %v376 = vstv %s375
        %v377 = vmul.f32 %v234, %v376
        %v378 = vadd.f32 %v374, %v377
        %s379 = sld [smem:[#allocation2 + $0x32]]
        %v380 = vstv %s379
        %v381 = vmul.f32 %v245, %v380
        %v382 = vadd.f32 %v378, %v381
        %s383 = sld [smem:[#allocation2 + $0x33]]
        %v384 = vstv %s383
        %v385 = vmul.f32 %v256, %v384
        %v386 = vadd.f32 %v382, %v385
        %s387 = sld [smem:[#allocation2 + $0x34]]
        %v388 = vstv %s387
        %v389 = vmul.f32 %v267, %v388
        %v390 = vadd.f32 %v386, %v389
        %s391 = sld [smem:[#allocation2 + $0x35]]
        %v392 = vstv %s391
        %v393 = vmul.f32 %v278, %v392
        %v394 = vadd.f32 %v390, %v393
        %v395 = vmax.f32 %v394, 0.0
        %s396 = sld [smem:[#allocation2 + $0x36]]
        %v397 = vstv %s396
        %v398 = vmul.f32 %v190, %v397
        %s399 = sld [smem:[#allocation2 + $0xc0]]
        %v400 = vstv %s399
        %v401 = vadd.f32 %v398, %v400
        %s402 = sld [smem:[#allocation2 + $0x37]]
        %v403 = vstv %s402
        %v404 = vmul.f32 %v201, %v403
        %v405 = vadd.f32 %v401, %v404
        %s406 = sld [smem:[#allocation2 + $0x38]]
        %v407 = vstv %s406
        %v408 = vmul.f32 %v212, %v407
        %v409 = vadd.f32 %v405, %v408
        %s410 = sld [smem:[#allocation2 + $0x39]]
        %v411 = vstv %s410
        %v412 = vmul.f32 %v223, %v411
        %v413 = vadd.f32 %v409, %v412
        %s414 = sld [smem:[#allocation2 + $0x3a]]
        %v415 = vstv %s414
        %v416 = vmul.f32 %v234, %v415
        %v417 = vadd.f32 %v413, %v416
        %s418 = sld [smem:[#allocation2 + $0x3b]]
        %v419 = vstv %s418
        %v420 = vmul.f32 %v245, %v419
        %v421 = vadd.f32 %v417, %v420
        %s422 = sld [smem:[#allocation2 + $0x3c]]
        %v423 = vstv %s422
        %v424 = vmul.f32 %v256, %v423
        %v425 = vadd.f32 %v421, %v424
        %s426 = sld [smem:[#allocation2 + $0x3d]]
        %v427 = vstv %s426
        %v428 = vmul.f32 %v267, %v427
        %v429 = vadd.f32 %v425, %v428
        %s430 = sld [smem:[#allocation2 + $0x3e]]
        %v431 = vstv %s430
        %v432 = vmul.f32 %v278, %v431
        %v433 = vadd.f32 %v429, %v432
        %v434 = vmax.f32 %v433, 0.0
        %s435 = sld [smem:[#allocation2 + $0x3f]]
        %v436 = vstv %s435
        %v437 = vmul.f32 %v190, %v436
        %s438 = sld [smem:[#allocation2 + $0xc1]]
        %v439 = vstv %s438
        %v440 = vadd.f32 %v437, %v439
        %s441 = sld [smem:[#allocation2 + $0x40]]
        %v442 = vstv %s441
        %v443 = vmul.f32 %v201, %v442
        %v444 = vadd.f32 %v440, %v443
        %s445 = sld [smem:[#allocation2 + $0x41]]
        %v446 = vstv %s445
        %v447 = vmul.f32 %v212, %v446
        %v448 = vadd.f32 %v444, %v447
        %s449 = sld [smem:[#allocation2 + $0x42]]
        %v450 = vstv %s449
        %v451 = vmul.f32 %v223, %v450
        %v452 = vadd.f32 %v448, %v451
        %s453 = sld [smem:[#allocation2 + $0x43]]
        %v454 = vstv %s453
        %v455 = vmul.f32 %v234, %v454
        %v456 = vadd.f32 %v452, %v455
        %s457 = sld [smem:[#allocation2 + $0x44]]
        %v458 = vstv %s457
        %v459 = vmul.f32 %v245, %v458
        %v460 = vadd.f32 %v456, %v459
        %s461 = sld [smem:[#allocation2 + $0x45]]
        %v462 = vstv %s461
        %v463 = vmul.f32 %v256, %v462
        %v464 = vadd.f32 %v460, %v463
        %s465 = sld [smem:[#allocation2 + $0x46]]
        %v466 = vstv %s465
        %v467 = vmul.f32 %v267, %v466
        %v468 = vadd.f32 %v464, %v467
        %s469 = sld [smem:[#allocation2 + $0x47]]
        %v470 = vstv %s469
        %v471 = vmul.f32 %v278, %v470
        %v472 = vadd.f32 %v468, %v471
        %v473 = vmax.f32 %v472, 0.0
        %s474 = sld [smem:[#allocation2 + $0x48]]
        %v475 = vstv %s474
        %v476 = vmul.f32 %v190, %v475
        %s477 = sld [smem:[#allocation2 + $0xc2]]
        %v478 = vstv %s477
        %v479 = vadd.f32 %v476, %v478
        %s480 = sld [smem:[#allocation2 + $0x49]]
        %v481 = vstv %s480
        %v482 = vmul.f32 %v201, %v481
        %v483 = vadd.f32 %v479, %v482
        %s484 = sld [smem:[#allocation2 + $0x4a]]
        %v485 = vstv %s484
        %v486 = vmul.f32 %v212, %v485
        %v487 = vadd.f32 %v483, %v486
        %s488 = sld [smem:[#allocation2 + $0x4b]]
        %v489 = vstv %s488
        %v490 = vmul.f32 %v223, %v489
        %v491 = vadd.f32 %v487, %v490
        %s492 = sld [smem:[#allocation2 + $0x4c]]
        %v493 = vstv %s492
        %v494 = vmul.f32 %v234, %v493
        %v495 = vadd.f32 %v491, %v494
        %s496 = sld [smem:[#allocation2 + $0x4d]]
        %v497 = vstv %s496
        %v498 = vmul.f32 %v245, %v497
        %v499 = vadd.f32 %v495, %v498
        %s500 = sld [smem:[#allocation2 + $0x4e]]
        %v501 = vstv %s500
        %v502 = vmul.f32 %v256, %v501
        %v503 = vadd.f32 %v499, %v502
        %s504 = sld [smem:[#allocation2 + $0x4f]]
        %v505 = vstv %s504
        %v506 = vmul.f32 %v267, %v505
        %v507 = vadd.f32 %v503, %v506
        %s508 = sld [smem:[#allocation2 + $0x50]]
        %v509 = vstv %s508
        %v510 = vmul.f32 %v278, %v509
        %v511 = vadd.f32 %v507, %v510
        %v512 = vmax.f32 %v511, 0.0
        %s513 = sld [smem:[#allocation2 + $0x51]]
        %v514 = vstv %s513
        %v515 = vmul.f32 %v190, %v514
        %s516 = sld [smem:[#allocation2 + $0xc3]]
        %v517 = vstv %s516
        %v518 = vadd.f32 %v515, %v517
        %s519 = sld [smem:[#allocation2 + $0x52]]
        %v520 = vstv %s519
        %v521 = vmul.f32 %v201, %v520
        %v522 = vadd.f32 %v518, %v521
        %s523 = sld [smem:[#allocation2 + $0x53]]
        %v524 = vstv %s523
        %v525 = vmul.f32 %v212, %v524
        %v526 = vadd.f32 %v522, %v525
        %s527 = sld [smem:[#allocation2 + $0x54]]
        %v528 = vstv %s527
        %v529 = vmul.f32 %v223, %v528
        %v530 = vadd.f32 %v526, %v529
        %s531 = sld [smem:[#allocation2 + $0x55]]
        %v532 = vstv %s531
        %v533 = vmul.f32 %v234, %v532
        %v534 = vadd.f32 %v530, %v533
        %s535 = sld [smem:[#allocation2 + $0x56]]
        %v536 = vstv %s535
        %v537 = vmul.f32 %v245, %v536
        %v538 = vadd.f32 %v534, %v537
        %s539 = sld [smem:[#allocation2 + $0x57]]
        %v540 = vstv %s539
        %v541 = vmul.f32 %v256, %v540
        %v542 = vadd.f32 %v538, %v541
        %s543 = sld [smem:[#allocation2 + $0x58]]
        %v544 = vstv %s543
        %v545 = vmul.f32 %v267, %v544
        %v546 = vadd.f32 %v542, %v545
        %s547 = sld [smem:[#allocation2 + $0x59]]
        %v548 = vstv %s547
        %v549 = vmul.f32 %v278, %v548
        %v550 = vadd.f32 %v546, %v549
        %v551 = vmax.f32 %v550, 0.0
        %s552 = sld [smem:[#allocation2 + $0x5a]]
        %v553 = vstv %s552
        %v554 = vmul.f32 %v190, %v553
        %s555 = sld [smem:[#allocation2 + $0xc4]]
        %v556 = vstv %s555
        %v557 = vadd.f32 %v554, %v556
        %s558 = sld [smem:[#allocation2 + $0x5b]]
        %v559 = vstv %s558
        %v560 = vmul.f32 %v201, %v559
        %v561 = vadd.f32 %v557, %v560
        %s562 = sld [smem:[#allocation2 + $0x5c]]
        %v563 = vstv %s562
        %v564 = vmul.f32 %v212, %v563
        %v565 = vadd.f32 %v561, %v564
        %s566 = sld [smem:[#allocation2 + $0x5d]]
        %v567 = vstv %s566
        %v568 = vmul.f32 %v223, %v567
        %v569 = vadd.f32 %v565, %v568
        %s570 = sld [smem:[#allocation2 + $0x5e]]
        %v571 = vstv %s570
        %v572 = vmul.f32 %v234, %v571
        %v573 = vadd.f32 %v569, %v572
        %s574 = sld [smem:[#allocation2 + $0x5f]]
        %v575 = vstv %s574
        %v576 = vmul.f32 %v245, %v575
        %v577 = vadd.f32 %v573, %v576
        %s578 = sld [smem:[#allocation2 + $0x60]]
        %v579 = vstv %s578
        %v580 = vmul.f32 %v256, %v579
        %v581 = vadd.f32 %v577, %v580
        %s582 = sld [smem:[#allocation2 + $0x61]]
        %v583 = vstv %s582
        %v584 = vmul.f32 %v267, %v583
        %v585 = vadd.f32 %v581, %v584
        %s586 = sld [smem:[#allocation2 + $0x62]]
        %v587 = vstv %s586
        %v588 = vmul.f32 %v278, %v587
        %v589 = vadd.f32 %v585, %v588
        %v590 = vmax.f32 %v589, 0.0
        %s591 = sld [smem:[#allocation2 + $0x63]]
        %v592 = vstv %s591
        %v593 = vmul.f32 %v190, %v592
        %s594 = sld [smem:[#allocation2 + $0xc5]]
        %v595 = vstv %s594
        %v596 = vadd.f32 %v593, %v595
        %s597 = sld [smem:[#allocation2 + $0x64]]
        %v598 = vstv %s597
        %v599 = vmul.f32 %v201, %v598
        %v600 = vadd.f32 %v596, %v599
        %s601 = sld [smem:[#allocation2 + $0x65]]
        %v602 = vstv %s601
        %v603 = vmul.f32 %v212, %v602
        %v604 = vadd.f32 %v600, %v603
        %s605 = sld [smem:[#allocation2 + $0x66]]
        %v606 = vstv %s605
        %v607 = vmul.f32 %v223, %v606
        %v608 = vadd.f32 %v604, %v607
        %s609 = sld [smem:[#allocation2 + $0x67]]
        %v610 = vstv %s609
        %v611 = vmul.f32 %v234, %v610
        %v612 = vadd.f32 %v608, %v611
        %s613 = sld [smem:[#allocation2 + $0x68]]
        %v614 = vstv %s613
        %v615 = vmul.f32 %v245, %v614
        %v616 = vadd.f32 %v612, %v615
        %s617 = sld [smem:[#allocation2 + $0x69]]
        %v618 = vstv %s617
        %v619 = vmul.f32 %v256, %v618
        %v620 = vadd.f32 %v616, %v619
        %s621 = sld [smem:[#allocation2 + $0x6a]]
        %v622 = vstv %s621
        %v623 = vmul.f32 %v267, %v622
        %v624 = vadd.f32 %v620, %v623
        %s625 = sld [smem:[#allocation2 + $0x6b]]
        %v626 = vstv %s625
        %v627 = vmul.f32 %v278, %v626
        %v628 = vadd.f32 %v624, %v627
        %v629 = vmax.f32 %v628, 0.0
        %s630 = sld [smem:[#allocation2 + $0x6c]]
        %v631 = vstv %s630
        %v632 = vmul.f32 %v190, %v631
        %s633 = sld [smem:[#allocation2 + $0xc6]]
        %v634 = vstv %s633
        %v635 = vadd.f32 %v632, %v634
        %s636 = sld [smem:[#allocation2 + $0x6d]]
        %v637 = vstv %s636
        %v638 = vmul.f32 %v201, %v637
        %v639 = vadd.f32 %v635, %v638
        %s640 = sld [smem:[#allocation2 + $0x6e]]
        %v641 = vstv %s640
        %v642 = vmul.f32 %v212, %v641
        %v643 = vadd.f32 %v639, %v642
        %s644 = sld [smem:[#allocation2 + $0x6f]]
        %v645 = vstv %s644
        %v646 = vmul.f32 %v223, %v645
        %v647 = vadd.f32 %v643, %v646
        %s648 = sld [smem:[#allocation2 + $0x70]]
        %v649 = vstv %s648
        %v650 = vmul.f32 %v234, %v649
        %v651 = vadd.f32 %v647, %v650
        %s652 = sld [smem:[#allocation2 + $0x71]]
        %v653 = vstv %s652
        %v654 = vmul.f32 %v245, %v653
        %v655 = vadd.f32 %v651, %v654
        %s656 = sld [smem:[#allocation2 + $0x72]]
        %v657 = vstv %s656
        %v658 = vmul.f32 %v256, %v657
        %v659 = vadd.f32 %v655, %v658
        %s660 = sld [smem:[#allocation2 + $0x73]]
        %v661 = vstv %s660
        %v662 = vmul.f32 %v267, %v661
        %v663 = vadd.f32 %v659, %v662
        %s664 = sld [smem:[#allocation2 + $0x74]]
        %v665 = vstv %s664
        %v666 = vmul.f32 %v278, %v665
        %v667 = vadd.f32 %v663, %v666
        %v668 = vmax.f32 %v667, 0.0
        %s669 = sld [smem:[#allocation2 + $0x75]]
        %v670 = vstv %s669
        %v671 = vmul.f32 %v190, %v670
        %s672 = sld [smem:[#allocation2 + $0xc7]]
        %v673 = vstv %s672
        %v674 = vadd.f32 %v671, %v673
        %s675 = sld [smem:[#allocation2 + $0x76]]
        %v676 = vstv %s675
        %v677 = vmul.f32 %v201, %v676
        %v678 = vadd.f32 %v674, %v677
        %s679 = sld [smem:[#allocation2 + $0x77]]
        %v680 = vstv %s679
        %v681 = vmul.f32 %v212, %v680
        %v682 = vadd.f32 %v678, %v681
        %s683 = sld [smem:[#allocation2 + $0x78]]
        %v684 = vstv %s683
        %v685 = vmul.f32 %v223, %v684
        %v686 = vadd.f32 %v682, %v685
        %s687 = sld [smem:[#allocation2 + $0x79]]
        %v688 = vstv %s687
        %v689 = vmul.f32 %v234, %v688
        %v690 = vadd.f32 %v686, %v689
        %s691 = sld [smem:[#allocation2 + $0x7a]]
        %v692 = vstv %s691
        %v693 = vmul.f32 %v245, %v692
        %v694 = vadd.f32 %v690, %v693
        %s695 = sld [smem:[#allocation2 + $0x7b]]
        %v696 = vstv %s695
        %v697 = vmul.f32 %v256, %v696
        %v698 = vadd.f32 %v694, %v697
        %s699 = sld [smem:[#allocation2 + $0x7c]]
        %v700 = vstv %s699
        %v701 = vmul.f32 %v267, %v700
        %v702 = vadd.f32 %v698, %v701
        %s703 = sld [smem:[#allocation2 + $0x7d]]
        %v704 = vstv %s703
        %v705 = vmul.f32 %v278, %v704
        %v706 = vadd.f32 %v702, %v705
        %v707 = vmax.f32 %v706, 0.0
        %s708 = sld [smem:[#allocation2 + $0x7e]]
        %v709 = vstv %s708
        %v710 = vmul.f32 %v190, %v709
        %s711 = sld [smem:[#allocation2 + $0xc8]]
        %v712 = vstv %s711
        %v713 = vadd.f32 %v710, %v712
        %s714 = sld [smem:[#allocation2 + $0x7f]]
        %v715 = vstv %s714
        %v716 = vmul.f32 %v201, %v715
        %v717 = vadd.f32 %v713, %v716
        %s718 = sld [smem:[#allocation2 + $0x80]]
        %v719 = vstv %s718
        %v720 = vmul.f32 %v212, %v719
        %v721 = vadd.f32 %v717, %v720
        %s722 = sld [smem:[#allocation2 + $0x81]]
        %v723 = vstv %s722
        %v724 = vmul.f32 %v223, %v723
        %v725 = vadd.f32 %v721, %v724
        %s726 = sld [smem:[#allocation2 + $0x82]]
        %v727 = vstv %s726
        %v728 = vmul.f32 %v234, %v727
        %v729 = vadd.f32 %v725, %v728
        %s730 = sld [smem:[#allocation2 + $0x83]]
        %v731 = vstv %s730
        %v732 = vmul.f32 %v245, %v731
        %v733 = vadd.f32 %v729, %v732
        %s734 = sld [smem:[#allocation2 + $0x84]]
        %v735 = vstv %s734
        %v736 = vmul.f32 %v256, %v735
        %v737 = vadd.f32 %v733, %v736
        %s738 = sld [smem:[#allocation2 + $0x85]]
        %v739 = vstv %s738
        %v740 = vmul.f32 %v267, %v739
        %v741 = vadd.f32 %v737, %v740
        %s742 = sld [smem:[#allocation2 + $0x86]]
        %v743 = vstv %s742
        %v744 = vmul.f32 %v278, %v743
        %v745 = vadd.f32 %v741, %v744
        %v746 = vmax.f32 %v745, 0.0
        %s747 = sld [smem:[#allocation2 + $0x87]]
        %v748 = vstv %s747
        %v749 = vmul.f32 %v190, %v748
        %s750 = sld [smem:[#allocation2 + $0xc9]]
        %v751 = vstv %s750
        %v752 = vadd.f32 %v749, %v751
        %s753 = sld [smem:[#allocation2 + $0x88]]
        %v754 = vstv %s753
        %v755 = vmul.f32 %v201, %v754
        %v756 = vadd.f32 %v752, %v755
        %s757 = sld [smem:[#allocation2 + $0x89]]
        %v758 = vstv %s757
        %v759 = vmul.f32 %v212, %v758
        %v760 = vadd.f32 %v756, %v759
        %s761 = sld [smem:[#allocation2 + $0x8a]]
        %v762 = vstv %s761
        %v763 = vmul.f32 %v223, %v762
        %v764 = vadd.f32 %v760, %v763
        %s765 = sld [smem:[#allocation2 + $0x8b]]
        %v766 = vstv %s765
        %v767 = vmul.f32 %v234, %v766
        %v768 = vadd.f32 %v764, %v767
        %s769 = sld [smem:[#allocation2 + $0x8c]]
        %v770 = vstv %s769
        %v771 = vmul.f32 %v245, %v770
        %v772 = vadd.f32 %v768, %v771
        %s773 = sld [smem:[#allocation2 + $0x8d]]
        %v774 = vstv %s773
        %v775 = vmul.f32 %v256, %v774
        %v776 = vadd.f32 %v772, %v775
        %s777 = sld [smem:[#allocation2 + $0x8e]]
        %v778 = vstv %s777
        %v779 = vmul.f32 %v267, %v778
        %v780 = vadd.f32 %v776, %v779
        %s781 = sld [smem:[#allocation2 + $0x8f]]
        %v782 = vstv %s781
        %v783 = vmul.f32 %v278, %v782
        %v784 = vadd.f32 %v780, %v783
        %v785 = vmax.f32 %v784, 0.0
        %s786 = sld [smem:[#allocation2 + $0x90]]
        %v787 = vstv %s786
        %v788 = vmul.f32 %v190, %v787
        %s789 = sld [smem:[#allocation2 + $0xca]]
        %v790 = vstv %s789
        %v791 = vadd.f32 %v788, %v790
        %s792 = sld [smem:[#allocation2 + $0x91]]
        %v793 = vstv %s792
        %v794 = vmul.f32 %v201, %v793
        %v795 = vadd.f32 %v791, %v794
        %s796 = sld [smem:[#allocation2 + $0x92]]
        %v797 = vstv %s796
        %v798 = vmul.f32 %v212, %v797
        %v799 = vadd.f32 %v795, %v798
        %s800 = sld [smem:[#allocation2 + $0x93]]
        %v801 = vstv %s800
        %v802 = vmul.f32 %v223, %v801
        %v803 = vadd.f32 %v799, %v802
        %s804 = sld [smem:[#allocation2 + $0x94]]
        %v805 = vstv %s804
        %v806 = vmul.f32 %v234, %v805
        %v807 = vadd.f32 %v803, %v806
        %s808 = sld [smem:[#allocation2 + $0x95]]
        %v809 = vstv %s808
        %v810 = vmul.f32 %v245, %v809
        %v811 = vadd.f32 %v807, %v810
        %s812 = sld [smem:[#allocation2 + $0x96]]
        %v813 = vstv %s812
        %v814 = vmul.f32 %v256, %v813
        %v815 = vadd.f32 %v811, %v814
        %s816 = sld [smem:[#allocation2 + $0x97]]
        %v817 = vstv %s816
        %v818 = vmul.f32 %v267, %v817
        %v819 = vadd.f32 %v815, %v818
        %s820 = sld [smem:[#allocation2 + $0x98]]
        %v821 = vstv %s820
        %v822 = vmul.f32 %v278, %v821
        %v823 = vadd.f32 %v819, %v822
        %v824 = vmax.f32 %v823, 0.0
        %s825 = sld [smem:[#allocation2 + $0x99]]
        %v826 = vstv %s825
        %v827 = vmul.f32 %v190, %v826
        %s828 = sld [smem:[#allocation2 + $0xcb]]
        %v829 = vstv %s828
        %v830 = vadd.f32 %v827, %v829
        %s831 = sld [smem:[#allocation2 + $0x9a]]
        %v832 = vstv %s831
        %v833 = vmul.f32 %v201, %v832
        %v834 = vadd.f32 %v830, %v833
        %s835 = sld [smem:[#allocation2 + $0x9b]]
        %v836 = vstv %s835
        %v837 = vmul.f32 %v212, %v836
        %v838 = vadd.f32 %v834, %v837
        %s839 = sld [smem:[#allocation2 + $0x9c]]
        %v840 = vstv %s839
        %v841 = vmul.f32 %v223, %v840
        %v842 = vadd.f32 %v838, %v841
        %s843 = sld [smem:[#allocation2 + $0x9d]]
        %v844 = vstv %s843
        %v845 = vmul.f32 %v234, %v844
        %v846 = vadd.f32 %v842, %v845
        %s847 = sld [smem:[#allocation2 + $0x9e]]
        %v848 = vstv %s847
        %v849 = vmul.f32 %v245, %v848
        %v850 = vadd.f32 %v846, %v849
        %s851 = sld [smem:[#allocation2 + $0x9f]]
        %v852 = vstv %s851
        %v853 = vmul.f32 %v256, %v852
        %v854 = vadd.f32 %v850, %v853
        %s855 = sld [smem:[#allocation2 + $0xa0]]
        %v856 = vstv %s855
        %v857 = vmul.f32 %v267, %v856
        %v858 = vadd.f32 %v854, %v857
        %s859 = sld [smem:[#allocation2 + $0xa1]]
        %v860 = vstv %s859
        %v861 = vmul.f32 %v278, %v860
        %v862 = vadd.f32 %v858, %v861
        %v863 = vmax.f32 %v862, 0.0
        %s864 = sld [smem:[#allocation2 + $0xa2]]
        %v865 = vstv %s864
        %v866 = vmul.f32 %v190, %v865
        %s867 = sld [smem:[#allocation2 + $0xcc]]
        %v868 = vstv %s867
        %v869 = vadd.f32 %v866, %v868
        %s870 = sld [smem:[#allocation2 + $0xa3]]
        %v871 = vstv %s870
        %v872 = vmul.f32 %v201, %v871
        %v873 = vadd.f32 %v869, %v872
        %s874 = sld [smem:[#allocation2 + $0xa4]]
        %v875 = vstv %s874
        %v876 = vmul.f32 %v212, %v875
        %v877 = vadd.f32 %v873, %v876
        %s878 = sld [smem:[#allocation2 + $0xa5]]
        %v879 = vstv %s878
        %v880 = vmul.f32 %v223, %v879
        %v881 = vadd.f32 %v877, %v880
        %s882 = sld [smem:[#allocation2 + $0xa6]]
        %v883 = vstv %s882
        %v884 = vmul.f32 %v234, %v883
        %v885 = vadd.f32 %v881, %v884
        %s886 = sld [smem:[#allocation2 + $0xa7]]
        %v887 = vstv %s886
        %v888 = vmul.f32 %v245, %v887
        %v889 = vadd.f32 %v885, %v888
        %s890 = sld [smem:[#allocation2 + $0xa8]]
        %v891 = vstv %s890
        %v892 = vmul.f32 %v256, %v891
        %v893 = vadd.f32 %v889, %v892
        %s894 = sld [smem:[#allocation2 + $0xa9]]
        %v895 = vstv %s894
        %v896 = vmul.f32 %v267, %v895
        %v897 = vadd.f32 %v893, %v896
        %s898 = sld [smem:[#allocation2 + $0xaa]]
        %v899 = vstv %s898
        %v900 = vmul.f32 %v278, %v899
        %v901 = vadd.f32 %v897, %v900
        %v902 = vmax.f32 %v901, 0.0
        %s903 = sld [smem:[#allocation2 + $0xab]]
        %v904 = vstv %s903
        %v905 = vmul.f32 %v190, %v904
        %s906 = sld [smem:[#allocation2 + $0xcd]]
        %v907 = vstv %s906
        %v908 = vadd.f32 %v905, %v907
        %s909 = sld [smem:[#allocation2 + $0xac]]
        %v910 = vstv %s909
        %v911 = vmul.f32 %v201, %v910
        %v912 = vadd.f32 %v908, %v911
        %s913 = sld [smem:[#allocation2 + $0xad]]
        %v914 = vstv %s913
        %v915 = vmul.f32 %v212, %v914
        %v916 = vadd.f32 %v912, %v915
        %s917 = sld [smem:[#allocation2 + $0xae]]
        %v918 = vstv %s917
        %v919 = vmul.f32 %v223, %v918
        %v920 = vadd.f32 %v916, %v919
        %s921 = sld [smem:[#allocation2 + $0xaf]]
        %v922 = vstv %s921
        %v923 = vmul.f32 %v234, %v922
        %v924 = vadd.f32 %v920, %v923
        %s925 = sld [smem:[#allocation2 + $0xb0]]
        %v926 = vstv %s925
        %v927 = vmul.f32 %v245, %v926
        %v928 = vadd.f32 %v924, %v927
        %s929 = sld [smem:[#allocation2 + $0xb1]]
        %v930 = vstv %s929
        %v931 = vmul.f32 %v256, %v930
        %v932 = vadd.f32 %v928, %v931
        %s933 = sld [smem:[#allocation2 + $0xb2]]
        %v934 = vstv %s933
        %v935 = vmul.f32 %v267, %v934
        %v936 = vadd.f32 %v932, %v935
        %s937 = sld [smem:[#allocation2 + $0xb3]]
        %v938 = vstv %s937
        %v939 = vmul.f32 %v278, %v938
        %v940 = vadd.f32 %v936, %v939
        %v941 = vmax.f32 %v940, 0.0
        %s942 = sld [smem:[#allocation2 + $0xb4]]
        %v943 = vstv %s942
        %v944 = vmul.f32 %v190, %v943
        %s945 = sld [smem:[#allocation2 + $0xce]]
        %v946 = vstv %s945
        %v947 = vadd.f32 %v944, %v946
        %s948 = sld [smem:[#allocation2 + $0xb5]]
        %v949 = vstv %s948
        %v950 = vmul.f32 %v201, %v949
        %v951 = vadd.f32 %v947, %v950
        %s952 = sld [smem:[#allocation2 + $0xb6]]
        %v953 = vstv %s952
        %v954 = vmul.f32 %v212, %v953
        %v955 = vadd.f32 %v951, %v954
        %s956 = sld [smem:[#allocation2 + $0xb7]]
        %v957 = vstv %s956
        %v958 = vmul.f32 %v223, %v957
        %v959 = vadd.f32 %v955, %v958
        %s960 = sld [smem:[#allocation2 + $0xb8]]
        %v961 = vstv %s960
        %v962 = vmul.f32 %v234, %v961
        %v963 = vadd.f32 %v959, %v962
        %s964 = sld [smem:[#allocation2 + $0xb9]]
        %v965 = vstv %s964
        %v966 = vmul.f32 %v245, %v965
        %v967 = vadd.f32 %v963, %v966
        %s968 = sld [smem:[#allocation2 + $0xba]]
        %v969 = vstv %s968
        %v970 = vmul.f32 %v256, %v969
        %v971 = vadd.f32 %v967, %v970
        %s972 = sld [smem:[#allocation2 + $0xbb]]
        %v973 = vstv %s972
        %v974 = vmul.f32 %v267, %v973
        %v975 = vadd.f32 %v971, %v974
        %s976 = sld [smem:[#allocation2 + $0xbc]]
        %v977 = vstv %s976
        %v978 = vmul.f32 %v278, %v977
        %v979 = vadd.f32 %v975, %v978
        %v980 = vmax.f32 %v979, 0.0
        %s981 = sld [smem:[#allocation2 + $0xcf]]
        %v982 = vstv %s981
        %v983 = vmul.f32 %v317, %v982
        %s984 = sld [smem:[#allocation2 + $0x171]]
        %v985 = vstv %s984
        %v986 = vadd.f32 %v983, %v985
        %s987 = sld [smem:[#allocation2 + $0xd0]]
        %v988 = vstv %s987
        %v989 = vmul.f32 %v356, %v988
        %v990 = vadd.f32 %v986, %v989
        %s991 = sld [smem:[#allocation2 + $0xd1]]
        %v992 = vstv %s991
        %v993 = vmul.f32 %v395, %v992
        %v994 = vadd.f32 %v990, %v993
        %s995 = sld [smem:[#allocation2 + $0xd2]]
        %v996 = vstv %s995
        %v997 = vmul.f32 %v434, %v996
        %v998 = vadd.f32 %v994, %v997
        %s999 = sld [smem:[#allocation2 + $0xd3]]
        %v1000 = vstv %s999
        %v1001 = vmul.f32 %v473, %v1000
        %v1002 = vadd.f32 %v998, %v1001
        %s1003 = sld [smem:[#allocation2 + $0xd4]]
        %v1004 = vstv %s1003
        %v1005 = vmul.f32 %v512, %v1004
        %v1006 = vadd.f32 %v1002, %v1005
        %s1007 = sld [smem:[#allocation2 + $0xd5]]
        %v1008 = vstv %s1007
        %v1009 = vmul.f32 %v551, %v1008
        %v1010 = vadd.f32 %v1006, %v1009
        %s1011 = sld [smem:[#allocation2 + $0xd6]]
        %v1012 = vstv %s1011
        %v1013 = vmul.f32 %v590, %v1012
        %v1014 = vadd.f32 %v1010, %v1013
        %s1015 = sld [smem:[#allocation2 + $0xd7]]
        %v1016 = vstv %s1015
        %v1017 = vmul.f32 %v629, %v1016
        %v1018 = vadd.f32 %v1014, %v1017
        %s1019 = sld [smem:[#allocation2 + $0xd8]]
        %v1020 = vstv %s1019
        %v1021 = vmul.f32 %v668, %v1020
        %v1022 = vadd.f32 %v1018, %v1021
        %s1023 = sld [smem:[#allocation2 + $0xd9]]
        %v1024 = vstv %s1023
        %v1025 = vmul.f32 %v707, %v1024
        %v1026 = vadd.f32 %v1022, %v1025
        %s1027 = sld [smem:[#allocation2 + $0xda]]
        %v1028 = vstv %s1027
        %v1029 = vmul.f32 %v746, %v1028
        %v1030 = vadd.f32 %v1026, %v1029
        %s1031 = sld [smem:[#allocation2 + $0xdb]]
        %v1032 = vstv %s1031
        %v1033 = vmul.f32 %v785, %v1032
        %v1034 = vadd.f32 %v1030, %v1033
        %s1035 = sld [smem:[#allocation2 + $0xdc]]
        %v1036 = vstv %s1035
        %v1037 = vmul.f32 %v824, %v1036
        %v1038 = vadd.f32 %v1034, %v1037
        %s1039 = sld [smem:[#allocation2 + $0xdd]]
        %v1040 = vstv %s1039
        %v1041 = vmul.f32 %v863, %v1040
        %v1042 = vadd.f32 %v1038, %v1041
        %s1043 = sld [smem:[#allocation2 + $0xde]]
        %v1044 = vstv %s1043
        %v1045 = vmul.f32 %v902, %v1044
        %v1046 = vadd.f32 %v1042, %v1045
        %s1047 = sld [smem:[#allocation2 + $0xdf]]
        %v1048 = vstv %s1047
        %v1049 = vmul.f32 %v941, %v1048
        %v1050 = vadd.f32 %v1046, %v1049
        %s1051 = sld [smem:[#allocation2 + $0xe0]]
        %v1052 = vstv %s1051
        %v1053 = vmul.f32 %v980, %v1052
        %v1054 = vadd.f32 %v1050, %v1053
        %s1055 = sld [smem:[#allocation2 + $0xe1]]
        %v1056 = vstv %s1055
        %v1057 = vmul.f32 %v317, %v1056
        %s1058 = sld [smem:[#allocation2 + $0x172]]
        %v1059 = vstv %s1058
        %v1060 = vadd.f32 %v1057, %v1059
        %s1061 = sld [smem:[#allocation2 + $0xe2]]
        %v1062 = vstv %s1061
        %v1063 = vmul.f32 %v356, %v1062
        %v1064 = vadd.f32 %v1060, %v1063
        %s1065 = sld [smem:[#allocation2 + $0xe3]]
        %v1066 = vstv %s1065
        %v1067 = vmul.f32 %v395, %v1066
        %v1068 = vadd.f32 %v1064, %v1067
        %s1069 = sld [smem:[#allocation2 + $0xe4]]
        %v1070 = vstv %s1069
        %v1071 = vmul.f32 %v434, %v1070
        %v1072 = vadd.f32 %v1068, %v1071
        %s1073 = sld [smem:[#allocation2 + $0xe5]]
        %v1074 = vstv %s1073
        %v1075 = vmul.f32 %v473, %v1074
        %v1076 = vadd.f32 %v1072, %v1075
        %s1077 = sld [smem:[#allocation2 + $0xe6]]
        %v1078 = vstv %s1077
        %v1079 = vmul.f32 %v512, %v1078
        %v1080 = vadd.f32 %v1076, %v1079
        %s1081 = sld [smem:[#allocation2 + $0xe7]]
        %v1082 = vstv %s1081
        %v1083 = vmul.f32 %v551, %v1082
        %v1084 = vadd.f32 %v1080, %v1083
        %s1085 = sld [smem:[#allocation2 + $0xe8]]
        %v1086 = vstv %s1085
        %v1087 = vmul.f32 %v590, %v1086
        %v1088 = vadd.f32 %v1084, %v1087
        %s1089 = sld [smem:[#allocation2 + $0xe9]]
        %v1090 = vstv %s1089
        %v1091 = vmul.f32 %v629, %v1090
        %v1092 = vadd.f32 %v1088, %v1091
        %s1093 = sld [smem:[#allocation2 + $0xea]]
        %v1094 = vstv %s1093
        %v1095 = vmul.f32 %v668, %v1094
        %v1096 = vadd.f32 %v1092, %v1095
        %s1097 = sld [smem:[#allocation2 + $0xeb]]
        %v1098 = vstv %s1097
        %v1099 = vmul.f32 %v707, %v1098
        %v1100 = vadd.f32 %v1096, %v1099
        %s1101 = sld [smem:[#allocation2 + $0xec]]
        %v1102 = vstv %s1101
        %v1103 = vmul.f32 %v746, %v1102
        %v1104 = vadd.f32 %v1100, %v1103
        %s1105 = sld [smem:[#allocation2 + $0xed]]
        %v1106 = vstv %s1105
        %v1107 = vmul.f32 %v785, %v1106
        %v1108 = vadd.f32 %v1104, %v1107
        %s1109 = sld [smem:[#allocation2 + $0xee]]
        %v1110 = vstv %s1109
        %v1111 = vmul.f32 %v824, %v1110
        %v1112 = vadd.f32 %v1108, %v1111
        %s1113 = sld [smem:[#allocation2 + $0xef]]
        %v1114 = vstv %s1113
        %v1115 = vmul.f32 %v863, %v1114
        %v1116 = vadd.f32 %v1112, %v1115
        %s1117 = sld [smem:[#allocation2 + $0xf0]]
        %v1118 = vstv %s1117
        %v1119 = vmul.f32 %v902, %v1118
        %v1120 = vadd.f32 %v1116, %v1119
        %s1121 = sld [smem:[#allocation2 + $0xf1]]
        %v1122 = vstv %s1121
        %v1123 = vmul.f32 %v941, %v1122
        %v1124 = vadd.f32 %v1120, %v1123
        %s1125 = sld [smem:[#allocation2 + $0xf2]]
        %v1126 = vstv %s1125
        %v1127 = vmul.f32 %v980, %v1126
        %v1128 = vadd.f32 %v1124, %v1127
        %s1129 = sld [smem:[#allocation2 + $0xf3]]
        %v1130 = vstv %s1129
        %v1131 = vmul.f32 %v317, %v1130
        %s1132 = sld [smem:[#allocation2 + $0x173]]
        %v1133 = vstv %s1132
        %v1134 = vadd.f32 %v1131, %v1133
        %s1135 = sld [smem:[#allocation2 + $0xf4]]
        %v1136 = vstv %s1135
        %v1137 = vmul.f32 %v356, %v1136
        %v1138 = vadd.f32 %v1134, %v1137
        %s1139 = sld [smem:[#allocation2 + $0xf5]]
        %v1140 = vstv %s1139
        %v1141 = vmul.f32 %v395, %v1140
        %v1142 = vadd.f32 %v1138, %v1141
        %s1143 = sld [smem:[#allocation2 + $0xf6]]
        %v1144 = vstv %s1143
        %v1145 = vmul.f32 %v434, %v1144
        %v1146 = vadd.f32 %v1142, %v1145
        %s1147 = sld [smem:[#allocation2 + $0xf7]]
        %v1148 = vstv %s1147
        %v1149 = vmul.f32 %v473, %v1148
        %v1150 = vadd.f32 %v1146, %v1149
        %s1151 = sld [smem:[#allocation2 + $0xf8]]
        %v1152 = vstv %s1151
        %v1153 = vmul.f32 %v512, %v1152
        %v1154 = vadd.f32 %v1150, %v1153
        %s1155 = sld [smem:[#allocation2 + $0xf9]]
        %v1156 = vstv %s1155
        %v1157 = vmul.f32 %v551, %v1156
        %v1158 = vadd.f32 %v1154, %v1157
        %s1159 = sld [smem:[#allocation2 + $0xfa]]
        %v1160 = vstv %s1159
        %v1161 = vmul.f32 %v590, %v1160
        %v1162 = vadd.f32 %v1158, %v1161
        %s1163 = sld [smem:[#allocation2 + $0xfb]]
        %v1164 = vstv %s1163
        %v1165 = vmul.f32 %v629, %v1164
        %v1166 = vadd.f32 %v1162, %v1165
        %s1167 = sld [smem:[#allocation2 + $0xfc]]
        %v1168 = vstv %s1167
        %v1169 = vmul.f32 %v668, %v1168
        %v1170 = vadd.f32 %v1166, %v1169
        %s1171 = sld [smem:[#allocation2 + $0xfd]]
        %v1172 = vstv %s1171
        %v1173 = vmul.f32 %v707, %v1172
        %v1174 = vadd.f32 %v1170, %v1173
        %s1175 = sld [smem:[#allocation2 + $0xfe]]
        %v1176 = vstv %s1175
        %v1177 = vmul.f32 %v746, %v1176
        %v1178 = vadd.f32 %v1174, %v1177
        %s1179 = sld [smem:[#allocation2 + $0xff]]
        %v1180 = vstv %s1179
        %v1181 = vmul.f32 %v785, %v1180
        %v1182 = vadd.f32 %v1178, %v1181
        %s1183 = sld [smem:[#allocation2 + $0x100]]
        %v1184 = vstv %s1183
        %v1185 = vmul.f32 %v824, %v1184
        %v1186 = vadd.f32 %v1182, %v1185
        %s1187 = sld [smem:[#allocation2 + $0x101]]
        %v1188 = vstv %s1187
        %v1189 = vmul.f32 %v863, %v1188
        %v1190 = vadd.f32 %v1186, %v1189
        %s1191 = sld [smem:[#allocation2 + $0x102]]
        %v1192 = vstv %s1191
        %v1193 = vmul.f32 %v902, %v1192
        %v1194 = vadd.f32 %v1190, %v1193
        %s1195 = sld [smem:[#allocation2 + $0x103]]
        %v1196 = vstv %s1195
        %v1197 = vmul.f32 %v941, %v1196
        %v1198 = vadd.f32 %v1194, %v1197
        %s1199 = sld [smem:[#allocation2 + $0x104]]
        %v1200 = vstv %s1199
        %v1201 = vmul.f32 %v980, %v1200
        %v1202 = vadd.f32 %v1198, %v1201
        %s1203 = sld [smem:[#allocation2 + $0x105]]
        %v1204 = vstv %s1203
        %v1205 = vmul.f32 %v317, %v1204
        %s1206 = sld [smem:[#allocation2 + $0x174]]
        %v1207 = vstv %s1206
        %v1208 = vadd.f32 %v1205, %v1207
        %s1209 = sld [smem:[#allocation2 + $0x106]]
        %v1210 = vstv %s1209
        %v1211 = vmul.f32 %v356, %v1210
        %v1212 = vadd.f32 %v1208, %v1211
        %s1213 = sld [smem:[#allocation2 + $0x107]]
        %v1214 = vstv %s1213
        %v1215 = vmul.f32 %v395, %v1214
        %v1216 = vadd.f32 %v1212, %v1215
        %s1217 = sld [smem:[#allocation2 + $0x108]]
        %v1218 = vstv %s1217
        %v1219 = vmul.f32 %v434, %v1218
        %v1220 = vadd.f32 %v1216, %v1219
        %s1221 = sld [smem:[#allocation2 + $0x109]]
        %v1222 = vstv %s1221
        %v1223 = vmul.f32 %v473, %v1222
        %v1224 = vadd.f32 %v1220, %v1223
        %s1225 = sld [smem:[#allocation2 + $0x10a]]
        %v1226 = vstv %s1225
        %v1227 = vmul.f32 %v512, %v1226
        %v1228 = vadd.f32 %v1224, %v1227
        %s1229 = sld [smem:[#allocation2 + $0x10b]]
        %v1230 = vstv %s1229
        %v1231 = vmul.f32 %v551, %v1230
        %v1232 = vadd.f32 %v1228, %v1231
        %s1233 = sld [smem:[#allocation2 + $0x10c]]
        %v1234 = vstv %s1233
        %v1235 = vmul.f32 %v590, %v1234
        %v1236 = vadd.f32 %v1232, %v1235
        %s1237 = sld [smem:[#allocation2 + $0x10d]]
        %v1238 = vstv %s1237
        %v1239 = vmul.f32 %v629, %v1238
        %v1240 = vadd.f32 %v1236, %v1239
        %s1241 = sld [smem:[#allocation2 + $0x10e]]
        %v1242 = vstv %s1241
        %v1243 = vmul.f32 %v668, %v1242
        %v1244 = vadd.f32 %v1240, %v1243
        %s1245 = sld [smem:[#allocation2 + $0x10f]]
        %v1246 = vstv %s1245
        %v1247 = vmul.f32 %v707, %v1246
        %v1248 = vadd.f32 %v1244, %v1247
        %s1249 = sld [smem:[#allocation2 + $0x110]]
        %v1250 = vstv %s1249
        %v1251 = vmul.f32 %v746, %v1250
        %v1252 = vadd.f32 %v1248, %v1251
        %s1253 = sld [smem:[#allocation2 + $0x111]]
        %v1254 = vstv %s1253
        %v1255 = vmul.f32 %v785, %v1254
        %v1256 = vadd.f32 %v1252, %v1255
        %s1257 = sld [smem:[#allocation2 + $0x112]]
        %v1258 = vstv %s1257
        %v1259 = vmul.f32 %v824, %v1258
        %v1260 = vadd.f32 %v1256, %v1259
        %s1261 = sld [smem:[#allocation2 + $0x113]]
        %v1262 = vstv %s1261
        %v1263 = vmul.f32 %v863, %v1262
        %v1264 = vadd.f32 %v1260, %v1263
        %s1265 = sld [smem:[#allocation2 + $0x114]]
        %v1266 = vstv %s1265
        %v1267 = vmul.f32 %v902, %v1266
        %v1268 = vadd.f32 %v1264, %v1267
        %s1269 = sld [smem:[#allocation2 + $0x115]]
        %v1270 = vstv %s1269
        %v1271 = vmul.f32 %v941, %v1270
        %v1272 = vadd.f32 %v1268, %v1271
        %s1273 = sld [smem:[#allocation2 + $0x116]]
        %v1274 = vstv %s1273
        %v1275 = vmul.f32 %v980, %v1274
        %v1276 = vadd.f32 %v1272, %v1275
        %s1277 = sld [smem:[#allocation2 + $0x117]]
        %v1278 = vstv %s1277
        %v1279 = vmul.f32 %v317, %v1278
        %s1280 = sld [smem:[#allocation2 + $0x175]]
        %v1281 = vstv %s1280
        %v1282 = vadd.f32 %v1279, %v1281
        %s1283 = sld [smem:[#allocation2 + $0x118]]
        %v1284 = vstv %s1283
        %v1285 = vmul.f32 %v356, %v1284
        %v1286 = vadd.f32 %v1282, %v1285
        %s1287 = sld [smem:[#allocation2 + $0x119]]
        %v1288 = vstv %s1287
        %v1289 = vmul.f32 %v395, %v1288
        %v1290 = vadd.f32 %v1286, %v1289
        %s1291 = sld [smem:[#allocation2 + $0x11a]]
        %v1292 = vstv %s1291
        %v1293 = vmul.f32 %v434, %v1292
        %v1294 = vadd.f32 %v1290, %v1293
        %s1295 = sld [smem:[#allocation2 + $0x11b]]
        %v1296 = vstv %s1295
        %v1297 = vmul.f32 %v473, %v1296
        %v1298 = vadd.f32 %v1294, %v1297
        %s1299 = sld [smem:[#allocation2 + $0x11c]]
        %v1300 = vstv %s1299
        %v1301 = vmul.f32 %v512, %v1300
        %v1302 = vadd.f32 %v1298, %v1301
        %s1303 = sld [smem:[#allocation2 + $0x11d]]
        %v1304 = vstv %s1303
        %v1305 = vmul.f32 %v551, %v1304
        %v1306 = vadd.f32 %v1302, %v1305
        %s1307 = sld [smem:[#allocation2 + $0x11e]]
        %v1308 = vstv %s1307
        %v1309 = vmul.f32 %v590, %v1308
        %v1310 = vadd.f32 %v1306, %v1309
        %s1311 = sld [smem:[#allocation2 + $0x11f]]
        %v1312 = vstv %s1311
        %v1313 = vmul.f32 %v629, %v1312
        %v1314 = vadd.f32 %v1310, %v1313
        %s1315 = sld [smem:[#allocation2 + $0x120]]
        %v1316 = vstv %s1315
        %v1317 = vmul.f32 %v668, %v1316
        %v1318 = vadd.f32 %v1314, %v1317
        %s1319 = sld [smem:[#allocation2 + $0x121]]
        %v1320 = vstv %s1319
        %v1321 = vmul.f32 %v707, %v1320
        %v1322 = vadd.f32 %v1318, %v1321
        %s1323 = sld [smem:[#allocation2 + $0x122]]
        %v1324 = vstv %s1323
        %v1325 = vmul.f32 %v746, %v1324
        %v1326 = vadd.f32 %v1322, %v1325
        %s1327 = sld [smem:[#allocation2 + $0x123]]
        %v1328 = vstv %s1327
        %v1329 = vmul.f32 %v785, %v1328
        %v1330 = vadd.f32 %v1326, %v1329
        %s1331 = sld [smem:[#allocation2 + $0x124]]
        %v1332 = vstv %s1331
        %v1333 = vmul.f32 %v824, %v1332
        %v1334 = vadd.f32 %v1330, %v1333
        %s1335 = sld [smem:[#allocation2 + $0x125]]
        %v1336 = vstv %s1335
        %v1337 = vmul.f32 %v863, %v1336
        %v1338 = vadd.f32 %v1334, %v1337
        %s1339 = sld [smem:[#allocation2 + $0x126]]
        %v1340 = vstv %s1339
        %v1341 = vmul.f32 %v902, %v1340
        %v1342 = vadd.f32 %v1338, %v1341
        %s1343 = sld [smem:[#allocation2 + $0x127]]
        %v1344 = vstv %s1343
        %v1345 = vmul.f32 %v941, %v1344
        %v1346 = vadd.f32 %v1342, %v1345
        %s1347 = sld [smem:[#allocation2 + $0x128]]
        %v1348 = vstv %s1347
        %v1349 = vmul.f32 %v980, %v1348
        %v1350 = vadd.f32 %v1346, %v1349
        %s1351 = sld [smem:[#allocation2 + $0x129]]
        %v1352 = vstv %s1351
        %v1353 = vmul.f32 %v317, %v1352
        %s1354 = sld [smem:[#allocation2 + $0x176]]
        %v1355 = vstv %s1354
        %v1356 = vadd.f32 %v1353, %v1355
        %s1357 = sld [smem:[#allocation2 + $0x12a]]
        %v1358 = vstv %s1357
        %v1359 = vmul.f32 %v356, %v1358
        %v1360 = vadd.f32 %v1356, %v1359
        %s1361 = sld [smem:[#allocation2 + $0x12b]]
        %v1362 = vstv %s1361
        %v1363 = vmul.f32 %v395, %v1362
        %v1364 = vadd.f32 %v1360, %v1363
        %s1365 = sld [smem:[#allocation2 + $0x12c]]
        %v1366 = vstv %s1365
        %v1367 = vmul.f32 %v434, %v1366
        %v1368 = vadd.f32 %v1364, %v1367
        %s1369 = sld [smem:[#allocation2 + $0x12d]]
        %v1370 = vstv %s1369
        %v1371 = vmul.f32 %v473, %v1370
        %v1372 = vadd.f32 %v1368, %v1371
        %s1373 = sld [smem:[#allocation2 + $0x12e]]
        %v1374 = vstv %s1373
        %v1375 = vmul.f32 %v512, %v1374
        %v1376 = vadd.f32 %v1372, %v1375
        %s1377 = sld [smem:[#allocation2 + $0x12f]]
        %v1378 = vstv %s1377
        %v1379 = vmul.f32 %v551, %v1378
        %v1380 = vadd.f32 %v1376, %v1379
        %s1381 = sld [smem:[#allocation2 + $0x130]]
        %v1382 = vstv %s1381
        %v1383 = vmul.f32 %v590, %v1382
        %v1384 = vadd.f32 %v1380, %v1383
        %s1385 = sld [smem:[#allocation2 + $0x131]]
        %v1386 = vstv %s1385
        %v1387 = vmul.f32 %v629, %v1386
        %v1388 = vadd.f32 %v1384, %v1387
        %s1389 = sld [smem:[#allocation2 + $0x132]]
        %v1390 = vstv %s1389
        %v1391 = vmul.f32 %v668, %v1390
        %v1392 = vadd.f32 %v1388, %v1391
        %s1393 = sld [smem:[#allocation2 + $0x133]]
        %v1394 = vstv %s1393
        %v1395 = vmul.f32 %v707, %v1394
        %v1396 = vadd.f32 %v1392, %v1395
        %s1397 = sld [smem:[#allocation2 + $0x134]]
        %v1398 = vstv %s1397
        %v1399 = vmul.f32 %v746, %v1398
        %v1400 = vadd.f32 %v1396, %v1399
        %s1401 = sld [smem:[#allocation2 + $0x135]]
        %v1402 = vstv %s1401
        %v1403 = vmul.f32 %v785, %v1402
        %v1404 = vadd.f32 %v1400, %v1403
        %s1405 = sld [smem:[#allocation2 + $0x136]]
        %v1406 = vstv %s1405
        %v1407 = vmul.f32 %v824, %v1406
        %v1408 = vadd.f32 %v1404, %v1407
        %s1409 = sld [smem:[#allocation2 + $0x137]]
        %v1410 = vstv %s1409
        %v1411 = vmul.f32 %v863, %v1410
        %v1412 = vadd.f32 %v1408, %v1411
        %s1413 = sld [smem:[#allocation2 + $0x138]]
        %v1414 = vstv %s1413
        %v1415 = vmul.f32 %v902, %v1414
        %v1416 = vadd.f32 %v1412, %v1415
        %s1417 = sld [smem:[#allocation2 + $0x139]]
        %v1418 = vstv %s1417
        %v1419 = vmul.f32 %v941, %v1418
        %v1420 = vadd.f32 %v1416, %v1419
        %s1421 = sld [smem:[#allocation2 + $0x13a]]
        %v1422 = vstv %s1421
        %v1423 = vmul.f32 %v980, %v1422
        %v1424 = vadd.f32 %v1420, %v1423
        %s1425 = sld [smem:[#allocation2 + $0x13b]]
        %v1426 = vstv %s1425
        %v1427 = vmul.f32 %v317, %v1426
        %s1428 = sld [smem:[#allocation2 + $0x177]]
        %v1429 = vstv %s1428
        %v1430 = vadd.f32 %v1427, %v1429
        %s1431 = sld [smem:[#allocation2 + $0x13c]]
        %v1432 = vstv %s1431
        %v1433 = vmul.f32 %v356, %v1432
        %v1434 = vadd.f32 %v1430, %v1433
        %s1435 = sld [smem:[#allocation2 + $0x13d]]
        %v1436 = vstv %s1435
        %v1437 = vmul.f32 %v395, %v1436
        %v1438 = vadd.f32 %v1434, %v1437
        %s1439 = sld [smem:[#allocation2 + $0x13e]]
        %v1440 = vstv %s1439
        %v1441 = vmul.f32 %v434, %v1440
        %v1442 = vadd.f32 %v1438, %v1441
        %s1443 = sld [smem:[#allocation2 + $0x13f]]
        %v1444 = vstv %s1443
        %v1445 = vmul.f32 %v473, %v1444
        %v1446 = vadd.f32 %v1442, %v1445
        %s1447 = sld [smem:[#allocation2 + $0x140]]
        %v1448 = vstv %s1447
        %v1449 = vmul.f32 %v512, %v1448
        %v1450 = vadd.f32 %v1446, %v1449
        %s1451 = sld [smem:[#allocation2 + $0x141]]
        %v1452 = vstv %s1451
        %v1453 = vmul.f32 %v551, %v1452
        %v1454 = vadd.f32 %v1450, %v1453
        %s1455 = sld [smem:[#allocation2 + $0x142]]
        %v1456 = vstv %s1455
        %v1457 = vmul.f32 %v590, %v1456
        %v1458 = vadd.f32 %v1454, %v1457
        %s1459 = sld [smem:[#allocation2 + $0x143]]
        %v1460 = vstv %s1459
        %v1461 = vmul.f32 %v629, %v1460
        %v1462 = vadd.f32 %v1458, %v1461
        %s1463 = sld [smem:[#allocation2 + $0x144]]
        %v1464 = vstv %s1463
        %v1465 = vmul.f32 %v668, %v1464
        %v1466 = vadd.f32 %v1462, %v1465
        %s1467 = sld [smem:[#allocation2 + $0x145]]
        %v1468 = vstv %s1467
        %v1469 = vmul.f32 %v707, %v1468
        %v1470 = vadd.f32 %v1466, %v1469
        %s1471 = sld [smem:[#allocation2 + $0x146]]
        %v1472 = vstv %s1471
        %v1473 = vmul.f32 %v746, %v1472
        %v1474 = vadd.f32 %v1470, %v1473
        %s1475 = sld [smem:[#allocation2 + $0x147]]
        %v1476 = vstv %s1475
        %v1477 = vmul.f32 %v785, %v1476
        %v1478 = vadd.f32 %v1474, %v1477
        %s1479 = sld [smem:[#allocation2 + $0x148]]
        %v1480 = vstv %s1479
        %v1481 = vmul.f32 %v824, %v1480
        %v1482 = vadd.f32 %v1478, %v1481
        %s1483 = sld [smem:[#allocation2 + $0x149]]
        %v1484 = vstv %s1483
        %v1485 = vmul.f32 %v863, %v1484
        %v1486 = vadd.f32 %v1482, %v1485
        %s1487 = sld [smem:[#allocation2 + $0x14a]]
        %v1488 = vstv %s1487
        %v1489 = vmul.f32 %v902, %v1488
        %v1490 = vadd.f32 %v1486, %v1489
        %s1491 = sld [smem:[#allocation2 + $0x14b]]
        %v1492 = vstv %s1491
        %v1493 = vmul.f32 %v941, %v1492
        %v1494 = vadd.f32 %v1490, %v1493
        %s1495 = sld [smem:[#allocation2 + $0x14c]]
        %v1496 = vstv %s1495
        %v1497 = vmul.f32 %v980, %v1496
        %v1498 = vadd.f32 %v1494, %v1497
        %s1499 = sld [smem:[#allocation2 + $0x14d]]
        %v1500 = vstv %s1499
        %v1501 = vmul.f32 %v317, %v1500
        %s1502 = sld [smem:[#allocation2 + $0x178]]
        %v1503 = vstv %s1502
        %v1504 = vadd.f32 %v1501, %v1503
        %s1505 = sld [smem:[#allocation2 + $0x14e]]
        %v1506 = vstv %s1505
        %v1507 = vmul.f32 %v356, %v1506
        %v1508 = vadd.f32 %v1504, %v1507
        %s1509 = sld [smem:[#allocation2 + $0x14f]]
        %v1510 = vstv %s1509
        %v1511 = vmul.f32 %v395, %v1510
        %v1512 = vadd.f32 %v1508, %v1511
        %s1513 = sld [smem:[#allocation2 + $0x150]]
        %v1514 = vstv %s1513
        %v1515 = vmul.f32 %v434, %v1514
        %v1516 = vadd.f32 %v1512, %v1515
        %s1517 = sld [smem:[#allocation2 + $0x151]]
        %v1518 = vstv %s1517
        %v1519 = vmul.f32 %v473, %v1518
        %v1520 = vadd.f32 %v1516, %v1519
        %s1521 = sld [smem:[#allocation2 + $0x152]]
        %v1522 = vstv %s1521
        %v1523 = vmul.f32 %v512, %v1522
        %v1524 = vadd.f32 %v1520, %v1523
        %s1525 = sld [smem:[#allocation2 + $0x153]]
        %v1526 = vstv %s1525
        %v1527 = vmul.f32 %v551, %v1526
        %v1528 = vadd.f32 %v1524, %v1527
        %s1529 = sld [smem:[#allocation2 + $0x154]]
        %v1530 = vstv %s1529
        %v1531 = vmul.f32 %v590, %v1530
        %v1532 = vadd.f32 %v1528, %v1531
        %s1533 = sld [smem:[#allocation2 + $0x155]]
        %v1534 = vstv %s1533
        %v1535 = vmul.f32 %v629, %v1534
        %v1536 = vadd.f32 %v1532, %v1535
        %s1537 = sld [smem:[#allocation2 + $0x156]]
        %v1538 = vstv %s1537
        %v1539 = vmul.f32 %v668, %v1538
        %v1540 = vadd.f32 %v1536, %v1539
        %s1541 = sld [smem:[#allocation2 + $0x157]]
        %v1542 = vstv %s1541
        %v1543 = vmul.f32 %v707, %v1542
        %v1544 = vadd.f32 %v1540, %v1543
        %s1545 = sld [smem:[#allocation2 + $0x158]]
        %v1546 = vstv %s1545
        %v1547 = vmul.f32 %v746, %v1546
        %v1548 = vadd.f32 %v1544, %v1547
        %s1549 = sld [smem:[#allocation2 + $0x159]]
        %v1550 = vstv %s1549
        %v1551 = vmul.f32 %v785, %v1550
        %v1552 = vadd.f32 %v1548, %v1551
        %s1553 = sld [smem:[#allocation2 + $0x15a]]
        %v1554 = vstv %s1553
        %v1555 = vmul.f32 %v824, %v1554
        %v1556 = vadd.f32 %v1552, %v1555
        %s1557 = sld [smem:[#allocation2 + $0x15b]]
        %v1558 = vstv %s1557
        %v1559 = vmul.f32 %v863, %v1558
        %v1560 = vadd.f32 %v1556, %v1559
        %s1561 = sld [smem:[#allocation2 + $0x15c]]
        %v1562 = vstv %s1561
        %v1563 = vmul.f32 %v902, %v1562
        %v1564 = vadd.f32 %v1560, %v1563
        %s1565 = sld [smem:[#allocation2 + $0x15d]]
        %v1566 = vstv %s1565
        %v1567 = vmul.f32 %v941, %v1566
        %v1568 = vadd.f32 %v1564, %v1567
        %s1569 = sld [smem:[#allocation2 + $0x15e]]
        %v1570 = vstv %s1569
        %v1571 = vmul.f32 %v980, %v1570
        %v1572 = vadd.f32 %v1568, %v1571
        %s1573 = sld [smem:[#allocation2 + $0x15f]]
        %v1574 = vstv %s1573
        %v1575 = vmul.f32 %v317, %v1574
        %s1576 = sld [smem:[#allocation2 + $0x179]]
        %v1577 = vstv %s1576
        %v1578 = vadd.f32 %v1575, %v1577
        %s1579 = sld [smem:[#allocation2 + $0x160]]
        %v1580 = vstv %s1579
        %v1581 = vmul.f32 %v356, %v1580
        %v1582 = vadd.f32 %v1578, %v1581
        %s1583 = sld [smem:[#allocation2 + $0x161]]
        %v1584 = vstv %s1583
        %v1585 = vmul.f32 %v395, %v1584
        %v1586 = vadd.f32 %v1582, %v1585
        %s1587 = sld [smem:[#allocation2 + $0x162]]
        %v1588 = vstv %s1587
        %v1589 = vmul.f32 %v434, %v1588
        %v1590 = vadd.f32 %v1586, %v1589
        %s1591 = sld [smem:[#allocation2 + $0x163]]
        %v1592 = vstv %s1591
        %v1593 = vmul.f32 %v473, %v1592
        %v1594 = vadd.f32 %v1590, %v1593
        %s1595 = sld [smem:[#allocation2 + $0x164]]
        %v1596 = vstv %s1595
        %v1597 = vmul.f32 %v512, %v1596
        %v1598 = vadd.f32 %v1594, %v1597
        %s1599 = sld [smem:[#allocation2 + $0x165]]
        %v1600 = vstv %s1599
        %v1601 = vmul.f32 %v551, %v1600
        %v1602 = vadd.f32 %v1598, %v1601
        %s1603 = sld [smem:[#allocation2 + $0x166]]
        %v1604 = vstv %s1603
        %v1605 = vmul.f32 %v590, %v1604
        %v1606 = vadd.f32 %v1602, %v1605
        %s1607 = sld [smem:[#allocation2 + $0x167]]
        %v1608 = vstv %s1607
        %v1609 = vmul.f32 %v629, %v1608
        %v1610 = vadd.f32 %v1606, %v1609
        %s1611 = sld [smem:[#allocation2 + $0x168]]
        %v1612 = vstv %s1611
        %v1613 = vmul.f32 %v668, %v1612
        %v1614 = vadd.f32 %v1610, %v1613
        %s1615 = sld [smem:[#allocation2 + $0x169]]
        %v1616 = vstv %s1615
        %v1617 = vmul.f32 %v707, %v1616
        %v1618 = vadd.f32 %v1614, %v1617
        %s1619 = sld [smem:[#allocation2 + $0x16a]]
        %v1620 = vstv %s1619
        %v1621 = vmul.f32 %v746, %v1620
        %v1622 = vadd.f32 %v1618, %v1621
        %s1623 = sld [smem:[#allocation2 + $0x16b]]
        %v1624 = vstv %s1623
        %v1625 = vmul.f32 %v785, %v1624
        %v1626 = vadd.f32 %v1622, %v1625
        %s1627 = sld [smem:[#allocation2 + $0x16c]]
        %v1628 = vstv %s1627
        %v1629 = vmul.f32 %v824, %v1628
        %v1630 = vadd.f32 %v1626, %v1629
        %s1631 = sld [smem:[#allocation2 + $0x16d]]
        %v1632 = vstv %s1631
        %v1633 = vmul.f32 %v863, %v1632
        %v1634 = vadd.f32 %v1630, %v1633
        %s1635 = sld [smem:[#allocation2 + $0x16e]]
        %v1636 = vstv %s1635
        %v1637 = vmul.f32 %v902, %v1636
        %v1638 = vadd.f32 %v1634, %v1637
        %s1639 = sld [smem:[#allocation2 + $0x16f]]
        %v1640 = vstv %s1639
        %v1641 = vmul.f32 %v941, %v1640
        %v1642 = vadd.f32 %v1638, %v1641
        %s1643 = sld [smem:[#allocation2 + $0x170]]
        %v1644 = vstv %s1643
        %v1645 = vmul.f32 %v980, %v1644
        %v1646 = vadd.f32 %v1642, %v1645
        %s1647 = sld [smem:[#allocation2 + $0x17a]]
        %v1648 = vstv %s1647
        %v1649 = vmul.f32 %v1054, %v1648
        %s1650 = sld [smem:[#allocation2 + $0x21c]]
        %v1651 = vstv %s1650
        %v1652 = vadd.f32 %v1649, %v1651
        %s1653 = sld [smem:[#allocation2 + $0x17b]]
        %v1654 = vstv %s1653
        %v1655 = vmul.f32 %v1128, %v1654
        %v1656 = vadd.f32 %v1652, %v1655
        %s1657 = sld [smem:[#allocation2 + $0x17c]]
        %v1658 = vstv %s1657
        %v1659 = vmul.f32 %v1202, %v1658
        %v1660 = vadd.f32 %v1656, %v1659
        %s1661 = sld [smem:[#allocation2 + $0x17d]]
        %v1662 = vstv %s1661
        %v1663 = vmul.f32 %v1276, %v1662
        %v1664 = vadd.f32 %v1660, %v1663
        %s1665 = sld [smem:[#allocation2 + $0x17e]]
        %v1666 = vstv %s1665
        %v1667 = vmul.f32 %v1350, %v1666
        %v1668 = vadd.f32 %v1664, %v1667
        %s1669 = sld [smem:[#allocation2 + $0x17f]]
        %v1670 = vstv %s1669
        %v1671 = vmul.f32 %v1424, %v1670
        %v1672 = vadd.f32 %v1668, %v1671
        %s1673 = sld [smem:[#allocation2 + $0x180]]
        %v1674 = vstv %s1673
        %v1675 = vmul.f32 %v1498, %v1674
        %v1676 = vadd.f32 %v1672, %v1675
        %s1677 = sld [smem:[#allocation2 + $0x181]]
        %v1678 = vstv %s1677
        %v1679 = vmul.f32 %v1572, %v1678
        %v1680 = vadd.f32 %v1676, %v1679
        %s1681 = sld [smem:[#allocation2 + $0x182]]
        %v1682 = vstv %s1681
        %v1683 = vmul.f32 %v1646, %v1682
        %v1684 = vadd.f32 %v1680, %v1683
        %v1685 = vmax.f32 %v1684, 0.0
        %s1686 = sld [smem:[#allocation2 + $0x183]]
        %v1687 = vstv %s1686
        %v1688 = vmul.f32 %v1054, %v1687
        %s1689 = sld [smem:[#allocation2 + $0x21d]]
        %v1690 = vstv %s1689
        %v1691 = vadd.f32 %v1688, %v1690
        %s1692 = sld [smem:[#allocation2 + $0x184]]
        %v1693 = vstv %s1692
        %v1694 = vmul.f32 %v1128, %v1693
        %v1695 = vadd.f32 %v1691, %v1694
        %s1696 = sld [smem:[#allocation2 + $0x185]]
        %v1697 = vstv %s1696
        %v1698 = vmul.f32 %v1202, %v1697
        %v1699 = vadd.f32 %v1695, %v1698
        %s1700 = sld [smem:[#allocation2 + $0x186]]
        %v1701 = vstv %s1700
        %v1702 = vmul.f32 %v1276, %v1701
        %v1703 = vadd.f32 %v1699, %v1702
        %s1704 = sld [smem:[#allocation2 + $0x187]]
        %v1705 = vstv %s1704
        %v1706 = vmul.f32 %v1350, %v1705
        %v1707 = vadd.f32 %v1703, %v1706
        %s1708 = sld [smem:[#allocation2 + $0x188]]
        %v1709 = vstv %s1708
        %v1710 = vmul.f32 %v1424, %v1709
        %v1711 = vadd.f32 %v1707, %v1710
        %s1712 = sld [smem:[#allocation2 + $0x189]]
        %v1713 = vstv %s1712
        %v1714 = vmul.f32 %v1498, %v1713
        %v1715 = vadd.f32 %v1711, %v1714
        %s1716 = sld [smem:[#allocation2 + $0x18a]]
        %v1717 = vstv %s1716
        %v1718 = vmul.f32 %v1572, %v1717
        %v1719 = vadd.f32 %v1715, %v1718
        %s1720 = sld [smem:[#allocation2 + $0x18b]]
        %v1721 = vstv %s1720
        %v1722 = vmul.f32 %v1646, %v1721
        %v1723 = vadd.f32 %v1719, %v1722
        %v1724 = vmax.f32 %v1723, 0.0
        %s1725 = sld [smem:[#allocation2 + $0x18c]]
        %v1726 = vstv %s1725
        %v1727 = vmul.f32 %v1054, %v1726
        %s1728 = sld [smem:[#allocation2 + $0x21e]]
        %v1729 = vstv %s1728
        %v1730 = vadd.f32 %v1727, %v1729
        %s1731 = sld [smem:[#allocation2 + $0x18d]]
        %v1732 = vstv %s1731
        %v1733 = vmul.f32 %v1128, %v1732
        %v1734 = vadd.f32 %v1730, %v1733
        %s1735 = sld [smem:[#allocation2 + $0x18e]]
        %v1736 = vstv %s1735
        %v1737 = vmul.f32 %v1202, %v1736
        %v1738 = vadd.f32 %v1734, %v1737
        %s1739 = sld [smem:[#allocation2 + $0x18f]]
        %v1740 = vstv %s1739
        %v1741 = vmul.f32 %v1276, %v1740
        %v1742 = vadd.f32 %v1738, %v1741
        %s1743 = sld [smem:[#allocation2 + $0x190]]
        %v1744 = vstv %s1743
        %v1745 = vmul.f32 %v1350, %v1744
        %v1746 = vadd.f32 %v1742, %v1745
        %s1747 = sld [smem:[#allocation2 + $0x191]]
        %v1748 = vstv %s1747
        %v1749 = vmul.f32 %v1424, %v1748
        %v1750 = vadd.f32 %v1746, %v1749
        %s1751 = sld [smem:[#allocation2 + $0x192]]
        %v1752 = vstv %s1751
        %v1753 = vmul.f32 %v1498, %v1752
        %v1754 = vadd.f32 %v1750, %v1753
        %s1755 = sld [smem:[#allocation2 + $0x193]]
        %v1756 = vstv %s1755
        %v1757 = vmul.f32 %v1572, %v1756
        %v1758 = vadd.f32 %v1754, %v1757
        %s1759 = sld [smem:[#allocation2 + $0x194]]
        %v1760 = vstv %s1759
        %v1761 = vmul.f32 %v1646, %v1760
        %v1762 = vadd.f32 %v1758, %v1761
        %v1763 = vmax.f32 %v1762, 0.0
        %s1764 = sld [smem:[#allocation2 + $0x195]]
        %v1765 = vstv %s1764
        %v1766 = vmul.f32 %v1054, %v1765
        %s1767 = sld [smem:[#allocation2 + $0x21f]]
        %v1768 = vstv %s1767
        %v1769 = vadd.f32 %v1766, %v1768
        %s1770 = sld [smem:[#allocation2 + $0x196]]
        %v1771 = vstv %s1770
        %v1772 = vmul.f32 %v1128, %v1771
        %v1773 = vadd.f32 %v1769, %v1772
        %s1774 = sld [smem:[#allocation2 + $0x197]]
        %v1775 = vstv %s1774
        %v1776 = vmul.f32 %v1202, %v1775
        %v1777 = vadd.f32 %v1773, %v1776
        %s1778 = sld [smem:[#allocation2 + $0x198]]
        %v1779 = vstv %s1778
        %v1780 = vmul.f32 %v1276, %v1779
        %v1781 = vadd.f32 %v1777, %v1780
        %s1782 = sld [smem:[#allocation2 + $0x199]]
        %v1783 = vstv %s1782
        %v1784 = vmul.f32 %v1350, %v1783
        %v1785 = vadd.f32 %v1781, %v1784
        %s1786 = sld [smem:[#allocation2 + $0x19a]]
        %v1787 = vstv %s1786
        %v1788 = vmul.f32 %v1424, %v1787
        %v1789 = vadd.f32 %v1785, %v1788
        %s1790 = sld [smem:[#allocation2 + $0x19b]]
        %v1791 = vstv %s1790
        %v1792 = vmul.f32 %v1498, %v1791
        %v1793 = vadd.f32 %v1789, %v1792
        %s1794 = sld [smem:[#allocation2 + $0x19c]]
        %v1795 = vstv %s1794
        %v1796 = vmul.f32 %v1572, %v1795
        %v1797 = vadd.f32 %v1793, %v1796
        %s1798 = sld [smem:[#allocation2 + $0x19d]]
        %v1799 = vstv %s1798
        %v1800 = vmul.f32 %v1646, %v1799
        %v1801 = vadd.f32 %v1797, %v1800
        %v1802 = vmax.f32 %v1801, 0.0
        %s1803 = sld [smem:[#allocation2 + $0x19e]]
        %v1804 = vstv %s1803
        %v1805 = vmul.f32 %v1054, %v1804
        %s1806 = sld [smem:[#allocation2 + $0x220]]
        %v1807 = vstv %s1806
        %v1808 = vadd.f32 %v1805, %v1807
        %s1809 = sld [smem:[#allocation2 + $0x19f]]
        %v1810 = vstv %s1809
        %v1811 = vmul.f32 %v1128, %v1810
        %v1812 = vadd.f32 %v1808, %v1811
        %s1813 = sld [smem:[#allocation2 + $0x1a0]]
        %v1814 = vstv %s1813
        %v1815 = vmul.f32 %v1202, %v1814
        %v1816 = vadd.f32 %v1812, %v1815
        %s1817 = sld [smem:[#allocation2 + $0x1a1]]
        %v1818 = vstv %s1817
        %v1819 = vmul.f32 %v1276, %v1818
        %v1820 = vadd.f32 %v1816, %v1819
        %s1821 = sld [smem:[#allocation2 + $0x1a2]]
        %v1822 = vstv %s1821
        %v1823 = vmul.f32 %v1350, %v1822
        %v1824 = vadd.f32 %v1820, %v1823
        %s1825 = sld [smem:[#allocation2 + $0x1a3]]
        %v1826 = vstv %s1825
        %v1827 = vmul.f32 %v1424, %v1826
        %v1828 = vadd.f32 %v1824, %v1827
        %s1829 = sld [smem:[#allocation2 + $0x1a4]]
        %v1830 = vstv %s1829
        %v1831 = vmul.f32 %v1498, %v1830
        %v1832 = vadd.f32 %v1828, %v1831
        %s1833 = sld [smem:[#allocation2 + $0x1a5]]
        %v1834 = vstv %s1833
        %v1835 = vmul.f32 %v1572, %v1834
        %v1836 = vadd.f32 %v1832, %v1835
        %s1837 = sld [smem:[#allocation2 + $0x1a6]]
        %v1838 = vstv %s1837
        %v1839 = vmul.f32 %v1646, %v1838
        %v1840 = vadd.f32 %v1836, %v1839
        %v1841 = vmax.f32 %v1840, 0.0
        %s1842 = sld [smem:[#allocation2 + $0x1a7]]
        %v1843 = vstv %s1842
        %v1844 = vmul.f32 %v1054, %v1843
        %s1845 = sld [smem:[#allocation2 + $0x221]]
        %v1846 = vstv %s1845
        %v1847 = vadd.f32 %v1844, %v1846
        %s1848 = sld [smem:[#allocation2 + $0x1a8]]
        %v1849 = vstv %s1848
        %v1850 = vmul.f32 %v1128, %v1849
        %v1851 = vadd.f32 %v1847, %v1850
        %s1852 = sld [smem:[#allocation2 + $0x1a9]]
        %v1853 = vstv %s1852
        %v1854 = vmul.f32 %v1202, %v1853
        %v1855 = vadd.f32 %v1851, %v1854
        %s1856 = sld [smem:[#allocation2 + $0x1aa]]
        %v1857 = vstv %s1856
        %v1858 = vmul.f32 %v1276, %v1857
        %v1859 = vadd.f32 %v1855, %v1858
        %s1860 = sld [smem:[#allocation2 + $0x1ab]]
        %v1861 = vstv %s1860
        %v1862 = vmul.f32 %v1350, %v1861
        %v1863 = vadd.f32 %v1859, %v1862
        %s1864 = sld [smem:[#allocation2 + $0x1ac]]
        %v1865 = vstv %s1864
        %v1866 = vmul.f32 %v1424, %v1865
        %v1867 = vadd.f32 %v1863, %v1866
        %s1868 = sld [smem:[#allocation2 + $0x1ad]]
        %v1869 = vstv %s1868
        %v1870 = vmul.f32 %v1498, %v1869
        %v1871 = vadd.f32 %v1867, %v1870
        %s1872 = sld [smem:[#allocation2 + $0x1ae]]
        %v1873 = vstv %s1872
        %v1874 = vmul.f32 %v1572, %v1873
        %v1875 = vadd.f32 %v1871, %v1874
        %s1876 = sld [smem:[#allocation2 + $0x1af]]
        %v1877 = vstv %s1876
        %v1878 = vmul.f32 %v1646, %v1877
        %v1879 = vadd.f32 %v1875, %v1878
        %v1880 = vmax.f32 %v1879, 0.0
        %s1881 = sld [smem:[#allocation2 + $0x1b0]]
        %v1882 = vstv %s1881
        %v1883 = vmul.f32 %v1054, %v1882
        %s1884 = sld [smem:[#allocation2 + $0x222]]
        %v1885 = vstv %s1884
        %v1886 = vadd.f32 %v1883, %v1885
        %s1887 = sld [smem:[#allocation2 + $0x1b1]]
        %v1888 = vstv %s1887
        %v1889 = vmul.f32 %v1128, %v1888
        %v1890 = vadd.f32 %v1886, %v1889
        %s1891 = sld [smem:[#allocation2 + $0x1b2]]
        %v1892 = vstv %s1891
        %v1893 = vmul.f32 %v1202, %v1892
        %v1894 = vadd.f32 %v1890, %v1893
        %s1895 = sld [smem:[#allocation2 + $0x1b3]]
        %v1896 = vstv %s1895
        %v1897 = vmul.f32 %v1276, %v1896
        %v1898 = vadd.f32 %v1894, %v1897
        %s1899 = sld [smem:[#allocation2 + $0x1b4]]
        %v1900 = vstv %s1899
        %v1901 = vmul.f32 %v1350, %v1900
        %v1902 = vadd.f32 %v1898, %v1901
        %s1903 = sld [smem:[#allocation2 + $0x1b5]]
        %v1904 = vstv %s1903
        %v1905 = vmul.f32 %v1424, %v1904
        %v1906 = vadd.f32 %v1902, %v1905
        %s1907 = sld [smem:[#allocation2 + $0x1b6]]
        %v1908 = vstv %s1907
        %v1909 = vmul.f32 %v1498, %v1908
        %v1910 = vadd.f32 %v1906, %v1909
        %s1911 = sld [smem:[#allocation2 + $0x1b7]]
        %v1912 = vstv %s1911
        %v1913 = vmul.f32 %v1572, %v1912
        %v1914 = vadd.f32 %v1910, %v1913
        %s1915 = sld [smem:[#allocation2 + $0x1b8]]
        %v1916 = vstv %s1915
        %v1917 = vmul.f32 %v1646, %v1916
        %v1918 = vadd.f32 %v1914, %v1917
        %v1919 = vmax.f32 %v1918, 0.0
        %s1920 = sld [smem:[#allocation2 + $0x1b9]]
        %v1921 = vstv %s1920
        %v1922 = vmul.f32 %v1054, %v1921
        %s1923 = sld [smem:[#allocation2 + $0x223]]
        %v1924 = vstv %s1923
        %v1925 = vadd.f32 %v1922, %v1924
        %s1926 = sld [smem:[#allocation2 + $0x1ba]]
        %v1927 = vstv %s1926
        %v1928 = vmul.f32 %v1128, %v1927
        %v1929 = vadd.f32 %v1925, %v1928
        %s1930 = sld [smem:[#allocation2 + $0x1bb]]
        %v1931 = vstv %s1930
        %v1932 = vmul.f32 %v1202, %v1931
        %v1933 = vadd.f32 %v1929, %v1932
        %s1934 = sld [smem:[#allocation2 + $0x1bc]]
        %v1935 = vstv %s1934
        %v1936 = vmul.f32 %v1276, %v1935
        %v1937 = vadd.f32 %v1933, %v1936
        %s1938 = sld [smem:[#allocation2 + $0x1bd]]
        %v1939 = vstv %s1938
        %v1940 = vmul.f32 %v1350, %v1939
        %v1941 = vadd.f32 %v1937, %v1940
        %s1942 = sld [smem:[#allocation2 + $0x1be]]
        %v1943 = vstv %s1942
        %v1944 = vmul.f32 %v1424, %v1943
        %v1945 = vadd.f32 %v1941, %v1944
        %s1946 = sld [smem:[#allocation2 + $0x1bf]]
        %v1947 = vstv %s1946
        %v1948 = vmul.f32 %v1498, %v1947
        %v1949 = vadd.f32 %v1945, %v1948
        %s1950 = sld [smem:[#allocation2 + $0x1c0]]
        %v1951 = vstv %s1950
        %v1952 = vmul.f32 %v1572, %v1951
        %v1953 = vadd.f32 %v1949, %v1952
        %s1954 = sld [smem:[#allocation2 + $0x1c1]]
        %v1955 = vstv %s1954
        %v1956 = vmul.f32 %v1646, %v1955
        %v1957 = vadd.f32 %v1953, %v1956
        %v1958 = vmax.f32 %v1957, 0.0
        %s1959 = sld [smem:[#allocation2 + $0x1c2]]
        %v1960 = vstv %s1959
        %v1961 = vmul.f32 %v1054, %v1960
        %s1962 = sld [smem:[#allocation2 + $0x224]]
        %v1963 = vstv %s1962
        %v1964 = vadd.f32 %v1961, %v1963
        %s1965 = sld [smem:[#allocation2 + $0x1c3]]
        %v1966 = vstv %s1965
        %v1967 = vmul.f32 %v1128, %v1966
        %v1968 = vadd.f32 %v1964, %v1967
        %s1969 = sld [smem:[#allocation2 + $0x1c4]]
        %v1970 = vstv %s1969
        %v1971 = vmul.f32 %v1202, %v1970
        %v1972 = vadd.f32 %v1968, %v1971
        %s1973 = sld [smem:[#allocation2 + $0x1c5]]
        %v1974 = vstv %s1973
        %v1975 = vmul.f32 %v1276, %v1974
        %v1976 = vadd.f32 %v1972, %v1975
        %s1977 = sld [smem:[#allocation2 + $0x1c6]]
        %v1978 = vstv %s1977
        %v1979 = vmul.f32 %v1350, %v1978
        %v1980 = vadd.f32 %v1976, %v1979
        %s1981 = sld [smem:[#allocation2 + $0x1c7]]
        %v1982 = vstv %s1981
        %v1983 = vmul.f32 %v1424, %v1982
        %v1984 = vadd.f32 %v1980, %v1983
        %s1985 = sld [smem:[#allocation2 + $0x1c8]]
        %v1986 = vstv %s1985
        %v1987 = vmul.f32 %v1498, %v1986
        %v1988 = vadd.f32 %v1984, %v1987
        %s1989 = sld [smem:[#allocation2 + $0x1c9]]
        %v1990 = vstv %s1989
        %v1991 = vmul.f32 %v1572, %v1990
        %v1992 = vadd.f32 %v1988, %v1991
        %s1993 = sld [smem:[#allocation2 + $0x1ca]]
        %v1994 = vstv %s1993
        %v1995 = vmul.f32 %v1646, %v1994
        %v1996 = vadd.f32 %v1992, %v1995
        %v1997 = vmax.f32 %v1996, 0.0
        %s1998 = sld [smem:[#allocation2 + $0x1cb]]
        %v1999 = vstv %s1998
        %v2000 = vmul.f32 %v1054, %v1999
        %s2001 = sld [smem:[#allocation2 + $0x225]]
        %v2002 = vstv %s2001
        %v2003 = vadd.f32 %v2000, %v2002
        %s2004 = sld [smem:[#allocation2 + $0x1cc]]
        %v2005 = vstv %s2004
        %v2006 = vmul.f32 %v1128, %v2005
        %v2007 = vadd.f32 %v2003, %v2006
        %s2008 = sld [smem:[#allocation2 + $0x1cd]]
        %v2009 = vstv %s2008
        %v2010 = vmul.f32 %v1202, %v2009
        %v2011 = vadd.f32 %v2007, %v2010
        %s2012 = sld [smem:[#allocation2 + $0x1ce]]
        %v2013 = vstv %s2012
        %v2014 = vmul.f32 %v1276, %v2013
        %v2015 = vadd.f32 %v2011, %v2014
        %s2016 = sld [smem:[#allocation2 + $0x1cf]]
        %v2017 = vstv %s2016
        %v2018 = vmul.f32 %v1350, %v2017
        %v2019 = vadd.f32 %v2015, %v2018
        %s2020 = sld [smem:[#allocation2 + $0x1d0]]
        %v2021 = vstv %s2020
        %v2022 = vmul.f32 %v1424, %v2021
        %v2023 = vadd.f32 %v2019, %v2022
        %s2024 = sld [smem:[#allocation2 + $0x1d1]]
        %v2025 = vstv %s2024
        %v2026 = vmul.f32 %v1498, %v2025
        %v2027 = vadd.f32 %v2023, %v2026
        %s2028 = sld [smem:[#allocation2 + $0x1d2]]
        %v2029 = vstv %s2028
        %v2030 = vmul.f32 %v1572, %v2029
        %v2031 = vadd.f32 %v2027, %v2030
        %s2032 = sld [smem:[#allocation2 + $0x1d3]]
        %v2033 = vstv %s2032
        %v2034 = vmul.f32 %v1646, %v2033
        %v2035 = vadd.f32 %v2031, %v2034
        %v2036 = vmax.f32 %v2035, 0.0
        %s2037 = sld [smem:[#allocation2 + $0x1d4]]
        %v2038 = vstv %s2037
        %v2039 = vmul.f32 %v1054, %v2038
        %s2040 = sld [smem:[#allocation2 + $0x226]]
        %v2041 = vstv %s2040
        %v2042 = vadd.f32 %v2039, %v2041
        %s2043 = sld [smem:[#allocation2 + $0x1d5]]
        %v2044 = vstv %s2043
        %v2045 = vmul.f32 %v1128, %v2044
        %v2046 = vadd.f32 %v2042, %v2045
        %s2047 = sld [smem:[#allocation2 + $0x1d6]]
        %v2048 = vstv %s2047
        %v2049 = vmul.f32 %v1202, %v2048
        %v2050 = vadd.f32 %v2046, %v2049
        %s2051 = sld [smem:[#allocation2 + $0x1d7]]
        %v2052 = vstv %s2051
        %v2053 = vmul.f32 %v1276, %v2052
        %v2054 = vadd.f32 %v2050, %v2053
        %s2055 = sld [smem:[#allocation2 + $0x1d8]]
        %v2056 = vstv %s2055
        %v2057 = vmul.f32 %v1350, %v2056
        %v2058 = vadd.f32 %v2054, %v2057
        %s2059 = sld [smem:[#allocation2 + $0x1d9]]
        %v2060 = vstv %s2059
        %v2061 = vmul.f32 %v1424, %v2060
        %v2062 = vadd.f32 %v2058, %v2061
        %s2063 = sld [smem:[#allocation2 + $0x1da]]
        %v2064 = vstv %s2063
        %v2065 = vmul.f32 %v1498, %v2064
        %v2066 = vadd.f32 %v2062, %v2065
        %s2067 = sld [smem:[#allocation2 + $0x1db]]
        %v2068 = vstv %s2067
        %v2069 = vmul.f32 %v1572, %v2068
        %v2070 = vadd.f32 %v2066, %v2069
        %s2071 = sld [smem:[#allocation2 + $0x1dc]]
        %v2072 = vstv %s2071
        %v2073 = vmul.f32 %v1646, %v2072
        %v2074 = vadd.f32 %v2070, %v2073
        %v2075 = vmax.f32 %v2074, 0.0
        %s2076 = sld [smem:[#allocation2 + $0x1dd]]
        %v2077 = vstv %s2076
        %v2078 = vmul.f32 %v1054, %v2077
        %s2079 = sld [smem:[#allocation2 + $0x227]]
        %v2080 = vstv %s2079
        %v2081 = vadd.f32 %v2078, %v2080
        %s2082 = sld [smem:[#allocation2 + $0x1de]]
        %v2083 = vstv %s2082
        %v2084 = vmul.f32 %v1128, %v2083
        %v2085 = vadd.f32 %v2081, %v2084
        %s2086 = sld [smem:[#allocation2 + $0x1df]]
        %v2087 = vstv %s2086
        %v2088 = vmul.f32 %v1202, %v2087
        %v2089 = vadd.f32 %v2085, %v2088
        %s2090 = sld [smem:[#allocation2 + $0x1e0]]
        %v2091 = vstv %s2090
        %v2092 = vmul.f32 %v1276, %v2091
        %v2093 = vadd.f32 %v2089, %v2092
        %s2094 = sld [smem:[#allocation2 + $0x1e1]]
        %v2095 = vstv %s2094
        %v2096 = vmul.f32 %v1350, %v2095
        %v2097 = vadd.f32 %v2093, %v2096
        %s2098 = sld [smem:[#allocation2 + $0x1e2]]
        %v2099 = vstv %s2098
        %v2100 = vmul.f32 %v1424, %v2099
        %v2101 = vadd.f32 %v2097, %v2100
        %s2102 = sld [smem:[#allocation2 + $0x1e3]]
        %v2103 = vstv %s2102
        %v2104 = vmul.f32 %v1498, %v2103
        %v2105 = vadd.f32 %v2101, %v2104
        %s2106 = sld [smem:[#allocation2 + $0x1e4]]
        %v2107 = vstv %s2106
        %v2108 = vmul.f32 %v1572, %v2107
        %v2109 = vadd.f32 %v2105, %v2108
        %s2110 = sld [smem:[#allocation2 + $0x1e5]]
        %v2111 = vstv %s2110
        %v2112 = vmul.f32 %v1646, %v2111
        %v2113 = vadd.f32 %v2109, %v2112
        %v2114 = vmax.f32 %v2113, 0.0
        %s2115 = sld [smem:[#allocation2 + $0x1e6]]
        %v2116 = vstv %s2115
        %v2117 = vmul.f32 %v1054, %v2116
        %s2118 = sld [smem:[#allocation2 + $0x228]]
        %v2119 = vstv %s2118
        %v2120 = vadd.f32 %v2117, %v2119
        %s2121 = sld [smem:[#allocation2 + $0x1e7]]
        %v2122 = vstv %s2121
        %v2123 = vmul.f32 %v1128, %v2122
        %v2124 = vadd.f32 %v2120, %v2123
        %s2125 = sld [smem:[#allocation2 + $0x1e8]]
        %v2126 = vstv %s2125
        %v2127 = vmul.f32 %v1202, %v2126
        %v2128 = vadd.f32 %v2124, %v2127
        %s2129 = sld [smem:[#allocation2 + $0x1e9]]
        %v2130 = vstv %s2129
        %v2131 = vmul.f32 %v1276, %v2130
        %v2132 = vadd.f32 %v2128, %v2131
        %s2133 = sld [smem:[#allocation2 + $0x1ea]]
        %v2134 = vstv %s2133
        %v2135 = vmul.f32 %v1350, %v2134
        %v2136 = vadd.f32 %v2132, %v2135
        %s2137 = sld [smem:[#allocation2 + $0x1eb]]
        %v2138 = vstv %s2137
        %v2139 = vmul.f32 %v1424, %v2138
        %v2140 = vadd.f32 %v2136, %v2139
        %s2141 = sld [smem:[#allocation2 + $0x1ec]]
        %v2142 = vstv %s2141
        %v2143 = vmul.f32 %v1498, %v2142
        %v2144 = vadd.f32 %v2140, %v2143
        %s2145 = sld [smem:[#allocation2 + $0x1ed]]
        %v2146 = vstv %s2145
        %v2147 = vmul.f32 %v1572, %v2146
        %v2148 = vadd.f32 %v2144, %v2147
        %s2149 = sld [smem:[#allocation2 + $0x1ee]]
        %v2150 = vstv %s2149
        %v2151 = vmul.f32 %v1646, %v2150
        %v2152 = vadd.f32 %v2148, %v2151
        %v2153 = vmax.f32 %v2152, 0.0
        %s2154 = sld [smem:[#allocation2 + $0x1ef]]
        %v2155 = vstv %s2154
        %v2156 = vmul.f32 %v1054, %v2155
        %s2157 = sld [smem:[#allocation2 + $0x229]]
        %v2158 = vstv %s2157
        %v2159 = vadd.f32 %v2156, %v2158
        %s2160 = sld [smem:[#allocation2 + $0x1f0]]
        %v2161 = vstv %s2160
        %v2162 = vmul.f32 %v1128, %v2161
        %v2163 = vadd.f32 %v2159, %v2162
        %s2164 = sld [smem:[#allocation2 + $0x1f1]]
        %v2165 = vstv %s2164
        %v2166 = vmul.f32 %v1202, %v2165
        %v2167 = vadd.f32 %v2163, %v2166
        %s2168 = sld [smem:[#allocation2 + $0x1f2]]
        %v2169 = vstv %s2168
        %v2170 = vmul.f32 %v1276, %v2169
        %v2171 = vadd.f32 %v2167, %v2170
        %s2172 = sld [smem:[#allocation2 + $0x1f3]]
        %v2173 = vstv %s2172
        %v2174 = vmul.f32 %v1350, %v2173
        %v2175 = vadd.f32 %v2171, %v2174
        %s2176 = sld [smem:[#allocation2 + $0x1f4]]
        %v2177 = vstv %s2176
        %v2178 = vmul.f32 %v1424, %v2177
        %v2179 = vadd.f32 %v2175, %v2178
        %s2180 = sld [smem:[#allocation2 + $0x1f5]]
        %v2181 = vstv %s2180
        %v2182 = vmul.f32 %v1498, %v2181
        %v2183 = vadd.f32 %v2179, %v2182
        %s2184 = sld [smem:[#allocation2 + $0x1f6]]
        %v2185 = vstv %s2184
        %v2186 = vmul.f32 %v1572, %v2185
        %v2187 = vadd.f32 %v2183, %v2186
        %s2188 = sld [smem:[#allocation2 + $0x1f7]]
        %v2189 = vstv %s2188
        %v2190 = vmul.f32 %v1646, %v2189
        %v2191 = vadd.f32 %v2187, %v2190
        %v2192 = vmax.f32 %v2191, 0.0
        %s2193 = sld [smem:[#allocation2 + $0x1f8]]
        %v2194 = vstv %s2193
        %v2195 = vmul.f32 %v1054, %v2194
        %s2196 = sld [smem:[#allocation2 + $0x22a]]
        %v2197 = vstv %s2196
        %v2198 = vadd.f32 %v2195, %v2197
        %s2199 = sld [smem:[#allocation2 + $0x1f9]]
        %v2200 = vstv %s2199
        %v2201 = vmul.f32 %v1128, %v2200
        %v2202 = vadd.f32 %v2198, %v2201
        %s2203 = sld [smem:[#allocation2 + $0x1fa]]
        %v2204 = vstv %s2203
        %v2205 = vmul.f32 %v1202, %v2204
        %v2206 = vadd.f32 %v2202, %v2205
        %s2207 = sld [smem:[#allocation2 + $0x1fb]]
        %v2208 = vstv %s2207
        %v2209 = vmul.f32 %v1276, %v2208
        %v2210 = vadd.f32 %v2206, %v2209
        %s2211 = sld [smem:[#allocation2 + $0x1fc]]
        %v2212 = vstv %s2211
        %v2213 = vmul.f32 %v1350, %v2212
        %v2214 = vadd.f32 %v2210, %v2213
        %s2215 = sld [smem:[#allocation2 + $0x1fd]]
        %v2216 = vstv %s2215
        %v2217 = vmul.f32 %v1424, %v2216
        %v2218 = vadd.f32 %v2214, %v2217
        %s2219 = sld [smem:[#allocation2 + $0x1fe]]
        %v2220 = vstv %s2219
        %v2221 = vmul.f32 %v1498, %v2220
        %v2222 = vadd.f32 %v2218, %v2221
        %s2223 = sld [smem:[#allocation2 + $0x1ff]]
        %v2224 = vstv %s2223
        %v2225 = vmul.f32 %v1572, %v2224
        %v2226 = vadd.f32 %v2222, %v2225
        %s2227 = sld [smem:[#allocation2 + $0x200]]
        %v2228 = vstv %s2227
        %v2229 = vmul.f32 %v1646, %v2228
        %v2230 = vadd.f32 %v2226, %v2229
        %v2231 = vmax.f32 %v2230, 0.0
        %s2232 = sld [smem:[#allocation2 + $0x201]]
        %v2233 = vstv %s2232
        %v2234 = vmul.f32 %v1054, %v2233
        %s2235 = sld [smem:[#allocation2 + $0x22b]]
        %v2236 = vstv %s2235
        %v2237 = vadd.f32 %v2234, %v2236
        %s2238 = sld [smem:[#allocation2 + $0x202]]
        %v2239 = vstv %s2238
        %v2240 = vmul.f32 %v1128, %v2239
        %v2241 = vadd.f32 %v2237, %v2240
        %s2242 = sld [smem:[#allocation2 + $0x203]]
        %v2243 = vstv %s2242
        %v2244 = vmul.f32 %v1202, %v2243
        %v2245 = vadd.f32 %v2241, %v2244
        %s2246 = sld [smem:[#allocation2 + $0x204]]
        %v2247 = vstv %s2246
        %v2248 = vmul.f32 %v1276, %v2247
        %v2249 = vadd.f32 %v2245, %v2248
        %s2250 = sld [smem:[#allocation2 + $0x205]]
        %v2251 = vstv %s2250
        %v2252 = vmul.f32 %v1350, %v2251
        %v2253 = vadd.f32 %v2249, %v2252
        %s2254 = sld [smem:[#allocation2 + $0x206]]
        %v2255 = vstv %s2254
        %v2256 = vmul.f32 %v1424, %v2255
        %v2257 = vadd.f32 %v2253, %v2256
        %s2258 = sld [smem:[#allocation2 + $0x207]]
        %v2259 = vstv %s2258
        %v2260 = vmul.f32 %v1498, %v2259
        %v2261 = vadd.f32 %v2257, %v2260
        %s2262 = sld [smem:[#allocation2 + $0x208]]
        %v2263 = vstv %s2262
        %v2264 = vmul.f32 %v1572, %v2263
        %v2265 = vadd.f32 %v2261, %v2264
        %s2266 = sld [smem:[#allocation2 + $0x209]]
        %v2267 = vstv %s2266
        %v2268 = vmul.f32 %v1646, %v2267
        %v2269 = vadd.f32 %v2265, %v2268
        %v2270 = vmax.f32 %v2269, 0.0
        %s2271 = sld [smem:[#allocation2 + $0x20a]]
        %v2272 = vstv %s2271
        %v2273 = vmul.f32 %v1054, %v2272
        %s2274 = sld [smem:[#allocation2 + $0x22c]]
        %v2275 = vstv %s2274
        %v2276 = vadd.f32 %v2273, %v2275
        %s2277 = sld [smem:[#allocation2 + $0x20b]]
        %v2278 = vstv %s2277
        %v2279 = vmul.f32 %v1128, %v2278
        %v2280 = vadd.f32 %v2276, %v2279
        %s2281 = sld [smem:[#allocation2 + $0x20c]]
        %v2282 = vstv %s2281
        %v2283 = vmul.f32 %v1202, %v2282
        %v2284 = vadd.f32 %v2280, %v2283
        %s2285 = sld [smem:[#allocation2 + $0x20d]]
        %v2286 = vstv %s2285
        %v2287 = vmul.f32 %v1276, %v2286
        %v2288 = vadd.f32 %v2284, %v2287
        %s2289 = sld [smem:[#allocation2 + $0x20e]]
        %v2290 = vstv %s2289
        %v2291 = vmul.f32 %v1350, %v2290
        %v2292 = vadd.f32 %v2288, %v2291
        %s2293 = sld [smem:[#allocation2 + $0x20f]]
        %v2294 = vstv %s2293
        %v2295 = vmul.f32 %v1424, %v2294
        %v2296 = vadd.f32 %v2292, %v2295
        %s2297 = sld [smem:[#allocation2 + $0x210]]
        %v2298 = vstv %s2297
        %v2299 = vmul.f32 %v1498, %v2298
        %v2300 = vadd.f32 %v2296, %v2299
        %s2301 = sld [smem:[#allocation2 + $0x211]]
        %v2302 = vstv %s2301
        %v2303 = vmul.f32 %v1572, %v2302
        %v2304 = vadd.f32 %v2300, %v2303
        %s2305 = sld [smem:[#allocation2 + $0x212]]
        %v2306 = vstv %s2305
        %v2307 = vmul.f32 %v1646, %v2306
        %v2308 = vadd.f32 %v2304, %v2307
        %v2309 = vmax.f32 %v2308, 0.0
        %s2310 = sld [smem:[#allocation2 + $0x213]]
        %v2311 = vstv %s2310
        %v2312 = vmul.f32 %v1054, %v2311
        %s2313 = sld [smem:[#allocation2 + $0x22d]]
        %v2314 = vstv %s2313
        %v2315 = vadd.f32 %v2312, %v2314
        %s2316 = sld [smem:[#allocation2 + $0x214]]
        %v2317 = vstv %s2316
        %v2318 = vmul.f32 %v1128, %v2317
        %v2319 = vadd.f32 %v2315, %v2318
        %s2320 = sld [smem:[#allocation2 + $0x215]]
        %v2321 = vstv %s2320
        %v2322 = vmul.f32 %v1202, %v2321
        %v2323 = vadd.f32 %v2319, %v2322
        %s2324 = sld [smem:[#allocation2 + $0x216]]
        %v2325 = vstv %s2324
        %v2326 = vmul.f32 %v1276, %v2325
        %v2327 = vadd.f32 %v2323, %v2326
        %s2328 = sld [smem:[#allocation2 + $0x217]]
        %v2329 = vstv %s2328
        %v2330 = vmul.f32 %v1350, %v2329
        %v2331 = vadd.f32 %v2327, %v2330
        %s2332 = sld [smem:[#allocation2 + $0x218]]
        %v2333 = vstv %s2332
        %v2334 = vmul.f32 %v1424, %v2333
        %v2335 = vadd.f32 %v2331, %v2334
        %s2336 = sld [smem:[#allocation2 + $0x219]]
        %v2337 = vstv %s2336
        %v2338 = vmul.f32 %v1498, %v2337
        %v2339 = vadd.f32 %v2335, %v2338
        %s2340 = sld [smem:[#allocation2 + $0x21a]]
        %v2341 = vstv %s2340
        %v2342 = vmul.f32 %v1572, %v2341
        %v2343 = vadd.f32 %v2339, %v2342
        %s2344 = sld [smem:[#allocation2 + $0x21b]]
        %v2345 = vstv %s2344
        %v2346 = vmul.f32 %v1646, %v2345
        %v2347 = vadd.f32 %v2343, %v2346
        %v2348 = vmax.f32 %v2347, 0.0
        %s2349 = sld [smem:[#allocation2 + $0x22e]]
        %v2350 = vstv %s2349
        %v2351 = vmul.f32 %v1685, %v2350
        %s2352 = sld [smem:[#allocation2 + $0x2d0]]
        %v2353 = vstv %s2352
        %v2354 = vadd.f32 %v2351, %v2353
        %s2355 = sld [smem:[#allocation2 + $0x22f]]
        %v2356 = vstv %s2355
        %v2357 = vmul.f32 %v1724, %v2356
        %v2358 = vadd.f32 %v2354, %v2357
        %s2359 = sld [smem:[#allocation2 + $0x230]]
        %v2360 = vstv %s2359
        %v2361 = vmul.f32 %v1763, %v2360
        %v2362 = vadd.f32 %v2358, %v2361
        %s2363 = sld [smem:[#allocation2 + $0x231]]
        %v2364 = vstv %s2363
        %v2365 = vmul.f32 %v1802, %v2364
        %v2366 = vadd.f32 %v2362, %v2365
        %s2367 = sld [smem:[#allocation2 + $0x232]]
        %v2368 = vstv %s2367
        %v2369 = vmul.f32 %v1841, %v2368
        %v2370 = vadd.f32 %v2366, %v2369
        %s2371 = sld [smem:[#allocation2 + $0x233]]
        %v2372 = vstv %s2371
        %v2373 = vmul.f32 %v1880, %v2372
        %v2374 = vadd.f32 %v2370, %v2373
        %s2375 = sld [smem:[#allocation2 + $0x234]]
        %v2376 = vstv %s2375
        %v2377 = vmul.f32 %v1919, %v2376
        %v2378 = vadd.f32 %v2374, %v2377
        %s2379 = sld [smem:[#allocation2 + $0x235]]
        %v2380 = vstv %s2379
        %v2381 = vmul.f32 %v1958, %v2380
        %v2382 = vadd.f32 %v2378, %v2381
        %s2383 = sld [smem:[#allocation2 + $0x236]]
        %v2384 = vstv %s2383
        %v2385 = vmul.f32 %v1997, %v2384
        %v2386 = vadd.f32 %v2382, %v2385
        %s2387 = sld [smem:[#allocation2 + $0x237]]
        %v2388 = vstv %s2387
        %v2389 = vmul.f32 %v2036, %v2388
        %v2390 = vadd.f32 %v2386, %v2389
        %s2391 = sld [smem:[#allocation2 + $0x238]]
        %v2392 = vstv %s2391
        %v2393 = vmul.f32 %v2075, %v2392
        %v2394 = vadd.f32 %v2390, %v2393
        %s2395 = sld [smem:[#allocation2 + $0x239]]
        %v2396 = vstv %s2395
        %v2397 = vmul.f32 %v2114, %v2396
        %v2398 = vadd.f32 %v2394, %v2397
        %s2399 = sld [smem:[#allocation2 + $0x23a]]
        %v2400 = vstv %s2399
        %v2401 = vmul.f32 %v2153, %v2400
        %v2402 = vadd.f32 %v2398, %v2401
        %s2403 = sld [smem:[#allocation2 + $0x23b]]
        %v2404 = vstv %s2403
        %v2405 = vmul.f32 %v2192, %v2404
        %v2406 = vadd.f32 %v2402, %v2405
        %s2407 = sld [smem:[#allocation2 + $0x23c]]
        %v2408 = vstv %s2407
        %v2409 = vmul.f32 %v2231, %v2408
        %v2410 = vadd.f32 %v2406, %v2409
        %s2411 = sld [smem:[#allocation2 + $0x23d]]
        %v2412 = vstv %s2411
        %v2413 = vmul.f32 %v2270, %v2412
        %v2414 = vadd.f32 %v2410, %v2413
        %s2415 = sld [smem:[#allocation2 + $0x23e]]
        %v2416 = vstv %s2415
        %v2417 = vmul.f32 %v2309, %v2416
        %v2418 = vadd.f32 %v2414, %v2417
        %s2419 = sld [smem:[#allocation2 + $0x23f]]
        %v2420 = vstv %s2419
        %v2421 = vmul.f32 %v2348, %v2420
        %v2422 = vadd.f32 %v2418, %v2421
        %v2423 = vmax.f32 %v2422, 0.0
        %s2424 = sld [smem:[#allocation2 + $0x240]]
        %v2425 = vstv %s2424
        %v2426 = vmul.f32 %v1685, %v2425
        %s2427 = sld [smem:[#allocation2 + $0x2d1]]
        %v2428 = vstv %s2427
        %v2429 = vadd.f32 %v2426, %v2428
        %s2430 = sld [smem:[#allocation2 + $0x241]]
        %v2431 = vstv %s2430
        %v2432 = vmul.f32 %v1724, %v2431
        %v2433 = vadd.f32 %v2429, %v2432
        %s2434 = sld [smem:[#allocation2 + $0x242]]
        %v2435 = vstv %s2434
        %v2436 = vmul.f32 %v1763, %v2435
        %v2437 = vadd.f32 %v2433, %v2436
        %s2438 = sld [smem:[#allocation2 + $0x243]]
        %v2439 = vstv %s2438
        %v2440 = vmul.f32 %v1802, %v2439
        %v2441 = vadd.f32 %v2437, %v2440
        %s2442 = sld [smem:[#allocation2 + $0x244]]
        %v2443 = vstv %s2442
        %v2444 = vmul.f32 %v1841, %v2443
        %v2445 = vadd.f32 %v2441, %v2444
        %s2446 = sld [smem:[#allocation2 + $0x245]]
        %v2447 = vstv %s2446
        %v2448 = vmul.f32 %v1880, %v2447
        %v2449 = vadd.f32 %v2445, %v2448
        %s2450 = sld [smem:[#allocation2 + $0x246]]
        %v2451 = vstv %s2450
        %v2452 = vmul.f32 %v1919, %v2451
        %v2453 = vadd.f32 %v2449, %v2452
        %s2454 = sld [smem:[#allocation2 + $0x247]]
        %v2455 = vstv %s2454
        %v2456 = vmul.f32 %v1958, %v2455
        %v2457 = vadd.f32 %v2453, %v2456
        %s2458 = sld [smem:[#allocation2 + $0x248]]
        %v2459 = vstv %s2458
        %v2460 = vmul.f32 %v1997, %v2459
        %v2461 = vadd.f32 %v2457, %v2460
        %s2462 = sld [smem:[#allocation2 + $0x249]]
        %v2463 = vstv %s2462
        %v2464 = vmul.f32 %v2036, %v2463
        %v2465 = vadd.f32 %v2461, %v2464
        %s2466 = sld [smem:[#allocation2 + $0x24a]]
        %v2467 = vstv %s2466
        %v2468 = vmul.f32 %v2075, %v2467
        %v2469 = vadd.f32 %v2465, %v2468
        %s2470 = sld [smem:[#allocation2 + $0x24b]]
        %v2471 = vstv %s2470
        %v2472 = vmul.f32 %v2114, %v2471
        %v2473 = vadd.f32 %v2469, %v2472
        %s2474 = sld [smem:[#allocation2 + $0x24c]]
        %v2475 = vstv %s2474
        %v2476 = vmul.f32 %v2153, %v2475
        %v2477 = vadd.f32 %v2473, %v2476
        %s2478 = sld [smem:[#allocation2 + $0x24d]]
        %v2479 = vstv %s2478
        %v2480 = vmul.f32 %v2192, %v2479
        %v2481 = vadd.f32 %v2477, %v2480
        %s2482 = sld [smem:[#allocation2 + $0x24e]]
        %v2483 = vstv %s2482
        %v2484 = vmul.f32 %v2231, %v2483
        %v2485 = vadd.f32 %v2481, %v2484
        %s2486 = sld [smem:[#allocation2 + $0x24f]]
        %v2487 = vstv %s2486
        %v2488 = vmul.f32 %v2270, %v2487
        %v2489 = vadd.f32 %v2485, %v2488
        %s2490 = sld [smem:[#allocation2 + $0x250]]
        %v2491 = vstv %s2490
        %v2492 = vmul.f32 %v2309, %v2491
        %v2493 = vadd.f32 %v2489, %v2492
        %s2494 = sld [smem:[#allocation2 + $0x251]]
        %v2495 = vstv %s2494
        %v2496 = vmul.f32 %v2348, %v2495
        %v2497 = vadd.f32 %v2493, %v2496
        %v2498 = vmax.f32 %v2497, 0.0
        %s2499 = sld [smem:[#allocation2 + $0x252]]
        %v2500 = vstv %s2499
        %v2501 = vmul.f32 %v1685, %v2500
        %s2502 = sld [smem:[#allocation2 + $0x2d2]]
        %v2503 = vstv %s2502
        %v2504 = vadd.f32 %v2501, %v2503
        %s2505 = sld [smem:[#allocation2 + $0x253]]
        %v2506 = vstv %s2505
        %v2507 = vmul.f32 %v1724, %v2506
        %v2508 = vadd.f32 %v2504, %v2507
        %s2509 = sld [smem:[#allocation2 + $0x254]]
        %v2510 = vstv %s2509
        %v2511 = vmul.f32 %v1763, %v2510
        %v2512 = vadd.f32 %v2508, %v2511
        %s2513 = sld [smem:[#allocation2 + $0x255]]
        %v2514 = vstv %s2513
        %v2515 = vmul.f32 %v1802, %v2514
        %v2516 = vadd.f32 %v2512, %v2515
        %s2517 = sld [smem:[#allocation2 + $0x256]]
        %v2518 = vstv %s2517
        %v2519 = vmul.f32 %v1841, %v2518
        %v2520 = vadd.f32 %v2516, %v2519
        %s2521 = sld [smem:[#allocation2 + $0x257]]
        %v2522 = vstv %s2521
        %v2523 = vmul.f32 %v1880, %v2522
        %v2524 = vadd.f32 %v2520, %v2523
        %s2525 = sld [smem:[#allocation2 + $0x258]]
        %v2526 = vstv %s2525
        %v2527 = vmul.f32 %v1919, %v2526
        %v2528 = vadd.f32 %v2524, %v2527
        %s2529 = sld [smem:[#allocation2 + $0x259]]
        %v2530 = vstv %s2529
        %v2531 = vmul.f32 %v1958, %v2530
        %v2532 = vadd.f32 %v2528, %v2531
        %s2533 = sld [smem:[#allocation2 + $0x25a]]
        %v2534 = vstv %s2533
        %v2535 = vmul.f32 %v1997, %v2534
        %v2536 = vadd.f32 %v2532, %v2535
        %s2537 = sld [smem:[#allocation2 + $0x25b]]
        %v2538 = vstv %s2537
        %v2539 = vmul.f32 %v2036, %v2538
        %v2540 = vadd.f32 %v2536, %v2539
        %s2541 = sld [smem:[#allocation2 + $0x25c]]
        %v2542 = vstv %s2541
        %v2543 = vmul.f32 %v2075, %v2542
        %v2544 = vadd.f32 %v2540, %v2543
        %s2545 = sld [smem:[#allocation2 + $0x25d]]
        %v2546 = vstv %s2545
        %v2547 = vmul.f32 %v2114, %v2546
        %v2548 = vadd.f32 %v2544, %v2547
        %s2549 = sld [smem:[#allocation2 + $0x25e]]
        %v2550 = vstv %s2549
        %v2551 = vmul.f32 %v2153, %v2550
        %v2552 = vadd.f32 %v2548, %v2551
        %s2553 = sld [smem:[#allocation2 + $0x25f]]
        %v2554 = vstv %s2553
        %v2555 = vmul.f32 %v2192, %v2554
        %v2556 = vadd.f32 %v2552, %v2555
        %s2557 = sld [smem:[#allocation2 + $0x260]]
        %v2558 = vstv %s2557
        %v2559 = vmul.f32 %v2231, %v2558
        %v2560 = vadd.f32 %v2556, %v2559
        %s2561 = sld [smem:[#allocation2 + $0x261]]
        %v2562 = vstv %s2561
        %v2563 = vmul.f32 %v2270, %v2562
        %v2564 = vadd.f32 %v2560, %v2563
        %s2565 = sld [smem:[#allocation2 + $0x262]]
        %v2566 = vstv %s2565
        %v2567 = vmul.f32 %v2309, %v2566
        %v2568 = vadd.f32 %v2564, %v2567
        %s2569 = sld [smem:[#allocation2 + $0x263]]
        %v2570 = vstv %s2569
        %v2571 = vmul.f32 %v2348, %v2570
        %v2572 = vadd.f32 %v2568, %v2571
        %v2573 = vmax.f32 %v2572, 0.0
        %s2574 = sld [smem:[#allocation2 + $0x264]]
        %v2575 = vstv %s2574
        %v2576 = vmul.f32 %v1685, %v2575
        %s2577 = sld [smem:[#allocation2 + $0x2d3]]
        %v2578 = vstv %s2577
        %v2579 = vadd.f32 %v2576, %v2578
        %s2580 = sld [smem:[#allocation2 + $0x265]]
        %v2581 = vstv %s2580
        %v2582 = vmul.f32 %v1724, %v2581
        %v2583 = vadd.f32 %v2579, %v2582
        %s2584 = sld [smem:[#allocation2 + $0x266]]
        %v2585 = vstv %s2584
        %v2586 = vmul.f32 %v1763, %v2585
        %v2587 = vadd.f32 %v2583, %v2586
        %s2588 = sld [smem:[#allocation2 + $0x267]]
        %v2589 = vstv %s2588
        %v2590 = vmul.f32 %v1802, %v2589
        %v2591 = vadd.f32 %v2587, %v2590
        %s2592 = sld [smem:[#allocation2 + $0x268]]
        %v2593 = vstv %s2592
        %v2594 = vmul.f32 %v1841, %v2593
        %v2595 = vadd.f32 %v2591, %v2594
        %s2596 = sld [smem:[#allocation2 + $0x269]]
        %v2597 = vstv %s2596
        %v2598 = vmul.f32 %v1880, %v2597
        %v2599 = vadd.f32 %v2595, %v2598
        %s2600 = sld [smem:[#allocation2 + $0x26a]]
        %v2601 = vstv %s2600
        %v2602 = vmul.f32 %v1919, %v2601
        %v2603 = vadd.f32 %v2599, %v2602
        %s2604 = sld [smem:[#allocation2 + $0x26b]]
        %v2605 = vstv %s2604
        %v2606 = vmul.f32 %v1958, %v2605
        %v2607 = vadd.f32 %v2603, %v2606
        %s2608 = sld [smem:[#allocation2 + $0x26c]]
        %v2609 = vstv %s2608
        %v2610 = vmul.f32 %v1997, %v2609
        %v2611 = vadd.f32 %v2607, %v2610
        %s2612 = sld [smem:[#allocation2 + $0x26d]]
        %v2613 = vstv %s2612
        %v2614 = vmul.f32 %v2036, %v2613
        %v2615 = vadd.f32 %v2611, %v2614
        %s2616 = sld [smem:[#allocation2 + $0x26e]]
        %v2617 = vstv %s2616
        %v2618 = vmul.f32 %v2075, %v2617
        %v2619 = vadd.f32 %v2615, %v2618
        %s2620 = sld [smem:[#allocation2 + $0x26f]]
        %v2621 = vstv %s2620
        %v2622 = vmul.f32 %v2114, %v2621
        %v2623 = vadd.f32 %v2619, %v2622
        %s2624 = sld [smem:[#allocation2 + $0x270]]
        %v2625 = vstv %s2624
        %v2626 = vmul.f32 %v2153, %v2625
        %v2627 = vadd.f32 %v2623, %v2626
        %s2628 = sld [smem:[#allocation2 + $0x271]]
        %v2629 = vstv %s2628
        %v2630 = vmul.f32 %v2192, %v2629
        %v2631 = vadd.f32 %v2627, %v2630
        %s2632 = sld [smem:[#allocation2 + $0x272]]
        %v2633 = vstv %s2632
        %v2634 = vmul.f32 %v2231, %v2633
        %v2635 = vadd.f32 %v2631, %v2634
        %s2636 = sld [smem:[#allocation2 + $0x273]]
        %v2637 = vstv %s2636
        %v2638 = vmul.f32 %v2270, %v2637
        %v2639 = vadd.f32 %v2635, %v2638
        %s2640 = sld [smem:[#allocation2 + $0x274]]
        %v2641 = vstv %s2640
        %v2642 = vmul.f32 %v2309, %v2641
        %v2643 = vadd.f32 %v2639, %v2642
        %s2644 = sld [smem:[#allocation2 + $0x275]]
        %v2645 = vstv %s2644
        %v2646 = vmul.f32 %v2348, %v2645
        %v2647 = vadd.f32 %v2643, %v2646
        %v2648 = vmax.f32 %v2647, 0.0
        %s2649 = sld [smem:[#allocation2 + $0x276]]
        %v2650 = vstv %s2649
        %v2651 = vmul.f32 %v1685, %v2650
        %s2652 = sld [smem:[#allocation2 + $0x2d4]]
        %v2653 = vstv %s2652
        %v2654 = vadd.f32 %v2651, %v2653
        %s2655 = sld [smem:[#allocation2 + $0x277]]
        %v2656 = vstv %s2655
        %v2657 = vmul.f32 %v1724, %v2656
        %v2658 = vadd.f32 %v2654, %v2657
        %s2659 = sld [smem:[#allocation2 + $0x278]]
        %v2660 = vstv %s2659
        %v2661 = vmul.f32 %v1763, %v2660
        %v2662 = vadd.f32 %v2658, %v2661
        %s2663 = sld [smem:[#allocation2 + $0x279]]
        %v2664 = vstv %s2663
        %v2665 = vmul.f32 %v1802, %v2664
        %v2666 = vadd.f32 %v2662, %v2665
        %s2667 = sld [smem:[#allocation2 + $0x27a]]
        %v2668 = vstv %s2667
        %v2669 = vmul.f32 %v1841, %v2668
        %v2670 = vadd.f32 %v2666, %v2669
        %s2671 = sld [smem:[#allocation2 + $0x27b]]
        %v2672 = vstv %s2671
        %v2673 = vmul.f32 %v1880, %v2672
        %v2674 = vadd.f32 %v2670, %v2673
        %s2675 = sld [smem:[#allocation2 + $0x27c]]
        %v2676 = vstv %s2675
        %v2677 = vmul.f32 %v1919, %v2676
        %v2678 = vadd.f32 %v2674, %v2677
        %s2679 = sld [smem:[#allocation2 + $0x27d]]
        %v2680 = vstv %s2679
        %v2681 = vmul.f32 %v1958, %v2680
        %v2682 = vadd.f32 %v2678, %v2681
        %s2683 = sld [smem:[#allocation2 + $0x27e]]
        %v2684 = vstv %s2683
        %v2685 = vmul.f32 %v1997, %v2684
        %v2686 = vadd.f32 %v2682, %v2685
        %s2687 = sld [smem:[#allocation2 + $0x27f]]
        %v2688 = vstv %s2687
        %v2689 = vmul.f32 %v2036, %v2688
        %v2690 = vadd.f32 %v2686, %v2689
        %s2691 = sld [smem:[#allocation2 + $0x280]]
        %v2692 = vstv %s2691
        %v2693 = vmul.f32 %v2075, %v2692
        %v2694 = vadd.f32 %v2690, %v2693
        %s2695 = sld [smem:[#allocation2 + $0x281]]
        %v2696 = vstv %s2695
        %v2697 = vmul.f32 %v2114, %v2696
        %v2698 = vadd.f32 %v2694, %v2697
        %s2699 = sld [smem:[#allocation2 + $0x282]]
        %v2700 = vstv %s2699
        %v2701 = vmul.f32 %v2153, %v2700
        %v2702 = vadd.f32 %v2698, %v2701
        %s2703 = sld [smem:[#allocation2 + $0x283]]
        %v2704 = vstv %s2703
        %v2705 = vmul.f32 %v2192, %v2704
        %v2706 = vadd.f32 %v2702, %v2705
        %s2707 = sld [smem:[#allocation2 + $0x284]]
        %v2708 = vstv %s2707
        %v2709 = vmul.f32 %v2231, %v2708
        %v2710 = vadd.f32 %v2706, %v2709
        %s2711 = sld [smem:[#allocation2 + $0x285]]
        %v2712 = vstv %s2711
        %v2713 = vmul.f32 %v2270, %v2712
        %v2714 = vadd.f32 %v2710, %v2713
        %s2715 = sld [smem:[#allocation2 + $0x286]]
        %v2716 = vstv %s2715
        %v2717 = vmul.f32 %v2309, %v2716
        %v2718 = vadd.f32 %v2714, %v2717
        %s2719 = sld [smem:[#allocation2 + $0x287]]
        %v2720 = vstv %s2719
        %v2721 = vmul.f32 %v2348, %v2720
        %v2722 = vadd.f32 %v2718, %v2721
        %v2723 = vmax.f32 %v2722, 0.0
        %s2724 = sld [smem:[#allocation2 + $0x288]]
        %v2725 = vstv %s2724
        %v2726 = vmul.f32 %v1685, %v2725
        %s2727 = sld [smem:[#allocation2 + $0x2d5]]
        %v2728 = vstv %s2727
        %v2729 = vadd.f32 %v2726, %v2728
        %s2730 = sld [smem:[#allocation2 + $0x289]]
        %v2731 = vstv %s2730
        %v2732 = vmul.f32 %v1724, %v2731
        %v2733 = vadd.f32 %v2729, %v2732
        %s2734 = sld [smem:[#allocation2 + $0x28a]]
        %v2735 = vstv %s2734
        %v2736 = vmul.f32 %v1763, %v2735
        %v2737 = vadd.f32 %v2733, %v2736
        %s2738 = sld [smem:[#allocation2 + $0x28b]]
        %v2739 = vstv %s2738
        %v2740 = vmul.f32 %v1802, %v2739
        %v2741 = vadd.f32 %v2737, %v2740
        %s2742 = sld [smem:[#allocation2 + $0x28c]]
        %v2743 = vstv %s2742
        %v2744 = vmul.f32 %v1841, %v2743
        %v2745 = vadd.f32 %v2741, %v2744
        %s2746 = sld [smem:[#allocation2 + $0x28d]]
        %v2747 = vstv %s2746
        %v2748 = vmul.f32 %v1880, %v2747
        %v2749 = vadd.f32 %v2745, %v2748
        %s2750 = sld [smem:[#allocation2 + $0x28e]]
        %v2751 = vstv %s2750
        %v2752 = vmul.f32 %v1919, %v2751
        %v2753 = vadd.f32 %v2749, %v2752
        %s2754 = sld [smem:[#allocation2 + $0x28f]]
        %v2755 = vstv %s2754
        %v2756 = vmul.f32 %v1958, %v2755
        %v2757 = vadd.f32 %v2753, %v2756
        %s2758 = sld [smem:[#allocation2 + $0x290]]
        %v2759 = vstv %s2758
        %v2760 = vmul.f32 %v1997, %v2759
        %v2761 = vadd.f32 %v2757, %v2760
        %s2762 = sld [smem:[#allocation2 + $0x291]]
        %v2763 = vstv %s2762
        %v2764 = vmul.f32 %v2036, %v2763
        %v2765 = vadd.f32 %v2761, %v2764
        %s2766 = sld [smem:[#allocation2 + $0x292]]
        %v2767 = vstv %s2766
        %v2768 = vmul.f32 %v2075, %v2767
        %v2769 = vadd.f32 %v2765, %v2768
        %s2770 = sld [smem:[#allocation2 + $0x293]]
        %v2771 = vstv %s2770
        %v2772 = vmul.f32 %v2114, %v2771
        %v2773 = vadd.f32 %v2769, %v2772
        %s2774 = sld [smem:[#allocation2 + $0x294]]
        %v2775 = vstv %s2774
        %v2776 = vmul.f32 %v2153, %v2775
        %v2777 = vadd.f32 %v2773, %v2776
        %s2778 = sld [smem:[#allocation2 + $0x295]]
        %v2779 = vstv %s2778
        %v2780 = vmul.f32 %v2192, %v2779
        %v2781 = vadd.f32 %v2777, %v2780
        %s2782 = sld [smem:[#allocation2 + $0x296]]
        %v2783 = vstv %s2782
        %v2784 = vmul.f32 %v2231, %v2783
        %v2785 = vadd.f32 %v2781, %v2784
        %s2786 = sld [smem:[#allocation2 + $0x297]]
        %v2787 = vstv %s2786
        %v2788 = vmul.f32 %v2270, %v2787
        %v2789 = vadd.f32 %v2785, %v2788
        %s2790 = sld [smem:[#allocation2 + $0x298]]
        %v2791 = vstv %s2790
        %v2792 = vmul.f32 %v2309, %v2791
        %v2793 = vadd.f32 %v2789, %v2792
        %s2794 = sld [smem:[#allocation2 + $0x299]]
        %v2795 = vstv %s2794
        %v2796 = vmul.f32 %v2348, %v2795
        %v2797 = vadd.f32 %v2793, %v2796
        %v2798 = vmax.f32 %v2797, 0.0
        %s2799 = sld [smem:[#allocation2 + $0x29a]]
        %v2800 = vstv %s2799
        %v2801 = vmul.f32 %v1685, %v2800
        %s2802 = sld [smem:[#allocation2 + $0x2d6]]
        %v2803 = vstv %s2802
        %v2804 = vadd.f32 %v2801, %v2803
        %s2805 = sld [smem:[#allocation2 + $0x29b]]
        %v2806 = vstv %s2805
        %v2807 = vmul.f32 %v1724, %v2806
        %v2808 = vadd.f32 %v2804, %v2807
        %s2809 = sld [smem:[#allocation2 + $0x29c]]
        %v2810 = vstv %s2809
        %v2811 = vmul.f32 %v1763, %v2810
        %v2812 = vadd.f32 %v2808, %v2811
        %s2813 = sld [smem:[#allocation2 + $0x29d]]
        %v2814 = vstv %s2813
        %v2815 = vmul.f32 %v1802, %v2814
        %v2816 = vadd.f32 %v2812, %v2815
        %s2817 = sld [smem:[#allocation2 + $0x29e]]
        %v2818 = vstv %s2817
        %v2819 = vmul.f32 %v1841, %v2818
        %v2820 = vadd.f32 %v2816, %v2819
        %s2821 = sld [smem:[#allocation2 + $0x29f]]
        %v2822 = vstv %s2821
        %v2823 = vmul.f32 %v1880, %v2822
        %v2824 = vadd.f32 %v2820, %v2823
        %s2825 = sld [smem:[#allocation2 + $0x2a0]]
        %v2826 = vstv %s2825
        %v2827 = vmul.f32 %v1919, %v2826
        %v2828 = vadd.f32 %v2824, %v2827
        %s2829 = sld [smem:[#allocation2 + $0x2a1]]
        %v2830 = vstv %s2829
        %v2831 = vmul.f32 %v1958, %v2830
        %v2832 = vadd.f32 %v2828, %v2831
        %s2833 = sld [smem:[#allocation2 + $0x2a2]]
        %v2834 = vstv %s2833
        %v2835 = vmul.f32 %v1997, %v2834
        %v2836 = vadd.f32 %v2832, %v2835
        %s2837 = sld [smem:[#allocation2 + $0x2a3]]
        %v2838 = vstv %s2837
        %v2839 = vmul.f32 %v2036, %v2838
        %v2840 = vadd.f32 %v2836, %v2839
        %s2841 = sld [smem:[#allocation2 + $0x2a4]]
        %v2842 = vstv %s2841
        %v2843 = vmul.f32 %v2075, %v2842
        %v2844 = vadd.f32 %v2840, %v2843
        %s2845 = sld [smem:[#allocation2 + $0x2a5]]
        %v2846 = vstv %s2845
        %v2847 = vmul.f32 %v2114, %v2846
        %v2848 = vadd.f32 %v2844, %v2847
        %s2849 = sld [smem:[#allocation2 + $0x2a6]]
        %v2850 = vstv %s2849
        %v2851 = vmul.f32 %v2153, %v2850
        %v2852 = vadd.f32 %v2848, %v2851
        %s2853 = sld [smem:[#allocation2 + $0x2a7]]
        %v2854 = vstv %s2853
        %v2855 = vmul.f32 %v2192, %v2854
        %v2856 = vadd.f32 %v2852, %v2855
        %s2857 = sld [smem:[#allocation2 + $0x2a8]]
        %v2858 = vstv %s2857
        %v2859 = vmul.f32 %v2231, %v2858
        %v2860 = vadd.f32 %v2856, %v2859
        %s2861 = sld [smem:[#allocation2 + $0x2a9]]
        %v2862 = vstv %s2861
        %v2863 = vmul.f32 %v2270, %v2862
        %v2864 = vadd.f32 %v2860, %v2863
        %s2865 = sld [smem:[#allocation2 + $0x2aa]]
        %v2866 = vstv %s2865
        %v2867 = vmul.f32 %v2309, %v2866
        %v2868 = vadd.f32 %v2864, %v2867
        %s2869 = sld [smem:[#allocation2 + $0x2ab]]
        %v2870 = vstv %s2869
        %v2871 = vmul.f32 %v2348, %v2870
        %v2872 = vadd.f32 %v2868, %v2871
        %v2873 = vmax.f32 %v2872, 0.0
        %s2874 = sld [smem:[#allocation2 + $0x2ac]]
        %v2875 = vstv %s2874
        %v2876 = vmul.f32 %v1685, %v2875
        %s2877 = sld [smem:[#allocation2 + $0x2d7]]
        %v2878 = vstv %s2877
        %v2879 = vadd.f32 %v2876, %v2878
        %s2880 = sld [smem:[#allocation2 + $0x2ad]]
        %v2881 = vstv %s2880
        %v2882 = vmul.f32 %v1724, %v2881
        %v2883 = vadd.f32 %v2879, %v2882
        %s2884 = sld [smem:[#allocation2 + $0x2ae]]
        %v2885 = vstv %s2884
        %v2886 = vmul.f32 %v1763, %v2885
        %v2887 = vadd.f32 %v2883, %v2886
        %s2888 = sld [smem:[#allocation2 + $0x2af]]
        %v2889 = vstv %s2888
        %v2890 = vmul.f32 %v1802, %v2889
        %v2891 = vadd.f32 %v2887, %v2890
        %s2892 = sld [smem:[#allocation2 + $0x2b0]]
        %v2893 = vstv %s2892
        %v2894 = vmul.f32 %v1841, %v2893
        %v2895 = vadd.f32 %v2891, %v2894
        %s2896 = sld [smem:[#allocation2 + $0x2b1]]
        %v2897 = vstv %s2896
        %v2898 = vmul.f32 %v1880, %v2897
        %v2899 = vadd.f32 %v2895, %v2898
        %s2900 = sld [smem:[#allocation2 + $0x2b2]]
        %v2901 = vstv %s2900
        %v2902 = vmul.f32 %v1919, %v2901
        %v2903 = vadd.f32 %v2899, %v2902
        %s2904 = sld [smem:[#allocation2 + $0x2b3]]
        %v2905 = vstv %s2904
        %v2906 = vmul.f32 %v1958, %v2905
        %v2907 = vadd.f32 %v2903, %v2906
        %s2908 = sld [smem:[#allocation2 + $0x2b4]]
        %v2909 = vstv %s2908
        %v2910 = vmul.f32 %v1997, %v2909
        %v2911 = vadd.f32 %v2907, %v2910
        %s2912 = sld [smem:[#allocation2 + $0x2b5]]
        %v2913 = vstv %s2912
        %v2914 = vmul.f32 %v2036, %v2913
        %v2915 = vadd.f32 %v2911, %v2914
        %s2916 = sld [smem:[#allocation2 + $0x2b6]]
        %v2917 = vstv %s2916
        %v2918 = vmul.f32 %v2075, %v2917
        %v2919 = vadd.f32 %v2915, %v2918
        %s2920 = sld [smem:[#allocation2 + $0x2b7]]
        %v2921 = vstv %s2920
        %v2922 = vmul.f32 %v2114, %v2921
        %v2923 = vadd.f32 %v2919, %v2922
        %s2924 = sld [smem:[#allocation2 + $0x2b8]]
        %v2925 = vstv %s2924
        %v2926 = vmul.f32 %v2153, %v2925
        %v2927 = vadd.f32 %v2923, %v2926
        %s2928 = sld [smem:[#allocation2 + $0x2b9]]
        %v2929 = vstv %s2928
        %v2930 = vmul.f32 %v2192, %v2929
        %v2931 = vadd.f32 %v2927, %v2930
        %s2932 = sld [smem:[#allocation2 + $0x2ba]]
        %v2933 = vstv %s2932
        %v2934 = vmul.f32 %v2231, %v2933
        %v2935 = vadd.f32 %v2931, %v2934
        %s2936 = sld [smem:[#allocation2 + $0x2bb]]
        %v2937 = vstv %s2936
        %v2938 = vmul.f32 %v2270, %v2937
        %v2939 = vadd.f32 %v2935, %v2938
        %s2940 = sld [smem:[#allocation2 + $0x2bc]]
        %v2941 = vstv %s2940
        %v2942 = vmul.f32 %v2309, %v2941
        %v2943 = vadd.f32 %v2939, %v2942
        %s2944 = sld [smem:[#allocation2 + $0x2bd]]
        %v2945 = vstv %s2944
        %v2946 = vmul.f32 %v2348, %v2945
        %v2947 = vadd.f32 %v2943, %v2946
        %v2948 = vmax.f32 %v2947, 0.0
        %s2949 = sld [smem:[#allocation2 + $0x2be]]
        %v2950 = vstv %s2949
        %v2951 = vmul.f32 %v1685, %v2950
        %s2952 = sld [smem:[#allocation2 + $0x2d8]]
        %v2953 = vstv %s2952
        %v2954 = vadd.f32 %v2951, %v2953
        %s2955 = sld [smem:[#allocation2 + $0x2bf]]
        %v2956 = vstv %s2955
        %v2957 = vmul.f32 %v1724, %v2956
        %v2958 = vadd.f32 %v2954, %v2957
        %s2959 = sld [smem:[#allocation2 + $0x2c0]]
        %v2960 = vstv %s2959
        %v2961 = vmul.f32 %v1763, %v2960
        %v2962 = vadd.f32 %v2958, %v2961
        %s2963 = sld [smem:[#allocation2 + $0x2c1]]
        %v2964 = vstv %s2963
        %v2965 = vmul.f32 %v1802, %v2964
        %v2966 = vadd.f32 %v2962, %v2965
        %s2967 = sld [smem:[#allocation2 + $0x2c2]]
        %v2968 = vstv %s2967
        %v2969 = vmul.f32 %v1841, %v2968
        %v2970 = vadd.f32 %v2966, %v2969
        %s2971 = sld [smem:[#allocation2 + $0x2c3]]
        %v2972 = vstv %s2971
        %v2973 = vmul.f32 %v1880, %v2972
        %v2974 = vadd.f32 %v2970, %v2973
        %s2975 = sld [smem:[#allocation2 + $0x2c4]]
        %v2976 = vstv %s2975
        %v2977 = vmul.f32 %v1919, %v2976
        %v2978 = vadd.f32 %v2974, %v2977
        %s2979 = sld [smem:[#allocation2 + $0x2c5]]
        %v2980 = vstv %s2979
        %v2981 = vmul.f32 %v1958, %v2980
        %v2982 = vadd.f32 %v2978, %v2981
        %s2983 = sld [smem:[#allocation2 + $0x2c6]]
        %v2984 = vstv %s2983
        %v2985 = vmul.f32 %v1997, %v2984
        %v2986 = vadd.f32 %v2982, %v2985
        %s2987 = sld [smem:[#allocation2 + $0x2c7]]
        %v2988 = vstv %s2987
        %v2989 = vmul.f32 %v2036, %v2988
        %v2990 = vadd.f32 %v2986, %v2989
        %s2991 = sld [smem:[#allocation2 + $0x2c8]]
        %v2992 = vstv %s2991
        %v2993 = vmul.f32 %v2075, %v2992
        %v2994 = vadd.f32 %v2990, %v2993
        %s2995 = sld [smem:[#allocation2 + $0x2c9]]
        %v2996 = vstv %s2995
        %v2997 = vmul.f32 %v2114, %v2996
        %v2998 = vadd.f32 %v2994, %v2997
        %s2999 = sld [smem:[#allocation2 + $0x2ca]]
        %v3000 = vstv %s2999
        %v3001 = vmul.f32 %v2153, %v3000
        %v3002 = vadd.f32 %v2998, %v3001
        %s3003 = sld [smem:[#allocation2 + $0x2cb]]
        %v3004 = vstv %s3003
        %v3005 = vmul.f32 %v2192, %v3004
        %v3006 = vadd.f32 %v3002, %v3005
        %s3007 = sld [smem:[#allocation2 + $0x2cc]]
        %v3008 = vstv %s3007
        %v3009 = vmul.f32 %v2231, %v3008
        %v3010 = vadd.f32 %v3006, %v3009
        %s3011 = sld [smem:[#allocation2 + $0x2cd]]
        %v3012 = vstv %s3011
        %v3013 = vmul.f32 %v2270, %v3012
        %v3014 = vadd.f32 %v3010, %v3013
        %s3015 = sld [smem:[#allocation2 + $0x2ce]]
        %v3016 = vstv %s3015
        %v3017 = vmul.f32 %v2309, %v3016
        %v3018 = vadd.f32 %v3014, %v3017
        %s3019 = sld [smem:[#allocation2 + $0x2cf]]
        %v3020 = vstv %s3019
        %v3021 = vmul.f32 %v2348, %v3020
        %v3022 = vadd.f32 %v3018, %v3021
        %v3023 = vmax.f32 %v3022, 0.0
        %s3024 = sld [smem:[#allocation2 + $0x2d9]]
        %v3025 = vstv %s3024
        %v3026 = vmul.f32 %v2423, %v3025
        %s3027 = sld [smem:[#allocation2 + $0x2eb]]
        %v3028 = vstv %s3027
        %v3029 = vadd.f32 %v3026, %v3028
        %s3030 = sld [smem:[#allocation2 + $0x2da]]
        %v3031 = vstv %s3030
        %v3032 = vmul.f32 %v2498, %v3031
        %v3033 = vadd.f32 %v3029, %v3032
        %s3034 = sld [smem:[#allocation2 + $0x2db]]
        %v3035 = vstv %s3034
        %v3036 = vmul.f32 %v2573, %v3035
        %v3037 = vadd.f32 %v3033, %v3036
        %s3038 = sld [smem:[#allocation2 + $0x2dc]]
        %v3039 = vstv %s3038
        %v3040 = vmul.f32 %v2648, %v3039
        %v3041 = vadd.f32 %v3037, %v3040
        %s3042 = sld [smem:[#allocation2 + $0x2dd]]
        %v3043 = vstv %s3042
        %v3044 = vmul.f32 %v2723, %v3043
        %v3045 = vadd.f32 %v3041, %v3044
        %s3046 = sld [smem:[#allocation2 + $0x2de]]
        %v3047 = vstv %s3046
        %v3048 = vmul.f32 %v2798, %v3047
        %v3049 = vadd.f32 %v3045, %v3048
        %s3050 = sld [smem:[#allocation2 + $0x2df]]
        %v3051 = vstv %s3050
        %v3052 = vmul.f32 %v2873, %v3051
        %v3053 = vadd.f32 %v3049, %v3052
        %s3054 = sld [smem:[#allocation2 + $0x2e0]]
        %v3055 = vstv %s3054
        %v3056 = vmul.f32 %v2948, %v3055
        %v3057 = vadd.f32 %v3053, %v3056
        %s3058 = sld [smem:[#allocation2 + $0x2e1]]
        %v3059 = vstv %s3058
        %v3060 = vmul.f32 %v3023, %v3059
        %v3061 = vadd.f32 %v3057, %v3060
        %s3062 = sld [smem:[#allocation2 + $0x2e2]]
        %v3063 = vstv %s3062
        %v3064 = vmul.f32 %v2423, %v3063
        %s3065 = sld [smem:[#allocation2 + $0x2ec]]
        %v3066 = vstv %s3065
        %v3067 = vadd.f32 %v3064, %v3066
        %s3068 = sld [smem:[#allocation2 + $0x2e3]]
        %v3069 = vstv %s3068
        %v3070 = vmul.f32 %v2498, %v3069
        %v3071 = vadd.f32 %v3067, %v3070
        %s3072 = sld [smem:[#allocation2 + $0x2e4]]
        %v3073 = vstv %s3072
        %v3074 = vmul.f32 %v2573, %v3073
        %v3075 = vadd.f32 %v3071, %v3074
        %s3076 = sld [smem:[#allocation2 + $0x2e5]]
        %v3077 = vstv %s3076
        %v3078 = vmul.f32 %v2648, %v3077
        %v3079 = vadd.f32 %v3075, %v3078
        %s3080 = sld [smem:[#allocation2 + $0x2e6]]
        %v3081 = vstv %s3080
        %v3082 = vmul.f32 %v2723, %v3081
        %v3083 = vadd.f32 %v3079, %v3082
        %s3084 = sld [smem:[#allocation2 + $0x2e7]]
        %v3085 = vstv %s3084
        %v3086 = vmul.f32 %v2798, %v3085
        %v3087 = vadd.f32 %v3083, %v3086
        %s3088 = sld [smem:[#allocation2 + $0x2e8]]
        %v3089 = vstv %s3088
        %v3090 = vmul.f32 %v2873, %v3089
        %v3091 = vadd.f32 %v3087, %v3090
        %s3092 = sld [smem:[#allocation2 + $0x2e9]]
        %v3093 = vstv %s3092
        %v3094 = vmul.f32 %v2948, %v3093
        %v3095 = vadd.f32 %v3091, %v3094
        %s3096 = sld [smem:[#allocation2 + $0x2ea]]
        %v3097 = vstv %s3096
        %v3098 = vmul.f32 %v3023, %v3097
        %v3099 = vadd.f32 %v3095, %v3098
        %3100 = vst [vmem:[%s176] sm:$0xff] %v3061
        %s3101 = scalar_lea.vmem %s176, 8 [#allocation7]
        %3102 = vst [vmem:[%s3101] sm:$0xff] %v3099
        %s3103 = sand.u32 %s75, 1
        %s3104 = scalar_lea.sflag [#allocation4], %s3103
        %s3105 = sand.u32 %s75, 1
        %s3106 = smul.addr %s3105, 16
        %s3107 = scalar_lea.vmem [#allocation7], %s3106
        // Predicated region
        $region37: #{tpu_custom_call.1} parent=27 // pred_check
          %p3108 = pneg %p85
        $region38: #{tpu_custom_call.1} parent=27 // pred_check_branch
          %3110 = sbr.rel (%p3108) target = $region40
        $region39: #{tpu_custom_call.1} parent=27 // pred_region
          %3112 = vsyncadd %s3104, 0
          %s3113 = smul.addr %s20, 8
          %s3114 = scalar_lea.hbm %s2, %s3113
          %s3115 = sshll.u32 %s3107, 4
          %s3116 = int_to_ptr.vmem [resolvable:$true] %s3115
          %s3117 = sshll.u32 %s3114, 4
          %s3118 = int_to_ptr.hbm [resolvable:$true] %s3117
          %3123 = dma.vmem_to_hbm [thread:$0]  %s3116, 256, %s3118, %s3104, 128, 256, 8
        $region40: #{tpu_custom_call.1} parent=27 // pred_fallthru
          _
      $region28: #{tpu_custom_call.1} parent=5 // pred_fallthru
        _
      %p3124 = scmp.le.s32.totalorder 2, %s15
      // Predicated region
      $region41: #{tpu_custom_call.1} parent=5 // pred_check
        %p3125 = pneg %p3124
      $region42: #{tpu_custom_call.1} parent=5 // pred_check_branch
        %3127 = sbr.rel (%p3125) target = $region44
      $region43: #{tpu_custom_call.1} parent=5 // pred_region
        %s3128 = ssub.s32 %s15, 2
        // Predicated region
        $region45: #{tpu_custom_call.1} parent=43 // pred_check
          %p3129 = pneg %p91
        $region46: #{tpu_custom_call.1} parent=43 // pred_check_branch
          %3131 = sbr.rel (%p3129) target = $region48
        $region47: #{tpu_custom_call.1} parent=43 // pred_region
          %s3132 = sand.u32 %s76, 1
          %s3133 = scalar_lea.sflag [#allocation4], %s3132
          %s3134 = sand.u32 %s76, 1
          %s3135 = smul.addr %s3134, 16
          %s3136 = scalar_lea.vmem [#allocation7], %s3135
          %3138 = dma.done %s3133, 256
        $region48: #{tpu_custom_call.1} parent=43 // pred_fallthru
          _
      $region44: #{tpu_custom_call.1} parent=5 // pred_fallthru
        _
    $region6: #{tpu_custom_call.1} parent=1 // loop_footer
      %s19 = sadd.s32 1, %s15
    $region7: #{tpu_custom_call.1} parent=1 // loop_footer_branch
      %14 = sbr.rel target = $region3
    $region8: #{tpu_custom_call.1} parent=1 // loop_exit
      _
    %3139 = vsyncpa [#allocation3], 1
    %s3140 = scalar_lea.sflag [#allocation3], 1
    %3141 = vsyncpa %s3140, 1
    %3142 = vsyncpa [#allocation4], 1
    %s3143 = scalar_lea.sflag [#allocation4], 1
    %3144 = vsyncpa %s3143, 1
    %3145 = vsyncpa [#allocation5], 1
    %s3146 = scalar_lea.sflag [#allocation5], 1
    %3147 = vsyncpa %s3146, 1

</llo_original>
